<compile_context>
chip_gen: v5e
topology: v5e:2x2
jax: 0.10.0
libtpu: 0.0.40
codegen_flags: <defaults>
</compile_context>

<pallas_src>
import math

import jax
import jax.numpy as jnp
from jax.experimental import pallas as pl
from jax.experimental.pallas import tpu as pltpu


# ----------------------------------------------------------------------------
# Fused gate + HMM kernel.  One batch block (Bblk elements) per grid step.
# Internal layout: rows are (t, b) t-major, source positions Ts on lanes.
# ----------------------------------------------------------------------------
def make_fused_kernel(Tt, Bblk, Ts, C, n_hidden):
    G = Tt * Bblk          # number of (t, b) row groups
    R = G * Ts             # number of gate rows (one per (t, b, s))
    n_params = 4 * n_hidden + 2
    neg_log_ts = -math.log(Ts)

    def kernel(obs_ref, em_ref, *refs):
        p = refs[:n_params]
        c0_ref, c1_ref, gamma_ref, read_ref, ash_scr, d_scr = refs[n_params:]

        f32 = jnp.float32
        bf16 = jnp.bfloat16

        # ------------------ gate MLP: Linear -> GLU, ..., Linear(., 1) -----
        h = obs_ref[...].reshape(R, C).astype(f32)          # (R, C)
        for l in range(n_hidden):
            wa = p[4 * l + 0][...]
            ba = p[4 * l + 1][...]
            wb = p[4 * l + 2][...]
            bb = p[4 * l + 3][...]
            hb = h.astype(bf16)
            lin = jnp.dot(hb, wa.astype(bf16), preferred_element_type=f32) + ba
            gat = jnp.dot(hb, wb.astype(bf16), preferred_element_type=f32) + bb
            sig = 1.0 / (1.0 + jnp.exp(-gat))
            h = lin * sig                                   # GLU
        w_out = p[4 * n_hidden][...]                        # (d_last, 1)
        b_out = p[4 * n_hidden + 1][...]                    # (1, 1)
        y = jnp.dot(h.astype(bf16), w_out.astype(bf16),
                    preferred_element_type=f32)             # (R, 1) per-row logit

        # Relayout the per-row logits (rows on sublanes) into (G, Ts) with the
        # source axis on lanes, using only plain 2-D masked matmuls.
        # TODO(synk): the (G, R) selection matrix scales as (Tt*Bblk)^2*Ts; for
        # large Tt*Ts replace with a 3-D masked sublane reduction.
        kk = jax.lax.broadcasted_iota(jnp.int32, (Ts, Ts), 0)
        jj = jax.lax.broadcasted_iota(jnp.int32, (Ts, Ts), 1)
        eye_ts = (kk == jj).astype(f32)
        big_eye = jnp.tile(eye_ts, (G, 1))                  # (R, Ts): [r, s] = (r % Ts == s)
        gg = jax.lax.broadcasted_iota(jnp.int32, (G, R), 0)
        rr = jax.lax.broadcasted_iota(jnp.int32, (G, R), 1)
        gsel = jnp.logical_and(rr >= gg * Ts, rr < (gg + 1) * Ts).astype(f32)
        logit = jnp.dot(gsel, y * big_eye, preferred_element_type=f32) + b_out  # (G, Ts)

        # stable log-sigmoid
        ls = jnp.minimum(logit, 0.0) - jnp.log(1.0 + jnp.exp(-jnp.abs(logit)))
        c0 = ls                                             # log(rho)
        c1 = ls - logit                                     # log(1 - rho)

        # raw controls (the torch module returns the un-forced values)
        c0_ref[...] = c0.reshape(Tt, Bblk, Ts)
        c1_ref[...] = c1.reshape(Tt, Bblk, Ts)

        # ------------------ HMM forward / backward --------------------------
        # Force a write at the last source position (applied on a clone in the
        # reference); log(rho) at the last position never enters the math.
        lane = jax.lax.broadcasted_iota(jnp.int32, (G, Ts), 1)
        c1f = jnp.where(lane == Ts - 1, 0.0, c1)

        tri_excl = (kk < jj).astype(f32)    # [l, j] = l <  j
        tri_incl = (kk <= jj).astype(f32)   # [k, j] = k <= j
        ge_mat = (kk >= jj).astype(f32)     # [j, k] = j >= k
        tri_after = (kk > jj).astype(f32)   # [m, j] = m >  j

        # cs[t,b,j] = sum_{l<j} log(rho)[t,b,l]   (one matmul for all t, b)
        cs = jnp.dot(c0, tri_excl, preferred_element_type=f32)    # (G, Ts)

        def rows(x, t):                     # (Bblk, Ts) slab for time t
            return x[t * Bblk:(t + 1) * Bblk, :]

        # forward alpha: using M[t,k,j] = c1f[t,j] + cs[t,j] - cs[t,k] (k<=j)
        alphas = []
        a_t = em_ref[0] + neg_log_ts
        alphas.append(a_t)
        for t in range(1, Tt):
            u = alphas[t - 1] - rows(cs, t - 1)
            mu = jnp.max(u, axis=-1, keepdims=True)
            csum = jnp.dot(jnp.exp(u - mu), tri_incl, preferred_element_type=f32)
            a_t = em_ref[t] + rows(c1f, t - 1) + rows(cs, t - 1) + mu + jnp.log(csum)
            alphas.append(a_t)

        a_last = alphas[Tt - 1]
        pm = jnp.max(a_last, axis=-1, keepdims=True)
        prior = pm + jnp.log(jnp.sum(jnp.exp(a_last - pm), axis=-1, keepdims=True))  # (Bblk, 1)

        # backward beta + gamma, stashing the vectors needed for `read`
        gamma_ref[Tt - 1] = jnp.exp(a_last - prior)          # beta[Tt-1] = 0
        b_next = jnp.zeros((Bblk, Ts), f32)
        for t in range(Tt - 2, -1, -1):
            v = rows(c1f, t) + rows(cs, t) + b_next + em_ref[t + 1]        # d_t
            d_scr[t * Bblk:(t + 1) * Bblk, :] = v
            ash_scr[t * Bblk:(t + 1) * Bblk, :] = alphas[t] - rows(cs, t) - prior
            mv = jnp.max(v, axis=-1, keepdims=True)
            rsum = jnp.dot(jnp.exp(v - mv), ge_mat, preferred_element_type=f32)
            b_t = -rows(cs, t) + mv + jnp.log(rsum)
            gamma_ref[t] = jnp.exp(alphas[t] + b_t - prior)
            b_next = b_t

        # read[t,b,j] = sum_{k<=j} sum_{m>j} ksi[t,b,k,m]
        #             = (sum_{k<=j} e^{a[k]}) * (sum_{m>j} e^{d[m]}) with
        #   a[k] = alpha[t,k] - cs[t,k] - prior,  d[m] = beta[t+1,m]+em[t+1,m]+c1f[t,m]+cs[t,m]
        ash = ash_scr[...]
        dd = d_scr[...]
        sA = jnp.max(ash, axis=-1, keepdims=True)
        sD = jnp.max(dd, axis=-1, keepdims=True)
        cumA = jnp.dot(jnp.exp(ash - sA), tri_incl, preferred_element_type=f32)
        cumD = jnp.dot(jnp.exp(dd - sD), tri_after, preferred_element_type=f32)
        read_ref[...] = (cumA * cumD * jnp.exp(sA + sD)).reshape(Tt - 1, Bblk, Ts)

    return kernel


# ----------------------------------------------------------------------------
# Parameter init (xavier-uniform weights, zero biases) mirroring the torch init
# ----------------------------------------------------------------------------
def init_params(key, controller_dim, num_controller_layers):
    params = []
    in_f = controller_dim
    keys = jax.random.split(key, num_controller_layers + 1)
    for i in range(num_controller_layers):
        bound = math.sqrt(6.0 / (in_f + in_f))
        w = jax.random.uniform(keys[i], (in_f, in_f), jnp.float32, -bound, bound)
        b = jnp.zeros((1, in_f), jnp.float32)
        params.append((w, b))
        in_f //= 2
    bound = math.sqrt(6.0 / (in_f + 1))
    w_final = jax.random.uniform(keys[-1], (in_f, 1), jnp.float32, -bound, bound)
    b_final = jnp.zeros((1, 1), jnp.float32)
    params.append((w_final, b_final))
    return params


# ----------------------------------------------------------------------------
# Full forward (mirrors HMMControls2.forward)
# ----------------------------------------------------------------------------
def hmm_controls2_forward(observations, emissions, params):
    # observations: (B, Tt, Ts, C),  emissions: (Tt, B, Ts)
    B, Tt, Ts, C = observations.shape
    assert Tt >= 2
    n_hidden = len(params) - 1

    obs_t = jnp.transpose(observations, (1, 0, 2, 3)).astype(jnp.float32)  # (Tt, B, Ts, C)
    em = emissions.astype(jnp.float32)                                     # (Tt, B, Ts)

    Bblk = 8
    Bpad = int(pl.cdiv(B, Bblk)) * Bblk
    if Bpad != B:
        obs_t = jnp.pad(obs_t, ((0, 0), (0, Bpad - B), (0, 0), (0, 0)))
        em = jnp.pad(em, ((0, 0), (0, Bpad - B), (0, 0)))

    # flatten parameters: per hidden layer (Wa, ba, Wb, bb), then (w_out, b_out)
    flat = []
    in_specs = [
        pl.BlockSpec((Tt, Bblk, Ts, C), lambda b: (0, b, 0, 0)),   # observations
        pl.BlockSpec((Tt, Bblk, Ts), lambda b: (0, b, 0)),         # emissions
    ]
    for (w, bias) in params[:-1]:
        d = w.shape[1] // 2
        for arr in (w[:, :d], bias[:, :d], w[:, d:], bias[:, d:]):
            flat.append(arr)
            in_specs.append(pl.BlockSpec(arr.shape, lambda b: (0, 0)))
    w_fin, b_fin = params[-1]
    for arr in (w_fin, b_fin):
        flat.append(arr)
        in_specs.append(pl.BlockSpec(arr.shape, lambda b: (0, 0)))

    out_shape = (
        jax.ShapeDtypeStruct((Tt, Bpad, Ts), jnp.float32),       # c0 = log(rho)
        jax.ShapeDtypeStruct((Tt, Bpad, Ts), jnp.float32),       # c1 = log(1-rho)
        jax.ShapeDtypeStruct((Tt, Bpad, Ts), jnp.float32),       # gamma
        jax.ShapeDtypeStruct((Tt - 1, Bpad, Ts), jnp.float32),   # read
    )
    out_specs = (
        pl.BlockSpec((Tt, Bblk, Ts), lambda b: (0, b, 0)),
        pl.BlockSpec((Tt, Bblk, Ts), lambda b: (0, b, 0)),
        pl.BlockSpec((Tt, Bblk, Ts), lambda b: (0, b, 0)),
        pl.BlockSpec((Tt - 1, Bblk, Ts), lambda b: (0, b, 0)),
    )

    c0, c1, gamma, read = pl.pallas_call(
        make_fused_kernel(Tt, Bblk, Ts, C, n_hidden),
        out_shape=out_shape,
        grid=(Bpad // Bblk,),
        in_specs=in_specs,
        out_specs=out_specs,
        scratch_shapes=[
            pltpu.VMEM(((Tt - 1) * Bblk, Ts), jnp.float32),   # alpha - cs - prior
            pltpu.VMEM(((Tt - 1) * Bblk, Ts), jnp.float32),   # d vectors
        ],
        compiler_params=pltpu.CompilerParams(dimension_semantics=("parallel",)),
    )(obs_t, em, *flat)

    if Bpad != B:
        c0 = c0[:, :B]
        c1 = c1[:, :B]
        gamma = gamma[:, :B]
        read = read[:, :B]

    controls = jnp.stack([c0, c1], axis=-1)    # (Tt, B, Ts, 2)
    write = gamma[1:]
    return controls[:-1], gamma, read, write


if __name__ == "__main__":
    B, Tt, Ts, C = 2, 8, 8, 32
    num_controller_layers = 2

    key = jax.random.PRNGKey(0)
    k_obs, k_em, k_par = jax.random.split(key, 3)

    observations = jax.random.normal(k_obs, (B, Tt, Ts, C), jnp.float32)
    emissions = jax.nn.log_softmax(
        jax.random.normal(k_em, (Tt, B, Ts), jnp.float32), axis=-1)
    params = init_params(k_par, C, num_controller_layers)

    fwd = jax.jit(lambda o, e: hmm_controls2_forward(o, e, params))
    controls, gamma, read, write = fwd(observations, emissions)
    jax.block_until_ready((controls, gamma, read, write))

    assert controls.shape == (Tt - 1, B, Ts, 2)
    assert gamma.shape == (Tt, B, Ts)
    assert read.shape == (Tt - 1, B, Ts)
    assert write.shape == (Tt - 1, B, Ts)
    assert bool(jnp.all(jnp.isfinite(controls)))
    assert bool(jnp.all(jnp.isfinite(gamma)))
    assert bool(jnp.all(jnp.isfinite(read)))
    # forward-backward invariant: posterior gamma sums to 1 over source positions
    assert bool(jnp.all(jnp.abs(jnp.sum(gamma, axis=-1) - 1.0) < 1e-2))

    print("KERNEL_OK")
</pallas_src>

<mosaic_0001>
module attributes {stable_mosaic.version = 11 : i64} {
  func.func @kernel(%arg0: i32, %arg1: memref<8x8x8x32xf32, #tpu.memory_space<vmem>>, %arg2: memref<8x8x8xf32, #tpu.memory_space<vmem>>, %arg3: memref<32x16xf32, #tpu.memory_space<vmem>>, %arg4: memref<1x16xf32, #tpu.memory_space<vmem>>, %arg5: memref<32x16xf32, #tpu.memory_space<vmem>>, %arg6: memref<1x16xf32, #tpu.memory_space<vmem>>, %arg7: memref<16x8xf32, #tpu.memory_space<vmem>>, %arg8: memref<1x8xf32, #tpu.memory_space<vmem>>, %arg9: memref<16x8xf32, #tpu.memory_space<vmem>>, %arg10: memref<1x8xf32, #tpu.memory_space<vmem>>, %arg11: memref<8x1xf32, #tpu.memory_space<vmem>>, %arg12: memref<1x1xf32, #tpu.memory_space<vmem>>, %arg13: memref<8x8x8xf32, #tpu.memory_space<vmem>>, %arg14: memref<8x8x8xf32, #tpu.memory_space<vmem>>, %arg15: memref<8x8x8xf32, #tpu.memory_space<vmem>>, %arg16: memref<7x8x8xf32, #tpu.memory_space<vmem>>, %arg17: memref<56x8xf32, #tpu.memory_space<vmem>>, %arg18: memref<56x8xf32, #tpu.memory_space<vmem>>) attributes {dimension_semantics = [#tpu.dimension_semantics<parallel>], iteration_bounds = array<i64: 1>, scalar_prefetch = 0 : i64, scratch_operands = 2 : i64, tpu.core_type = #tpu.core_type<tc>, window_params = [{transform_indices = @transform_0, window_bounds = array<i64: 8, 8, 8, 32>}, {transform_indices = @transform_1, window_bounds = array<i64: 8, 8, 8>}, {pipeline_mode = #tpu.pipeline_mode<synchronous>, transform_indices = @transform_2, window_bounds = array<i64: 32, 16>}, {pipeline_mode = #tpu.pipeline_mode<synchronous>, transform_indices = @transform_3, window_bounds = array<i64: 1, 16>}, {pipeline_mode = #tpu.pipeline_mode<synchronous>, transform_indices = @transform_4, window_bounds = array<i64: 32, 16>}, {pipeline_mode = #tpu.pipeline_mode<synchronous>, transform_indices = @transform_5, window_bounds = array<i64: 1, 16>}, {pipeline_mode = #tpu.pipeline_mode<synchronous>, transform_indices = @transform_6, window_bounds = array<i64: 16, 8>}, {pipeline_mode = #tpu.pipeline_mode<synchronous>, transform_indices = @transform_7, window_bounds = array<i64: 1, 8>}, {pipeline_mode = #tpu.pipeline_mode<synchronous>, transform_indices = @transform_8, window_bounds = array<i64: 16, 8>}, {pipeline_mode = #tpu.pipeline_mode<synchronous>, transform_indices = @transform_9, window_bounds = array<i64: 1, 8>}, {pipeline_mode = #tpu.pipeline_mode<synchronous>, transform_indices = @transform_10, window_bounds = array<i64: 8, 1>}, {pipeline_mode = #tpu.pipeline_mode<synchronous>, transform_indices = @transform_11, window_bounds = array<i64: 1, 1>}, {transform_indices = @transform_12, window_bounds = array<i64: 8, 8, 8>}, {transform_indices = @transform_13, window_bounds = array<i64: 8, 8, 8>}, {transform_indices = @transform_14, window_bounds = array<i64: 8, 8, 8>}, {transform_indices = @transform_15, window_bounds = array<i64: 7, 8, 8>}]} {
    %c0 = arith.constant 0 : index
    %c0_0 = arith.constant 0 : index
    %c0_1 = arith.constant 0 : index
    %c0_2 = arith.constant 0 : index
    %0 = vector.load %arg1[%c0, %c0_0, %c0_1, %c0_2] : memref<8x8x8x32xf32, #tpu.memory_space<vmem>>, vector<8x8x8x32xf32>
    %1 = vector.shape_cast %0 : vector<8x8x8x32xf32> to vector<512x32xf32>
    %c0_3 = arith.constant 0 : index
    %c0_4 = arith.constant 0 : index
    %2 = vector.load %arg3[%c0_3, %c0_4] : memref<32x16xf32, #tpu.memory_space<vmem>>, vector<32x16xf32>
    %c0_5 = arith.constant 0 : index
    %c0_6 = arith.constant 0 : index
    %3 = vector.load %arg4[%c0_5, %c0_6] : memref<1x16xf32, #tpu.memory_space<vmem>>, vector<1x16xf32>
    %c0_7 = arith.constant 0 : index
    %c0_8 = arith.constant 0 : index
    %4 = vector.load %arg5[%c0_7, %c0_8] : memref<32x16xf32, #tpu.memory_space<vmem>>, vector<32x16xf32>
    %c0_9 = arith.constant 0 : index
    %c0_10 = arith.constant 0 : index
    %5 = vector.load %arg6[%c0_9, %c0_10] : memref<1x16xf32, #tpu.memory_space<vmem>>, vector<1x16xf32>
    %6 = arith.truncf %1 : vector<512x32xf32> to vector<512x32xbf16>
    %7 = arith.truncf %2 : vector<32x16xf32> to vector<32x16xbf16>
    %cst = arith.constant dense<0.000000e+00> : vector<512x16xf32>
    %8 = tpu.matmul %6, %7, %cst {dimension_numbers = #tpu.dot_dimension_numbers<[1], [0], [0], [1], [0, 0, 1, 1], [], []>} : vector<512x32xbf16>, vector<32x16xbf16>, vector<512x16xf32> -> vector<512x16xf32>
    %9 = vector.broadcast %3 : vector<1x16xf32> to vector<512x16xf32>
    %10 = arith.addf %8, %9 : vector<512x16xf32>
    %11 = arith.truncf %4 : vector<32x16xf32> to vector<32x16xbf16>
    %cst_11 = arith.constant dense<0.000000e+00> : vector<512x16xf32>
    %12 = tpu.matmul %6, %11, %cst_11 {dimension_numbers = #tpu.dot_dimension_numbers<[1], [0], [0], [1], [0, 0, 1, 1], [], []>} : vector<512x32xbf16>, vector<32x16xbf16>, vector<512x16xf32> -> vector<512x16xf32>
    %13 = vector.broadcast %5 : vector<1x16xf32> to vector<512x16xf32>
    %14 = arith.addf %12, %13 : vector<512x16xf32>
    %cst_12 = arith.constant 0.000000e+00 : f32
    %15 = vector.broadcast %cst_12 : f32 to vector<512x16xf32>
    %16 = arith.subf %15, %14 : vector<512x16xf32>
    %17 = math.exp %16 : vector<512x16xf32>
    %cst_13 = arith.constant 1.000000e+00 : f32
    %18 = vector.broadcast %cst_13 : f32 to vector<512x16xf32>
    %19 = arith.addf %18, %17 : vector<512x16xf32>
    %cst_14 = arith.constant 1.000000e+00 : f32
    %20 = vector.broadcast %cst_14 : f32 to vector<512x16xf32>
    %21 = arith.divf %20, %19 : vector<512x16xf32>
    %22 = arith.mulf %10, %21 : vector<512x16xf32>
    %c0_15 = arith.constant 0 : index
    %c0_16 = arith.constant 0 : index
    %23 = vector.load %arg7[%c0_15, %c0_16] : memref<16x8xf32, #tpu.memory_space<vmem>>, vector<16x8xf32>
    %c0_17 = arith.constant 0 : index
    %c0_18 = arith.constant 0 : index
    %24 = vector.load %arg8[%c0_17, %c0_18] : memref<1x8xf32, #tpu.memory_space<vmem>>, vector<1x8xf32>
    %c0_19 = arith.constant 0 : index
    %c0_20 = arith.constant 0 : index
    %25 = vector.load %arg9[%c0_19, %c0_20] : memref<16x8xf32, #tpu.memory_space<vmem>>, vector<16x8xf32>
    %c0_21 = arith.constant 0 : index
    %c0_22 = arith.constant 0 : index
    %26 = vector.load %arg10[%c0_21, %c0_22] : memref<1x8xf32, #tpu.memory_space<vmem>>, vector<1x8xf32>
    %27 = arith.truncf %22 : vector<512x16xf32> to vector<512x16xbf16>
    %28 = arith.truncf %23 : vector<16x8xf32> to vector<16x8xbf16>
    %cst_23 = arith.constant dense<0.000000e+00> : vector<512x8xf32>
    %29 = tpu.matmul %27, %28, %cst_23 {dimension_numbers = #tpu.dot_dimension_numbers<[1], [0], [0], [1], [0, 0, 1, 1], [], []>} : vector<512x16xbf16>, vector<16x8xbf16>, vector<512x8xf32> -> vector<512x8xf32>
    %30 = vector.broadcast %24 : vector<1x8xf32> to vector<512x8xf32>
    %31 = arith.addf %29, %30 : vector<512x8xf32>
    %32 = arith.truncf %25 : vector<16x8xf32> to vector<16x8xbf16>
    %cst_24 = arith.constant dense<0.000000e+00> : vector<512x8xf32>
    %33 = tpu.matmul %27, %32, %cst_24 {dimension_numbers = #tpu.dot_dimension_numbers<[1], [0], [0], [1], [0, 0, 1, 1], [], []>} : vector<512x16xbf16>, vector<16x8xbf16>, vector<512x8xf32> -> vector<512x8xf32>
    %34 = vector.broadcast %26 : vector<1x8xf32> to vector<512x8xf32>
    %35 = arith.addf %33, %34 : vector<512x8xf32>
    %cst_25 = arith.constant 0.000000e+00 : f32
    %36 = vector.broadcast %cst_25 : f32 to vector<512x8xf32>
    %37 = arith.subf %36, %35 : vector<512x8xf32>
    %38 = math.exp %37 : vector<512x8xf32>
    %cst_26 = arith.constant 1.000000e+00 : f32
    %39 = vector.broadcast %cst_26 : f32 to vector<512x8xf32>
    %40 = arith.addf %39, %38 : vector<512x8xf32>
    %cst_27 = arith.constant 1.000000e+00 : f32
    %41 = vector.broadcast %cst_27 : f32 to vector<512x8xf32>
    %42 = arith.divf %41, %40 : vector<512x8xf32>
    %43 = arith.mulf %31, %42 : vector<512x8xf32>
    %c0_28 = arith.constant 0 : index
    %c0_29 = arith.constant 0 : index
    %44 = vector.load %arg11[%c0_28, %c0_29] : memref<8x1xf32, #tpu.memory_space<vmem>>, vector<8x1xf32>
    %c0_30 = arith.constant 0 : index
    %c0_31 = arith.constant 0 : index
    %45 = vector.load %arg12[%c0_30, %c0_31] : memref<1x1xf32, #tpu.memory_space<vmem>>, vector<1x1xf32>
    %46 = arith.truncf %43 : vector<512x8xf32> to vector<512x8xbf16>
    %47 = arith.truncf %44 : vector<8x1xf32> to vector<8x1xbf16>
    %cst_32 = arith.constant dense<0.000000e+00> : vector<512x1xf32>
    %48 = tpu.matmul %46, %47, %cst_32 {dimension_numbers = #tpu.dot_dimension_numbers<[1], [0], [0], [1], [0, 0, 1, 1], [], []>} : vector<512x8xbf16>, vector<8x1xbf16>, vector<512x1xf32> -> vector<512x1xf32>
    %49 = tpu.iota {dimensions = array<i32: 0>} : vector<8x8xi32>
    %50 = tpu.iota {dimensions = array<i32: 1>} : vector<8x8xi32>
    %51 = arith.cmpi eq, %49, %50 : vector<8x8xi32>
    %52 = arith.extui %51 : vector<8x8xi1> to vector<8x8xi32>
    %53 = arith.sitofp %52 : vector<8x8xi32> to vector<8x8xf32>
    %54 = tpu.concatenate %53, %53, %53, %53, %53, %53, %53, %53, %53, %53, %53, %53, %53, %53, %53, %53, %53, %53, %53, %53, %53, %53, %53, %53, %53, %53, %53, %53, %53, %53, %53, %53, %53, %53, %53, %53, %53, %53, %53, %53, %53, %53, %53, %53, %53, %53, %53, %53, %53, %53, %53, %53, %53, %53, %53, %53, %53, %53, %53, %53, %53, %53, %53, %53 in 0 : vector<8x8xf32>, vector<8x8xf32>, vector<8x8xf32>, vector<8x8xf32>, vector<8x8xf32>, vector<8x8xf32>, vector<8x8xf32>, vector<8x8xf32>, vector<8x8xf32>, vector<8x8xf32>, vector<8x8xf32>, vector<8x8xf32>, vector<8x8xf32>, vector<8x8xf32>, vector<8x8xf32>, vector<8x8xf32>, vector<8x8xf32>, vector<8x8xf32>, vector<8x8xf32>, vector<8x8xf32>, vector<8x8xf32>, vector<8x8xf32>, vector<8x8xf32>, vector<8x8xf32>, vector<8x8xf32>, vector<8x8xf32>, vector<8x8xf32>, vector<8x8xf32>, vector<8x8xf32>, vector<8x8xf32>, vector<8x8xf32>, vector<8x8xf32>, vector<8x8xf32>, vector<8x8xf32>, vector<8x8xf32>, vector<8x8xf32>, vector<8x8xf32>, vector<8x8xf32>, vector<8x8xf32>, vector<8x8xf32>, vector<8x8xf32>, vector<8x8xf32>, vector<8x8xf32>, vector<8x8xf32>, vector<8x8xf32>, vector<8x8xf32>, vector<8x8xf32>, vector<8x8xf32>, vector<8x8xf32>, vector<8x8xf32>, vector<8x8xf32>, vector<8x8xf32>, vector<8x8xf32>, vector<8x8xf32>, vector<8x8xf32>, vector<8x8xf32>, vector<8x8xf32>, vector<8x8xf32>, vector<8x8xf32>, vector<8x8xf32>, vector<8x8xf32>, vector<8x8xf32>, vector<8x8xf32>, vector<8x8xf32> -> vector<512x8xf32>
    %55 = tpu.iota {dimensions = array<i32: 0>} : vector<64x512xi32>
    %56 = tpu.iota {dimensions = array<i32: 1>} : vector<64x512xi32>
    %c8_i32 = arith.constant 8 : i32
    %57 = vector.broadcast %c8_i32 : i32 to vector<64x512xi32>
    %58 = arith.muli %55, %57 : vector<64x512xi32>
    %59 = arith.cmpi sge, %56, %58 : vector<64x512xi32>
    %c1_i32 = arith.constant 1 : i32
    %60 = vector.broadcast %c1_i32 : i32 to vector<64x512xi32>
    %61 = arith.addi %55, %60 : vector<64x512xi32>
    %c8_i32_33 = arith.constant 8 : i32
    %62 = vector.broadcast %c8_i32_33 : i32 to vector<64x512xi32>
    %63 = arith.muli %61, %62 : vector<64x512xi32>
    %64 = arith.cmpi slt, %56, %63 : vector<64x512xi32>
    %65 = arith.andi %59, %64 : vector<64x512xi1>
    %66 = arith.extui %65 : vector<64x512xi1> to vector<64x512xi32>
    %67 = arith.sitofp %66 : vector<64x512xi32> to vector<64x512xf32>
    %68 = vector.broadcast %48 : vector<512x1xf32> to vector<512x8xf32>
    %69 = arith.mulf %68, %54 : vector<512x8xf32>
    %cst_34 = arith.constant dense<0.000000e+00> : vector<64x8xf32>
    %70 = tpu.matmul %67, %69, %cst_34 {dimension_numbers = #tpu.dot_dimension_numbers<[1], [0], [0], [1], [0, 0, 1, 1], [], []>} : vector<64x512xf32>, vector<512x8xf32>, vector<64x8xf32> -> vector<64x8xf32>
    %71 = vector.broadcast %45 : vector<1x1xf32> to vector<64x8xf32>
    %72 = arith.addf %70, %71 : vector<64x8xf32>
    %cst_35 = arith.constant 0.000000e+00 : f32
    %73 = vector.broadcast %cst_35 : f32 to vector<64x8xf32>
    %74 = arith.minimumf %72, %73 : vector<64x8xf32>
    %75 = math.absf %72 : vector<64x8xf32>
    %cst_36 = arith.constant 0.000000e+00 : f32
    %76 = vector.broadcast %cst_36 : f32 to vector<64x8xf32>
    %77 = arith.subf %76, %75 : vector<64x8xf32>
    %78 = math.exp %77 : vector<64x8xf32>
    %cst_37 = arith.constant 1.000000e+00 : f32
    %79 = vector.broadcast %cst_37 : f32 to vector<64x8xf32>
    %80 = arith.addf %79, %78 : vector<64x8xf32>
    %81 = math.log %80 : vector<64x8xf32>
    %82 = arith.subf %74, %81 : vector<64x8xf32>
    %83 = arith.subf %82, %72 : vector<64x8xf32>
    %84 = vector.shape_cast %82 : vector<64x8xf32> to vector<8x8x8xf32>
    %c0_38 = arith.constant 0 : index
    %c0_39 = arith.constant 0 : index
    %c0_40 = arith.constant 0 : index
    %85 = vector.load %arg13[%c0_38, %c0_39, %c0_40] : memref<8x8x8xf32, #tpu.memory_space<vmem>>, vector<8x8x8xf32>
    tpu.vector_store %arg13[%c0_38, %c0_39, %c0_40], %84 {strides = array<i32>} : memref<8x8x8xf32, #tpu.memory_space<vmem>>, vector<8x8x8xf32>,
    %86 = vector.shape_cast %83 : vector<64x8xf32> to vector<8x8x8xf32>
    %c0_41 = arith.constant 0 : index
    %c0_42 = arith.constant 0 : index
    %c0_43 = arith.constant 0 : index
    %87 = vector.load %arg14[%c0_41, %c0_42, %c0_43] : memref<8x8x8xf32, #tpu.memory_space<vmem>>, vector<8x8x8xf32>
    tpu.vector_store %arg14[%c0_41, %c0_42, %c0_43], %86 {strides = array<i32>} : memref<8x8x8xf32, #tpu.memory_space<vmem>>, vector<8x8x8xf32>,
    %88 = tpu.iota {dimensions = array<i32: 1>} : vector<64x8xi32>
    %c7_i32 = arith.constant 7 : i32
    %89 = vector.broadcast %c7_i32 : i32 to vector<64x8xi32>
    %90 = arith.cmpi eq, %88, %89 : vector<64x8xi32>
    %cst_44 = arith.constant 0.000000e+00 : f32
    %91 = vector.broadcast %cst_44 : f32 to vector<64x8xf32>
    %92 = arith.select %90, %91, %83 : vector<64x8xi1>, vector<64x8xf32>
    %93 = arith.cmpi slt, %49, %50 : vector<8x8xi32>
    %94 = arith.extui %93 : vector<8x8xi1> to vector<8x8xi32>
    %95 = arith.sitofp %94 : vector<8x8xi32> to vector<8x8xf32>
    %96 = arith.cmpi sle, %49, %50 : vector<8x8xi32>
    %97 = arith.extui %96 : vector<8x8xi1> to vector<8x8xi32>
    %98 = arith.sitofp %97 : vector<8x8xi32> to vector<8x8xf32>
    %99 = arith.cmpi sge, %49, %50 : vector<8x8xi32>
    %100 = arith.extui %99 : vector<8x8xi1> to vector<8x8xi32>
    %101 = arith.sitofp %100 : vector<8x8xi32> to vector<8x8xf32>
    %102 = arith.cmpi sgt, %49, %50 : vector<8x8xi32>
    %103 = arith.extui %102 : vector<8x8xi1> to vector<8x8xi32>
    %104 = arith.sitofp %103 : vector<8x8xi32> to vector<8x8xf32>
    %cst_45 = arith.constant dense<0.000000e+00> : vector<64x8xf32>
    %105 = tpu.matmul %82, %95, %cst_45 {dimension_numbers = #tpu.dot_dimension_numbers<[1], [0], [0], [1], [0, 0, 1, 1], [], []>} : vector<64x8xf32>, vector<8x8xf32>, vector<64x8xf32> -> vector<64x8xf32>
    %c0_46 = arith.constant 0 : index
    %c0_47 = arith.constant 0 : index
    %c0_48 = arith.constant 0 : index
    %106 = vector.load %arg2[%c0_46, %c0_47, %c0_48] : memref<8x8x8xf32, #tpu.memory_space<vmem>>, vector<1x8x8xf32>
    %107 = vector.shape_cast %106 : vector<1x8x8xf32> to vector<8x8xf32>
    %cst_49 = arith.constant -2.07944155 : f32
    %108 = vector.broadcast %cst_49 : f32 to vector<8x8xf32>
    %109 = arith.addf %107, %108 : vector<8x8xf32>
    %110 = vector.extract_strided_slice %105 {offsets = [0, 0], sizes = [8, 8], strides = [1, 1]} : vector<64x8xf32> to vector<8x8xf32>
    %111 = arith.subf %109, %110 : vector<8x8xf32>
    %cst_50 = arith.constant dense<0xFF800000> : vector<8xf32>
    %112 = vector.multi_reduction <maximumf>, %111, %cst_50 [1] : vector<8x8xf32> to vector<8xf32>
    %113 = vector.shape_cast %112 : vector<8xf32> to vector<8x1xf32>
    %114 = vector.broadcast %113 : vector<8x1xf32> to vector<8x8xf32>
    %115 = arith.subf %111, %114 : vector<8x8xf32>
    %116 = math.exp %115 : vector<8x8xf32>
    %cst_51 = arith.constant dense<0.000000e+00> : vector<8x8xf32>
    %117 = tpu.matmul %116, %98, %cst_51 {dimension_numbers = #tpu.dot_dimension_numbers<[1], [0], [0], [1], [0, 0, 1, 1], [], []>} : vector<8x8xf32>, vector<8x8xf32>, vector<8x8xf32> -> vector<8x8xf32>
    %c1 = arith.constant 1 : index
    %c0_52 = arith.constant 0 : index
    %c0_53 = arith.constant 0 : index
    %118 = vector.load %arg2[%c1, %c0_52, %c0_53] : memref<8x8x8xf32, #tpu.memory_space<vmem>>, vector<1x8x8xf32>
    %119 = vector.shape_cast %118 : vector<1x8x8xf32> to vector<8x8xf32>
    %120 = vector.extract_strided_slice %92 {offsets = [0, 0], sizes = [8, 8], strides = [1, 1]} : vector<64x8xf32> to vector<8x8xf32>
    %121 = arith.addf %119, %120 : vector<8x8xf32>
    %122 = vector.extract_strided_slice %105 {offsets = [0, 0], sizes = [8, 8], strides = [1, 1]} : vector<64x8xf32> to vector<8x8xf32>
    %123 = arith.addf %121, %122 : vector<8x8xf32>
    %124 = vector.broadcast %113 : vector<8x1xf32> to vector<8x8xf32>
    %125 = arith.addf %123, %124 : vector<8x8xf32>
    %126 = math.log %117 : vector<8x8xf32>
    %127 = arith.addf %125, %126 : vector<8x8xf32>
    %128 = vector.extract_strided_slice %105 {offsets = [8, 0], sizes = [8, 8], strides = [1, 1]} : vector<64x8xf32> to vector<8x8xf32>
    %129 = arith.subf %127, %128 : vector<8x8xf32>
    %cst_54 = arith.constant dense<0xFF800000> : vector<8xf32>
    %130 = vector.multi_reduction <maximumf>, %129, %cst_54 [1] : vector<8x8xf32> to vector<8xf32>
    %131 = vector.shape_cast %130 : vector<8xf32> to vector<8x1xf32>
    %132 = vector.broadcast %131 : vector<8x1xf32> to vector<8x8xf32>
    %133 = arith.subf %129, %132 : vector<8x8xf32>
    %134 = math.exp %133 : vector<8x8xf32>
    %cst_55 = arith.constant dense<0.000000e+00> : vector<8x8xf32>
    %135 = tpu.matmul %134, %98, %cst_55 {dimension_numbers = #tpu.dot_dimension_numbers<[1], [0], [0], [1], [0, 0, 1, 1], [], []>} : vector<8x8xf32>, vector<8x8xf32>, vector<8x8xf32> -> vector<8x8xf32>
    %c2 = arith.constant 2 : index
    %c0_56 = arith.constant 0 : index
    %c0_57 = arith.constant 0 : index
    %136 = vector.load %arg2[%c2, %c0_56, %c0_57] : memref<8x8x8xf32, #tpu.memory_space<vmem>>, vector<1x8x8xf32>
    %137 = vector.shape_cast %136 : vector<1x8x8xf32> to vector<8x8xf32>
    %138 = vector.extract_strided_slice %92 {offsets = [8, 0], sizes = [8, 8], strides = [1, 1]} : vector<64x8xf32> to vector<8x8xf32>
    %139 = arith.addf %137, %138 : vector<8x8xf32>
    %140 = vector.extract_strided_slice %105 {offsets = [8, 0], sizes = [8, 8], strides = [1, 1]} : vector<64x8xf32> to vector<8x8xf32>
    %141 = arith.addf %139, %140 : vector<8x8xf32>
    %142 = vector.broadcast %131 : vector<8x1xf32> to vector<8x8xf32>
    %143 = arith.addf %141, %142 : vector<8x8xf32>
    %144 = math.log %135 : vector<8x8xf32>
    %145 = arith.addf %143, %144 : vector<8x8xf32>
    %146 = vector.extract_strided_slice %105 {offsets = [16, 0], sizes = [8, 8], strides = [1, 1]} : vector<64x8xf32> to vector<8x8xf32>
    %147 = arith.subf %145, %146 : vector<8x8xf32>
    %cst_58 = arith.constant dense<0xFF800000> : vector<8xf32>
    %148 = vector.multi_reduction <maximumf>, %147, %cst_58 [1] : vector<8x8xf32> to vector<8xf32>
    %149 = vector.shape_cast %148 : vector<8xf32> to vector<8x1xf32>
    %150 = vector.broadcast %149 : vector<8x1xf32> to vector<8x8xf32>
    %151 = arith.subf %147, %150 : vector<8x8xf32>
    %152 = math.exp %151 : vector<8x8xf32>
    %cst_59 = arith.constant dense<0.000000e+00> : vector<8x8xf32>
    %153 = tpu.matmul %152, %98, %cst_59 {dimension_numbers = #tpu.dot_dimension_numbers<[1], [0], [0], [1], [0, 0, 1, 1], [], []>} : vector<8x8xf32>, vector<8x8xf32>, vector<8x8xf32> -> vector<8x8xf32>
    %c3 = arith.constant 3 : index
    %c0_60 = arith.constant 0 : index
    %c0_61 = arith.constant 0 : index
    %154 = vector.load %arg2[%c3, %c0_60, %c0_61] : memref<8x8x8xf32, #tpu.memory_space<vmem>>, vector<1x8x8xf32>
    %155 = vector.shape_cast %154 : vector<1x8x8xf32> to vector<8x8xf32>
    %156 = vector.extract_strided_slice %92 {offsets = [16, 0], sizes = [8, 8], strides = [1, 1]} : vector<64x8xf32> to vector<8x8xf32>
    %157 = arith.addf %155, %156 : vector<8x8xf32>
    %158 = vector.extract_strided_slice %105 {offsets = [16, 0], sizes = [8, 8], strides = [1, 1]} : vector<64x8xf32> to vector<8x8xf32>
    %159 = arith.addf %157, %158 : vector<8x8xf32>
    %160 = vector.broadcast %149 : vector<8x1xf32> to vector<8x8xf32>
    %161 = arith.addf %159, %160 : vector<8x8xf32>
    %162 = math.log %153 : vector<8x8xf32>
    %163 = arith.addf %161, %162 : vector<8x8xf32>
    %164 = vector.extract_strided_slice %105 {offsets = [24, 0], sizes = [8, 8], strides = [1, 1]} : vector<64x8xf32> to vector<8x8xf32>
    %165 = arith.subf %163, %164 : vector<8x8xf32>
    %cst_62 = arith.constant dense<0xFF800000> : vector<8xf32>
    %166 = vector.multi_reduction <maximumf>, %165, %cst_62 [1] : vector<8x8xf32> to vector<8xf32>
    %167 = vector.shape_cast %166 : vector<8xf32> to vector<8x1xf32>
    %168 = vector.broadcast %167 : vector<8x1xf32> to vector<8x8xf32>
    %169 = arith.subf %165, %168 : vector<8x8xf32>
    %170 = math.exp %169 : vector<8x8xf32>
    %cst_63 = arith.constant dense<0.000000e+00> : vector<8x8xf32>
    %171 = tpu.matmul %170, %98, %cst_63 {dimension_numbers = #tpu.dot_dimension_numbers<[1], [0], [0], [1], [0, 0, 1, 1], [], []>} : vector<8x8xf32>, vector<8x8xf32>, vector<8x8xf32> -> vector<8x8xf32>
    %c4 = arith.constant 4 : index
    %c0_64 = arith.constant 0 : index
    %c0_65 = arith.constant 0 : index
    %172 = vector.load %arg2[%c4, %c0_64, %c0_65] : memref<8x8x8xf32, #tpu.memory_space<vmem>>, vector<1x8x8xf32>
    %173 = vector.shape_cast %172 : vector<1x8x8xf32> to vector<8x8xf32>
    %174 = vector.extract_strided_slice %92 {offsets = [24, 0], sizes = [8, 8], strides = [1, 1]} : vector<64x8xf32> to vector<8x8xf32>
    %175 = arith.addf %173, %174 : vector<8x8xf32>
    %176 = vector.extract_strided_slice %105 {offsets = [24, 0], sizes = [8, 8], strides = [1, 1]} : vector<64x8xf32> to vector<8x8xf32>
    %177 = arith.addf %175, %176 : vector<8x8xf32>
    %178 = vector.broadcast %167 : vector<8x1xf32> to vector<8x8xf32>
    %179 = arith.addf %177, %178 : vector<8x8xf32>
    %180 = math.log %171 : vector<8x8xf32>
    %181 = arith.addf %179, %180 : vector<8x8xf32>
    %182 = vector.extract_strided_slice %105 {offsets = [32, 0], sizes = [8, 8], strides = [1, 1]} : vector<64x8xf32> to vector<8x8xf32>
    %183 = arith.subf %181, %182 : vector<8x8xf32>
    %cst_66 = arith.constant dense<0xFF800000> : vector<8xf32>
    %184 = vector.multi_reduction <maximumf>, %183, %cst_66 [1] : vector<8x8xf32> to vector<8xf32>
    %185 = vector.shape_cast %184 : vector<8xf32> to vector<8x1xf32>
    %186 = vector.broadcast %185 : vector<8x1xf32> to vector<8x8xf32>
    %187 = arith.subf %183, %186 : vector<8x8xf32>
    %188 = math.exp %187 : vector<8x8xf32>
    %cst_67 = arith.constant dense<0.000000e+00> : vector<8x8xf32>
    %189 = tpu.matmul %188, %98, %cst_67 {dimension_numbers = #tpu.dot_dimension_numbers<[1], [0], [0], [1], [0, 0, 1, 1], [], []>} : vector<8x8xf32>, vector<8x8xf32>, vector<8x8xf32> -> vector<8x8xf32>
    %c5 = arith.constant 5 : index
    %c0_68 = arith.constant 0 : index
    %c0_69 = arith.constant 0 : index
    %190 = vector.load %arg2[%c5, %c0_68, %c0_69] : memref<8x8x8xf32, #tpu.memory_space<vmem>>, vector<1x8x8xf32>
    %191 = vector.shape_cast %190 : vector<1x8x8xf32> to vector<8x8xf32>
    %192 = vector.extract_strided_slice %92 {offsets = [32, 0], sizes = [8, 8], strides = [1, 1]} : vector<64x8xf32> to vector<8x8xf32>
    %193 = arith.addf %191, %192 : vector<8x8xf32>
    %194 = vector.extract_strided_slice %105 {offsets = [32, 0], sizes = [8, 8], strides = [1, 1]} : vector<64x8xf32> to vector<8x8xf32>
    %195 = arith.addf %193, %194 : vector<8x8xf32>
    %196 = vector.broadcast %185 : vector<8x1xf32> to vector<8x8xf32>
    %197 = arith.addf %195, %196 : vector<8x8xf32>
    %198 = math.log %189 : vector<8x8xf32>
    %199 = arith.addf %197, %198 : vector<8x8xf32>
    %200 = vector.extract_strided_slice %105 {offsets = [40, 0], sizes = [8, 8], strides = [1, 1]} : vector<64x8xf32> to vector<8x8xf32>
    %201 = arith.subf %199, %200 : vector<8x8xf32>
    %cst_70 = arith.constant dense<0xFF800000> : vector<8xf32>
    %202 = vector.multi_reduction <maximumf>, %201, %cst_70 [1] : vector<8x8xf32> to vector<8xf32>
    %203 = vector.shape_cast %202 : vector<8xf32> to vector<8x1xf32>
    %204 = vector.broadcast %203 : vector<8x1xf32> to vector<8x8xf32>
    %205 = arith.subf %201, %204 : vector<8x8xf32>
    %206 = math.exp %205 : vector<8x8xf32>
    %cst_71 = arith.constant dense<0.000000e+00> : vector<8x8xf32>
    %207 = tpu.matmul %206, %98, %cst_71 {dimension_numbers = #tpu.dot_dimension_numbers<[1], [0], [0], [1], [0, 0, 1, 1], [], []>} : vector<8x8xf32>, vector<8x8xf32>, vector<8x8xf32> -> vector<8x8xf32>
    %c6 = arith.constant 6 : index
    %c0_72 = arith.constant 0 : index
    %c0_73 = arith.constant 0 : index
    %208 = vector.load %arg2[%c6, %c0_72, %c0_73] : memref<8x8x8xf32, #tpu.memory_space<vmem>>, vector<1x8x8xf32>
    %209 = vector.shape_cast %208 : vector<1x8x8xf32> to vector<8x8xf32>
    %210 = vector.extract_strided_slice %92 {offsets = [40, 0], sizes = [8, 8], strides = [1, 1]} : vector<64x8xf32> to vector<8x8xf32>
    %211 = arith.addf %209, %210 : vector<8x8xf32>
    %212 = vector.extract_strided_slice %105 {offsets = [40, 0], sizes = [8, 8], strides = [1, 1]} : vector<64x8xf32> to vector<8x8xf32>
    %213 = arith.addf %211, %212 : vector<8x8xf32>
    %214 = vector.broadcast %203 : vector<8x1xf32> to vector<8x8xf32>
    %215 = arith.addf %213, %214 : vector<8x8xf32>
    %216 = math.log %207 : vector<8x8xf32>
    %217 = arith.addf %215, %216 : vector<8x8xf32>
    %218 = vector.extract_strided_slice %105 {offsets = [48, 0], sizes = [8, 8], strides = [1, 1]} : vector<64x8xf32> to vector<8x8xf32>
    %219 = arith.subf %217, %218 : vector<8x8xf32>
    %cst_74 = arith.constant dense<0xFF800000> : vector<8xf32>
    %220 = vector.multi_reduction <maximumf>, %219, %cst_74 [1] : vector<8x8xf32> to vector<8xf32>
    %221 = vector.shape_cast %220 : vector<8xf32> to vector<8x1xf32>
    %222 = vector.broadcast %221 : vector<8x1xf32> to vector<8x8xf32>
    %223 = arith.subf %219, %222 : vector<8x8xf32>
    %224 = math.exp %223 : vector<8x8xf32>
    %cst_75 = arith.constant dense<0.000000e+00> : vector<8x8xf32>
    %225 = tpu.matmul %224, %98, %cst_75 {dimension_numbers = #tpu.dot_dimension_numbers<[1], [0], [0], [1], [0, 0, 1, 1], [], []>} : vector<8x8xf32>, vector<8x8xf32>, vector<8x8xf32> -> vector<8x8xf32>
    %c7 = arith.constant 7 : index
    %c0_76 = arith.constant 0 : index
    %c0_77 = arith.constant 0 : index
    %226 = vector.load %arg2[%c7, %c0_76, %c0_77] : memref<8x8x8xf32, #tpu.memory_space<vmem>>, vector<1x8x8xf32>
    %227 = vector.shape_cast %226 : vector<1x8x8xf32> to vector<8x8xf32>
    %228 = vector.extract_strided_slice %92 {offsets = [48, 0], sizes = [8, 8], strides = [1, 1]} : vector<64x8xf32> to vector<8x8xf32>
    %229 = arith.addf %227, %228 : vector<8x8xf32>
    %230 = vector.extract_strided_slice %105 {offsets = [48, 0], sizes = [8, 8], strides = [1, 1]} : vector<64x8xf32> to vector<8x8xf32>
    %231 = arith.addf %229, %230 : vector<8x8xf32>
    %232 = vector.broadcast %221 : vector<8x1xf32> to vector<8x8xf32>
    %233 = arith.addf %231, %232 : vector<8x8xf32>
    %234 = math.log %225 : vector<8x8xf32>
    %235 = arith.addf %233, %234 : vector<8x8xf32>
    %cst_78 = arith.constant dense<0xFF800000> : vector<8xf32>
    %236 = vector.multi_reduction <maximumf>, %235, %cst_78 [1] : vector<8x8xf32> to vector<8xf32>
    %237 = vector.shape_cast %236 : vector<8xf32> to vector<8x1xf32>
    %238 = vector.broadcast %237 : vector<8x1xf32> to vector<8x8xf32>
    %239 = arith.subf %235, %238 : vector<8x8xf32>
    %240 = math.exp %239 : vector<8x8xf32>
    %cst_79 = arith.constant dense<0.000000e+00> : vector<8xf32>
    %241 = vector.multi_reduction <add>, %240, %cst_79 [1] : vector<8x8xf32> to vector<8xf32>
    %242 = vector.shape_cast %241 : vector<8xf32> to vector<8x1xf32>
    %243 = math.log %242 : vector<8x1xf32>
    %244 = arith.addf %237, %243 : vector<8x1xf32>
    %245 = vector.broadcast %244 : vector<8x1xf32> to vector<8x8xf32>
    %246 = arith.subf %235, %245 : vector<8x8xf32>
    %247 = math.exp %246 : vector<8x8xf32>
    %c7_80 = arith.constant 7 : index
    %c0_81 = arith.constant 0 : index
    %c0_82 = arith.constant 0 : index
    %248 = vector.load %arg15[%c7_80, %c0_81, %c0_82] : memref<8x8x8xf32, #tpu.memory_space<vmem>>, vector<1x8x8xf32>
    %249 = vector.shape_cast %248 : vector<1x8x8xf32> to vector<8x8xf32>
    %250 = vector.shape_cast %247 : vector<8x8xf32> to vector<1x8x8xf32>
    tpu.vector_store %arg15[%c7_80, %c0_81, %c0_82], %250 {strides = array<i32>} : memref<8x8x8xf32, #tpu.memory_space<vmem>>, vector<1x8x8xf32>,
    %cst_83 = arith.constant 0.000000e+00 : f32
    %251 = vector.broadcast %cst_83 : f32 to vector<8x8xf32>
    %252 = vector.extract_strided_slice %92 {offsets = [48, 0], sizes = [8, 8], strides = [1, 1]} : vector<64x8xf32> to vector<8x8xf32>
    %253 = vector.extract_strided_slice %105 {offsets = [48, 0], sizes = [8, 8], strides = [1, 1]} : vector<64x8xf32> to vector<8x8xf32>
    %254 = arith.addf %252, %253 : vector<8x8xf32>
    %255 = arith.addf %254, %251 : vector<8x8xf32>
    %c7_84 = arith.constant 7 : index
    %c0_85 = arith.constant 0 : index
    %c0_86 = arith.constant 0 : index
    %256 = vector.load %arg2[%c7_84, %c0_85, %c0_86] : memref<8x8x8xf32, #tpu.memory_space<vmem>>, vector<1x8x8xf32>
    %257 = vector.shape_cast %256 : vector<1x8x8xf32> to vector<8x8xf32>
    %258 = arith.addf %255, %257 : vector<8x8xf32>
    %c48 = arith.constant 48 : index
    %c0_87 = arith.constant 0 : index
    %259 = vector.load %arg18[%c48, %c0_87] : memref<56x8xf32, #tpu.memory_space<vmem>>, vector<8x8xf32>
    tpu.vector_store %arg18[%c48, %c0_87], %258 {strides = array<i32>} : memref<56x8xf32, #tpu.memory_space<vmem>>, vector<8x8xf32>,
    %260 = vector.extract_strided_slice %105 {offsets = [48, 0], sizes = [8, 8], strides = [1, 1]} : vector<64x8xf32> to vector<8x8xf32>
    %261 = arith.subf %217, %260 : vector<8x8xf32>
    %262 = vector.broadcast %244 : vector<8x1xf32> to vector<8x8xf32>
    %263 = arith.subf %261, %262 : vector<8x8xf32>
    %c48_88 = arith.constant 48 : index
    %c0_89 = arith.constant 0 : index
    %264 = vector.load %arg17[%c48_88, %c0_89] : memref<56x8xf32, #tpu.memory_space<vmem>>, vector<8x8xf32>
    tpu.vector_store %arg17[%c48_88, %c0_89], %263 {strides = array<i32>} : memref<56x8xf32, #tpu.memory_space<vmem>>, vector<8x8xf32>,
    %cst_90 = arith.constant dense<0xFF800000> : vector<8xf32>
    %265 = vector.multi_reduction <maximumf>, %258, %cst_90 [1] : vector<8x8xf32> to vector<8xf32>
    %266 = vector.shape_cast %265 : vector<8xf32> to vector<8x1xf32>
    %267 = vector.broadcast %266 : vector<8x1xf32> to vector<8x8xf32>
    %268 = arith.subf %258, %267 : vector<8x8xf32>
    %269 = math.exp %268 : vector<8x8xf32>
    %cst_91 = arith.constant dense<0.000000e+00> : vector<8x8xf32>
    %270 = tpu.matmul %269, %101, %cst_91 {dimension_numbers = #tpu.dot_dimension_numbers<[1], [0], [0], [1], [0, 0, 1, 1], [], []>} : vector<8x8xf32>, vector<8x8xf32>, vector<8x8xf32> -> vector<8x8xf32>
    %271 = vector.extract_strided_slice %105 {offsets = [48, 0], sizes = [8, 8], strides = [1, 1]} : vector<64x8xf32> to vector<8x8xf32>
    %cst_92 = arith.constant 0.000000e+00 : f32
    %272 = vector.broadcast %cst_92 : f32 to vector<8x8xf32>
    %273 = arith.subf %272, %271 : vector<8x8xf32>
    %274 = vector.broadcast %266 : vector<8x1xf32> to vector<8x8xf32>
    %275 = arith.addf %273, %274 : vector<8x8xf32>
    %276 = math.log %270 : vector<8x8xf32>
    %277 = arith.addf %275, %276 : vector<8x8xf32>
    %278 = arith.addf %217, %277 : vector<8x8xf32>
    %279 = vector.broadcast %244 : vector<8x1xf32> to vector<8x8xf32>
    %280 = arith.subf %278, %279 : vector<8x8xf32>
    %281 = math.exp %280 : vector<8x8xf32>
    %c6_93 = arith.constant 6 : index
    %c0_94 = arith.constant 0 : index
    %c0_95 = arith.constant 0 : index
    %282 = vector.load %arg15[%c6_93, %c0_94, %c0_95] : memref<8x8x8xf32, #tpu.memory_space<vmem>>, vector<1x8x8xf32>
    %283 = vector.shape_cast %282 : vector<1x8x8xf32> to vector<8x8xf32>
    %284 = vector.shape_cast %281 : vector<8x8xf32> to vector<1x8x8xf32>
    tpu.vector_store %arg15[%c6_93, %c0_94, %c0_95], %284 {strides = array<i32>} : memref<8x8x8xf32, #tpu.memory_space<vmem>>, vector<1x8x8xf32>,
    %285 = vector.extract_strided_slice %92 {offsets = [40, 0], sizes = [8, 8], strides = [1, 1]} : vector<64x8xf32> to vector<8x8xf32>
    %286 = vector.extract_strided_slice %105 {offsets = [40, 0], sizes = [8, 8], strides = [1, 1]} : vector<64x8xf32> to vector<8x8xf32>
    %287 = arith.addf %285, %286 : vector<8x8xf32>
    %288 = arith.addf %287, %277 : vector<8x8xf32>
    %c6_96 = arith.constant 6 : index
    %c0_97 = arith.constant 0 : index
    %c0_98 = arith.constant 0 : index
    %289 = vector.load %arg2[%c6_96, %c0_97, %c0_98] : memref<8x8x8xf32, #tpu.memory_space<vmem>>, vector<1x8x8xf32>
    %290 = vector.shape_cast %289 : vector<1x8x8xf32> to vector<8x8xf32>
    %291 = arith.addf %288, %290 : vector<8x8xf32>
    %c40 = arith.constant 40 : index
    %c0_99 = arith.constant 0 : index
    %292 = vector.load %arg18[%c40, %c0_99] : memref<56x8xf32, #tpu.memory_space<vmem>>, vector<8x8xf32>
    tpu.vector_store %arg18[%c40, %c0_99], %291 {strides = array<i32>} : memref<56x8xf32, #tpu.memory_space<vmem>>, vector<8x8xf32>,
    %293 = vector.extract_strided_slice %105 {offsets = [40, 0], sizes = [8, 8], strides = [1, 1]} : vector<64x8xf32> to vector<8x8xf32>
    %294 = arith.subf %199, %293 : vector<8x8xf32>
    %295 = vector.broadcast %244 : vector<8x1xf32> to vector<8x8xf32>
    %296 = arith.subf %294, %295 : vector<8x8xf32>
    %c40_100 = arith.constant 40 : index
    %c0_101 = arith.constant 0 : index
    %297 = vector.load %arg17[%c40_100, %c0_101] : memref<56x8xf32, #tpu.memory_space<vmem>>, vector<8x8xf32>
    tpu.vector_store %arg17[%c40_100, %c0_101], %296 {strides = array<i32>} : memref<56x8xf32, #tpu.memory_space<vmem>>, vector<8x8xf32>,
    %cst_102 = arith.constant dense<0xFF800000> : vector<8xf32>
    %298 = vector.multi_reduction <maximumf>, %291, %cst_102 [1] : vector<8x8xf32> to vector<8xf32>
    %299 = vector.shape_cast %298 : vector<8xf32> to vector<8x1xf32>
    %300 = vector.broadcast %299 : vector<8x1xf32> to vector<8x8xf32>
    %301 = arith.subf %291, %300 : vector<8x8xf32>
    %302 = math.exp %301 : vector<8x8xf32>
    %cst_103 = arith.constant dense<0.000000e+00> : vector<8x8xf32>
    %303 = tpu.matmul %302, %101, %cst_103 {dimension_numbers = #tpu.dot_dimension_numbers<[1], [0], [0], [1], [0, 0, 1, 1], [], []>} : vector<8x8xf32>, vector<8x8xf32>, vector<8x8xf32> -> vector<8x8xf32>
    %304 = vector.extract_strided_slice %105 {offsets = [40, 0], sizes = [8, 8], strides = [1, 1]} : vector<64x8xf32> to vector<8x8xf32>
    %cst_104 = arith.constant 0.000000e+00 : f32
    %305 = vector.broadcast %cst_104 : f32 to vector<8x8xf32>
    %306 = arith.subf %305, %304 : vector<8x8xf32>
    %307 = vector.broadcast %299 : vector<8x1xf32> to vector<8x8xf32>
    %308 = arith.addf %306, %307 : vector<8x8xf32>
    %309 = math.log %303 : vector<8x8xf32>
    %310 = arith.addf %308, %309 : vector<8x8xf32>
    %311 = arith.addf %199, %310 : vector<8x8xf32>
    %312 = vector.broadcast %244 : vector<8x1xf32> to vector<8x8xf32>
    %313 = arith.subf %311, %312 : vector<8x8xf32>
    %314 = math.exp %313 : vector<8x8xf32>
    %c5_105 = arith.constant 5 : index
    %c0_106 = arith.constant 0 : index
    %c0_107 = arith.constant 0 : index
    %315 = vector.load %arg15[%c5_105, %c0_106, %c0_107] : memref<8x8x8xf32, #tpu.memory_space<vmem>>, vector<1x8x8xf32>
    %316 = vector.shape_cast %315 : vector<1x8x8xf32> to vector<8x8xf32>
    %317 = vector.shape_cast %314 : vector<8x8xf32> to vector<1x8x8xf32>
    tpu.vector_store %arg15[%c5_105, %c0_106, %c0_107], %317 {strides = array<i32>} : memref<8x8x8xf32, #tpu.memory_space<vmem>>, vector<1x8x8xf32>,
    %318 = vector.extract_strided_slice %92 {offsets = [32, 0], sizes = [8, 8], strides = [1, 1]} : vector<64x8xf32> to vector<8x8xf32>
    %319 = vector.extract_strided_slice %105 {offsets = [32, 0], sizes = [8, 8], strides = [1, 1]} : vector<64x8xf32> to vector<8x8xf32>
    %320 = arith.addf %318, %319 : vector<8x8xf32>
    %321 = arith.addf %320, %310 : vector<8x8xf32>
    %c5_108 = arith.constant 5 : index
    %c0_109 = arith.constant 0 : index
    %c0_110 = arith.constant 0 : index
    %322 = vector.load %arg2[%c5_108, %c0_109, %c0_110] : memref<8x8x8xf32, #tpu.memory_space<vmem>>, vector<1x8x8xf32>
    %323 = vector.shape_cast %322 : vector<1x8x8xf32> to vector<8x8xf32>
    %324 = arith.addf %321, %323 : vector<8x8xf32>
    %c32 = arith.constant 32 : index
    %c0_111 = arith.constant 0 : index
    %325 = vector.load %arg18[%c32, %c0_111] : memref<56x8xf32, #tpu.memory_space<vmem>>, vector<8x8xf32>
    tpu.vector_store %arg18[%c32, %c0_111], %324 {strides = array<i32>} : memref<56x8xf32, #tpu.memory_space<vmem>>, vector<8x8xf32>,
    %326 = vector.extract_strided_slice %105 {offsets = [32, 0], sizes = [8, 8], strides = [1, 1]} : vector<64x8xf32> to vector<8x8xf32>
    %327 = arith.subf %181, %326 : vector<8x8xf32>
    %328 = vector.broadcast %244 : vector<8x1xf32> to vector<8x8xf32>
    %329 = arith.subf %327, %328 : vector<8x8xf32>
    %c32_112 = arith.constant 32 : index
    %c0_113 = arith.constant 0 : index
    %330 = vector.load %arg17[%c32_112, %c0_113] : memref<56x8xf32, #tpu.memory_space<vmem>>, vector<8x8xf32>
    tpu.vector_store %arg17[%c32_112, %c0_113], %329 {strides = array<i32>} : memref<56x8xf32, #tpu.memory_space<vmem>>, vector<8x8xf32>,
    %cst_114 = arith.constant dense<0xFF800000> : vector<8xf32>
    %331 = vector.multi_reduction <maximumf>, %324, %cst_114 [1] : vector<8x8xf32> to vector<8xf32>
    %332 = vector.shape_cast %331 : vector<8xf32> to vector<8x1xf32>
    %333 = vector.broadcast %332 : vector<8x1xf32> to vector<8x8xf32>
    %334 = arith.subf %324, %333 : vector<8x8xf32>
    %335 = math.exp %334 : vector<8x8xf32>
    %cst_115 = arith.constant dense<0.000000e+00> : vector<8x8xf32>
    %336 = tpu.matmul %335, %101, %cst_115 {dimension_numbers = #tpu.dot_dimension_numbers<[1], [0], [0], [1], [0, 0, 1, 1], [], []>} : vector<8x8xf32>, vector<8x8xf32>, vector<8x8xf32> -> vector<8x8xf32>
    %337 = vector.extract_strided_slice %105 {offsets = [32, 0], sizes = [8, 8], strides = [1, 1]} : vector<64x8xf32> to vector<8x8xf32>
    %cst_116 = arith.constant 0.000000e+00 : f32
    %338 = vector.broadcast %cst_116 : f32 to vector<8x8xf32>
    %339 = arith.subf %338, %337 : vector<8x8xf32>
    %340 = vector.broadcast %332 : vector<8x1xf32> to vector<8x8xf32>
    %341 = arith.addf %339, %340 : vector<8x8xf32>
    %342 = math.log %336 : vector<8x8xf32>
    %343 = arith.addf %341, %342 : vector<8x8xf32>
    %344 = arith.addf %181, %343 : vector<8x8xf32>
    %345 = vector.broadcast %244 : vector<8x1xf32> to vector<8x8xf32>
    %346 = arith.subf %344, %345 : vector<8x8xf32>
    %347 = math.exp %346 : vector<8x8xf32>
    %c4_117 = arith.constant 4 : index
    %c0_118 = arith.constant 0 : index
    %c0_119 = arith.constant 0 : index
    %348 = vector.load %arg15[%c4_117, %c0_118, %c0_119] : memref<8x8x8xf32, #tpu.memory_space<vmem>>, vector<1x8x8xf32>
    %349 = vector.shape_cast %348 : vector<1x8x8xf32> to vector<8x8xf32>
    %350 = vector.shape_cast %347 : vector<8x8xf32> to vector<1x8x8xf32>
    tpu.vector_store %arg15[%c4_117, %c0_118, %c0_119], %350 {strides = array<i32>} : memref<8x8x8xf32, #tpu.memory_space<vmem>>, vector<1x8x8xf32>,
    %351 = vector.extract_strided_slice %92 {offsets = [24, 0], sizes = [8, 8], strides = [1, 1]} : vector<64x8xf32> to vector<8x8xf32>
    %352 = vector.extract_strided_slice %105 {offsets = [24, 0], sizes = [8, 8], strides = [1, 1]} : vector<64x8xf32> to vector<8x8xf32>
    %353 = arith.addf %351, %352 : vector<8x8xf32>
    %354 = arith.addf %353, %343 : vector<8x8xf32>
    %c4_120 = arith.constant 4 : index
    %c0_121 = arith.constant 0 : index
    %c0_122 = arith.constant 0 : index
    %355 = vector.load %arg2[%c4_120, %c0_121, %c0_122] : memref<8x8x8xf32, #tpu.memory_space<vmem>>, vector<1x8x8xf32>
    %356 = vector.shape_cast %355 : vector<1x8x8xf32> to vector<8x8xf32>
    %357 = arith.addf %354, %356 : vector<8x8xf32>
    %c24 = arith.constant 24 : index
    %c0_123 = arith.constant 0 : index
    %358 = vector.load %arg18[%c24, %c0_123] : memref<56x8xf32, #tpu.memory_space<vmem>>, vector<8x8xf32>
    tpu.vector_store %arg18[%c24, %c0_123], %357 {strides = array<i32>} : memref<56x8xf32, #tpu.memory_space<vmem>>, vector<8x8xf32>,
    %359 = vector.extract_strided_slice %105 {offsets = [24, 0], sizes = [8, 8], strides = [1, 1]} : vector<64x8xf32> to vector<8x8xf32>
    %360 = arith.subf %163, %359 : vector<8x8xf32>
    %361 = vector.broadcast %244 : vector<8x1xf32> to vector<8x8xf32>
    %362 = arith.subf %360, %361 : vector<8x8xf32>
    %c24_124 = arith.constant 24 : index
    %c0_125 = arith.constant 0 : index
    %363 = vector.load %arg17[%c24_124, %c0_125] : memref<56x8xf32, #tpu.memory_space<vmem>>, vector<8x8xf32>
    tpu.vector_store %arg17[%c24_124, %c0_125], %362 {strides = array<i32>} : memref<56x8xf32, #tpu.memory_space<vmem>>, vector<8x8xf32>,
    %cst_126 = arith.constant dense<0xFF800000> : vector<8xf32>
    %364 = vector.multi_reduction <maximumf>, %357, %cst_126 [1] : vector<8x8xf32> to vector<8xf32>
    %365 = vector.shape_cast %364 : vector<8xf32> to vector<8x1xf32>
    %366 = vector.broadcast %365 : vector<8x1xf32> to vector<8x8xf32>
    %367 = arith.subf %357, %366 : vector<8x8xf32>
    %368 = math.exp %367 : vector<8x8xf32>
    %cst_127 = arith.constant dense<0.000000e+00> : vector<8x8xf32>
    %369 = tpu.matmul %368, %101, %cst_127 {dimension_numbers = #tpu.dot_dimension_numbers<[1], [0], [0], [1], [0, 0, 1, 1], [], []>} : vector<8x8xf32>, vector<8x8xf32>, vector<8x8xf32> -> vector<8x8xf32>
    %370 = vector.extract_strided_slice %105 {offsets = [24, 0], sizes = [8, 8], strides = [1, 1]} : vector<64x8xf32> to vector<8x8xf32>
    %cst_128 = arith.constant 0.000000e+00 : f32
    %371 = vector.broadcast %cst_128 : f32 to vector<8x8xf32>
    %372 = arith.subf %371, %370 : vector<8x8xf32>
    %373 = vector.broadcast %365 : vector<8x1xf32> to vector<8x8xf32>
    %374 = arith.addf %372, %373 : vector<8x8xf32>
    %375 = math.log %369 : vector<8x8xf32>
    %376 = arith.addf %374, %375 : vector<8x8xf32>
    %377 = arith.addf %163, %376 : vector<8x8xf32>
    %378 = vector.broadcast %244 : vector<8x1xf32> to vector<8x8xf32>
    %379 = arith.subf %377, %378 : vector<8x8xf32>
    %380 = math.exp %379 : vector<8x8xf32>
    %c3_129 = arith.constant 3 : index
    %c0_130 = arith.constant 0 : index
    %c0_131 = arith.constant 0 : index
    %381 = vector.load %arg15[%c3_129, %c0_130, %c0_131] : memref<8x8x8xf32, #tpu.memory_space<vmem>>, vector<1x8x8xf32>
    %382 = vector.shape_cast %381 : vector<1x8x8xf32> to vector<8x8xf32>
    %383 = vector.shape_cast %380 : vector<8x8xf32> to vector<1x8x8xf32>
    tpu.vector_store %arg15[%c3_129, %c0_130, %c0_131], %383 {strides = array<i32>} : memref<8x8x8xf32, #tpu.memory_space<vmem>>, vector<1x8x8xf32>,
    %384 = vector.extract_strided_slice %92 {offsets = [16, 0], sizes = [8, 8], strides = [1, 1]} : vector<64x8xf32> to vector<8x8xf32>
    %385 = vector.extract_strided_slice %105 {offsets = [16, 0], sizes = [8, 8], strides = [1, 1]} : vector<64x8xf32> to vector<8x8xf32>
    %386 = arith.addf %384, %385 : vector<8x8xf32>
    %387 = arith.addf %386, %376 : vector<8x8xf32>
    %c3_132 = arith.constant 3 : index
    %c0_133 = arith.constant 0 : index
    %c0_134 = arith.constant 0 : index
    %388 = vector.load %arg2[%c3_132, %c0_133, %c0_134] : memref<8x8x8xf32, #tpu.memory_space<vmem>>, vector<1x8x8xf32>
    %389 = vector.shape_cast %388 : vector<1x8x8xf32> to vector<8x8xf32>
    %390 = arith.addf %387, %389 : vector<8x8xf32>
    %c16 = arith.constant 16 : index
    %c0_135 = arith.constant 0 : index
    %391 = vector.load %arg18[%c16, %c0_135] : memref<56x8xf32, #tpu.memory_space<vmem>>, vector<8x8xf32>
    tpu.vector_store %arg18[%c16, %c0_135], %390 {strides = array<i32>} : memref<56x8xf32, #tpu.memory_space<vmem>>, vector<8x8xf32>,
    %392 = vector.extract_strided_slice %105 {offsets = [16, 0], sizes = [8, 8], strides = [1, 1]} : vector<64x8xf32> to vector<8x8xf32>
    %393 = arith.subf %145, %392 : vector<8x8xf32>
    %394 = vector.broadcast %244 : vector<8x1xf32> to vector<8x8xf32>
    %395 = arith.subf %393, %394 : vector<8x8xf32>
    %c16_136 = arith.constant 16 : index
    %c0_137 = arith.constant 0 : index
    %396 = vector.load %arg17[%c16_136, %c0_137] : memref<56x8xf32, #tpu.memory_space<vmem>>, vector<8x8xf32>
    tpu.vector_store %arg17[%c16_136, %c0_137], %395 {strides = array<i32>} : memref<56x8xf32, #tpu.memory_space<vmem>>, vector<8x8xf32>,
    %cst_138 = arith.constant dense<0xFF800000> : vector<8xf32>
    %397 = vector.multi_reduction <maximumf>, %390, %cst_138 [1] : vector<8x8xf32> to vector<8xf32>
    %398 = vector.shape_cast %397 : vector<8xf32> to vector<8x1xf32>
    %399 = vector.broadcast %398 : vector<8x1xf32> to vector<8x8xf32>
    %400 = arith.subf %390, %399 : vector<8x8xf32>
    %401 = math.exp %400 : vector<8x8xf32>
    %cst_139 = arith.constant dense<0.000000e+00> : vector<8x8xf32>
    %402 = tpu.matmul %401, %101, %cst_139 {dimension_numbers = #tpu.dot_dimension_numbers<[1], [0], [0], [1], [0, 0, 1, 1], [], []>} : vector<8x8xf32>, vector<8x8xf32>, vector<8x8xf32> -> vector<8x8xf32>
    %403 = vector.extract_strided_slice %105 {offsets = [16, 0], sizes = [8, 8], strides = [1, 1]} : vector<64x8xf32> to vector<8x8xf32>
    %cst_140 = arith.constant 0.000000e+00 : f32
    %404 = vector.broadcast %cst_140 : f32 to vector<8x8xf32>
    %405 = arith.subf %404, %403 : vector<8x8xf32>
    %406 = vector.broadcast %398 : vector<8x1xf32> to vector<8x8xf32>
    %407 = arith.addf %405, %406 : vector<8x8xf32>
    %408 = math.log %402 : vector<8x8xf32>
    %409 = arith.addf %407, %408 : vector<8x8xf32>
    %410 = arith.addf %145, %409 : vector<8x8xf32>
    %411 = vector.broadcast %244 : vector<8x1xf32> to vector<8x8xf32>
    %412 = arith.subf %410, %411 : vector<8x8xf32>
    %413 = math.exp %412 : vector<8x8xf32>
    %c2_141 = arith.constant 2 : index
    %c0_142 = arith.constant 0 : index
    %c0_143 = arith.constant 0 : index
    %414 = vector.load %arg15[%c2_141, %c0_142, %c0_143] : memref<8x8x8xf32, #tpu.memory_space<vmem>>, vector<1x8x8xf32>
    %415 = vector.shape_cast %414 : vector<1x8x8xf32> to vector<8x8xf32>
    %416 = vector.shape_cast %413 : vector<8x8xf32> to vector<1x8x8xf32>
    tpu.vector_store %arg15[%c2_141, %c0_142, %c0_143], %416 {strides = array<i32>} : memref<8x8x8xf32, #tpu.memory_space<vmem>>, vector<1x8x8xf32>,
    %417 = vector.extract_strided_slice %92 {offsets = [8, 0], sizes = [8, 8], strides = [1, 1]} : vector<64x8xf32> to vector<8x8xf32>
    %418 = vector.extract_strided_slice %105 {offsets = [8, 0], sizes = [8, 8], strides = [1, 1]} : vector<64x8xf32> to vector<8x8xf32>
    %419 = arith.addf %417, %418 : vector<8x8xf32>
    %420 = arith.addf %419, %409 : vector<8x8xf32>
    %c2_144 = arith.constant 2 : index
    %c0_145 = arith.constant 0 : index
    %c0_146 = arith.constant 0 : index
    %421 = vector.load %arg2[%c2_144, %c0_145, %c0_146] : memref<8x8x8xf32, #tpu.memory_space<vmem>>, vector<1x8x8xf32>
    %422 = vector.shape_cast %421 : vector<1x8x8xf32> to vector<8x8xf32>
    %423 = arith.addf %420, %422 : vector<8x8xf32>
    %c8 = arith.constant 8 : index
    %c0_147 = arith.constant 0 : index
    %424 = vector.load %arg18[%c8, %c0_147] : memref<56x8xf32, #tpu.memory_space<vmem>>, vector<8x8xf32>
    tpu.vector_store %arg18[%c8, %c0_147], %423 {strides = array<i32>} : memref<56x8xf32, #tpu.memory_space<vmem>>, vector<8x8xf32>,
    %425 = vector.extract_strided_slice %105 {offsets = [8, 0], sizes = [8, 8], strides = [1, 1]} : vector<64x8xf32> to vector<8x8xf32>
    %426 = arith.subf %127, %425 : vector<8x8xf32>
    %427 = vector.broadcast %244 : vector<8x1xf32> to vector<8x8xf32>
    %428 = arith.subf %426, %427 : vector<8x8xf32>
    %c8_148 = arith.constant 8 : index
    %c0_149 = arith.constant 0 : index
    %429 = vector.load %arg17[%c8_148, %c0_149] : memref<56x8xf32, #tpu.memory_space<vmem>>, vector<8x8xf32>
    tpu.vector_store %arg17[%c8_148, %c0_149], %428 {strides = array<i32>} : memref<56x8xf32, #tpu.memory_space<vmem>>, vector<8x8xf32>,
    %cst_150 = arith.constant dense<0xFF800000> : vector<8xf32>
    %430 = vector.multi_reduction <maximumf>, %423, %cst_150 [1] : vector<8x8xf32> to vector<8xf32>
    %431 = vector.shape_cast %430 : vector<8xf32> to vector<8x1xf32>
    %432 = vector.broadcast %431 : vector<8x1xf32> to vector<8x8xf32>
    %433 = arith.subf %423, %432 : vector<8x8xf32>
    %434 = math.exp %433 : vector<8x8xf32>
    %cst_151 = arith.constant dense<0.000000e+00> : vector<8x8xf32>
    %435 = tpu.matmul %434, %101, %cst_151 {dimension_numbers = #tpu.dot_dimension_numbers<[1], [0], [0], [1], [0, 0, 1, 1], [], []>} : vector<8x8xf32>, vector<8x8xf32>, vector<8x8xf32> -> vector<8x8xf32>
    %436 = vector.extract_strided_slice %105 {offsets = [8, 0], sizes = [8, 8], strides = [1, 1]} : vector<64x8xf32> to vector<8x8xf32>
    %cst_152 = arith.constant 0.000000e+00 : f32
    %437 = vector.broadcast %cst_152 : f32 to vector<8x8xf32>
    %438 = arith.subf %437, %436 : vector<8x8xf32>
    %439 = vector.broadcast %431 : vector<8x1xf32> to vector<8x8xf32>
    %440 = arith.addf %438, %439 : vector<8x8xf32>
    %441 = math.log %435 : vector<8x8xf32>
    %442 = arith.addf %440, %441 : vector<8x8xf32>
    %443 = arith.addf %127, %442 : vector<8x8xf32>
    %444 = vector.broadcast %244 : vector<8x1xf32> to vector<8x8xf32>
    %445 = arith.subf %443, %444 : vector<8x8xf32>
    %446 = math.exp %445 : vector<8x8xf32>
    %c1_153 = arith.constant 1 : index
    %c0_154 = arith.constant 0 : index
    %c0_155 = arith.constant 0 : index
    %447 = vector.load %arg15[%c1_153, %c0_154, %c0_155] : memref<8x8x8xf32, #tpu.memory_space<vmem>>, vector<1x8x8xf32>
    %448 = vector.shape_cast %447 : vector<1x8x8xf32> to vector<8x8xf32>
    %449 = vector.shape_cast %446 : vector<8x8xf32> to vector<1x8x8xf32>
    tpu.vector_store %arg15[%c1_153, %c0_154, %c0_155], %449 {strides = array<i32>} : memref<8x8x8xf32, #tpu.memory_space<vmem>>, vector<1x8x8xf32>,
    %450 = vector.extract_strided_slice %92 {offsets = [0, 0], sizes = [8, 8], strides = [1, 1]} : vector<64x8xf32> to vector<8x8xf32>
    %451 = vector.extract_strided_slice %105 {offsets = [0, 0], sizes = [8, 8], strides = [1, 1]} : vector<64x8xf32> to vector<8x8xf32>
    %452 = arith.addf %450, %451 : vector<8x8xf32>
    %453 = arith.addf %452, %442 : vector<8x8xf32>
    %c1_156 = arith.constant 1 : index
    %c0_157 = arith.constant 0 : index
    %c0_158 = arith.constant 0 : index
    %454 = vector.load %arg2[%c1_156, %c0_157, %c0_158] : memref<8x8x8xf32, #tpu.memory_space<vmem>>, vector<1x8x8xf32>
    %455 = vector.shape_cast %454 : vector<1x8x8xf32> to vector<8x8xf32>
    %456 = arith.addf %453, %455 : vector<8x8xf32>
    %c0_159 = arith.constant 0 : index
    %c0_160 = arith.constant 0 : index
    %457 = vector.load %arg18[%c0_159, %c0_160] : memref<56x8xf32, #tpu.memory_space<vmem>>, vector<8x8xf32>
    tpu.vector_store %arg18[%c0_159, %c0_160], %456 {strides = array<i32>} : memref<56x8xf32, #tpu.memory_space<vmem>>, vector<8x8xf32>,
    %458 = vector.extract_strided_slice %105 {offsets = [0, 0], sizes = [8, 8], strides = [1, 1]} : vector<64x8xf32> to vector<8x8xf32>
    %459 = arith.subf %109, %458 : vector<8x8xf32>
    %460 = vector.broadcast %244 : vector<8x1xf32> to vector<8x8xf32>
    %461 = arith.subf %459, %460 : vector<8x8xf32>
    %c0_161 = arith.constant 0 : index
    %c0_162 = arith.constant 0 : index
    %462 = vector.load %arg17[%c0_161, %c0_162] : memref<56x8xf32, #tpu.memory_space<vmem>>, vector<8x8xf32>
    tpu.vector_store %arg17[%c0_161, %c0_162], %461 {strides = array<i32>} : memref<56x8xf32, #tpu.memory_space<vmem>>, vector<8x8xf32>,
    %cst_163 = arith.constant dense<0xFF800000> : vector<8xf32>
    %463 = vector.multi_reduction <maximumf>, %456, %cst_163 [1] : vector<8x8xf32> to vector<8xf32>
    %464 = vector.shape_cast %463 : vector<8xf32> to vector<8x1xf32>
    %465 = vector.broadcast %464 : vector<8x1xf32> to vector<8x8xf32>
    %466 = arith.subf %456, %465 : vector<8x8xf32>
    %467 = math.exp %466 : vector<8x8xf32>
    %cst_164 = arith.constant dense<0.000000e+00> : vector<8x8xf32>
    %468 = tpu.matmul %467, %101, %cst_164 {dimension_numbers = #tpu.dot_dimension_numbers<[1], [0], [0], [1], [0, 0, 1, 1], [], []>} : vector<8x8xf32>, vector<8x8xf32>, vector<8x8xf32> -> vector<8x8xf32>
    %469 = vector.extract_strided_slice %105 {offsets = [0, 0], sizes = [8, 8], strides = [1, 1]} : vector<64x8xf32> to vector<8x8xf32>
    %cst_165 = arith.constant 0.000000e+00 : f32
    %470 = vector.broadcast %cst_165 : f32 to vector<8x8xf32>
    %471 = arith.subf %470, %469 : vector<8x8xf32>
    %472 = vector.broadcast %464 : vector<8x1xf32> to vector<8x8xf32>
    %473 = arith.addf %471, %472 : vector<8x8xf32>
    %474 = math.log %468 : vector<8x8xf32>
    %475 = arith.addf %473, %474 : vector<8x8xf32>
    %476 = arith.addf %109, %475 : vector<8x8xf32>
    %477 = vector.broadcast %244 : vector<8x1xf32> to vector<8x8xf32>
    %478 = arith.subf %476, %477 : vector<8x8xf32>
    %479 = math.exp %478 : vector<8x8xf32>
    %c0_166 = arith.constant 0 : index
    %c0_167 = arith.constant 0 : index
    %c0_168 = arith.constant 0 : index
    %480 = vector.load %arg15[%c0_166, %c0_167, %c0_168] : memref<8x8x8xf32, #tpu.memory_space<vmem>>, vector<1x8x8xf32>
    %481 = vector.shape_cast %480 : vector<1x8x8xf32> to vector<8x8xf32>
    %482 = vector.shape_cast %479 : vector<8x8xf32> to vector<1x8x8xf32>
    tpu.vector_store %arg15[%c0_166, %c0_167, %c0_168], %482 {strides = array<i32>} : memref<8x8x8xf32, #tpu.memory_space<vmem>>, vector<1x8x8xf32>,
    %c0_169 = arith.constant 0 : index
    %c0_170 = arith.constant 0 : index
    %483 = vector.load %arg17[%c0_169, %c0_170] : memref<56x8xf32, #tpu.memory_space<vmem>>, vector<56x8xf32>
    %c0_171 = arith.constant 0 : index
    %c0_172 = arith.constant 0 : index
    %484 = vector.load %arg18[%c0_171, %c0_172] : memref<56x8xf32, #tpu.memory_space<vmem>>, vector<56x8xf32>
    %cst_173 = arith.constant dense<0xFF800000> : vector<56xf32>
    %485 = vector.multi_reduction <maximumf>, %483, %cst_173 [1] : vector<56x8xf32> to vector<56xf32>
    %486 = vector.shape_cast %485 : vector<56xf32> to vector<56x1xf32>
    %cst_174 = arith.constant dense<0xFF800000> : vector<56xf32>
    %487 = vector.multi_reduction <maximumf>, %484, %cst_174 [1] : vector<56x8xf32> to vector<56xf32>
    %488 = vector.shape_cast %487 : vector<56xf32> to vector<56x1xf32>
    %489 = vector.broadcast %486 : vector<56x1xf32> to vector<56x8xf32>
    %490 = arith.subf %483, %489 : vector<56x8xf32>
    %491 = math.exp %490 : vector<56x8xf32>
    %cst_175 = arith.constant dense<0.000000e+00> : vector<56x8xf32>
    %492 = tpu.matmul %491, %98, %cst_175 {dimension_numbers = #tpu.dot_dimension_numbers<[1], [0], [0], [1], [0, 0, 1, 1], [], []>} : vector<56x8xf32>, vector<8x8xf32>, vector<56x8xf32> -> vector<56x8xf32>
    %493 = vector.broadcast %488 : vector<56x1xf32> to vector<56x8xf32>
    %494 = arith.subf %484, %493 : vector<56x8xf32>
    %495 = math.exp %494 : vector<56x8xf32>
    %cst_176 = arith.constant dense<0.000000e+00> : vector<56x8xf32>
    %496 = tpu.matmul %495, %104, %cst_176 {dimension_numbers = #tpu.dot_dimension_numbers<[1], [0], [0], [1], [0, 0, 1, 1], [], []>} : vector<56x8xf32>, vector<8x8xf32>, vector<56x8xf32> -> vector<56x8xf32>
    %497 = arith.mulf %492, %496 : vector<56x8xf32>
    %498 = arith.addf %486, %488 : vector<56x1xf32>
    %499 = math.exp %498 : vector<56x1xf32>
    %500 = vector.broadcast %499 : vector<56x1xf32> to vector<56x8xf32>
    %501 = arith.mulf %497, %500 : vector<56x8xf32>
    %502 = vector.shape_cast %501 : vector<56x8xf32> to vector<7x8x8xf32>
    %c0_177 = arith.constant 0 : index
    %c0_178 = arith.constant 0 : index
    %c0_179 = arith.constant 0 : index
    %503 = vector.load %arg16[%c0_177, %c0_178, %c0_179] : memref<7x8x8xf32, #tpu.memory_space<vmem>>, vector<7x8x8xf32>
    tpu.vector_store %arg16[%c0_177, %c0_178, %c0_179], %502 {strides = array<i32>} : memref<7x8x8xf32, #tpu.memory_space<vmem>>, vector<7x8x8xf32>,
    return
  }
  func.func @transform_0(%arg0: i32) -> (i32, i32, i32, i32) {
    %c0_i32 = arith.constant 0 : i32
    %c0_i32_0 = arith.constant 0 : i32
    %c0_i32_1 = arith.constant 0 : i32
    %c0_i32_2 = arith.constant 0 : i32
    return %c0_i32, %arg0, %c0_i32_0, %c0_i32_1 : i32, i32, i32, i32
  }
  func.func @transform_1(%arg0: i32) -> (i32, i32, i32) {
    %c0_i32 = arith.constant 0 : i32
    %c0_i32_0 = arith.constant 0 : i32
    %c0_i32_1 = arith.constant 0 : i32
    return %c0_i32, %arg0, %c0_i32_0 : i32, i32, i32
  }
  func.func @transform_2(%arg0: i32) -> (i32, i32) {
    %c0_i32 = arith.constant 0 : i32
    %c0_i32_0 = arith.constant 0 : i32
    %c0_i32_1 = arith.constant 0 : i32
    return %c0_i32, %c0_i32_0 : i32, i32
  }
  func.func @transform_3(%arg0: i32) -> (i32, i32) {
    %c0_i32 = arith.constant 0 : i32
    %c0_i32_0 = arith.constant 0 : i32
    %c0_i32_1 = arith.constant 0 : i32
    return %c0_i32, %c0_i32_0 : i32, i32
  }
  func.func @transform_4(%arg0: i32) -> (i32, i32) {
    %c0_i32 = arith.constant 0 : i32
    %c0_i32_0 = arith.constant 0 : i32
    %c0_i32_1 = arith.constant 0 : i32
    return %c0_i32, %c0_i32_0 : i32, i32
  }
  func.func @transform_5(%arg0: i32) -> (i32, i32) {
    %c0_i32 = arith.constant 0 : i32
    %c0_i32_0 = arith.constant 0 : i32
    %c0_i32_1 = arith.constant 0 : i32
    return %c0_i32, %c0_i32_0 : i32, i32
  }
  func.func @transform_6(%arg0: i32) -> (i32, i32) {
    %c0_i32 = arith.constant 0 : i32
    %c0_i32_0 = arith.constant 0 : i32
    %c0_i32_1 = arith.constant 0 : i32
    return %c0_i32, %c0_i32_0 : i32, i32
  }
  func.func @transform_7(%arg0: i32) -> (i32, i32) {
    %c0_i32 = arith.constant 0 : i32
    %c0_i32_0 = arith.constant 0 : i32
    %c0_i32_1 = arith.constant 0 : i32
    return %c0_i32, %c0_i32_0 : i32, i32
  }
  func.func @transform_8(%arg0: i32) -> (i32, i32) {
    %c0_i32 = arith.constant 0 : i32
    %c0_i32_0 = arith.constant 0 : i32
    %c0_i32_1 = arith.constant 0 : i32
    return %c0_i32, %c0_i32_0 : i32, i32
  }
  func.func @transform_9(%arg0: i32) -> (i32, i32) {
    %c0_i32 = arith.constant 0 : i32
    %c0_i32_0 = arith.constant 0 : i32
    %c0_i32_1 = arith.constant 0 : i32
    return %c0_i32, %c0_i32_0 : i32, i32
  }
  func.func @transform_10(%arg0: i32) -> (i32, i32) {
    %c0_i32 = arith.constant 0 : i32
    %c0_i32_0 = arith.constant 0 : i32
    %c0_i32_1 = arith.constant 0 : i32
    return %c0_i32, %c0_i32_0 : i32, i32
  }
  func.func @transform_11(%arg0: i32) -> (i32, i32) {
    %c0_i32 = arith.constant 0 : i32
    %c0_i32_0 = arith.constant 0 : i32
    %c0_i32_1 = arith.constant 0 : i32
    return %c0_i32, %c0_i32_0 : i32, i32
  }
  func.func @transform_12(%arg0: i32) -> (i32, i32, i32) {
    %c0_i32 = arith.constant 0 : i32
    %c0_i32_0 = arith.constant 0 : i32
    %c0_i32_1 = arith.constant 0 : i32
    return %c0_i32, %arg0, %c0_i32_0 : i32, i32, i32
  }
  func.func @transform_13(%arg0: i32) -> (i32, i32, i32) {
    %c0_i32 = arith.constant 0 : i32
    %c0_i32_0 = arith.constant 0 : i32
    %c0_i32_1 = arith.constant 0 : i32
    return %c0_i32, %arg0, %c0_i32_0 : i32, i32, i32
  }
  func.func @transform_14(%arg0: i32) -> (i32, i32, i32) {
    %c0_i32 = arith.constant 0 : i32
    %c0_i32_0 = arith.constant 0 : i32
    %c0_i32_1 = arith.constant 0 : i32
    return %c0_i32, %arg0, %c0_i32_0 : i32, i32, i32
  }
  func.func @transform_15(%arg0: i32) -> (i32, i32, i32) {
    %c0_i32 = arith.constant 0 : i32
    %c0_i32_0 = arith.constant 0 : i32
    %c0_i32_1 = arith.constant 0 : i32
    return %c0_i32, %arg0, %c0_i32_0 : i32, i32, i32
  }
}

</mosaic_0001>

<llo_original>
// kernel: _lambda_.1
$region0: #{_lambda_.1}
  #allocation0 [shape = 'u32[]', space=smem, size = 0x4, offset = 0x4, fixed_abs, tag = 'smem constant byte address 0x4 - core index']
  #allocation1 [shape = 'u32[72,128]{1,0:T(1,128)}', space=vmem, size = 0x9000, scoped, tag = 'internal scratch']
  #allocation2 [shape = 'f32[56,8]{1,0:T(8,128)}', space=vmem, size = 0x7000, scoped, tag = 'scratch operand']
  #allocation3 [shape = 'f32[56,8]{1,0:T(8,128)}', space=vmem, size = 0x7000, scoped, tag = 'scratch operand']
  #allocation4 [shape = 'f32[1,1]{1,0:T(1,128)S(1)}', space=vmem, size = 0x200, scoped, tag = 'scoped memory for _lambda_.1']
  %s0 = inlined_call_operand.vmem [shape: f32[8,8,8,32], index: 0, kind: input, shape index: {}]
  %s1 = inlined_call_operand.vmem [shape: f32[8,8,8], index: 1, kind: input, shape index: {}]
  %s2 = inlined_call_operand.vmem [shape: f32[32,16], index: 2, kind: input, shape index: {}]
  %s3 = inlined_call_operand.vmem [shape: f32[1,16], index: 3, kind: input, shape index: {}, may-alias: {3,5}]
  %s4 = inlined_call_operand.vmem [shape: f32[32,16], index: 4, kind: input, shape index: {}]
  %s5 = inlined_call_operand.vmem [shape: f32[1,16], index: 5, kind: input, shape index: {}, may-alias: {3,5}]
  %s6 = inlined_call_operand.vmem [shape: f32[16,8], index: 6, kind: input, shape index: {}]
  %s7 = inlined_call_operand.vmem [shape: f32[1,8], index: 7, kind: input, shape index: {}, may-alias: {7,9}]
  %s8 = inlined_call_operand.vmem [shape: f32[16,8], index: 8, kind: input, shape index: {}]
  %s9 = inlined_call_operand.vmem [shape: f32[1,8], index: 9, kind: input, shape index: {}, may-alias: {7,9}]
  %s10 = inlined_call_operand.vmem [shape: f32[8,1], index: 10, kind: input, shape index: {}]
  %s11 = inlined_call_operand.<no memory space> [shape: f32[1,1], index: 11, kind: input, shape index: {}]
  %s12 = inlined_call_operand.vmem [shape: f32[8,8,8], index: 12, kind: output, shape index: {0}]
  %s13 = inlined_call_operand.vmem [shape: f32[8,8,8], index: 13, kind: output, shape index: {1}]
  %s14 = inlined_call_operand.vmem [shape: f32[8,8,8], index: 14, kind: output, shape index: {2}]
  %s15 = inlined_call_operand.vmem [shape: f32[7,8,8], index: 15, kind: output, shape index: {3}]
  %16 = xla_tuple %s12, %s13, %s14, %s15
  %s17 = sld [smem:[#allocation0]]
  $region82: #{_lambda_.1} parent=0
    _
  %s19 = ssub.s32 1, %s17
  %s20 = scalar_select 0, %s19, %s17
  %v21 = vstv %s11
  %22 = vst [vmem:[#allocation4] sm:$0x1] %v21
  // Predicated region
  $region2: #{_lambda_.1} parent=0 // pred_check
    _
  $region3: #{_lambda_.1} parent=0 // pred_check_branch
    %24 = sbr.rel (0) target = $region5
  $region4: #{_lambda_.1} parent=0 // pred_region
    _
  $region5: #{_lambda_.1} parent=0 // pred_fallthru
    _
  // Predicated region
  $region6: #{_lambda_.1} parent=0 // pred_check
    _
  $region7: #{_lambda_.1} parent=0 // pred_check_branch
    %26 = sbr.rel (0) target = $region9
  $region8: #{_lambda_.1} parent=0 // pred_region
    _
  $region9: #{_lambda_.1} parent=0 // pred_fallthru
    _
  // Predicated region
  $region10: #{_lambda_.1} parent=0 // pred_check
    _
  $region11: #{_lambda_.1} parent=0 // pred_check_branch
    %28 = sbr.rel (0) target = $region13
  $region12: #{_lambda_.1} parent=0 // pred_region
    _
  $region13: #{_lambda_.1} parent=0 // pred_fallthru
    _
  // Predicated region
  $region14: #{_lambda_.1} parent=0 // pred_check
    _
  $region15: #{_lambda_.1} parent=0 // pred_check_branch
    %30 = sbr.rel (0) target = $region17
  $region16: #{_lambda_.1} parent=0 // pred_region
    _
  $region17: #{_lambda_.1} parent=0 // pred_fallthru
    _
  // Predicated region
  $region18: #{_lambda_.1} parent=0 // pred_check
    _
  $region19: #{_lambda_.1} parent=0 // pred_check_branch
    %32 = sbr.rel (0) target = $region21
  $region20: #{_lambda_.1} parent=0 // pred_region
    _
  $region21: #{_lambda_.1} parent=0 // pred_fallthru
    _
  // Predicated region
  $region22: #{_lambda_.1} parent=0 // pred_check
    _
  $region23: #{_lambda_.1} parent=0 // pred_check_branch
    %34 = sbr.rel (0) target = $region25
  $region24: #{_lambda_.1} parent=0 // pred_region
    _
  $region25: #{_lambda_.1} parent=0 // pred_fallthru
    _
  // Predicated region
  $region26: #{_lambda_.1} parent=0 // pred_check
    _
  $region27: #{_lambda_.1} parent=0 // pred_check_branch
    %36 = sbr.rel (0) target = $region29
  $region28: #{_lambda_.1} parent=0 // pred_region
    _
  $region29: #{_lambda_.1} parent=0 // pred_fallthru
    _
  // Predicated region
  $region30: #{_lambda_.1} parent=0 // pred_check
    _
  $region31: #{_lambda_.1} parent=0 // pred_check_branch
    %38 = sbr.rel (0) target = $region33
  $region32: #{_lambda_.1} parent=0 // pred_region
    _
  $region33: #{_lambda_.1} parent=0 // pred_fallthru
    _
  // Predicated region
  $region34: #{_lambda_.1} parent=0 // pred_check
    _
  $region35: #{_lambda_.1} parent=0 // pred_check_branch
    %40 = sbr.rel (0) target = $region37
  $region36: #{_lambda_.1} parent=0 // pred_region
    _
  $region37: #{_lambda_.1} parent=0 // pred_fallthru
    _
  // Predicated region
  $region38: #{_lambda_.1} parent=0 // pred_check
    _
  $region39: #{_lambda_.1} parent=0 // pred_check_branch
    %42 = sbr.rel (0) target = $region41
  $region40: #{_lambda_.1} parent=0 // pred_region
    _
  $region41: #{_lambda_.1} parent=0 // pred_fallthru
    _
  // Predicated region
  $region42: #{_lambda_.1} parent=0 // pred_check
    _
  $region43: #{_lambda_.1} parent=0 // pred_check_branch
    %44 = sbr.rel (0) target = $region45
  $region44: #{_lambda_.1} parent=0 // pred_region
    _
  $region45: #{_lambda_.1} parent=0 // pred_fallthru
    _
  // Predicated region
  $region46: #{_lambda_.1} parent=0 // pred_check
    _
  $region47: #{_lambda_.1} parent=0 // pred_check_branch
    %46 = sbr.rel (0) target = $region49
  $region48: #{_lambda_.1} parent=0 // pred_region
    _
  $region49: #{_lambda_.1} parent=0 // pred_fallthru
    _
  %v48 = vld [vmem:[%s0] sm:$0xff]
  %v49 = vld [vmem:[%s0 + $0x8] sm:$0xff]
  %v50 = vld [vmem:[%s0 + $0x10] sm:$0xff]
  %v51 = vld [vmem:[%s0 + $0x18] sm:$0xff]
  %v52 = vld [vmem:[%s0 + $0x20] sm:$0xff]
  %v53 = vld [vmem:[%s0 + $0x28] sm:$0xff]
  %v54 = vld [vmem:[%s0 + $0x30] sm:$0xff]
  %v55 = vld [vmem:[%s0 + $0x38] sm:$0xff]
  %v56 = vld [vmem:[%s0 + $0x40] sm:$0xff]
  %v57 = vld [vmem:[%s0 + $0x48] sm:$0xff]
  %v58 = vld [vmem:[%s0 + $0x50] sm:$0xff]
  %v59 = vld [vmem:[%s0 + $0x58] sm:$0xff]
  %v60 = vld [vmem:[%s0 + $0x60] sm:$0xff]
  %v61 = vld [vmem:[%s0 + $0x68] sm:$0xff]
  %v62 = vld [vmem:[%s0 + $0x70] sm:$0xff]
  %v63 = vld [vmem:[%s0 + $0x78] sm:$0xff]
  %v64 = vld [vmem:[%s0 + $0x80] sm:$0xff]
  %v65 = vld [vmem:[%s0 + $0x88] sm:$0xff]
  %v66 = vld [vmem:[%s0 + $0x90] sm:$0xff]
  %v67 = vld [vmem:[%s0 + $0x98] sm:$0xff]
  %v68 = vld [vmem:[%s0 + $0xa0] sm:$0xff]
  %v69 = vld [vmem:[%s0 + $0xa8] sm:$0xff]
  %v70 = vld [vmem:[%s0 + $0xb0] sm:$0xff]
  %v71 = vld [vmem:[%s0 + $0xb8] sm:$0xff]
  %v72 = vld [vmem:[%s0 + $0xc0] sm:$0xff]
  %v73 = vld [vmem:[%s0 + $0xc8] sm:$0xff]
  %v74 = vld [vmem:[%s0 + $0xd0] sm:$0xff]
  %v75 = vld [vmem:[%s0 + $0xd8] sm:$0xff]
  %v76 = vld [vmem:[%s0 + $0xe0] sm:$0xff]
  %v77 = vld [vmem:[%s0 + $0xe8] sm:$0xff]
  %v78 = vld [vmem:[%s0 + $0xf0] sm:$0xff]
  %v79 = vld [vmem:[%s0 + $0xf8] sm:$0xff]
  %v80 = vld [vmem:[%s0 + $0x100] sm:$0xff]
  %v81 = vld [vmem:[%s0 + $0x108] sm:$0xff]
  %v82 = vld [vmem:[%s0 + $0x110] sm:$0xff]
  %v83 = vld [vmem:[%s0 + $0x118] sm:$0xff]
  %v84 = vld [vmem:[%s0 + $0x120] sm:$0xff]
  %v85 = vld [vmem:[%s0 + $0x128] sm:$0xff]
  %v86 = vld [vmem:[%s0 + $0x130] sm:$0xff]
  %v87 = vld [vmem:[%s0 + $0x138] sm:$0xff]
  %v88 = vld [vmem:[%s0 + $0x140] sm:$0xff]
  %v89 = vld [vmem:[%s0 + $0x148] sm:$0xff]
  %v90 = vld [vmem:[%s0 + $0x150] sm:$0xff]
  %v91 = vld [vmem:[%s0 + $0x158] sm:$0xff]
  %v92 = vld [vmem:[%s0 + $0x160] sm:$0xff]
  %v93 = vld [vmem:[%s0 + $0x168] sm:$0xff]
  %v94 = vld [vmem:[%s0 + $0x170] sm:$0xff]
  %v95 = vld [vmem:[%s0 + $0x178] sm:$0xff]
  %v96 = vld [vmem:[%s0 + $0x180] sm:$0xff]
  %v97 = vld [vmem:[%s0 + $0x188] sm:$0xff]
  %v98 = vld [vmem:[%s0 + $0x190] sm:$0xff]
  %v99 = vld [vmem:[%s0 + $0x198] sm:$0xff]
  %v100 = vld [vmem:[%s0 + $0x1a0] sm:$0xff]
  %v101 = vld [vmem:[%s0 + $0x1a8] sm:$0xff]
  %v102 = vld [vmem:[%s0 + $0x1b0] sm:$0xff]
  %v103 = vld [vmem:[%s0 + $0x1b8] sm:$0xff]
  %v104 = vld [vmem:[%s0 + $0x1c0] sm:$0xff]
  %v105 = vld [vmem:[%s0 + $0x1c8] sm:$0xff]
  %v106 = vld [vmem:[%s0 + $0x1d0] sm:$0xff]
  %v107 = vld [vmem:[%s0 + $0x1d8] sm:$0xff]
  %v108 = vld [vmem:[%s0 + $0x1e0] sm:$0xff]
  %v109 = vld [vmem:[%s0 + $0x1e8] sm:$0xff]
  %v110 = vld [vmem:[%s0 + $0x1f0] sm:$0xff]
  %v111 = vld [vmem:[%s0 + $0x1f8] sm:$0xff]
  %v112 = vld [vmem:[%s2] sm:$0xff]
  %v113 = vld [vmem:[%s2 + $0x8] sm:$0xff]
  %v114 = vld [vmem:[%s2 + $0x10] sm:$0xff]
  %v115 = vld [vmem:[%s2 + $0x18] sm:$0xff]
  %v116 = vld [vmem:[%s3] sm:$0x1]
  %v117 = vld [vmem:[%s4] sm:$0xff]
  %v118 = vld [vmem:[%s4 + $0x8] sm:$0xff]
  %v119 = vld [vmem:[%s4 + $0x10] sm:$0xff]
  %v120 = vld [vmem:[%s4 + $0x18] sm:$0xff]
  %v121 = vld [vmem:[%s5] sm:$0x1]
  %v122 = vpack.c.bf16 %v49, %v48
  %v123 = vpack.c.bf16 %v51, %v50
  %v124 = vpack.c.bf16 %v53, %v52
  %v125 = vpack.c.bf16 %v55, %v54
  %v126 = vpack.c.bf16 %v57, %v56
  %v127 = vpack.c.bf16 %v59, %v58
  %v128 = vpack.c.bf16 %v61, %v60
  %v129 = vpack.c.bf16 %v63, %v62
  %v130 = vpack.c.bf16 %v65, %v64
  %v131 = vpack.c.bf16 %v67, %v66
  %v132 = vpack.c.bf16 %v69, %v68
  %v133 = vpack.c.bf16 %v71, %v70
  %v134 = vpack.c.bf16 %v73, %v72
  %v135 = vpack.c.bf16 %v75, %v74
  %v136 = vpack.c.bf16 %v77, %v76
  %v137 = vpack.c.bf16 %v79, %v78
  %v138 = vpack.c.bf16 %v81, %v80
  %v139 = vpack.c.bf16 %v83, %v82
  %v140 = vpack.c.bf16 %v85, %v84
  %v141 = vpack.c.bf16 %v87, %v86
  %v142 = vpack.c.bf16 %v89, %v88
  %v143 = vpack.c.bf16 %v91, %v90
  %v144 = vpack.c.bf16 %v93, %v92
  %v145 = vpack.c.bf16 %v95, %v94
  %v146 = vpack.c.bf16 %v97, %v96
  %v147 = vpack.c.bf16 %v99, %v98
  %v148 = vpack.c.bf16 %v101, %v100
  %v149 = vpack.c.bf16 %v103, %v102
  %v150 = vpack.c.bf16 %v105, %v104
  %v151 = vpack.c.bf16 %v107, %v106
  %v152 = vpack.c.bf16 %v109, %v108
  %v153 = vpack.c.bf16 %v111, %v110
  %v154 = vpack.c.bf16 %v113, %v112
  %v155 = vpack.c.bf16 %v115, %v114
  %v157 = vperm.slane %v116, 0
  %vm159 = vcmask 261120
  %v161 = vsel %vm159, %v122, 0
  %v164 = vsel %vm159, %v123, 0
  %v167 = vsel %vm159, %v124, 0
  %v170 = vsel %vm159, %v125, 0
  %v173 = vsel %vm159, %v126, 0
  %v176 = vsel %vm159, %v127, 0
  %v179 = vsel %vm159, %v128, 0
  %v182 = vsel %vm159, %v129, 0
  %v185 = vsel %vm159, %v130, 0
  %v188 = vsel %vm159, %v131, 0
  %v191 = vsel %vm159, %v132, 0
  %v194 = vsel %vm159, %v133, 0
  %v197 = vsel %vm159, %v134, 0
  %v200 = vsel %vm159, %v135, 0
  %v203 = vsel %vm159, %v136, 0
  %v206 = vsel %vm159, %v137, 0
  %v209 = vsel %vm159, %v138, 0
  %v212 = vsel %vm159, %v139, 0
  %v215 = vsel %vm159, %v140, 0
  %v218 = vsel %vm159, %v141, 0
  %v221 = vsel %vm159, %v142, 0
  %v224 = vsel %vm159, %v143, 0
  %v227 = vsel %vm159, %v144, 0
  %v230 = vsel %vm159, %v145, 0
  %v233 = vsel %vm159, %v146, 0
  %v236 = vsel %vm159, %v147, 0
  %v239 = vsel %vm159, %v148, 0
  %v242 = vsel %vm159, %v149, 0
  %v245 = vsel %vm159, %v150, 0
  %v248 = vsel %vm159, %v151, 0
  %v251 = vsel %vm159, %v152, 0
  %v254 = vsel %vm159, %v153, 0
  %256 = vmatpush.bf16.msra.mxu0 0
  %257 = vmatpush.bf16.msra.mxu0 0
  %258 = vmatpush.bf16.msra.mxu0 0
  %259 = vmatpush.bf16.msra.mxu0 0
  %260 = vmatpush.bf16.msra.mxu0 0
  %261 = vmatpush.bf16.msra.mxu0 0
  %262 = vmatpush.bf16.msra.mxu0 %v155
  %263 = vmatpush.bf16.msra.mxu0 %v154
  %264 = vmatmul.bf16.gmra.mxu0 %v161
  %v265 = vpop.f32.mrf.mxu0
  %v266 = vadd.f32 %v157, %v265
  %v267 = vpop.f32.mrf.mxu0
  %v268 = vadd.f32 %v157, %v267
  %269 = vmatmul.bf16.gmra.mxu0 %v164
  %v270 = vpop.f32.mrf.mxu0
  %v271 = vadd.f32 %v157, %v270
  %v272 = vpop.f32.mrf.mxu0
  %v273 = vadd.f32 %v157, %v272
  %274 = vmatmul.bf16.gmra.mxu0 %v167
  %v275 = vpop.f32.mrf.mxu0
  %v276 = vadd.f32 %v157, %v275
  %v277 = vpop.f32.mrf.mxu0
  %v278 = vadd.f32 %v157, %v277
  %279 = vmatmul.bf16.gmra.mxu0 %v170
  %v280 = vpop.f32.mrf.mxu0
  %v281 = vadd.f32 %v157, %v280
  %v282 = vpop.f32.mrf.mxu0
  %v283 = vadd.f32 %v157, %v282
  %284 = vmatmul.bf16.gmra.mxu0 %v173
  %v285 = vpop.f32.mrf.mxu0
  %v286 = vadd.f32 %v157, %v285
  %v287 = vpop.f32.mrf.mxu0
  %v288 = vadd.f32 %v157, %v287
  %289 = vmatmul.bf16.gmra.mxu0 %v176
  %v290 = vpop.f32.mrf.mxu0
  %v291 = vadd.f32 %v157, %v290
  %v292 = vpop.f32.mrf.mxu0
  %v293 = vadd.f32 %v157, %v292
  %294 = vmatmul.bf16.gmra.mxu0 %v179
  %v295 = vpop.f32.mrf.mxu0
  %v296 = vadd.f32 %v157, %v295
  %v297 = vpop.f32.mrf.mxu0
  %v298 = vadd.f32 %v157, %v297
  %299 = vmatmul.bf16.gmra.mxu0 %v182
  %v300 = vpop.f32.mrf.mxu0
  %v301 = vadd.f32 %v157, %v300
  %v302 = vpop.f32.mrf.mxu0
  %v303 = vadd.f32 %v157, %v302
  %304 = vmatmul.bf16.gmra.mxu0 %v185
  %v305 = vpop.f32.mrf.mxu0
  %v306 = vadd.f32 %v157, %v305
  %v307 = vpop.f32.mrf.mxu0
  %v308 = vadd.f32 %v157, %v307
  %309 = vmatmul.bf16.gmra.mxu0 %v188
  %v310 = vpop.f32.mrf.mxu0
  %v311 = vadd.f32 %v157, %v310
  %v312 = vpop.f32.mrf.mxu0
  %v313 = vadd.f32 %v157, %v312
  %314 = vmatmul.bf16.gmra.mxu0 %v191
  %v315 = vpop.f32.mrf.mxu0
  %v316 = vadd.f32 %v157, %v315
  %v317 = vpop.f32.mrf.mxu0
  %v318 = vadd.f32 %v157, %v317
  %319 = vmatmul.bf16.gmra.mxu0 %v194
  %v320 = vpop.f32.mrf.mxu0
  %v321 = vadd.f32 %v157, %v320
  %v322 = vpop.f32.mrf.mxu0
  %v323 = vadd.f32 %v157, %v322
  %324 = vmatmul.bf16.gmra.mxu0 %v197
  %v325 = vpop.f32.mrf.mxu0
  %v326 = vadd.f32 %v157, %v325
  %v327 = vpop.f32.mrf.mxu0
  %v328 = vadd.f32 %v157, %v327
  %329 = vmatmul.bf16.gmra.mxu0 %v200
  %v330 = vpop.f32.mrf.mxu0
  %v331 = vadd.f32 %v157, %v330
  %v332 = vpop.f32.mrf.mxu0
  %v333 = vadd.f32 %v157, %v332
  %334 = vmatmul.bf16.gmra.mxu0 %v203
  %v335 = vpop.f32.mrf.mxu0
  %v336 = vadd.f32 %v157, %v335
  %v337 = vpop.f32.mrf.mxu0
  %v338 = vadd.f32 %v157, %v337
  %339 = vmatmul.bf16.gmra.mxu0 %v206
  %v340 = vpop.f32.mrf.mxu0
  %v341 = vadd.f32 %v157, %v340
  %v342 = vpop.f32.mrf.mxu0
  %v343 = vadd.f32 %v157, %v342
  %344 = vmatmul.bf16.gmra.mxu0 %v209
  %v345 = vpop.f32.mrf.mxu0
  %v346 = vadd.f32 %v157, %v345
  %v347 = vpop.f32.mrf.mxu0
  %v348 = vadd.f32 %v157, %v347
  %349 = vmatmul.bf16.gmra.mxu0 %v212
  %v350 = vpop.f32.mrf.mxu0
  %v351 = vadd.f32 %v157, %v350
  %v352 = vpop.f32.mrf.mxu0
  %v353 = vadd.f32 %v157, %v352
  %354 = vmatmul.bf16.gmra.mxu0 %v215
  %v355 = vpop.f32.mrf.mxu0
  %v356 = vadd.f32 %v157, %v355
  %v357 = vpop.f32.mrf.mxu0
  %v358 = vadd.f32 %v157, %v357
  %359 = vmatmul.bf16.gmra.mxu0 %v218
  %v360 = vpop.f32.mrf.mxu0
  %v361 = vadd.f32 %v157, %v360
  %v362 = vpop.f32.mrf.mxu0
  %v363 = vadd.f32 %v157, %v362
  %364 = vmatmul.bf16.gmra.mxu0 %v221
  %v365 = vpop.f32.mrf.mxu0
  %v366 = vadd.f32 %v157, %v365
  %v367 = vpop.f32.mrf.mxu0
  %v368 = vadd.f32 %v157, %v367
  %369 = vmatmul.bf16.gmra.mxu0 %v224
  %v370 = vpop.f32.mrf.mxu0
  %v371 = vadd.f32 %v157, %v370
  %v372 = vpop.f32.mrf.mxu0
  %v373 = vadd.f32 %v157, %v372
  %374 = vmatmul.bf16.gmra.mxu0 %v227
  %v375 = vpop.f32.mrf.mxu0
  %v376 = vadd.f32 %v157, %v375
  %v377 = vpop.f32.mrf.mxu0
  %v378 = vadd.f32 %v157, %v377
  %379 = vmatmul.bf16.gmra.mxu0 %v230
  %v380 = vpop.f32.mrf.mxu0
  %v381 = vadd.f32 %v157, %v380
  %v382 = vpop.f32.mrf.mxu0
  %v383 = vadd.f32 %v157, %v382
  %384 = vmatmul.bf16.gmra.mxu0 %v233
  %v385 = vpop.f32.mrf.mxu0
  %v386 = vadd.f32 %v157, %v385
  %v387 = vpop.f32.mrf.mxu0
  %v388 = vadd.f32 %v157, %v387
  %389 = vmatmul.bf16.gmra.mxu0 %v236
  %v390 = vpop.f32.mrf.mxu0
  %v391 = vadd.f32 %v157, %v390
  %v392 = vpop.f32.mrf.mxu0
  %v393 = vadd.f32 %v157, %v392
  %394 = vmatmul.bf16.gmra.mxu0 %v239
  %v395 = vpop.f32.mrf.mxu0
  %v396 = vadd.f32 %v157, %v395
  %v397 = vpop.f32.mrf.mxu0
  %v398 = vadd.f32 %v157, %v397
  %399 = vmatmul.bf16.gmra.mxu0 %v242
  %v400 = vpop.f32.mrf.mxu0
  %v401 = vadd.f32 %v157, %v400
  %v402 = vpop.f32.mrf.mxu0
  %v403 = vadd.f32 %v157, %v402
  %404 = vmatmul.bf16.gmra.mxu0 %v245
  %v405 = vpop.f32.mrf.mxu0
  %v406 = vadd.f32 %v157, %v405
  %v407 = vpop.f32.mrf.mxu0
  %v408 = vadd.f32 %v157, %v407
  %409 = vmatmul.bf16.gmra.mxu0 %v248
  %v410 = vpop.f32.mrf.mxu0
  %v411 = vadd.f32 %v157, %v410
  %v412 = vpop.f32.mrf.mxu0
  %v413 = vadd.f32 %v157, %v412
  %414 = vmatmul.bf16.gmra.mxu0 %v251
  %v415 = vpop.f32.mrf.mxu0
  %v416 = vadd.f32 %v157, %v415
  %v417 = vpop.f32.mrf.mxu0
  %v418 = vadd.f32 %v157, %v417
  %419 = vmatmul.bf16.gmra.mxu0 %v254
  %v420 = vpop.f32.mrf.mxu0
  %v421 = vadd.f32 %v157, %v420
  %v422 = vpop.f32.mrf.mxu0
  %v423 = vadd.f32 %v157, %v422
  %424 = vdwg.mxu0
  %v425 = vpack.c.bf16 %v118, %v117
  %v426 = vpack.c.bf16 %v120, %v119
  %v428 = vperm.slane %v121, 0
  %430 = vmatpush.bf16.msra.mxu0 0
  %431 = vmatpush.bf16.msra.mxu0 0
  %432 = vmatpush.bf16.msra.mxu0 0
  %433 = vmatpush.bf16.msra.mxu0 0
  %434 = vmatpush.bf16.msra.mxu0 0
  %435 = vmatpush.bf16.msra.mxu0 0
  %436 = vmatpush.bf16.msra.mxu0 %v426
  %437 = vmatpush.bf16.msra.mxu0 %v425
  %438 = vmatmul.bf16.gmra.mxu0 %v161
  %v439 = vpop.f32.mrf.mxu0
  %v440 = vadd.f32 %v428, %v439
  %v441 = vpop.f32.mrf.mxu0
  %v442 = vadd.f32 %v428, %v441
  %443 = vmatmul.bf16.gmra.mxu0 %v164
  %v444 = vpop.f32.mrf.mxu0
  %v445 = vadd.f32 %v428, %v444
  %v446 = vpop.f32.mrf.mxu0
  %v447 = vadd.f32 %v428, %v446
  %448 = vmatmul.bf16.gmra.mxu0 %v167
  %v449 = vpop.f32.mrf.mxu0
  %v450 = vadd.f32 %v428, %v449
  %v451 = vpop.f32.mrf.mxu0
  %v452 = vadd.f32 %v428, %v451
  %453 = vmatmul.bf16.gmra.mxu0 %v170
  %v454 = vpop.f32.mrf.mxu0
  %v455 = vadd.f32 %v428, %v454
  %v456 = vpop.f32.mrf.mxu0
  %v457 = vadd.f32 %v428, %v456
  %458 = vmatmul.bf16.gmra.mxu0 %v173
  %v459 = vpop.f32.mrf.mxu0
  %v460 = vadd.f32 %v428, %v459
  %v461 = vpop.f32.mrf.mxu0
  %v462 = vadd.f32 %v428, %v461
  %463 = vmatmul.bf16.gmra.mxu0 %v176
  %v464 = vpop.f32.mrf.mxu0
  %v465 = vadd.f32 %v428, %v464
  %v466 = vpop.f32.mrf.mxu0
  %v467 = vadd.f32 %v428, %v466
  %468 = vmatmul.bf16.gmra.mxu0 %v179
  %v469 = vpop.f32.mrf.mxu0
  %v470 = vadd.f32 %v428, %v469
  %v471 = vpop.f32.mrf.mxu0
  %v472 = vadd.f32 %v428, %v471
  %473 = vmatmul.bf16.gmra.mxu0 %v182
  %v474 = vpop.f32.mrf.mxu0
  %v475 = vadd.f32 %v428, %v474
  %v476 = vpop.f32.mrf.mxu0
  %v477 = vadd.f32 %v428, %v476
  %478 = vmatmul.bf16.gmra.mxu0 %v185
  %v479 = vpop.f32.mrf.mxu0
  %v480 = vadd.f32 %v428, %v479
  %v481 = vpop.f32.mrf.mxu0
  %v482 = vadd.f32 %v428, %v481
  %483 = vmatmul.bf16.gmra.mxu0 %v188
  %v484 = vpop.f32.mrf.mxu0
  %v485 = vadd.f32 %v428, %v484
  %v486 = vpop.f32.mrf.mxu0
  %v487 = vadd.f32 %v428, %v486
  %488 = vmatmul.bf16.gmra.mxu0 %v191
  %v489 = vpop.f32.mrf.mxu0
  %v490 = vadd.f32 %v428, %v489
  %v491 = vpop.f32.mrf.mxu0
  %v492 = vadd.f32 %v428, %v491
  %493 = vmatmul.bf16.gmra.mxu0 %v194
  %v494 = vpop.f32.mrf.mxu0
  %v495 = vadd.f32 %v428, %v494
  %v496 = vpop.f32.mrf.mxu0
  %v497 = vadd.f32 %v428, %v496
  %498 = vmatmul.bf16.gmra.mxu0 %v197
  %v499 = vpop.f32.mrf.mxu0
  %v500 = vadd.f32 %v428, %v499
  %v501 = vpop.f32.mrf.mxu0
  %v502 = vadd.f32 %v428, %v501
  %503 = vmatmul.bf16.gmra.mxu0 %v200
  %v504 = vpop.f32.mrf.mxu0
  %v505 = vadd.f32 %v428, %v504
  %v506 = vpop.f32.mrf.mxu0
  %v507 = vadd.f32 %v428, %v506
  %508 = vmatmul.bf16.gmra.mxu0 %v203
  %v509 = vpop.f32.mrf.mxu0
  %v510 = vadd.f32 %v428, %v509
  %v511 = vpop.f32.mrf.mxu0
  %v512 = vadd.f32 %v428, %v511
  %513 = vmatmul.bf16.gmra.mxu0 %v206
  %v514 = vpop.f32.mrf.mxu0
  %v515 = vadd.f32 %v428, %v514
  %v516 = vpop.f32.mrf.mxu0
  %v517 = vadd.f32 %v428, %v516
  %518 = vmatmul.bf16.gmra.mxu0 %v209
  %v519 = vpop.f32.mrf.mxu0
  %v520 = vadd.f32 %v428, %v519
  %v521 = vpop.f32.mrf.mxu0
  %v522 = vadd.f32 %v428, %v521
  %523 = vmatmul.bf16.gmra.mxu0 %v212
  %v524 = vpop.f32.mrf.mxu0
  %v525 = vadd.f32 %v428, %v524
  %v526 = vpop.f32.mrf.mxu0
  %v527 = vadd.f32 %v428, %v526
  %528 = vmatmul.bf16.gmra.mxu0 %v215
  %v529 = vpop.f32.mrf.mxu0
  %v530 = vadd.f32 %v428, %v529
  %v531 = vpop.f32.mrf.mxu0
  %v532 = vadd.f32 %v428, %v531
  %533 = vmatmul.bf16.gmra.mxu0 %v218
  %v534 = vpop.f32.mrf.mxu0
  %v535 = vadd.f32 %v428, %v534
  %v536 = vpop.f32.mrf.mxu0
  %v537 = vadd.f32 %v428, %v536
  %538 = vmatmul.bf16.gmra.mxu0 %v221
  %v539 = vpop.f32.mrf.mxu0
  %v540 = vadd.f32 %v428, %v539
  %v541 = vpop.f32.mrf.mxu0
  %v542 = vadd.f32 %v428, %v541
  %543 = vmatmul.bf16.gmra.mxu0 %v224
  %v544 = vpop.f32.mrf.mxu0
  %v545 = vadd.f32 %v428, %v544
  %v546 = vpop.f32.mrf.mxu0
  %v547 = vadd.f32 %v428, %v546
  %548 = vmatmul.bf16.gmra.mxu0 %v227
  %v549 = vpop.f32.mrf.mxu0
  %v550 = vadd.f32 %v428, %v549
  %v551 = vpop.f32.mrf.mxu0
  %v552 = vadd.f32 %v428, %v551
  %553 = vmatmul.bf16.gmra.mxu0 %v230
  %v554 = vpop.f32.mrf.mxu0
  %v555 = vadd.f32 %v428, %v554
  %v556 = vpop.f32.mrf.mxu0
  %v557 = vadd.f32 %v428, %v556
  %558 = vmatmul.bf16.gmra.mxu0 %v233
  %v559 = vpop.f32.mrf.mxu0
  %v560 = vadd.f32 %v428, %v559
  %v561 = vpop.f32.mrf.mxu0
  %v562 = vadd.f32 %v428, %v561
  %563 = vmatmul.bf16.gmra.mxu0 %v236
  %v564 = vpop.f32.mrf.mxu0
  %v565 = vadd.f32 %v428, %v564
  %v566 = vpop.f32.mrf.mxu0
  %v567 = vadd.f32 %v428, %v566
  %568 = vmatmul.bf16.gmra.mxu0 %v239
  %v569 = vpop.f32.mrf.mxu0
  %v570 = vadd.f32 %v428, %v569
  %v571 = vpop.f32.mrf.mxu0
  %v572 = vadd.f32 %v428, %v571
  %573 = vmatmul.bf16.gmra.mxu0 %v242
  %v574 = vpop.f32.mrf.mxu0
  %v575 = vadd.f32 %v428, %v574
  %v576 = vpop.f32.mrf.mxu0
  %v577 = vadd.f32 %v428, %v576
  %578 = vmatmul.bf16.gmra.mxu0 %v245
  %v579 = vpop.f32.mrf.mxu0
  %v580 = vadd.f32 %v428, %v579
  %v581 = vpop.f32.mrf.mxu0
  %v582 = vadd.f32 %v428, %v581
  %583 = vmatmul.bf16.gmra.mxu0 %v248
  %v584 = vpop.f32.mrf.mxu0
  %v585 = vadd.f32 %v428, %v584
  %v586 = vpop.f32.mrf.mxu0
  %v587 = vadd.f32 %v428, %v586
  %588 = vmatmul.bf16.gmra.mxu0 %v251
  %v589 = vpop.f32.mrf.mxu0
  %v590 = vadd.f32 %v428, %v589
  %v591 = vpop.f32.mrf.mxu0
  %v592 = vadd.f32 %v428, %v591
  %593 = vmatmul.bf16.gmra.mxu0 %v254
  %v594 = vpop.f32.mrf.mxu0
  %v595 = vadd.f32 %v428, %v594
  %v596 = vpop.f32.mrf.mxu0
  %v597 = vadd.f32 %v428, %v596
  %598 = vdwg.mxu0
  %v599 = vsub.f32 0.0, %v440
  %v600 = vsub.f32 0.0, %v442
  %v601 = vsub.f32 0.0, %v445
  %v602 = vsub.f32 0.0, %v447
  %v603 = vsub.f32 0.0, %v450
  %v604 = vsub.f32 0.0, %v452
  %v605 = vsub.f32 0.0, %v455
  %v606 = vsub.f32 0.0, %v457
  %v607 = vsub.f32 0.0, %v460
  %v608 = vsub.f32 0.0, %v462
  %v609 = vsub.f32 0.0, %v465
  %v610 = vsub.f32 0.0, %v467
  %v611 = vsub.f32 0.0, %v470
  %v612 = vsub.f32 0.0, %v472
  %v613 = vsub.f32 0.0, %v475
  %v614 = vsub.f32 0.0, %v477
  %v615 = vsub.f32 0.0, %v480
  %v616 = vsub.f32 0.0, %v482
  %v617 = vsub.f32 0.0, %v485
  %v618 = vsub.f32 0.0, %v487
  %v619 = vsub.f32 0.0, %v490
  %v620 = vsub.f32 0.0, %v492
  %v621 = vsub.f32 0.0, %v495
  %v622 = vsub.f32 0.0, %v497
  %v623 = vsub.f32 0.0, %v500
  %v624 = vsub.f32 0.0, %v502
  %v625 = vsub.f32 0.0, %v505
  %v626 = vsub.f32 0.0, %v507
  %v627 = vsub.f32 0.0, %v510
  %v628 = vsub.f32 0.0, %v512
  %v629 = vsub.f32 0.0, %v515
  %v630 = vsub.f32 0.0, %v517
  %v631 = vsub.f32 0.0, %v520
  %v632 = vsub.f32 0.0, %v522
  %v633 = vsub.f32 0.0, %v525
  %v634 = vsub.f32 0.0, %v527
  %v635 = vsub.f32 0.0, %v530
  %v636 = vsub.f32 0.0, %v532
  %v637 = vsub.f32 0.0, %v535
  %v638 = vsub.f32 0.0, %v537
  %v639 = vsub.f32 0.0, %v540
  %v640 = vsub.f32 0.0, %v542
  %v641 = vsub.f32 0.0, %v545
  %v642 = vsub.f32 0.0, %v547
  %v643 = vsub.f32 0.0, %v550
  %v644 = vsub.f32 0.0, %v552
  %v645 = vsub.f32 0.0, %v555
  %v646 = vsub.f32 0.0, %v557
  %v647 = vsub.f32 0.0, %v560
  %v648 = vsub.f32 0.0, %v562
  %v649 = vsub.f32 0.0, %v565
  %v650 = vsub.f32 0.0, %v567
  %v651 = vsub.f32 0.0, %v570
  %v652 = vsub.f32 0.0, %v572
  %v653 = vsub.f32 0.0, %v575
  %v654 = vsub.f32 0.0, %v577
  %v655 = vsub.f32 0.0, %v580
  %v656 = vsub.f32 0.0, %v582
  %v657 = vsub.f32 0.0, %v585
  %v658 = vsub.f32 0.0, %v587
  %v659 = vsub.f32 0.0, %v590
  %v660 = vsub.f32 0.0, %v592
  %v661 = vsub.f32 0.0, %v595
  %v662 = vsub.f32 0.0, %v597
  %v663 = vmul.f32 %v599, 1.442695
  %v664 = vpow.pop %v663
  %v665 = vmul.f32 %v600, 1.442695
  %v666 = vpow.pop %v665
  %v667 = vmul.f32 %v601, 1.442695
  %v668 = vpow.pop %v667
  %v669 = vmul.f32 %v602, 1.442695
  %v670 = vpow.pop %v669
  %v671 = vmul.f32 %v603, 1.442695
  %v672 = vpow.pop %v671
  %v673 = vmul.f32 %v604, 1.442695
  %v674 = vpow.pop %v673
  %v675 = vmul.f32 %v605, 1.442695
  %v676 = vpow.pop %v675
  %v677 = vmul.f32 %v606, 1.442695
  %v678 = vpow.pop %v677
  %v679 = vmul.f32 %v607, 1.442695
  %v680 = vpow.pop %v679
  %v681 = vmul.f32 %v608, 1.442695
  %v682 = vpow.pop %v681
  %v683 = vmul.f32 %v609, 1.442695
  %v684 = vpow.pop %v683
  %v685 = vmul.f32 %v610, 1.442695
  %v686 = vpow.pop %v685
  %v687 = vmul.f32 %v611, 1.442695
  %v688 = vpow.pop %v687
  %v689 = vmul.f32 %v612, 1.442695
  %v690 = vpow.pop %v689
  %v691 = vmul.f32 %v613, 1.442695
  %v692 = vpow.pop %v691
  %v693 = vmul.f32 %v614, 1.442695
  %v694 = vpow.pop %v693
  %v695 = vmul.f32 %v615, 1.442695
  %v696 = vpow.pop %v695
  %v697 = vmul.f32 %v616, 1.442695
  %v698 = vpow.pop %v697
  %v699 = vmul.f32 %v617, 1.442695
  %v700 = vpow.pop %v699
  %v701 = vmul.f32 %v618, 1.442695
  %v702 = vpow.pop %v701
  %v703 = vmul.f32 %v619, 1.442695
  %v704 = vpow.pop %v703
  %v705 = vmul.f32 %v620, 1.442695
  %v706 = vpow.pop %v705
  %v707 = vmul.f32 %v621, 1.442695
  %v708 = vpow.pop %v707
  %v709 = vmul.f32 %v622, 1.442695
  %v710 = vpow.pop %v709
  %v711 = vmul.f32 %v623, 1.442695
  %v712 = vpow.pop %v711
  %v713 = vmul.f32 %v624, 1.442695
  %v714 = vpow.pop %v713
  %v715 = vmul.f32 %v625, 1.442695
  %v716 = vpow.pop %v715
  %v717 = vmul.f32 %v626, 1.442695
  %v718 = vpow.pop %v717
  %v719 = vmul.f32 %v627, 1.442695
  %v720 = vpow.pop %v719
  %v721 = vmul.f32 %v628, 1.442695
  %v722 = vpow.pop %v721
  %v723 = vmul.f32 %v629, 1.442695
  %v724 = vpow.pop %v723
  %v725 = vmul.f32 %v630, 1.442695
  %v726 = vpow.pop %v725
  %v727 = vmul.f32 %v631, 1.442695
  %v728 = vpow.pop %v727
  %v729 = vmul.f32 %v632, 1.442695
  %v730 = vpow.pop %v729
  %v731 = vmul.f32 %v633, 1.442695
  %v732 = vpow.pop %v731
  %v733 = vmul.f32 %v634, 1.442695
  %v734 = vpow.pop %v733
  %v735 = vmul.f32 %v635, 1.442695
  %v736 = vpow.pop %v735
  %v737 = vmul.f32 %v636, 1.442695
  %v738 = vpow.pop %v737
  %v739 = vmul.f32 %v637, 1.442695
  %v740 = vpow.pop %v739
  %v741 = vmul.f32 %v638, 1.442695
  %v742 = vpow.pop %v741
  %v743 = vmul.f32 %v639, 1.442695
  %v744 = vpow.pop %v743
  %v745 = vmul.f32 %v640, 1.442695
  %v746 = vpow.pop %v745
  %v747 = vmul.f32 %v641, 1.442695
  %v748 = vpow.pop %v747
  %v749 = vmul.f32 %v642, 1.442695
  %v750 = vpow.pop %v749
  %v751 = vmul.f32 %v643, 1.442695
  %v752 = vpow.pop %v751
  %v753 = vmul.f32 %v644, 1.442695
  %v754 = vpow.pop %v753
  %v755 = vmul.f32 %v645, 1.442695
  %v756 = vpow.pop %v755
  %v757 = vmul.f32 %v646, 1.442695
  %v758 = vpow.pop %v757
  %v759 = vmul.f32 %v647, 1.442695
  %v760 = vpow.pop %v759
  %v761 = vmul.f32 %v648, 1.442695
  %v762 = vpow.pop %v761
  %v763 = vmul.f32 %v649, 1.442695
  %v764 = vpow.pop %v763
  %v765 = vmul.f32 %v650, 1.442695
  %v766 = vpow.pop %v765
  %v767 = vmul.f32 %v651, 1.442695
  %v768 = vpow.pop %v767
  %v769 = vmul.f32 %v652, 1.442695
  %v770 = vpow.pop %v769
  %v771 = vmul.f32 %v653, 1.442695
  %v772 = vpow.pop %v771
  %v773 = vmul.f32 %v654, 1.442695
  %v774 = vpow.pop %v773
  %v775 = vmul.f32 %v655, 1.442695
  %v776 = vpow.pop %v775
  %v777 = vmul.f32 %v656, 1.442695
  %v778 = vpow.pop %v777
  %v779 = vmul.f32 %v657, 1.442695
  %v780 = vpow.pop %v779
  %v781 = vmul.f32 %v658, 1.442695
  %v782 = vpow.pop %v781
  %v783 = vmul.f32 %v659, 1.442695
  %v784 = vpow.pop %v783
  %v785 = vmul.f32 %v660, 1.442695
  %v786 = vpow.pop %v785
  %v787 = vmul.f32 %v661, 1.442695
  %v788 = vpow.pop %v787
  %v789 = vmul.f32 %v662, 1.442695
  %v790 = vpow.pop %v789
  %v791 = vadd.f32 %v664, 1.0
  %v792 = vadd.f32 %v666, 1.0
  %v793 = vadd.f32 %v668, 1.0
  %v794 = vadd.f32 %v670, 1.0
  %v795 = vadd.f32 %v672, 1.0
  %v796 = vadd.f32 %v674, 1.0
  %v797 = vadd.f32 %v676, 1.0
  %v798 = vadd.f32 %v678, 1.0
  %v799 = vadd.f32 %v680, 1.0
  %v800 = vadd.f32 %v682, 1.0
  %v801 = vadd.f32 %v684, 1.0
  %v802 = vadd.f32 %v686, 1.0
  %v803 = vadd.f32 %v688, 1.0
  %v804 = vadd.f32 %v690, 1.0
  %v805 = vadd.f32 %v692, 1.0
  %v806 = vadd.f32 %v694, 1.0
  %v807 = vadd.f32 %v696, 1.0
  %v808 = vadd.f32 %v698, 1.0
  %v809 = vadd.f32 %v700, 1.0
  %v810 = vadd.f32 %v702, 1.0
  %v811 = vadd.f32 %v704, 1.0
  %v812 = vadd.f32 %v706, 1.0
  %v813 = vadd.f32 %v708, 1.0
  %v814 = vadd.f32 %v710, 1.0
  %v815 = vadd.f32 %v712, 1.0
  %v816 = vadd.f32 %v714, 1.0
  %v817 = vadd.f32 %v716, 1.0
  %v818 = vadd.f32 %v718, 1.0
  %v819 = vadd.f32 %v720, 1.0
  %v820 = vadd.f32 %v722, 1.0
  %v821 = vadd.f32 %v724, 1.0
  %v822 = vadd.f32 %v726, 1.0
  %v823 = vadd.f32 %v728, 1.0
  %v824 = vadd.f32 %v730, 1.0
  %v825 = vadd.f32 %v732, 1.0
  %v826 = vadd.f32 %v734, 1.0
  %v827 = vadd.f32 %v736, 1.0
  %v828 = vadd.f32 %v738, 1.0
  %v829 = vadd.f32 %v740, 1.0
  %v830 = vadd.f32 %v742, 1.0
  %v831 = vadd.f32 %v744, 1.0
  %v832 = vadd.f32 %v746, 1.0
  %v833 = vadd.f32 %v748, 1.0
  %v834 = vadd.f32 %v750, 1.0
  %v835 = vadd.f32 %v752, 1.0
  %v836 = vadd.f32 %v754, 1.0
  %v837 = vadd.f32 %v756, 1.0
  %v838 = vadd.f32 %v758, 1.0
  %v839 = vadd.f32 %v760, 1.0
  %v840 = vadd.f32 %v762, 1.0
  %v841 = vadd.f32 %v764, 1.0
  %v842 = vadd.f32 %v766, 1.0
  %v843 = vadd.f32 %v768, 1.0
  %v844 = vadd.f32 %v770, 1.0
  %v845 = vadd.f32 %v772, 1.0
  %v846 = vadd.f32 %v774, 1.0
  %v847 = vadd.f32 %v776, 1.0
  %v848 = vadd.f32 %v778, 1.0
  %v849 = vadd.f32 %v780, 1.0
  %v850 = vadd.f32 %v782, 1.0
  %v851 = vadd.f32 %v784, 1.0
  %v852 = vadd.f32 %v786, 1.0
  %v853 = vadd.f32 %v788, 1.0
  %v854 = vadd.f32 %v790, 1.0
  %v855 = vrcp.pop %v791
  %v856 = vmul.f32 %v791, %v855
  %v857 = vsub.f32 1.0, %v856
  %v858 = vmul.f32 %v855, %v857
  %v859 = vadd.f32 %v855, %v858
  %vm860 = vweird.f32 %v791
  %vm861 = vweird.f32 %v855
  %vm862 = vmor %vm860, %vm861
  %v863 = vsel %vm862, %v855, %v859
  %v864 = vand.u32 2147483647, %v791
  %vm865 = vcmp.eq.f32.partialorder %v864, 8.507059e+37
  %v866 = vand.u32 %v791, 2147483648
  %v867 = vor.u32 1.1754944e-38, %v866
  %v868 = vsel %vm865, %v867, %v863
  %v869 = vmul.f32 1.0, %v868
  %v870 = vrcp.pop %v792
  %v871 = vmul.f32 %v792, %v870
  %v872 = vsub.f32 1.0, %v871
  %v873 = vmul.f32 %v870, %v872
  %v874 = vadd.f32 %v870, %v873
  %vm875 = vweird.f32 %v792
  %vm876 = vweird.f32 %v870
  %vm877 = vmor %vm875, %vm876
  %v878 = vsel %vm877, %v870, %v874
  %v879 = vand.u32 2147483647, %v792
  %vm880 = vcmp.eq.f32.partialorder %v879, 8.507059e+37
  %v881 = vand.u32 %v792, 2147483648
  %v882 = vor.u32 1.1754944e-38, %v881
  %v883 = vsel %vm880, %v882, %v878
  %v884 = vmul.f32 1.0, %v883
  %v885 = vrcp.pop %v793
  %v886 = vmul.f32 %v793, %v885
  %v887 = vsub.f32 1.0, %v886
  %v888 = vmul.f32 %v885, %v887
  %v889 = vadd.f32 %v885, %v888
  %vm890 = vweird.f32 %v793
  %vm891 = vweird.f32 %v885
  %vm892 = vmor %vm890, %vm891
  %v893 = vsel %vm892, %v885, %v889
  %v894 = vand.u32 2147483647, %v793
  %vm895 = vcmp.eq.f32.partialorder %v894, 8.507059e+37
  %v896 = vand.u32 %v793, 2147483648
  %v897 = vor.u32 1.1754944e-38, %v896
  %v898 = vsel %vm895, %v897, %v893
  %v899 = vmul.f32 1.0, %v898
  %v900 = vrcp.pop %v794
  %v901 = vmul.f32 %v794, %v900
  %v902 = vsub.f32 1.0, %v901
  %v903 = vmul.f32 %v900, %v902
  %v904 = vadd.f32 %v900, %v903
  %vm905 = vweird.f32 %v794
  %vm906 = vweird.f32 %v900
  %vm907 = vmor %vm905, %vm906
  %v908 = vsel %vm907, %v900, %v904
  %v909 = vand.u32 2147483647, %v794
  %vm910 = vcmp.eq.f32.partialorder %v909, 8.507059e+37
  %v911 = vand.u32 %v794, 2147483648
  %v912 = vor.u32 1.1754944e-38, %v911
  %v913 = vsel %vm910, %v912, %v908
  %v914 = vmul.f32 1.0, %v913
  %v915 = vrcp.pop %v795
  %v916 = vmul.f32 %v795, %v915
  %v917 = vsub.f32 1.0, %v916
  %v918 = vmul.f32 %v915, %v917
  %v919 = vadd.f32 %v915, %v918
  %vm920 = vweird.f32 %v795
  %vm921 = vweird.f32 %v915
  %vm922 = vmor %vm920, %vm921
  %v923 = vsel %vm922, %v915, %v919
  %v924 = vand.u32 2147483647, %v795
  %vm925 = vcmp.eq.f32.partialorder %v924, 8.507059e+37
  %v926 = vand.u32 %v795, 2147483648
  %v927 = vor.u32 1.1754944e-38, %v926
  %v928 = vsel %vm925, %v927, %v923
  %v929 = vmul.f32 1.0, %v928
  %v930 = vrcp.pop %v796
  %v931 = vmul.f32 %v796, %v930
  %v932 = vsub.f32 1.0, %v931
  %v933 = vmul.f32 %v930, %v932
  %v934 = vadd.f32 %v930, %v933
  %vm935 = vweird.f32 %v796
  %vm936 = vweird.f32 %v930
  %vm937 = vmor %vm935, %vm936
  %v938 = vsel %vm937, %v930, %v934
  %v939 = vand.u32 2147483647, %v796
  %vm940 = vcmp.eq.f32.partialorder %v939, 8.507059e+37
  %v941 = vand.u32 %v796, 2147483648
  %v942 = vor.u32 1.1754944e-38, %v941
  %v943 = vsel %vm940, %v942, %v938
  %v944 = vmul.f32 1.0, %v943
  %v945 = vrcp.pop %v797
  %v946 = vmul.f32 %v797, %v945
  %v947 = vsub.f32 1.0, %v946
  %v948 = vmul.f32 %v945, %v947
  %v949 = vadd.f32 %v945, %v948
  %vm950 = vweird.f32 %v797
  %vm951 = vweird.f32 %v945
  %vm952 = vmor %vm950, %vm951
  %v953 = vsel %vm952, %v945, %v949
  %v954 = vand.u32 2147483647, %v797
  %vm955 = vcmp.eq.f32.partialorder %v954, 8.507059e+37
  %v956 = vand.u32 %v797, 2147483648
  %v957 = vor.u32 1.1754944e-38, %v956
  %v958 = vsel %vm955, %v957, %v953
  %v959 = vmul.f32 1.0, %v958
  %v960 = vrcp.pop %v798
  %v961 = vmul.f32 %v798, %v960
  %v962 = vsub.f32 1.0, %v961
  %v963 = vmul.f32 %v960, %v962
  %v964 = vadd.f32 %v960, %v963
  %vm965 = vweird.f32 %v798
  %vm966 = vweird.f32 %v960
  %vm967 = vmor %vm965, %vm966
  %v968 = vsel %vm967, %v960, %v964
  %v969 = vand.u32 2147483647, %v798
  %vm970 = vcmp.eq.f32.partialorder %v969, 8.507059e+37
  %v971 = vand.u32 %v798, 2147483648
  %v972 = vor.u32 1.1754944e-38, %v971
  %v973 = vsel %vm970, %v972, %v968
  %v974 = vmul.f32 1.0, %v973
  %v975 = vrcp.pop %v799
  %v976 = vmul.f32 %v799, %v975
  %v977 = vsub.f32 1.0, %v976
  %v978 = vmul.f32 %v975, %v977
  %v979 = vadd.f32 %v975, %v978
  %vm980 = vweird.f32 %v799
  %vm981 = vweird.f32 %v975
  %vm982 = vmor %vm980, %vm981
  %v983 = vsel %vm982, %v975, %v979
  %v984 = vand.u32 2147483647, %v799
  %vm985 = vcmp.eq.f32.partialorder %v984, 8.507059e+37
  %v986 = vand.u32 %v799, 2147483648
  %v987 = vor.u32 1.1754944e-38, %v986
  %v988 = vsel %vm985, %v987, %v983
  %v989 = vmul.f32 1.0, %v988
  %v990 = vrcp.pop %v800
  %v991 = vmul.f32 %v800, %v990
  %v992 = vsub.f32 1.0, %v991
  %v993 = vmul.f32 %v990, %v992
  %v994 = vadd.f32 %v990, %v993
  %vm995 = vweird.f32 %v800
  %vm996 = vweird.f32 %v990
  %vm997 = vmor %vm995, %vm996
  %v998 = vsel %vm997, %v990, %v994
  %v999 = vand.u32 2147483647, %v800
  %vm1000 = vcmp.eq.f32.partialorder %v999, 8.507059e+37
  %v1001 = vand.u32 %v800, 2147483648
  %v1002 = vor.u32 1.1754944e-38, %v1001
  %v1003 = vsel %vm1000, %v1002, %v998
  %v1004 = vmul.f32 1.0, %v1003
  %v1005 = vrcp.pop %v801
  %v1006 = vmul.f32 %v801, %v1005
  %v1007 = vsub.f32 1.0, %v1006
  %v1008 = vmul.f32 %v1005, %v1007
  %v1009 = vadd.f32 %v1005, %v1008
  %vm1010 = vweird.f32 %v801
  %vm1011 = vweird.f32 %v1005
  %vm1012 = vmor %vm1010, %vm1011
  %v1013 = vsel %vm1012, %v1005, %v1009
  %v1014 = vand.u32 2147483647, %v801
  %vm1015 = vcmp.eq.f32.partialorder %v1014, 8.507059e+37
  %v1016 = vand.u32 %v801, 2147483648
  %v1017 = vor.u32 1.1754944e-38, %v1016
  %v1018 = vsel %vm1015, %v1017, %v1013
  %v1019 = vmul.f32 1.0, %v1018
  %v1020 = vrcp.pop %v802
  %v1021 = vmul.f32 %v802, %v1020
  %v1022 = vsub.f32 1.0, %v1021
  %v1023 = vmul.f32 %v1020, %v1022
  %v1024 = vadd.f32 %v1020, %v1023
  %vm1025 = vweird.f32 %v802
  %vm1026 = vweird.f32 %v1020
  %vm1027 = vmor %vm1025, %vm1026
  %v1028 = vsel %vm1027, %v1020, %v1024
  %v1029 = vand.u32 2147483647, %v802
  %vm1030 = vcmp.eq.f32.partialorder %v1029, 8.507059e+37
  %v1031 = vand.u32 %v802, 2147483648
  %v1032 = vor.u32 1.1754944e-38, %v1031
  %v1033 = vsel %vm1030, %v1032, %v1028
  %v1034 = vmul.f32 1.0, %v1033
  %v1035 = vrcp.pop %v803
  %v1036 = vmul.f32 %v803, %v1035
  %v1037 = vsub.f32 1.0, %v1036
  %v1038 = vmul.f32 %v1035, %v1037
  %v1039 = vadd.f32 %v1035, %v1038
  %vm1040 = vweird.f32 %v803
  %vm1041 = vweird.f32 %v1035
  %vm1042 = vmor %vm1040, %vm1041
  %v1043 = vsel %vm1042, %v1035, %v1039
  %v1044 = vand.u32 2147483647, %v803
  %vm1045 = vcmp.eq.f32.partialorder %v1044, 8.507059e+37
  %v1046 = vand.u32 %v803, 2147483648
  %v1047 = vor.u32 1.1754944e-38, %v1046
  %v1048 = vsel %vm1045, %v1047, %v1043
  %v1049 = vmul.f32 1.0, %v1048
  %v1050 = vrcp.pop %v804
  %v1051 = vmul.f32 %v804, %v1050
  %v1052 = vsub.f32 1.0, %v1051
  %v1053 = vmul.f32 %v1050, %v1052
  %v1054 = vadd.f32 %v1050, %v1053
  %vm1055 = vweird.f32 %v804
  %vm1056 = vweird.f32 %v1050
  %vm1057 = vmor %vm1055, %vm1056
  %v1058 = vsel %vm1057, %v1050, %v1054
  %v1059 = vand.u32 2147483647, %v804
  %vm1060 = vcmp.eq.f32.partialorder %v1059, 8.507059e+37
  %v1061 = vand.u32 %v804, 2147483648
  %v1062 = vor.u32 1.1754944e-38, %v1061
  %v1063 = vsel %vm1060, %v1062, %v1058
  %v1064 = vmul.f32 1.0, %v1063
  %v1065 = vrcp.pop %v805
  %v1066 = vmul.f32 %v805, %v1065
  %v1067 = vsub.f32 1.0, %v1066
  %v1068 = vmul.f32 %v1065, %v1067
  %v1069 = vadd.f32 %v1065, %v1068
  %vm1070 = vweird.f32 %v805
  %vm1071 = vweird.f32 %v1065
  %vm1072 = vmor %vm1070, %vm1071
  %v1073 = vsel %vm1072, %v1065, %v1069
  %v1074 = vand.u32 2147483647, %v805
  %vm1075 = vcmp.eq.f32.partialorder %v1074, 8.507059e+37
  %v1076 = vand.u32 %v805, 2147483648
  %v1077 = vor.u32 1.1754944e-38, %v1076
  %v1078 = vsel %vm1075, %v1077, %v1073
  %v1079 = vmul.f32 1.0, %v1078
  %v1080 = vrcp.pop %v806
  %v1081 = vmul.f32 %v806, %v1080
  %v1082 = vsub.f32 1.0, %v1081
  %v1083 = vmul.f32 %v1080, %v1082
  %v1084 = vadd.f32 %v1080, %v1083
  %vm1085 = vweird.f32 %v806
  %vm1086 = vweird.f32 %v1080
  %vm1087 = vmor %vm1085, %vm1086
  %v1088 = vsel %vm1087, %v1080, %v1084
  %v1089 = vand.u32 2147483647, %v806
  %vm1090 = vcmp.eq.f32.partialorder %v1089, 8.507059e+37
  %v1091 = vand.u32 %v806, 2147483648
  %v1092 = vor.u32 1.1754944e-38, %v1091
  %v1093 = vsel %vm1090, %v1092, %v1088
  %v1094 = vmul.f32 1.0, %v1093
  %v1095 = vrcp.pop %v807
  %v1096 = vmul.f32 %v807, %v1095
  %v1097 = vsub.f32 1.0, %v1096
  %v1098 = vmul.f32 %v1095, %v1097
  %v1099 = vadd.f32 %v1095, %v1098
  %vm1100 = vweird.f32 %v807
  %vm1101 = vweird.f32 %v1095
  %vm1102 = vmor %vm1100, %vm1101
  %v1103 = vsel %vm1102, %v1095, %v1099
  %v1104 = vand.u32 2147483647, %v807
  %vm1105 = vcmp.eq.f32.partialorder %v1104, 8.507059e+37
  %v1106 = vand.u32 %v807, 2147483648
  %v1107 = vor.u32 1.1754944e-38, %v1106
  %v1108 = vsel %vm1105, %v1107, %v1103
  %v1109 = vmul.f32 1.0, %v1108
  %v1110 = vrcp.pop %v808
  %v1111 = vmul.f32 %v808, %v1110
  %v1112 = vsub.f32 1.0, %v1111
  %v1113 = vmul.f32 %v1110, %v1112
  %v1114 = vadd.f32 %v1110, %v1113
  %vm1115 = vweird.f32 %v808
  %vm1116 = vweird.f32 %v1110
  %vm1117 = vmor %vm1115, %vm1116
  %v1118 = vsel %vm1117, %v1110, %v1114
  %v1119 = vand.u32 2147483647, %v808
  %vm1120 = vcmp.eq.f32.partialorder %v1119, 8.507059e+37
  %v1121 = vand.u32 %v808, 2147483648
  %v1122 = vor.u32 1.1754944e-38, %v1121
  %v1123 = vsel %vm1120, %v1122, %v1118
  %v1124 = vmul.f32 1.0, %v1123
  %v1125 = vrcp.pop %v809
  %v1126 = vmul.f32 %v809, %v1125
  %v1127 = vsub.f32 1.0, %v1126
  %v1128 = vmul.f32 %v1125, %v1127
  %v1129 = vadd.f32 %v1125, %v1128
  %vm1130 = vweird.f32 %v809
  %vm1131 = vweird.f32 %v1125
  %vm1132 = vmor %vm1130, %vm1131
  %v1133 = vsel %vm1132, %v1125, %v1129
  %v1134 = vand.u32 2147483647, %v809
  %vm1135 = vcmp.eq.f32.partialorder %v1134, 8.507059e+37
  %v1136 = vand.u32 %v809, 2147483648
  %v1137 = vor.u32 1.1754944e-38, %v1136
  %v1138 = vsel %vm1135, %v1137, %v1133
  %v1139 = vmul.f32 1.0, %v1138
  %v1140 = vrcp.pop %v810
  %v1141 = vmul.f32 %v810, %v1140
  %v1142 = vsub.f32 1.0, %v1141
  %v1143 = vmul.f32 %v1140, %v1142
  %v1144 = vadd.f32 %v1140, %v1143
  %vm1145 = vweird.f32 %v810
  %vm1146 = vweird.f32 %v1140
  %vm1147 = vmor %vm1145, %vm1146
  %v1148 = vsel %vm1147, %v1140, %v1144
  %v1149 = vand.u32 2147483647, %v810
  %vm1150 = vcmp.eq.f32.partialorder %v1149, 8.507059e+37
  %v1151 = vand.u32 %v810, 2147483648
  %v1152 = vor.u32 1.1754944e-38, %v1151
  %v1153 = vsel %vm1150, %v1152, %v1148
  %v1154 = vmul.f32 1.0, %v1153
  %v1155 = vrcp.pop %v811
  %v1156 = vmul.f32 %v811, %v1155
  %v1157 = vsub.f32 1.0, %v1156
  %v1158 = vmul.f32 %v1155, %v1157
  %v1159 = vadd.f32 %v1155, %v1158
  %vm1160 = vweird.f32 %v811
  %vm1161 = vweird.f32 %v1155
  %vm1162 = vmor %vm1160, %vm1161
  %v1163 = vsel %vm1162, %v1155, %v1159
  %v1164 = vand.u32 2147483647, %v811
  %vm1165 = vcmp.eq.f32.partialorder %v1164, 8.507059e+37
  %v1166 = vand.u32 %v811, 2147483648
  %v1167 = vor.u32 1.1754944e-38, %v1166
  %v1168 = vsel %vm1165, %v1167, %v1163
  %v1169 = vmul.f32 1.0, %v1168
  %v1170 = vrcp.pop %v812
  %v1171 = vmul.f32 %v812, %v1170
  %v1172 = vsub.f32 1.0, %v1171
  %v1173 = vmul.f32 %v1170, %v1172
  %v1174 = vadd.f32 %v1170, %v1173
  %vm1175 = vweird.f32 %v812
  %vm1176 = vweird.f32 %v1170
  %vm1177 = vmor %vm1175, %vm1176
  %v1178 = vsel %vm1177, %v1170, %v1174
  %v1179 = vand.u32 2147483647, %v812
  %vm1180 = vcmp.eq.f32.partialorder %v1179, 8.507059e+37
  %v1181 = vand.u32 %v812, 2147483648
  %v1182 = vor.u32 1.1754944e-38, %v1181
  %v1183 = vsel %vm1180, %v1182, %v1178
  %v1184 = vmul.f32 1.0, %v1183
  %v1185 = vrcp.pop %v813
  %v1186 = vmul.f32 %v813, %v1185
  %v1187 = vsub.f32 1.0, %v1186
  %v1188 = vmul.f32 %v1185, %v1187
  %v1189 = vadd.f32 %v1185, %v1188
  %vm1190 = vweird.f32 %v813
  %vm1191 = vweird.f32 %v1185
  %vm1192 = vmor %vm1190, %vm1191
  %v1193 = vsel %vm1192, %v1185, %v1189
  %v1194 = vand.u32 2147483647, %v813
  %vm1195 = vcmp.eq.f32.partialorder %v1194, 8.507059e+37
  %v1196 = vand.u32 %v813, 2147483648
  %v1197 = vor.u32 1.1754944e-38, %v1196
  %v1198 = vsel %vm1195, %v1197, %v1193
  %v1199 = vmul.f32 1.0, %v1198
  %v1200 = vrcp.pop %v814
  %v1201 = vmul.f32 %v814, %v1200
  %v1202 = vsub.f32 1.0, %v1201
  %v1203 = vmul.f32 %v1200, %v1202
  %v1204 = vadd.f32 %v1200, %v1203
  %vm1205 = vweird.f32 %v814
  %vm1206 = vweird.f32 %v1200
  %vm1207 = vmor %vm1205, %vm1206
  %v1208 = vsel %vm1207, %v1200, %v1204
  %v1209 = vand.u32 2147483647, %v814
  %vm1210 = vcmp.eq.f32.partialorder %v1209, 8.507059e+37
  %v1211 = vand.u32 %v814, 2147483648
  %v1212 = vor.u32 1.1754944e-38, %v1211
  %v1213 = vsel %vm1210, %v1212, %v1208
  %v1214 = vmul.f32 1.0, %v1213
  %v1215 = vrcp.pop %v815
  %v1216 = vmul.f32 %v815, %v1215
  %v1217 = vsub.f32 1.0, %v1216
  %v1218 = vmul.f32 %v1215, %v1217
  %v1219 = vadd.f32 %v1215, %v1218
  %vm1220 = vweird.f32 %v815
  %vm1221 = vweird.f32 %v1215
  %vm1222 = vmor %vm1220, %vm1221
  %v1223 = vsel %vm1222, %v1215, %v1219
  %v1224 = vand.u32 2147483647, %v815
  %vm1225 = vcmp.eq.f32.partialorder %v1224, 8.507059e+37
  %v1226 = vand.u32 %v815, 2147483648
  %v1227 = vor.u32 1.1754944e-38, %v1226
  %v1228 = vsel %vm1225, %v1227, %v1223
  %v1229 = vmul.f32 1.0, %v1228
  %v1230 = vrcp.pop %v816
  %v1231 = vmul.f32 %v816, %v1230
  %v1232 = vsub.f32 1.0, %v1231
  %v1233 = vmul.f32 %v1230, %v1232
  %v1234 = vadd.f32 %v1230, %v1233
  %vm1235 = vweird.f32 %v816
  %vm1236 = vweird.f32 %v1230
  %vm1237 = vmor %vm1235, %vm1236
  %v1238 = vsel %vm1237, %v1230, %v1234
  %v1239 = vand.u32 2147483647, %v816
  %vm1240 = vcmp.eq.f32.partialorder %v1239, 8.507059e+37
  %v1241 = vand.u32 %v816, 2147483648
  %v1242 = vor.u32 1.1754944e-38, %v1241
  %v1243 = vsel %vm1240, %v1242, %v1238
  %v1244 = vmul.f32 1.0, %v1243
  %v1245 = vrcp.pop %v817
  %v1246 = vmul.f32 %v817, %v1245
  %v1247 = vsub.f32 1.0, %v1246
  %v1248 = vmul.f32 %v1245, %v1247
  %v1249 = vadd.f32 %v1245, %v1248
  %vm1250 = vweird.f32 %v817
  %vm1251 = vweird.f32 %v1245
  %vm1252 = vmor %vm1250, %vm1251
  %v1253 = vsel %vm1252, %v1245, %v1249
  %v1254 = vand.u32 2147483647, %v817
  %vm1255 = vcmp.eq.f32.partialorder %v1254, 8.507059e+37
  %v1256 = vand.u32 %v817, 2147483648
  %v1257 = vor.u32 1.1754944e-38, %v1256
  %v1258 = vsel %vm1255, %v1257, %v1253
  %v1259 = vmul.f32 1.0, %v1258
  %v1260 = vrcp.pop %v818
  %v1261 = vmul.f32 %v818, %v1260
  %v1262 = vsub.f32 1.0, %v1261
  %v1263 = vmul.f32 %v1260, %v1262
  %v1264 = vadd.f32 %v1260, %v1263
  %vm1265 = vweird.f32 %v818
  %vm1266 = vweird.f32 %v1260
  %vm1267 = vmor %vm1265, %vm1266
  %v1268 = vsel %vm1267, %v1260, %v1264
  %v1269 = vand.u32 2147483647, %v818
  %vm1270 = vcmp.eq.f32.partialorder %v1269, 8.507059e+37
  %v1271 = vand.u32 %v818, 2147483648
  %v1272 = vor.u32 1.1754944e-38, %v1271
  %v1273 = vsel %vm1270, %v1272, %v1268
  %v1274 = vmul.f32 1.0, %v1273
  %v1275 = vrcp.pop %v819
  %v1276 = vmul.f32 %v819, %v1275
  %v1277 = vsub.f32 1.0, %v1276
  %v1278 = vmul.f32 %v1275, %v1277
  %v1279 = vadd.f32 %v1275, %v1278
  %vm1280 = vweird.f32 %v819
  %vm1281 = vweird.f32 %v1275
  %vm1282 = vmor %vm1280, %vm1281
  %v1283 = vsel %vm1282, %v1275, %v1279
  %v1284 = vand.u32 2147483647, %v819
  %vm1285 = vcmp.eq.f32.partialorder %v1284, 8.507059e+37
  %v1286 = vand.u32 %v819, 2147483648
  %v1287 = vor.u32 1.1754944e-38, %v1286
  %v1288 = vsel %vm1285, %v1287, %v1283
  %v1289 = vmul.f32 1.0, %v1288
  %v1290 = vrcp.pop %v820
  %v1291 = vmul.f32 %v820, %v1290
  %v1292 = vsub.f32 1.0, %v1291
  %v1293 = vmul.f32 %v1290, %v1292
  %v1294 = vadd.f32 %v1290, %v1293
  %vm1295 = vweird.f32 %v820
  %vm1296 = vweird.f32 %v1290
  %vm1297 = vmor %vm1295, %vm1296
  %v1298 = vsel %vm1297, %v1290, %v1294
  %v1299 = vand.u32 2147483647, %v820
  %vm1300 = vcmp.eq.f32.partialorder %v1299, 8.507059e+37
  %v1301 = vand.u32 %v820, 2147483648
  %v1302 = vor.u32 1.1754944e-38, %v1301
  %v1303 = vsel %vm1300, %v1302, %v1298
  %v1304 = vmul.f32 1.0, %v1303
  %v1305 = vrcp.pop %v821
  %v1306 = vmul.f32 %v821, %v1305
  %v1307 = vsub.f32 1.0, %v1306
  %v1308 = vmul.f32 %v1305, %v1307
  %v1309 = vadd.f32 %v1305, %v1308
  %vm1310 = vweird.f32 %v821
  %vm1311 = vweird.f32 %v1305
  %vm1312 = vmor %vm1310, %vm1311
  %v1313 = vsel %vm1312, %v1305, %v1309
  %v1314 = vand.u32 2147483647, %v821
  %vm1315 = vcmp.eq.f32.partialorder %v1314, 8.507059e+37
  %v1316 = vand.u32 %v821, 2147483648
  %v1317 = vor.u32 1.1754944e-38, %v1316
  %v1318 = vsel %vm1315, %v1317, %v1313
  %v1319 = vmul.f32 1.0, %v1318
  %v1320 = vrcp.pop %v822
  %v1321 = vmul.f32 %v822, %v1320
  %v1322 = vsub.f32 1.0, %v1321
  %v1323 = vmul.f32 %v1320, %v1322
  %v1324 = vadd.f32 %v1320, %v1323
  %vm1325 = vweird.f32 %v822
  %vm1326 = vweird.f32 %v1320
  %vm1327 = vmor %vm1325, %vm1326
  %v1328 = vsel %vm1327, %v1320, %v1324
  %v1329 = vand.u32 2147483647, %v822
  %vm1330 = vcmp.eq.f32.partialorder %v1329, 8.507059e+37
  %v1331 = vand.u32 %v822, 2147483648
  %v1332 = vor.u32 1.1754944e-38, %v1331
  %v1333 = vsel %vm1330, %v1332, %v1328
  %v1334 = vmul.f32 1.0, %v1333
  %v1335 = vrcp.pop %v823
  %v1336 = vmul.f32 %v823, %v1335
  %v1337 = vsub.f32 1.0, %v1336
  %v1338 = vmul.f32 %v1335, %v1337
  %v1339 = vadd.f32 %v1335, %v1338
  %vm1340 = vweird.f32 %v823
  %vm1341 = vweird.f32 %v1335
  %vm1342 = vmor %vm1340, %vm1341
  %v1343 = vsel %vm1342, %v1335, %v1339
  %v1344 = vand.u32 2147483647, %v823
  %vm1345 = vcmp.eq.f32.partialorder %v1344, 8.507059e+37
  %v1346 = vand.u32 %v823, 2147483648
  %v1347 = vor.u32 1.1754944e-38, %v1346
  %v1348 = vsel %vm1345, %v1347, %v1343
  %v1349 = vmul.f32 1.0, %v1348
  %v1350 = vrcp.pop %v824
  %v1351 = vmul.f32 %v824, %v1350
  %v1352 = vsub.f32 1.0, %v1351
  %v1353 = vmul.f32 %v1350, %v1352
  %v1354 = vadd.f32 %v1350, %v1353
  %vm1355 = vweird.f32 %v824
  %vm1356 = vweird.f32 %v1350
  %vm1357 = vmor %vm1355, %vm1356
  %v1358 = vsel %vm1357, %v1350, %v1354
  %v1359 = vand.u32 2147483647, %v824
  %vm1360 = vcmp.eq.f32.partialorder %v1359, 8.507059e+37
  %v1361 = vand.u32 %v824, 2147483648
  %v1362 = vor.u32 1.1754944e-38, %v1361
  %v1363 = vsel %vm1360, %v1362, %v1358
  %v1364 = vmul.f32 1.0, %v1363
  %v1365 = vrcp.pop %v825
  %v1366 = vmul.f32 %v825, %v1365
  %v1367 = vsub.f32 1.0, %v1366
  %v1368 = vmul.f32 %v1365, %v1367
  %v1369 = vadd.f32 %v1365, %v1368
  %vm1370 = vweird.f32 %v825
  %vm1371 = vweird.f32 %v1365
  %vm1372 = vmor %vm1370, %vm1371
  %v1373 = vsel %vm1372, %v1365, %v1369
  %v1374 = vand.u32 2147483647, %v825
  %vm1375 = vcmp.eq.f32.partialorder %v1374, 8.507059e+37
  %v1376 = vand.u32 %v825, 2147483648
  %v1377 = vor.u32 1.1754944e-38, %v1376
  %v1378 = vsel %vm1375, %v1377, %v1373
  %v1379 = vmul.f32 1.0, %v1378
  %v1380 = vrcp.pop %v826
  %v1381 = vmul.f32 %v826, %v1380
  %v1382 = vsub.f32 1.0, %v1381
  %v1383 = vmul.f32 %v1380, %v1382
  %v1384 = vadd.f32 %v1380, %v1383
  %vm1385 = vweird.f32 %v826
  %vm1386 = vweird.f32 %v1380
  %vm1387 = vmor %vm1385, %vm1386
  %v1388 = vsel %vm1387, %v1380, %v1384
  %v1389 = vand.u32 2147483647, %v826
  %vm1390 = vcmp.eq.f32.partialorder %v1389, 8.507059e+37
  %v1391 = vand.u32 %v826, 2147483648
  %v1392 = vor.u32 1.1754944e-38, %v1391
  %v1393 = vsel %vm1390, %v1392, %v1388
  %v1394 = vmul.f32 1.0, %v1393
  %v1395 = vrcp.pop %v827
  %v1396 = vmul.f32 %v827, %v1395
  %v1397 = vsub.f32 1.0, %v1396
  %v1398 = vmul.f32 %v1395, %v1397
  %v1399 = vadd.f32 %v1395, %v1398
  %vm1400 = vweird.f32 %v827
  %vm1401 = vweird.f32 %v1395
  %vm1402 = vmor %vm1400, %vm1401
  %v1403 = vsel %vm1402, %v1395, %v1399
  %v1404 = vand.u32 2147483647, %v827
  %vm1405 = vcmp.eq.f32.partialorder %v1404, 8.507059e+37
  %v1406 = vand.u32 %v827, 2147483648
  %v1407 = vor.u32 1.1754944e-38, %v1406
  %v1408 = vsel %vm1405, %v1407, %v1403
  %v1409 = vmul.f32 1.0, %v1408
  %v1410 = vrcp.pop %v828
  %v1411 = vmul.f32 %v828, %v1410
  %v1412 = vsub.f32 1.0, %v1411
  %v1413 = vmul.f32 %v1410, %v1412
  %v1414 = vadd.f32 %v1410, %v1413
  %vm1415 = vweird.f32 %v828
  %vm1416 = vweird.f32 %v1410
  %vm1417 = vmor %vm1415, %vm1416
  %v1418 = vsel %vm1417, %v1410, %v1414
  %v1419 = vand.u32 2147483647, %v828
  %vm1420 = vcmp.eq.f32.partialorder %v1419, 8.507059e+37
  %v1421 = vand.u32 %v828, 2147483648
  %v1422 = vor.u32 1.1754944e-38, %v1421
  %v1423 = vsel %vm1420, %v1422, %v1418
  %v1424 = vmul.f32 1.0, %v1423
  %v1425 = vrcp.pop %v829
  %v1426 = vmul.f32 %v829, %v1425
  %v1427 = vsub.f32 1.0, %v1426
  %v1428 = vmul.f32 %v1425, %v1427
  %v1429 = vadd.f32 %v1425, %v1428
  %vm1430 = vweird.f32 %v829
  %vm1431 = vweird.f32 %v1425
  %vm1432 = vmor %vm1430, %vm1431
  %v1433 = vsel %vm1432, %v1425, %v1429
  %v1434 = vand.u32 2147483647, %v829
  %vm1435 = vcmp.eq.f32.partialorder %v1434, 8.507059e+37
  %v1436 = vand.u32 %v829, 2147483648
  %v1437 = vor.u32 1.1754944e-38, %v1436
  %v1438 = vsel %vm1435, %v1437, %v1433
  %v1439 = vmul.f32 1.0, %v1438
  %v1440 = vrcp.pop %v830
  %v1441 = vmul.f32 %v830, %v1440
  %v1442 = vsub.f32 1.0, %v1441
  %v1443 = vmul.f32 %v1440, %v1442
  %v1444 = vadd.f32 %v1440, %v1443
  %vm1445 = vweird.f32 %v830
  %vm1446 = vweird.f32 %v1440
  %vm1447 = vmor %vm1445, %vm1446
  %v1448 = vsel %vm1447, %v1440, %v1444
  %v1449 = vand.u32 2147483647, %v830
  %vm1450 = vcmp.eq.f32.partialorder %v1449, 8.507059e+37
  %v1451 = vand.u32 %v830, 2147483648
  %v1452 = vor.u32 1.1754944e-38, %v1451
  %v1453 = vsel %vm1450, %v1452, %v1448
  %v1454 = vmul.f32 1.0, %v1453
  %v1455 = vrcp.pop %v831
  %v1456 = vmul.f32 %v831, %v1455
  %v1457 = vsub.f32 1.0, %v1456
  %v1458 = vmul.f32 %v1455, %v1457
  %v1459 = vadd.f32 %v1455, %v1458
  %vm1460 = vweird.f32 %v831
  %vm1461 = vweird.f32 %v1455
  %vm1462 = vmor %vm1460, %vm1461
  %v1463 = vsel %vm1462, %v1455, %v1459
  %v1464 = vand.u32 2147483647, %v831
  %vm1465 = vcmp.eq.f32.partialorder %v1464, 8.507059e+37
  %v1466 = vand.u32 %v831, 2147483648
  %v1467 = vor.u32 1.1754944e-38, %v1466
  %v1468 = vsel %vm1465, %v1467, %v1463
  %v1469 = vmul.f32 1.0, %v1468
  %v1470 = vrcp.pop %v832
  %v1471 = vmul.f32 %v832, %v1470
  %v1472 = vsub.f32 1.0, %v1471
  %v1473 = vmul.f32 %v1470, %v1472
  %v1474 = vadd.f32 %v1470, %v1473
  %vm1475 = vweird.f32 %v832
  %vm1476 = vweird.f32 %v1470
  %vm1477 = vmor %vm1475, %vm1476
  %v1478 = vsel %vm1477, %v1470, %v1474
  %v1479 = vand.u32 2147483647, %v832
  %vm1480 = vcmp.eq.f32.partialorder %v1479, 8.507059e+37
  %v1481 = vand.u32 %v832, 2147483648
  %v1482 = vor.u32 1.1754944e-38, %v1481
  %v1483 = vsel %vm1480, %v1482, %v1478
  %v1484 = vmul.f32 1.0, %v1483
  %v1485 = vrcp.pop %v833
  %v1486 = vmul.f32 %v833, %v1485
  %v1487 = vsub.f32 1.0, %v1486
  %v1488 = vmul.f32 %v1485, %v1487
  %v1489 = vadd.f32 %v1485, %v1488
  %vm1490 = vweird.f32 %v833
  %vm1491 = vweird.f32 %v1485
  %vm1492 = vmor %vm1490, %vm1491
  %v1493 = vsel %vm1492, %v1485, %v1489
  %v1494 = vand.u32 2147483647, %v833
  %vm1495 = vcmp.eq.f32.partialorder %v1494, 8.507059e+37
  %v1496 = vand.u32 %v833, 2147483648
  %v1497 = vor.u32 1.1754944e-38, %v1496
  %v1498 = vsel %vm1495, %v1497, %v1493
  %v1499 = vmul.f32 1.0, %v1498
  %v1500 = vrcp.pop %v834
  %v1501 = vmul.f32 %v834, %v1500
  %v1502 = vsub.f32 1.0, %v1501
  %v1503 = vmul.f32 %v1500, %v1502
  %v1504 = vadd.f32 %v1500, %v1503
  %vm1505 = vweird.f32 %v834
  %vm1506 = vweird.f32 %v1500
  %vm1507 = vmor %vm1505, %vm1506
  %v1508 = vsel %vm1507, %v1500, %v1504
  %v1509 = vand.u32 2147483647, %v834
  %vm1510 = vcmp.eq.f32.partialorder %v1509, 8.507059e+37
  %v1511 = vand.u32 %v834, 2147483648
  %v1512 = vor.u32 1.1754944e-38, %v1511
  %v1513 = vsel %vm1510, %v1512, %v1508
  %v1514 = vmul.f32 1.0, %v1513
  %v1515 = vrcp.pop %v835
  %v1516 = vmul.f32 %v835, %v1515
  %v1517 = vsub.f32 1.0, %v1516
  %v1518 = vmul.f32 %v1515, %v1517
  %v1519 = vadd.f32 %v1515, %v1518
  %vm1520 = vweird.f32 %v835
  %vm1521 = vweird.f32 %v1515
  %vm1522 = vmor %vm1520, %vm1521
  %v1523 = vsel %vm1522, %v1515, %v1519
  %v1524 = vand.u32 2147483647, %v835
  %vm1525 = vcmp.eq.f32.partialorder %v1524, 8.507059e+37
  %v1526 = vand.u32 %v835, 2147483648
  %v1527 = vor.u32 1.1754944e-38, %v1526
  %v1528 = vsel %vm1525, %v1527, %v1523
  %v1529 = vmul.f32 1.0, %v1528
  %v1530 = vrcp.pop %v836
  %v1531 = vmul.f32 %v836, %v1530
  %v1532 = vsub.f32 1.0, %v1531
  %v1533 = vmul.f32 %v1530, %v1532
  %v1534 = vadd.f32 %v1530, %v1533
  %vm1535 = vweird.f32 %v836
  %vm1536 = vweird.f32 %v1530
  %vm1537 = vmor %vm1535, %vm1536
  %v1538 = vsel %vm1537, %v1530, %v1534
  %v1539 = vand.u32 2147483647, %v836
  %vm1540 = vcmp.eq.f32.partialorder %v1539, 8.507059e+37
  %v1541 = vand.u32 %v836, 2147483648
  %v1542 = vor.u32 1.1754944e-38, %v1541
  %v1543 = vsel %vm1540, %v1542, %v1538
  %v1544 = vmul.f32 1.0, %v1543
  %v1545 = vrcp.pop %v837
  %v1546 = vmul.f32 %v837, %v1545
  %v1547 = vsub.f32 1.0, %v1546
  %v1548 = vmul.f32 %v1545, %v1547
  %v1549 = vadd.f32 %v1545, %v1548
  %vm1550 = vweird.f32 %v837
  %vm1551 = vweird.f32 %v1545
  %vm1552 = vmor %vm1550, %vm1551
  %v1553 = vsel %vm1552, %v1545, %v1549
  %v1554 = vand.u32 2147483647, %v837
  %vm1555 = vcmp.eq.f32.partialorder %v1554, 8.507059e+37
  %v1556 = vand.u32 %v837, 2147483648
  %v1557 = vor.u32 1.1754944e-38, %v1556
  %v1558 = vsel %vm1555, %v1557, %v1553
  %v1559 = vmul.f32 1.0, %v1558
  %v1560 = vrcp.pop %v838
  %v1561 = vmul.f32 %v838, %v1560
  %v1562 = vsub.f32 1.0, %v1561
  %v1563 = vmul.f32 %v1560, %v1562
  %v1564 = vadd.f32 %v1560, %v1563
  %vm1565 = vweird.f32 %v838
  %vm1566 = vweird.f32 %v1560
  %vm1567 = vmor %vm1565, %vm1566
  %v1568 = vsel %vm1567, %v1560, %v1564
  %v1569 = vand.u32 2147483647, %v838
  %vm1570 = vcmp.eq.f32.partialorder %v1569, 8.507059e+37
  %v1571 = vand.u32 %v838, 2147483648
  %v1572 = vor.u32 1.1754944e-38, %v1571
  %v1573 = vsel %vm1570, %v1572, %v1568
  %v1574 = vmul.f32 1.0, %v1573
  %v1575 = vrcp.pop %v839
  %v1576 = vmul.f32 %v839, %v1575
  %v1577 = vsub.f32 1.0, %v1576
  %v1578 = vmul.f32 %v1575, %v1577
  %v1579 = vadd.f32 %v1575, %v1578
  %vm1580 = vweird.f32 %v839
  %vm1581 = vweird.f32 %v1575
  %vm1582 = vmor %vm1580, %vm1581
  %v1583 = vsel %vm1582, %v1575, %v1579
  %v1584 = vand.u32 2147483647, %v839
  %vm1585 = vcmp.eq.f32.partialorder %v1584, 8.507059e+37
  %v1586 = vand.u32 %v839, 2147483648
  %v1587 = vor.u32 1.1754944e-38, %v1586
  %v1588 = vsel %vm1585, %v1587, %v1583
  %v1589 = vmul.f32 1.0, %v1588
  %v1590 = vrcp.pop %v840
  %v1591 = vmul.f32 %v840, %v1590
  %v1592 = vsub.f32 1.0, %v1591
  %v1593 = vmul.f32 %v1590, %v1592
  %v1594 = vadd.f32 %v1590, %v1593
  %vm1595 = vweird.f32 %v840
  %vm1596 = vweird.f32 %v1590
  %vm1597 = vmor %vm1595, %vm1596
  %v1598 = vsel %vm1597, %v1590, %v1594
  %v1599 = vand.u32 2147483647, %v840
  %vm1600 = vcmp.eq.f32.partialorder %v1599, 8.507059e+37
  %v1601 = vand.u32 %v840, 2147483648
  %v1602 = vor.u32 1.1754944e-38, %v1601
  %v1603 = vsel %vm1600, %v1602, %v1598
  %v1604 = vmul.f32 1.0, %v1603
  %v1605 = vrcp.pop %v841
  %v1606 = vmul.f32 %v841, %v1605
  %v1607 = vsub.f32 1.0, %v1606
  %v1608 = vmul.f32 %v1605, %v1607
  %v1609 = vadd.f32 %v1605, %v1608
  %vm1610 = vweird.f32 %v841
  %vm1611 = vweird.f32 %v1605
  %vm1612 = vmor %vm1610, %vm1611
  %v1613 = vsel %vm1612, %v1605, %v1609
  %v1614 = vand.u32 2147483647, %v841
  %vm1615 = vcmp.eq.f32.partialorder %v1614, 8.507059e+37
  %v1616 = vand.u32 %v841, 2147483648
  %v1617 = vor.u32 1.1754944e-38, %v1616
  %v1618 = vsel %vm1615, %v1617, %v1613
  %v1619 = vmul.f32 1.0, %v1618
  %v1620 = vrcp.pop %v842
  %v1621 = vmul.f32 %v842, %v1620
  %v1622 = vsub.f32 1.0, %v1621
  %v1623 = vmul.f32 %v1620, %v1622
  %v1624 = vadd.f32 %v1620, %v1623
  %vm1625 = vweird.f32 %v842
  %vm1626 = vweird.f32 %v1620
  %vm1627 = vmor %vm1625, %vm1626
  %v1628 = vsel %vm1627, %v1620, %v1624
  %v1629 = vand.u32 2147483647, %v842
  %vm1630 = vcmp.eq.f32.partialorder %v1629, 8.507059e+37
  %v1631 = vand.u32 %v842, 2147483648
  %v1632 = vor.u32 1.1754944e-38, %v1631
  %v1633 = vsel %vm1630, %v1632, %v1628
  %v1634 = vmul.f32 1.0, %v1633
  %v1635 = vrcp.pop %v843
  %v1636 = vmul.f32 %v843, %v1635
  %v1637 = vsub.f32 1.0, %v1636
  %v1638 = vmul.f32 %v1635, %v1637
  %v1639 = vadd.f32 %v1635, %v1638
  %vm1640 = vweird.f32 %v843
  %vm1641 = vweird.f32 %v1635
  %vm1642 = vmor %vm1640, %vm1641
  %v1643 = vsel %vm1642, %v1635, %v1639
  %v1644 = vand.u32 2147483647, %v843
  %vm1645 = vcmp.eq.f32.partialorder %v1644, 8.507059e+37
  %v1646 = vand.u32 %v843, 2147483648
  %v1647 = vor.u32 1.1754944e-38, %v1646
  %v1648 = vsel %vm1645, %v1647, %v1643
  %v1649 = vmul.f32 1.0, %v1648
  %v1650 = vrcp.pop %v844
  %v1651 = vmul.f32 %v844, %v1650
  %v1652 = vsub.f32 1.0, %v1651
  %v1653 = vmul.f32 %v1650, %v1652
  %v1654 = vadd.f32 %v1650, %v1653
  %vm1655 = vweird.f32 %v844
  %vm1656 = vweird.f32 %v1650
  %vm1657 = vmor %vm1655, %vm1656
  %v1658 = vsel %vm1657, %v1650, %v1654
  %v1659 = vand.u32 2147483647, %v844
  %vm1660 = vcmp.eq.f32.partialorder %v1659, 8.507059e+37
  %v1661 = vand.u32 %v844, 2147483648
  %v1662 = vor.u32 1.1754944e-38, %v1661
  %v1663 = vsel %vm1660, %v1662, %v1658
  %v1664 = vmul.f32 1.0, %v1663
  %v1665 = vrcp.pop %v845
  %v1666 = vmul.f32 %v845, %v1665
  %v1667 = vsub.f32 1.0, %v1666
  %v1668 = vmul.f32 %v1665, %v1667
  %v1669 = vadd.f32 %v1665, %v1668
  %vm1670 = vweird.f32 %v845
  %vm1671 = vweird.f32 %v1665
  %vm1672 = vmor %vm1670, %vm1671
  %v1673 = vsel %vm1672, %v1665, %v1669
  %v1674 = vand.u32 2147483647, %v845
  %vm1675 = vcmp.eq.f32.partialorder %v1674, 8.507059e+37
  %v1676 = vand.u32 %v845, 2147483648
  %v1677 = vor.u32 1.1754944e-38, %v1676
  %v1678 = vsel %vm1675, %v1677, %v1673
  %v1679 = vmul.f32 1.0, %v1678
  %v1680 = vrcp.pop %v846
  %v1681 = vmul.f32 %v846, %v1680
  %v1682 = vsub.f32 1.0, %v1681
  %v1683 = vmul.f32 %v1680, %v1682
  %v1684 = vadd.f32 %v1680, %v1683
  %vm1685 = vweird.f32 %v846
  %vm1686 = vweird.f32 %v1680
  %vm1687 = vmor %vm1685, %vm1686
  %v1688 = vsel %vm1687, %v1680, %v1684
  %v1689 = vand.u32 2147483647, %v846
  %vm1690 = vcmp.eq.f32.partialorder %v1689, 8.507059e+37
  %v1691 = vand.u32 %v846, 2147483648
  %v1692 = vor.u32 1.1754944e-38, %v1691
  %v1693 = vsel %vm1690, %v1692, %v1688
  %v1694 = vmul.f32 1.0, %v1693
  %v1695 = vrcp.pop %v847
  %v1696 = vmul.f32 %v847, %v1695
  %v1697 = vsub.f32 1.0, %v1696
  %v1698 = vmul.f32 %v1695, %v1697
  %v1699 = vadd.f32 %v1695, %v1698
  %vm1700 = vweird.f32 %v847
  %vm1701 = vweird.f32 %v1695
  %vm1702 = vmor %vm1700, %vm1701
  %v1703 = vsel %vm1702, %v1695, %v1699
  %v1704 = vand.u32 2147483647, %v847
  %vm1705 = vcmp.eq.f32.partialorder %v1704, 8.507059e+37
  %v1706 = vand.u32 %v847, 2147483648
  %v1707 = vor.u32 1.1754944e-38, %v1706
  %v1708 = vsel %vm1705, %v1707, %v1703
  %v1709 = vmul.f32 1.0, %v1708
  %v1710 = vrcp.pop %v848
  %v1711 = vmul.f32 %v848, %v1710
  %v1712 = vsub.f32 1.0, %v1711
  %v1713 = vmul.f32 %v1710, %v1712
  %v1714 = vadd.f32 %v1710, %v1713
  %vm1715 = vweird.f32 %v848
  %vm1716 = vweird.f32 %v1710
  %vm1717 = vmor %vm1715, %vm1716
  %v1718 = vsel %vm1717, %v1710, %v1714
  %v1719 = vand.u32 2147483647, %v848
  %vm1720 = vcmp.eq.f32.partialorder %v1719, 8.507059e+37
  %v1721 = vand.u32 %v848, 2147483648
  %v1722 = vor.u32 1.1754944e-38, %v1721
  %v1723 = vsel %vm1720, %v1722, %v1718
  %v1724 = vmul.f32 1.0, %v1723
  %v1725 = vrcp.pop %v849
  %v1726 = vmul.f32 %v849, %v1725
  %v1727 = vsub.f32 1.0, %v1726
  %v1728 = vmul.f32 %v1725, %v1727
  %v1729 = vadd.f32 %v1725, %v1728
  %vm1730 = vweird.f32 %v849
  %vm1731 = vweird.f32 %v1725
  %vm1732 = vmor %vm1730, %vm1731
  %v1733 = vsel %vm1732, %v1725, %v1729
  %v1734 = vand.u32 2147483647, %v849
  %vm1735 = vcmp.eq.f32.partialorder %v1734, 8.507059e+37
  %v1736 = vand.u32 %v849, 2147483648
  %v1737 = vor.u32 1.1754944e-38, %v1736
  %v1738 = vsel %vm1735, %v1737, %v1733
  %v1739 = vmul.f32 1.0, %v1738
  %v1740 = vrcp.pop %v850
  %v1741 = vmul.f32 %v850, %v1740
  %v1742 = vsub.f32 1.0, %v1741
  %v1743 = vmul.f32 %v1740, %v1742
  %v1744 = vadd.f32 %v1740, %v1743
  %vm1745 = vweird.f32 %v850
  %vm1746 = vweird.f32 %v1740
  %vm1747 = vmor %vm1745, %vm1746
  %v1748 = vsel %vm1747, %v1740, %v1744
  %v1749 = vand.u32 2147483647, %v850
  %vm1750 = vcmp.eq.f32.partialorder %v1749, 8.507059e+37
  %v1751 = vand.u32 %v850, 2147483648
  %v1752 = vor.u32 1.1754944e-38, %v1751
  %v1753 = vsel %vm1750, %v1752, %v1748
  %v1754 = vmul.f32 1.0, %v1753
  %v1755 = vrcp.pop %v851
  %v1756 = vmul.f32 %v851, %v1755
  %v1757 = vsub.f32 1.0, %v1756
  %v1758 = vmul.f32 %v1755, %v1757
  %v1759 = vadd.f32 %v1755, %v1758
  %vm1760 = vweird.f32 %v851
  %vm1761 = vweird.f32 %v1755
  %vm1762 = vmor %vm1760, %vm1761
  %v1763 = vsel %vm1762, %v1755, %v1759
  %v1764 = vand.u32 2147483647, %v851
  %vm1765 = vcmp.eq.f32.partialorder %v1764, 8.507059e+37
  %v1766 = vand.u32 %v851, 2147483648
  %v1767 = vor.u32 1.1754944e-38, %v1766
  %v1768 = vsel %vm1765, %v1767, %v1763
  %v1769 = vmul.f32 1.0, %v1768
  %v1770 = vrcp.pop %v852
  %v1771 = vmul.f32 %v852, %v1770
  %v1772 = vsub.f32 1.0, %v1771
  %v1773 = vmul.f32 %v1770, %v1772
  %v1774 = vadd.f32 %v1770, %v1773
  %vm1775 = vweird.f32 %v852
  %vm1776 = vweird.f32 %v1770
  %vm1777 = vmor %vm1775, %vm1776
  %v1778 = vsel %vm1777, %v1770, %v1774
  %v1779 = vand.u32 2147483647, %v852
  %vm1780 = vcmp.eq.f32.partialorder %v1779, 8.507059e+37
  %v1781 = vand.u32 %v852, 2147483648
  %v1782 = vor.u32 1.1754944e-38, %v1781
  %v1783 = vsel %vm1780, %v1782, %v1778
  %v1784 = vmul.f32 1.0, %v1783
  %v1785 = vrcp.pop %v853
  %v1786 = vmul.f32 %v853, %v1785
  %v1787 = vsub.f32 1.0, %v1786
  %v1788 = vmul.f32 %v1785, %v1787
  %v1789 = vadd.f32 %v1785, %v1788
  %vm1790 = vweird.f32 %v853
  %vm1791 = vweird.f32 %v1785
  %vm1792 = vmor %vm1790, %vm1791
  %v1793 = vsel %vm1792, %v1785, %v1789
  %v1794 = vand.u32 2147483647, %v853
  %vm1795 = vcmp.eq.f32.partialorder %v1794, 8.507059e+37
  %v1796 = vand.u32 %v853, 2147483648
  %v1797 = vor.u32 1.1754944e-38, %v1796
  %v1798 = vsel %vm1795, %v1797, %v1793
  %v1799 = vmul.f32 1.0, %v1798
  %v1800 = vrcp.pop %v854
  %v1801 = vmul.f32 %v854, %v1800
  %v1802 = vsub.f32 1.0, %v1801
  %v1803 = vmul.f32 %v1800, %v1802
  %v1804 = vadd.f32 %v1800, %v1803
  %vm1805 = vweird.f32 %v854
  %vm1806 = vweird.f32 %v1800
  %vm1807 = vmor %vm1805, %vm1806
  %v1808 = vsel %vm1807, %v1800, %v1804
  %v1809 = vand.u32 2147483647, %v854
  %vm1810 = vcmp.eq.f32.partialorder %v1809, 8.507059e+37
  %v1811 = vand.u32 %v854, 2147483648
  %v1812 = vor.u32 1.1754944e-38, %v1811
  %v1813 = vsel %vm1810, %v1812, %v1808
  %v1814 = vmul.f32 1.0, %v1813
  %v1815 = vmul.f32 %v266, %v869
  %v1816 = vmul.f32 %v268, %v884
  %v1817 = vmul.f32 %v271, %v899
  %v1818 = vmul.f32 %v273, %v914
  %v1819 = vmul.f32 %v276, %v929
  %v1820 = vmul.f32 %v278, %v944
  %v1821 = vmul.f32 %v281, %v959
  %v1822 = vmul.f32 %v283, %v974
  %v1823 = vmul.f32 %v286, %v989
  %v1824 = vmul.f32 %v288, %v1004
  %v1825 = vmul.f32 %v291, %v1019
  %v1826 = vmul.f32 %v293, %v1034
  %v1827 = vmul.f32 %v296, %v1049
  %v1828 = vmul.f32 %v298, %v1064
  %v1829 = vmul.f32 %v301, %v1079
  %v1830 = vmul.f32 %v303, %v1094
  %v1831 = vmul.f32 %v306, %v1109
  %v1832 = vmul.f32 %v308, %v1124
  %v1833 = vmul.f32 %v311, %v1139
  %v1834 = vmul.f32 %v313, %v1154
  %v1835 = vmul.f32 %v316, %v1169
  %v1836 = vmul.f32 %v318, %v1184
  %v1837 = vmul.f32 %v321, %v1199
  %v1838 = vmul.f32 %v323, %v1214
  %v1839 = vmul.f32 %v326, %v1229
  %v1840 = vmul.f32 %v328, %v1244
  %v1841 = vmul.f32 %v331, %v1259
  %v1842 = vmul.f32 %v333, %v1274
  %v1843 = vmul.f32 %v336, %v1289
  %v1844 = vmul.f32 %v338, %v1304
  %v1845 = vmul.f32 %v341, %v1319
  %v1846 = vmul.f32 %v343, %v1334
  %v1847 = vmul.f32 %v346, %v1349
  %v1848 = vmul.f32 %v348, %v1364
  %v1849 = vmul.f32 %v351, %v1379
  %v1850 = vmul.f32 %v353, %v1394
  %v1851 = vmul.f32 %v356, %v1409
  %v1852 = vmul.f32 %v358, %v1424
  %v1853 = vmul.f32 %v361, %v1439
  %v1854 = vmul.f32 %v363, %v1454
  %v1855 = vmul.f32 %v366, %v1469
  %v1856 = vmul.f32 %v368, %v1484
  %v1857 = vmul.f32 %v371, %v1499
  %v1858 = vmul.f32 %v373, %v1514
  %v1859 = vmul.f32 %v376, %v1529
  %v1860 = vmul.f32 %v378, %v1544
  %v1861 = vmul.f32 %v381, %v1559
  %v1862 = vmul.f32 %v383, %v1574
  %v1863 = vmul.f32 %v386, %v1589
  %v1864 = vmul.f32 %v388, %v1604
  %v1865 = vmul.f32 %v391, %v1619
  %v1866 = vmul.f32 %v393, %v1634
  %v1867 = vmul.f32 %v396, %v1649
  %v1868 = vmul.f32 %v398, %v1664
  %v1869 = vmul.f32 %v401, %v1679
  %v1870 = vmul.f32 %v403, %v1694
  %v1871 = vmul.f32 %v406, %v1709
  %v1872 = vmul.f32 %v408, %v1724
  %v1873 = vmul.f32 %v411, %v1739
  %v1874 = vmul.f32 %v413, %v1754
  %v1875 = vmul.f32 %v416, %v1769
  %v1876 = vmul.f32 %v418, %v1784
  %v1877 = vmul.f32 %v421, %v1799
  %v1878 = vmul.f32 %v423, %v1814
  %v1879 = vld [vmem:[%s6] sm:$0xff]
  %v1880 = vld [vmem:[%s6 + $0x8] sm:$0xff]
  %v1881 = vld [vmem:[%s7] sm:$0x1]
  %v1882 = vld [vmem:[%s8] sm:$0xff]
  %v1883 = vld [vmem:[%s8 + $0x8] sm:$0xff]
  %v1884 = vld [vmem:[%s9] sm:$0x1]
  %v1885 = vpack.c.bf16 %v1816, %v1815
  %v1886 = vpack.c.bf16 %v1818, %v1817
  %v1887 = vpack.c.bf16 %v1820, %v1819
  %v1888 = vpack.c.bf16 %v1822, %v1821
  %v1889 = vpack.c.bf16 %v1824, %v1823
  %v1890 = vpack.c.bf16 %v1826, %v1825
  %v1891 = vpack.c.bf16 %v1828, %v1827
  %v1892 = vpack.c.bf16 %v1830, %v1829
  %v1893 = vpack.c.bf16 %v1832, %v1831
  %v1894 = vpack.c.bf16 %v1834, %v1833
  %v1895 = vpack.c.bf16 %v1836, %v1835
  %v1896 = vpack.c.bf16 %v1838, %v1837
  %v1897 = vpack.c.bf16 %v1840, %v1839
  %v1898 = vpack.c.bf16 %v1842, %v1841
  %v1899 = vpack.c.bf16 %v1844, %v1843
  %v1900 = vpack.c.bf16 %v1846, %v1845
  %v1901 = vpack.c.bf16 %v1848, %v1847
  %v1902 = vpack.c.bf16 %v1850, %v1849
  %v1903 = vpack.c.bf16 %v1852, %v1851
  %v1904 = vpack.c.bf16 %v1854, %v1853
  %v1905 = vpack.c.bf16 %v1856, %v1855
  %v1906 = vpack.c.bf16 %v1858, %v1857
  %v1907 = vpack.c.bf16 %v1860, %v1859
  %v1908 = vpack.c.bf16 %v1862, %v1861
  %v1909 = vpack.c.bf16 %v1864, %v1863
  %v1910 = vpack.c.bf16 %v1866, %v1865
  %v1911 = vpack.c.bf16 %v1868, %v1867
  %v1912 = vpack.c.bf16 %v1870, %v1869
  %v1913 = vpack.c.bf16 %v1872, %v1871
  %v1914 = vpack.c.bf16 %v1874, %v1873
  %v1915 = vpack.c.bf16 %v1876, %v1875
  %v1916 = vpack.c.bf16 %v1878, %v1877
  %v1917 = vpack.c.bf16 %v1880, %v1879
  %v1919 = vperm.slane %v1881, 0
  %vm1921 = vcmask 130048
  %v1923 = vsel %vm1921, %v1885, 0
  %v1926 = vsel %vm1921, %v1886, 0
  %v1929 = vsel %vm1921, %v1887, 0
  %v1932 = vsel %vm1921, %v1888, 0
  %v1935 = vsel %vm1921, %v1889, 0
  %v1938 = vsel %vm1921, %v1890, 0
  %v1941 = vsel %vm1921, %v1891, 0
  %v1944 = vsel %vm1921, %v1892, 0
  %v1947 = vsel %vm1921, %v1893, 0
  %v1950 = vsel %vm1921, %v1894, 0
  %v1953 = vsel %vm1921, %v1895, 0
  %v1956 = vsel %vm1921, %v1896, 0
  %v1959 = vsel %vm1921, %v1897, 0
  %v1962 = vsel %vm1921, %v1898, 0
  %v1965 = vsel %vm1921, %v1899, 0
  %v1968 = vsel %vm1921, %v1900, 0
  %v1971 = vsel %vm1921, %v1901, 0
  %v1974 = vsel %vm1921, %v1902, 0
  %v1977 = vsel %vm1921, %v1903, 0
  %v1980 = vsel %vm1921, %v1904, 0
  %v1983 = vsel %vm1921, %v1905, 0
  %v1986 = vsel %vm1921, %v1906, 0
  %v1989 = vsel %vm1921, %v1907, 0
  %v1992 = vsel %vm1921, %v1908, 0
  %v1995 = vsel %vm1921, %v1909, 0
  %v1998 = vsel %vm1921, %v1910, 0
  %v2001 = vsel %vm1921, %v1911, 0
  %v2004 = vsel %vm1921, %v1912, 0
  %v2007 = vsel %vm1921, %v1913, 0
  %v2010 = vsel %vm1921, %v1914, 0
  %v2013 = vsel %vm1921, %v1915, 0
  %v2016 = vsel %vm1921, %v1916, 0
  %2018 = vmatpush.bf16.msra.mxu0 0
  %2019 = vmatpush.bf16.msra.mxu0 0
  %2020 = vmatpush.bf16.msra.mxu0 0
  %2021 = vmatpush.bf16.msra.mxu0 0
  %2022 = vmatpush.bf16.msra.mxu0 0
  %2023 = vmatpush.bf16.msra.mxu0 0
  %2024 = vmatpush.bf16.msra.mxu0 0
  %2025 = vmatpush.bf16.msra.mxu0 %v1917
  %2026 = vmatmul.bf16.gmra.mxu0 %v1923
  %v2027 = vpop.f32.mrf.mxu0
  %v2028 = vadd.f32 %v1919, %v2027
  %v2029 = vpop.f32.mrf.mxu0
  %v2030 = vadd.f32 %v1919, %v2029
  %2031 = vmatmul.bf16.gmra.mxu0 %v1926
  %v2032 = vpop.f32.mrf.mxu0
  %v2033 = vadd.f32 %v1919, %v2032
  %v2034 = vpop.f32.mrf.mxu0
  %v2035 = vadd.f32 %v1919, %v2034
  %2036 = vmatmul.bf16.gmra.mxu0 %v1929
  %v2037 = vpop.f32.mrf.mxu0
  %v2038 = vadd.f32 %v1919, %v2037
  %v2039 = vpop.f32.mrf.mxu0
  %v2040 = vadd.f32 %v1919, %v2039
  %2041 = vmatmul.bf16.gmra.mxu0 %v1932
  %v2042 = vpop.f32.mrf.mxu0
  %v2043 = vadd.f32 %v1919, %v2042
  %v2044 = vpop.f32.mrf.mxu0
  %v2045 = vadd.f32 %v1919, %v2044
  %2046 = vmatmul.bf16.gmra.mxu0 %v1935
  %v2047 = vpop.f32.mrf.mxu0
  %v2048 = vadd.f32 %v1919, %v2047
  %v2049 = vpop.f32.mrf.mxu0
  %v2050 = vadd.f32 %v1919, %v2049
  %2051 = vmatmul.bf16.gmra.mxu0 %v1938
  %v2052 = vpop.f32.mrf.mxu0
  %v2053 = vadd.f32 %v1919, %v2052
  %v2054 = vpop.f32.mrf.mxu0
  %v2055 = vadd.f32 %v1919, %v2054
  %2056 = vmatmul.bf16.gmra.mxu0 %v1941
  %v2057 = vpop.f32.mrf.mxu0
  %v2058 = vadd.f32 %v1919, %v2057
  %v2059 = vpop.f32.mrf.mxu0
  %v2060 = vadd.f32 %v1919, %v2059
  %2061 = vmatmul.bf16.gmra.mxu0 %v1944
  %v2062 = vpop.f32.mrf.mxu0
  %v2063 = vadd.f32 %v1919, %v2062
  %v2064 = vpop.f32.mrf.mxu0
  %v2065 = vadd.f32 %v1919, %v2064
  %2066 = vmatmul.bf16.gmra.mxu0 %v1947
  %v2067 = vpop.f32.mrf.mxu0
  %v2068 = vadd.f32 %v1919, %v2067
  %v2069 = vpop.f32.mrf.mxu0
  %v2070 = vadd.f32 %v1919, %v2069
  %2071 = vmatmul.bf16.gmra.mxu0 %v1950
  %v2072 = vpop.f32.mrf.mxu0
  %v2073 = vadd.f32 %v1919, %v2072
  %v2074 = vpop.f32.mrf.mxu0
  %v2075 = vadd.f32 %v1919, %v2074
  %2076 = vmatmul.bf16.gmra.mxu0 %v1953
  %v2077 = vpop.f32.mrf.mxu0
  %v2078 = vadd.f32 %v1919, %v2077
  %v2079 = vpop.f32.mrf.mxu0
  %v2080 = vadd.f32 %v1919, %v2079
  %2081 = vmatmul.bf16.gmra.mxu0 %v1956
  %v2082 = vpop.f32.mrf.mxu0
  %v2083 = vadd.f32 %v1919, %v2082
  %v2084 = vpop.f32.mrf.mxu0
  %v2085 = vadd.f32 %v1919, %v2084
  %2086 = vmatmul.bf16.gmra.mxu0 %v1959
  %v2087 = vpop.f32.mrf.mxu0
  %v2088 = vadd.f32 %v1919, %v2087
  %v2089 = vpop.f32.mrf.mxu0
  %v2090 = vadd.f32 %v1919, %v2089
  %2091 = vmatmul.bf16.gmra.mxu0 %v1962
  %v2092 = vpop.f32.mrf.mxu0
  %v2093 = vadd.f32 %v1919, %v2092
  %v2094 = vpop.f32.mrf.mxu0
  %v2095 = vadd.f32 %v1919, %v2094
  %2096 = vmatmul.bf16.gmra.mxu0 %v1965
  %v2097 = vpop.f32.mrf.mxu0
  %v2098 = vadd.f32 %v1919, %v2097
  %v2099 = vpop.f32.mrf.mxu0
  %v2100 = vadd.f32 %v1919, %v2099
  %2101 = vmatmul.bf16.gmra.mxu0 %v1968
  %v2102 = vpop.f32.mrf.mxu0
  %v2103 = vadd.f32 %v1919, %v2102
  %v2104 = vpop.f32.mrf.mxu0
  %v2105 = vadd.f32 %v1919, %v2104
  %2106 = vmatmul.bf16.gmra.mxu0 %v1971
  %v2107 = vpop.f32.mrf.mxu0
  %v2108 = vadd.f32 %v1919, %v2107
  %v2109 = vpop.f32.mrf.mxu0
  %v2110 = vadd.f32 %v1919, %v2109
  %2111 = vmatmul.bf16.gmra.mxu0 %v1974
  %v2112 = vpop.f32.mrf.mxu0
  %v2113 = vadd.f32 %v1919, %v2112
  %v2114 = vpop.f32.mrf.mxu0
  %v2115 = vadd.f32 %v1919, %v2114
  %2116 = vmatmul.bf16.gmra.mxu0 %v1977
  %v2117 = vpop.f32.mrf.mxu0
  %v2118 = vadd.f32 %v1919, %v2117
  %v2119 = vpop.f32.mrf.mxu0
  %v2120 = vadd.f32 %v1919, %v2119
  %2121 = vmatmul.bf16.gmra.mxu0 %v1980
  %v2122 = vpop.f32.mrf.mxu0
  %v2123 = vadd.f32 %v1919, %v2122
  %v2124 = vpop.f32.mrf.mxu0
  %v2125 = vadd.f32 %v1919, %v2124
  %2126 = vmatmul.bf16.gmra.mxu0 %v1983
  %v2127 = vpop.f32.mrf.mxu0
  %v2128 = vadd.f32 %v1919, %v2127
  %v2129 = vpop.f32.mrf.mxu0
  %v2130 = vadd.f32 %v1919, %v2129
  %2131 = vmatmul.bf16.gmra.mxu0 %v1986
  %v2132 = vpop.f32.mrf.mxu0
  %v2133 = vadd.f32 %v1919, %v2132
  %v2134 = vpop.f32.mrf.mxu0
  %v2135 = vadd.f32 %v1919, %v2134
  %2136 = vmatmul.bf16.gmra.mxu0 %v1989
  %v2137 = vpop.f32.mrf.mxu0
  %v2138 = vadd.f32 %v1919, %v2137
  %v2139 = vpop.f32.mrf.mxu0
  %v2140 = vadd.f32 %v1919, %v2139
  %2141 = vmatmul.bf16.gmra.mxu0 %v1992
  %v2142 = vpop.f32.mrf.mxu0
  %v2143 = vadd.f32 %v1919, %v2142
  %v2144 = vpop.f32.mrf.mxu0
  %v2145 = vadd.f32 %v1919, %v2144
  %2146 = vmatmul.bf16.gmra.mxu0 %v1995
  %v2147 = vpop.f32.mrf.mxu0
  %v2148 = vadd.f32 %v1919, %v2147
  %v2149 = vpop.f32.mrf.mxu0
  %v2150 = vadd.f32 %v1919, %v2149
  %2151 = vmatmul.bf16.gmra.mxu0 %v1998
  %v2152 = vpop.f32.mrf.mxu0
  %v2153 = vadd.f32 %v1919, %v2152
  %v2154 = vpop.f32.mrf.mxu0
  %v2155 = vadd.f32 %v1919, %v2154
  %2156 = vmatmul.bf16.gmra.mxu0 %v2001
  %v2157 = vpop.f32.mrf.mxu0
  %v2158 = vadd.f32 %v1919, %v2157
  %v2159 = vpop.f32.mrf.mxu0
  %v2160 = vadd.f32 %v1919, %v2159
  %2161 = vmatmul.bf16.gmra.mxu0 %v2004
  %v2162 = vpop.f32.mrf.mxu0
  %v2163 = vadd.f32 %v1919, %v2162
  %v2164 = vpop.f32.mrf.mxu0
  %v2165 = vadd.f32 %v1919, %v2164
  %2166 = vmatmul.bf16.gmra.mxu0 %v2007
  %v2167 = vpop.f32.mrf.mxu0
  %v2168 = vadd.f32 %v1919, %v2167
  %v2169 = vpop.f32.mrf.mxu0
  %v2170 = vadd.f32 %v1919, %v2169
  %2171 = vmatmul.bf16.gmra.mxu0 %v2010
  %v2172 = vpop.f32.mrf.mxu0
  %v2173 = vadd.f32 %v1919, %v2172
  %v2174 = vpop.f32.mrf.mxu0
  %v2175 = vadd.f32 %v1919, %v2174
  %2176 = vmatmul.bf16.gmra.mxu0 %v2013
  %v2177 = vpop.f32.mrf.mxu0
  %v2178 = vadd.f32 %v1919, %v2177
  %v2179 = vpop.f32.mrf.mxu0
  %v2180 = vadd.f32 %v1919, %v2179
  %2181 = vmatmul.bf16.gmra.mxu0 %v2016
  %v2182 = vpop.f32.mrf.mxu0
  %v2183 = vadd.f32 %v1919, %v2182
  %v2184 = vpop.f32.mrf.mxu0
  %v2185 = vadd.f32 %v1919, %v2184
  %2186 = vdwg.mxu0
  %v2187 = vpack.c.bf16 %v1883, %v1882
  %v2189 = vperm.slane %v1884, 0
  %2191 = vmatpush.bf16.msra.mxu0 0
  %2192 = vmatpush.bf16.msra.mxu0 0
  %2193 = vmatpush.bf16.msra.mxu0 0
  %2194 = vmatpush.bf16.msra.mxu0 0
  %2195 = vmatpush.bf16.msra.mxu0 0
  %2196 = vmatpush.bf16.msra.mxu0 0
  %2197 = vmatpush.bf16.msra.mxu0 0
  %2198 = vmatpush.bf16.msra.mxu0 %v2187
  %2199 = vmatmul.bf16.gmra.mxu0 %v1923
  %v2200 = vpop.f32.mrf.mxu0
  %v2201 = vadd.f32 %v2189, %v2200
  %v2202 = vpop.f32.mrf.mxu0
  %v2203 = vadd.f32 %v2189, %v2202
  %2204 = vmatmul.bf16.gmra.mxu0 %v1926
  %v2205 = vpop.f32.mrf.mxu0
  %v2206 = vadd.f32 %v2189, %v2205
  %v2207 = vpop.f32.mrf.mxu0
  %v2208 = vadd.f32 %v2189, %v2207
  %2209 = vmatmul.bf16.gmra.mxu0 %v1929
  %v2210 = vpop.f32.mrf.mxu0
  %v2211 = vadd.f32 %v2189, %v2210
  %v2212 = vpop.f32.mrf.mxu0
  %v2213 = vadd.f32 %v2189, %v2212
  %2214 = vmatmul.bf16.gmra.mxu0 %v1932
  %v2215 = vpop.f32.mrf.mxu0
  %v2216 = vadd.f32 %v2189, %v2215
  %v2217 = vpop.f32.mrf.mxu0
  %v2218 = vadd.f32 %v2189, %v2217
  %2219 = vmatmul.bf16.gmra.mxu0 %v1935
  %v2220 = vpop.f32.mrf.mxu0
  %v2221 = vadd.f32 %v2189, %v2220
  %v2222 = vpop.f32.mrf.mxu0
  %v2223 = vadd.f32 %v2189, %v2222
  %2224 = vmatmul.bf16.gmra.mxu0 %v1938
  %v2225 = vpop.f32.mrf.mxu0
  %v2226 = vadd.f32 %v2189, %v2225
  %v2227 = vpop.f32.mrf.mxu0
  %v2228 = vadd.f32 %v2189, %v2227
  %2229 = vmatmul.bf16.gmra.mxu0 %v1941
  %v2230 = vpop.f32.mrf.mxu0
  %v2231 = vadd.f32 %v2189, %v2230
  %v2232 = vpop.f32.mrf.mxu0
  %v2233 = vadd.f32 %v2189, %v2232
  %2234 = vmatmul.bf16.gmra.mxu0 %v1944
  %v2235 = vpop.f32.mrf.mxu0
  %v2236 = vadd.f32 %v2189, %v2235
  %v2237 = vpop.f32.mrf.mxu0
  %v2238 = vadd.f32 %v2189, %v2237
  %2239 = vmatmul.bf16.gmra.mxu0 %v1947
  %v2240 = vpop.f32.mrf.mxu0
  %v2241 = vadd.f32 %v2189, %v2240
  %v2242 = vpop.f32.mrf.mxu0
  %v2243 = vadd.f32 %v2189, %v2242
  %2244 = vmatmul.bf16.gmra.mxu0 %v1950
  %v2245 = vpop.f32.mrf.mxu0
  %v2246 = vadd.f32 %v2189, %v2245
  %v2247 = vpop.f32.mrf.mxu0
  %v2248 = vadd.f32 %v2189, %v2247
  %2249 = vmatmul.bf16.gmra.mxu0 %v1953
  %v2250 = vpop.f32.mrf.mxu0
  %v2251 = vadd.f32 %v2189, %v2250
  %v2252 = vpop.f32.mrf.mxu0
  %v2253 = vadd.f32 %v2189, %v2252
  %2254 = vmatmul.bf16.gmra.mxu0 %v1956
  %v2255 = vpop.f32.mrf.mxu0
  %v2256 = vadd.f32 %v2189, %v2255
  %v2257 = vpop.f32.mrf.mxu0
  %v2258 = vadd.f32 %v2189, %v2257
  %2259 = vmatmul.bf16.gmra.mxu0 %v1959
  %v2260 = vpop.f32.mrf.mxu0
  %v2261 = vadd.f32 %v2189, %v2260
  %v2262 = vpop.f32.mrf.mxu0
  %v2263 = vadd.f32 %v2189, %v2262
  %2264 = vmatmul.bf16.gmra.mxu0 %v1962
  %v2265 = vpop.f32.mrf.mxu0
  %v2266 = vadd.f32 %v2189, %v2265
  %v2267 = vpop.f32.mrf.mxu0
  %v2268 = vadd.f32 %v2189, %v2267
  %2269 = vmatmul.bf16.gmra.mxu0 %v1965
  %v2270 = vpop.f32.mrf.mxu0
  %v2271 = vadd.f32 %v2189, %v2270
  %v2272 = vpop.f32.mrf.mxu0
  %v2273 = vadd.f32 %v2189, %v2272
  %2274 = vmatmul.bf16.gmra.mxu0 %v1968
  %v2275 = vpop.f32.mrf.mxu0
  %v2276 = vadd.f32 %v2189, %v2275
  %v2277 = vpop.f32.mrf.mxu0
  %v2278 = vadd.f32 %v2189, %v2277
  %2279 = vmatmul.bf16.gmra.mxu0 %v1971
  %v2280 = vpop.f32.mrf.mxu0
  %v2281 = vadd.f32 %v2189, %v2280
  %v2282 = vpop.f32.mrf.mxu0
  %v2283 = vadd.f32 %v2189, %v2282
  %2284 = vmatmul.bf16.gmra.mxu0 %v1974
  %v2285 = vpop.f32.mrf.mxu0
  %v2286 = vadd.f32 %v2189, %v2285
  %v2287 = vpop.f32.mrf.mxu0
  %v2288 = vadd.f32 %v2189, %v2287
  %2289 = vmatmul.bf16.gmra.mxu0 %v1977
  %v2290 = vpop.f32.mrf.mxu0
  %v2291 = vadd.f32 %v2189, %v2290
  %v2292 = vpop.f32.mrf.mxu0
  %v2293 = vadd.f32 %v2189, %v2292
  %2294 = vmatmul.bf16.gmra.mxu0 %v1980
  %v2295 = vpop.f32.mrf.mxu0
  %v2296 = vadd.f32 %v2189, %v2295
  %v2297 = vpop.f32.mrf.mxu0
  %v2298 = vadd.f32 %v2189, %v2297
  %2299 = vmatmul.bf16.gmra.mxu0 %v1983
  %v2300 = vpop.f32.mrf.mxu0
  %v2301 = vadd.f32 %v2189, %v2300
  %v2302 = vpop.f32.mrf.mxu0
  %v2303 = vadd.f32 %v2189, %v2302
  %2304 = vmatmul.bf16.gmra.mxu0 %v1986
  %v2305 = vpop.f32.mrf.mxu0
  %v2306 = vadd.f32 %v2189, %v2305
  %v2307 = vpop.f32.mrf.mxu0
  %v2308 = vadd.f32 %v2189, %v2307
  %2309 = vmatmul.bf16.gmra.mxu0 %v1989
  %v2310 = vpop.f32.mrf.mxu0
  %v2311 = vadd.f32 %v2189, %v2310
  %v2312 = vpop.f32.mrf.mxu0
  %v2313 = vadd.f32 %v2189, %v2312
  %2314 = vmatmul.bf16.gmra.mxu0 %v1992
  %v2315 = vpop.f32.mrf.mxu0
  %v2316 = vadd.f32 %v2189, %v2315
  %v2317 = vpop.f32.mrf.mxu0
  %v2318 = vadd.f32 %v2189, %v2317
  %2319 = vmatmul.bf16.gmra.mxu0 %v1995
  %v2320 = vpop.f32.mrf.mxu0
  %v2321 = vadd.f32 %v2189, %v2320
  %v2322 = vpop.f32.mrf.mxu0
  %v2323 = vadd.f32 %v2189, %v2322
  %2324 = vmatmul.bf16.gmra.mxu0 %v1998
  %v2325 = vpop.f32.mrf.mxu0
  %v2326 = vadd.f32 %v2189, %v2325
  %v2327 = vpop.f32.mrf.mxu0
  %v2328 = vadd.f32 %v2189, %v2327
  %2329 = vmatmul.bf16.gmra.mxu0 %v2001
  %v2330 = vpop.f32.mrf.mxu0
  %v2331 = vadd.f32 %v2189, %v2330
  %v2332 = vpop.f32.mrf.mxu0
  %v2333 = vadd.f32 %v2189, %v2332
  %2334 = vmatmul.bf16.gmra.mxu0 %v2004
  %v2335 = vpop.f32.mrf.mxu0
  %v2336 = vadd.f32 %v2189, %v2335
  %v2337 = vpop.f32.mrf.mxu0
  %v2338 = vadd.f32 %v2189, %v2337
  %2339 = vmatmul.bf16.gmra.mxu0 %v2007
  %v2340 = vpop.f32.mrf.mxu0
  %v2341 = vadd.f32 %v2189, %v2340
  %v2342 = vpop.f32.mrf.mxu0
  %v2343 = vadd.f32 %v2189, %v2342
  %2344 = vmatmul.bf16.gmra.mxu0 %v2010
  %v2345 = vpop.f32.mrf.mxu0
  %v2346 = vadd.f32 %v2189, %v2345
  %v2347 = vpop.f32.mrf.mxu0
  %v2348 = vadd.f32 %v2189, %v2347
  %2349 = vmatmul.bf16.gmra.mxu0 %v2013
  %v2350 = vpop.f32.mrf.mxu0
  %v2351 = vadd.f32 %v2189, %v2350
  %v2352 = vpop.f32.mrf.mxu0
  %v2353 = vadd.f32 %v2189, %v2352
  %2354 = vmatmul.bf16.gmra.mxu0 %v2016
  %v2355 = vpop.f32.mrf.mxu0
  %v2356 = vadd.f32 %v2189, %v2355
  %v2357 = vpop.f32.mrf.mxu0
  %v2358 = vadd.f32 %v2189, %v2357
  %2359 = vdwg.mxu0
  %v2360 = vsub.f32 0.0, %v2201
  %v2361 = vsub.f32 0.0, %v2203
  %v2362 = vsub.f32 0.0, %v2206
  %v2363 = vsub.f32 0.0, %v2208
  %v2364 = vsub.f32 0.0, %v2211
  %v2365 = vsub.f32 0.0, %v2213
  %v2366 = vsub.f32 0.0, %v2216
  %v2367 = vsub.f32 0.0, %v2218
  %v2368 = vsub.f32 0.0, %v2221
  %v2369 = vsub.f32 0.0, %v2223
  %v2370 = vsub.f32 0.0, %v2226
  %v2371 = vsub.f32 0.0, %v2228
  %v2372 = vsub.f32 0.0, %v2231
  %v2373 = vsub.f32 0.0, %v2233
  %v2374 = vsub.f32 0.0, %v2236
  %v2375 = vsub.f32 0.0, %v2238
  %v2376 = vsub.f32 0.0, %v2241
  %v2377 = vsub.f32 0.0, %v2243
  %v2378 = vsub.f32 0.0, %v2246
  %v2379 = vsub.f32 0.0, %v2248
  %v2380 = vsub.f32 0.0, %v2251
  %v2381 = vsub.f32 0.0, %v2253
  %v2382 = vsub.f32 0.0, %v2256
  %v2383 = vsub.f32 0.0, %v2258
  %v2384 = vsub.f32 0.0, %v2261
  %v2385 = vsub.f32 0.0, %v2263
  %v2386 = vsub.f32 0.0, %v2266
  %v2387 = vsub.f32 0.0, %v2268
  %v2388 = vsub.f32 0.0, %v2271
  %v2389 = vsub.f32 0.0, %v2273
  %v2390 = vsub.f32 0.0, %v2276
  %v2391 = vsub.f32 0.0, %v2278
  %v2392 = vsub.f32 0.0, %v2281
  %v2393 = vsub.f32 0.0, %v2283
  %v2394 = vsub.f32 0.0, %v2286
  %v2395 = vsub.f32 0.0, %v2288
  %v2396 = vsub.f32 0.0, %v2291
  %v2397 = vsub.f32 0.0, %v2293
  %v2398 = vsub.f32 0.0, %v2296
  %v2399 = vsub.f32 0.0, %v2298
  %v2400 = vsub.f32 0.0, %v2301
  %v2401 = vsub.f32 0.0, %v2303
  %v2402 = vsub.f32 0.0, %v2306
  %v2403 = vsub.f32 0.0, %v2308
  %v2404 = vsub.f32 0.0, %v2311
  %v2405 = vsub.f32 0.0, %v2313
  %v2406 = vsub.f32 0.0, %v2316
  %v2407 = vsub.f32 0.0, %v2318
  %v2408 = vsub.f32 0.0, %v2321
  %v2409 = vsub.f32 0.0, %v2323
  %v2410 = vsub.f32 0.0, %v2326
  %v2411 = vsub.f32 0.0, %v2328
  %v2412 = vsub.f32 0.0, %v2331
  %v2413 = vsub.f32 0.0, %v2333
  %v2414 = vsub.f32 0.0, %v2336
  %v2415 = vsub.f32 0.0, %v2338
  %v2416 = vsub.f32 0.0, %v2341
  %v2417 = vsub.f32 0.0, %v2343
  %v2418 = vsub.f32 0.0, %v2346
  %v2419 = vsub.f32 0.0, %v2348
  %v2420 = vsub.f32 0.0, %v2351
  %v2421 = vsub.f32 0.0, %v2353
  %v2422 = vsub.f32 0.0, %v2356
  %v2423 = vsub.f32 0.0, %v2358
  %v2424 = vmul.f32 %v2360, 1.442695
  %v2425 = vpow.pop %v2424
  %v2426 = vmul.f32 %v2361, 1.442695
  %v2427 = vpow.pop %v2426
  %v2428 = vmul.f32 %v2362, 1.442695
  %v2429 = vpow.pop %v2428
  %v2430 = vmul.f32 %v2363, 1.442695
  %v2431 = vpow.pop %v2430
  %v2432 = vmul.f32 %v2364, 1.442695
  %v2433 = vpow.pop %v2432
  %v2434 = vmul.f32 %v2365, 1.442695
  %v2435 = vpow.pop %v2434
  %v2436 = vmul.f32 %v2366, 1.442695
  %v2437 = vpow.pop %v2436
  %v2438 = vmul.f32 %v2367, 1.442695
  %v2439 = vpow.pop %v2438
  %v2440 = vmul.f32 %v2368, 1.442695
  %v2441 = vpow.pop %v2440
  %v2442 = vmul.f32 %v2369, 1.442695
  %v2443 = vpow.pop %v2442
  %v2444 = vmul.f32 %v2370, 1.442695
  %v2445 = vpow.pop %v2444
  %v2446 = vmul.f32 %v2371, 1.442695
  %v2447 = vpow.pop %v2446
  %v2448 = vmul.f32 %v2372, 1.442695
  %v2449 = vpow.pop %v2448
  %v2450 = vmul.f32 %v2373, 1.442695
  %v2451 = vpow.pop %v2450
  %v2452 = vmul.f32 %v2374, 1.442695
  %v2453 = vpow.pop %v2452
  %v2454 = vmul.f32 %v2375, 1.442695
  %v2455 = vpow.pop %v2454
  %v2456 = vmul.f32 %v2376, 1.442695
  %v2457 = vpow.pop %v2456
  %v2458 = vmul.f32 %v2377, 1.442695
  %v2459 = vpow.pop %v2458
  %v2460 = vmul.f32 %v2378, 1.442695
  %v2461 = vpow.pop %v2460
  %v2462 = vmul.f32 %v2379, 1.442695
  %v2463 = vpow.pop %v2462
  %v2464 = vmul.f32 %v2380, 1.442695
  %v2465 = vpow.pop %v2464
  %v2466 = vmul.f32 %v2381, 1.442695
  %v2467 = vpow.pop %v2466
  %v2468 = vmul.f32 %v2382, 1.442695
  %v2469 = vpow.pop %v2468
  %v2470 = vmul.f32 %v2383, 1.442695
  %v2471 = vpow.pop %v2470
  %v2472 = vmul.f32 %v2384, 1.442695
  %v2473 = vpow.pop %v2472
  %v2474 = vmul.f32 %v2385, 1.442695
  %v2475 = vpow.pop %v2474
  %v2476 = vmul.f32 %v2386, 1.442695
  %v2477 = vpow.pop %v2476
  %v2478 = vmul.f32 %v2387, 1.442695
  %v2479 = vpow.pop %v2478
  %v2480 = vmul.f32 %v2388, 1.442695
  %v2481 = vpow.pop %v2480
  %v2482 = vmul.f32 %v2389, 1.442695
  %v2483 = vpow.pop %v2482
  %v2484 = vmul.f32 %v2390, 1.442695
  %v2485 = vpow.pop %v2484
  %v2486 = vmul.f32 %v2391, 1.442695
  %v2487 = vpow.pop %v2486
  %v2488 = vmul.f32 %v2392, 1.442695
  %v2489 = vpow.pop %v2488
  %v2490 = vmul.f32 %v2393, 1.442695
  %v2491 = vpow.pop %v2490
  %v2492 = vmul.f32 %v2394, 1.442695
  %v2493 = vpow.pop %v2492
  %v2494 = vmul.f32 %v2395, 1.442695
  %v2495 = vpow.pop %v2494
  %v2496 = vmul.f32 %v2396, 1.442695
  %v2497 = vpow.pop %v2496
  %v2498 = vmul.f32 %v2397, 1.442695
  %v2499 = vpow.pop %v2498
  %v2500 = vmul.f32 %v2398, 1.442695
  %v2501 = vpow.pop %v2500
  %v2502 = vmul.f32 %v2399, 1.442695
  %v2503 = vpow.pop %v2502
  %v2504 = vmul.f32 %v2400, 1.442695
  %v2505 = vpow.pop %v2504
  %v2506 = vmul.f32 %v2401, 1.442695
  %v2507 = vpow.pop %v2506
  %v2508 = vmul.f32 %v2402, 1.442695
  %v2509 = vpow.pop %v2508
  %v2510 = vmul.f32 %v2403, 1.442695
  %v2511 = vpow.pop %v2510
  %v2512 = vmul.f32 %v2404, 1.442695
  %v2513 = vpow.pop %v2512
  %v2514 = vmul.f32 %v2405, 1.442695
  %v2515 = vpow.pop %v2514
  %v2516 = vmul.f32 %v2406, 1.442695
  %v2517 = vpow.pop %v2516
  %v2518 = vmul.f32 %v2407, 1.442695
  %v2519 = vpow.pop %v2518
  %v2520 = vmul.f32 %v2408, 1.442695
  %v2521 = vpow.pop %v2520
  %v2522 = vmul.f32 %v2409, 1.442695
  %v2523 = vpow.pop %v2522
  %v2524 = vmul.f32 %v2410, 1.442695
  %v2525 = vpow.pop %v2524
  %v2526 = vmul.f32 %v2411, 1.442695
  %v2527 = vpow.pop %v2526
  %v2528 = vmul.f32 %v2412, 1.442695
  %v2529 = vpow.pop %v2528
  %v2530 = vmul.f32 %v2413, 1.442695
  %v2531 = vpow.pop %v2530
  %v2532 = vmul.f32 %v2414, 1.442695
  %v2533 = vpow.pop %v2532
  %v2534 = vmul.f32 %v2415, 1.442695
  %v2535 = vpow.pop %v2534
  %v2536 = vmul.f32 %v2416, 1.442695
  %v2537 = vpow.pop %v2536
  %v2538 = vmul.f32 %v2417, 1.442695
  %v2539 = vpow.pop %v2538
  %v2540 = vmul.f32 %v2418, 1.442695
  %v2541 = vpow.pop %v2540
  %v2542 = vmul.f32 %v2419, 1.442695
  %v2543 = vpow.pop %v2542
  %v2544 = vmul.f32 %v2420, 1.442695
  %v2545 = vpow.pop %v2544
  %v2546 = vmul.f32 %v2421, 1.442695
  %v2547 = vpow.pop %v2546
  %v2548 = vmul.f32 %v2422, 1.442695
  %v2549 = vpow.pop %v2548
  %v2550 = vmul.f32 %v2423, 1.442695
  %v2551 = vpow.pop %v2550
  %v2552 = vadd.f32 %v2425, 1.0
  %v2553 = vadd.f32 %v2427, 1.0
  %v2554 = vadd.f32 %v2429, 1.0
  %v2555 = vadd.f32 %v2431, 1.0
  %v2556 = vadd.f32 %v2433, 1.0
  %v2557 = vadd.f32 %v2435, 1.0
  %v2558 = vadd.f32 %v2437, 1.0
  %v2559 = vadd.f32 %v2439, 1.0
  %v2560 = vadd.f32 %v2441, 1.0
  %v2561 = vadd.f32 %v2443, 1.0
  %v2562 = vadd.f32 %v2445, 1.0
  %v2563 = vadd.f32 %v2447, 1.0
  %v2564 = vadd.f32 %v2449, 1.0
  %v2565 = vadd.f32 %v2451, 1.0
  %v2566 = vadd.f32 %v2453, 1.0
  %v2567 = vadd.f32 %v2455, 1.0
  %v2568 = vadd.f32 %v2457, 1.0
  %v2569 = vadd.f32 %v2459, 1.0
  %v2570 = vadd.f32 %v2461, 1.0
  %v2571 = vadd.f32 %v2463, 1.0
  %v2572 = vadd.f32 %v2465, 1.0
  %v2573 = vadd.f32 %v2467, 1.0
  %v2574 = vadd.f32 %v2469, 1.0
  %v2575 = vadd.f32 %v2471, 1.0
  %v2576 = vadd.f32 %v2473, 1.0
  %v2577 = vadd.f32 %v2475, 1.0
  %v2578 = vadd.f32 %v2477, 1.0
  %v2579 = vadd.f32 %v2479, 1.0
  %v2580 = vadd.f32 %v2481, 1.0
  %v2581 = vadd.f32 %v2483, 1.0
  %v2582 = vadd.f32 %v2485, 1.0
  %v2583 = vadd.f32 %v2487, 1.0
  %v2584 = vadd.f32 %v2489, 1.0
  %v2585 = vadd.f32 %v2491, 1.0
  %v2586 = vadd.f32 %v2493, 1.0
  %v2587 = vadd.f32 %v2495, 1.0
  %v2588 = vadd.f32 %v2497, 1.0
  %v2589 = vadd.f32 %v2499, 1.0
  %v2590 = vadd.f32 %v2501, 1.0
  %v2591 = vadd.f32 %v2503, 1.0
  %v2592 = vadd.f32 %v2505, 1.0
  %v2593 = vadd.f32 %v2507, 1.0
  %v2594 = vadd.f32 %v2509, 1.0
  %v2595 = vadd.f32 %v2511, 1.0
  %v2596 = vadd.f32 %v2513, 1.0
  %v2597 = vadd.f32 %v2515, 1.0
  %v2598 = vadd.f32 %v2517, 1.0
  %v2599 = vadd.f32 %v2519, 1.0
  %v2600 = vadd.f32 %v2521, 1.0
  %v2601 = vadd.f32 %v2523, 1.0
  %v2602 = vadd.f32 %v2525, 1.0
  %v2603 = vadd.f32 %v2527, 1.0
  %v2604 = vadd.f32 %v2529, 1.0
  %v2605 = vadd.f32 %v2531, 1.0
  %v2606 = vadd.f32 %v2533, 1.0
  %v2607 = vadd.f32 %v2535, 1.0
  %v2608 = vadd.f32 %v2537, 1.0
  %v2609 = vadd.f32 %v2539, 1.0
  %v2610 = vadd.f32 %v2541, 1.0
  %v2611 = vadd.f32 %v2543, 1.0
  %v2612 = vadd.f32 %v2545, 1.0
  %v2613 = vadd.f32 %v2547, 1.0
  %v2614 = vadd.f32 %v2549, 1.0
  %v2615 = vadd.f32 %v2551, 1.0
  %v2616 = vrcp.pop %v2552
  %v2617 = vmul.f32 %v2552, %v2616
  %v2618 = vsub.f32 1.0, %v2617
  %v2619 = vmul.f32 %v2616, %v2618
  %v2620 = vadd.f32 %v2616, %v2619
  %vm2621 = vweird.f32 %v2552
  %vm2622 = vweird.f32 %v2616
  %vm2623 = vmor %vm2621, %vm2622
  %v2624 = vsel %vm2623, %v2616, %v2620
  %v2625 = vand.u32 2147483647, %v2552
  %vm2626 = vcmp.eq.f32.partialorder %v2625, 8.507059e+37
  %v2627 = vand.u32 %v2552, 2147483648
  %v2628 = vor.u32 1.1754944e-38, %v2627
  %v2629 = vsel %vm2626, %v2628, %v2624
  %v2630 = vmul.f32 1.0, %v2629
  %v2631 = vrcp.pop %v2553
  %v2632 = vmul.f32 %v2553, %v2631
  %v2633 = vsub.f32 1.0, %v2632
  %v2634 = vmul.f32 %v2631, %v2633
  %v2635 = vadd.f32 %v2631, %v2634
  %vm2636 = vweird.f32 %v2553
  %vm2637 = vweird.f32 %v2631
  %vm2638 = vmor %vm2636, %vm2637
  %v2639 = vsel %vm2638, %v2631, %v2635
  %v2640 = vand.u32 2147483647, %v2553
  %vm2641 = vcmp.eq.f32.partialorder %v2640, 8.507059e+37
  %v2642 = vand.u32 %v2553, 2147483648
  %v2643 = vor.u32 1.1754944e-38, %v2642
  %v2644 = vsel %vm2641, %v2643, %v2639
  %v2645 = vmul.f32 1.0, %v2644
  %v2646 = vrcp.pop %v2554
  %v2647 = vmul.f32 %v2554, %v2646
  %v2648 = vsub.f32 1.0, %v2647
  %v2649 = vmul.f32 %v2646, %v2648
  %v2650 = vadd.f32 %v2646, %v2649
  %vm2651 = vweird.f32 %v2554
  %vm2652 = vweird.f32 %v2646
  %vm2653 = vmor %vm2651, %vm2652
  %v2654 = vsel %vm2653, %v2646, %v2650
  %v2655 = vand.u32 2147483647, %v2554
  %vm2656 = vcmp.eq.f32.partialorder %v2655, 8.507059e+37
  %v2657 = vand.u32 %v2554, 2147483648
  %v2658 = vor.u32 1.1754944e-38, %v2657
  %v2659 = vsel %vm2656, %v2658, %v2654
  %v2660 = vmul.f32 1.0, %v2659
  %v2661 = vrcp.pop %v2555
  %v2662 = vmul.f32 %v2555, %v2661
  %v2663 = vsub.f32 1.0, %v2662
  %v2664 = vmul.f32 %v2661, %v2663
  %v2665 = vadd.f32 %v2661, %v2664
  %vm2666 = vweird.f32 %v2555
  %vm2667 = vweird.f32 %v2661
  %vm2668 = vmor %vm2666, %vm2667
  %v2669 = vsel %vm2668, %v2661, %v2665
  %v2670 = vand.u32 2147483647, %v2555
  %vm2671 = vcmp.eq.f32.partialorder %v2670, 8.507059e+37
  %v2672 = vand.u32 %v2555, 2147483648
  %v2673 = vor.u32 1.1754944e-38, %v2672
  %v2674 = vsel %vm2671, %v2673, %v2669
  %v2675 = vmul.f32 1.0, %v2674
  %v2676 = vrcp.pop %v2556
  %v2677 = vmul.f32 %v2556, %v2676
  %v2678 = vsub.f32 1.0, %v2677
  %v2679 = vmul.f32 %v2676, %v2678
  %v2680 = vadd.f32 %v2676, %v2679
  %vm2681 = vweird.f32 %v2556
  %vm2682 = vweird.f32 %v2676
  %vm2683 = vmor %vm2681, %vm2682
  %v2684 = vsel %vm2683, %v2676, %v2680
  %v2685 = vand.u32 2147483647, %v2556
  %vm2686 = vcmp.eq.f32.partialorder %v2685, 8.507059e+37
  %v2687 = vand.u32 %v2556, 2147483648
  %v2688 = vor.u32 1.1754944e-38, %v2687
  %v2689 = vsel %vm2686, %v2688, %v2684
  %v2690 = vmul.f32 1.0, %v2689
  %v2691 = vrcp.pop %v2557
  %v2692 = vmul.f32 %v2557, %v2691
  %v2693 = vsub.f32 1.0, %v2692
  %v2694 = vmul.f32 %v2691, %v2693
  %v2695 = vadd.f32 %v2691, %v2694
  %vm2696 = vweird.f32 %v2557
  %vm2697 = vweird.f32 %v2691
  %vm2698 = vmor %vm2696, %vm2697
  %v2699 = vsel %vm2698, %v2691, %v2695
  %v2700 = vand.u32 2147483647, %v2557
  %vm2701 = vcmp.eq.f32.partialorder %v2700, 8.507059e+37
  %v2702 = vand.u32 %v2557, 2147483648
  %v2703 = vor.u32 1.1754944e-38, %v2702
  %v2704 = vsel %vm2701, %v2703, %v2699
  %v2705 = vmul.f32 1.0, %v2704
  %v2706 = vrcp.pop %v2558
  %v2707 = vmul.f32 %v2558, %v2706
  %v2708 = vsub.f32 1.0, %v2707
  %v2709 = vmul.f32 %v2706, %v2708
  %v2710 = vadd.f32 %v2706, %v2709
  %vm2711 = vweird.f32 %v2558
  %vm2712 = vweird.f32 %v2706
  %vm2713 = vmor %vm2711, %vm2712
  %v2714 = vsel %vm2713, %v2706, %v2710
  %v2715 = vand.u32 2147483647, %v2558
  %vm2716 = vcmp.eq.f32.partialorder %v2715, 8.507059e+37
  %v2717 = vand.u32 %v2558, 2147483648
  %v2718 = vor.u32 1.1754944e-38, %v2717
  %v2719 = vsel %vm2716, %v2718, %v2714
  %v2720 = vmul.f32 1.0, %v2719
  %v2721 = vrcp.pop %v2559
  %v2722 = vmul.f32 %v2559, %v2721
  %v2723 = vsub.f32 1.0, %v2722
  %v2724 = vmul.f32 %v2721, %v2723
  %v2725 = vadd.f32 %v2721, %v2724
  %vm2726 = vweird.f32 %v2559
  %vm2727 = vweird.f32 %v2721
  %vm2728 = vmor %vm2726, %vm2727
  %v2729 = vsel %vm2728, %v2721, %v2725
  %v2730 = vand.u32 2147483647, %v2559
  %vm2731 = vcmp.eq.f32.partialorder %v2730, 8.507059e+37
  %v2732 = vand.u32 %v2559, 2147483648
  %v2733 = vor.u32 1.1754944e-38, %v2732
  %v2734 = vsel %vm2731, %v2733, %v2729
  %v2735 = vmul.f32 1.0, %v2734
  %v2736 = vrcp.pop %v2560
  %v2737 = vmul.f32 %v2560, %v2736
  %v2738 = vsub.f32 1.0, %v2737
  %v2739 = vmul.f32 %v2736, %v2738
  %v2740 = vadd.f32 %v2736, %v2739
  %vm2741 = vweird.f32 %v2560
  %vm2742 = vweird.f32 %v2736
  %vm2743 = vmor %vm2741, %vm2742
  %v2744 = vsel %vm2743, %v2736, %v2740
  %v2745 = vand.u32 2147483647, %v2560
  %vm2746 = vcmp.eq.f32.partialorder %v2745, 8.507059e+37
  %v2747 = vand.u32 %v2560, 2147483648
  %v2748 = vor.u32 1.1754944e-38, %v2747
  %v2749 = vsel %vm2746, %v2748, %v2744
  %v2750 = vmul.f32 1.0, %v2749
  %v2751 = vrcp.pop %v2561
  %v2752 = vmul.f32 %v2561, %v2751
  %v2753 = vsub.f32 1.0, %v2752
  %v2754 = vmul.f32 %v2751, %v2753
  %v2755 = vadd.f32 %v2751, %v2754
  %vm2756 = vweird.f32 %v2561
  %vm2757 = vweird.f32 %v2751
  %vm2758 = vmor %vm2756, %vm2757
  %v2759 = vsel %vm2758, %v2751, %v2755
  %v2760 = vand.u32 2147483647, %v2561
  %vm2761 = vcmp.eq.f32.partialorder %v2760, 8.507059e+37
  %v2762 = vand.u32 %v2561, 2147483648
  %v2763 = vor.u32 1.1754944e-38, %v2762
  %v2764 = vsel %vm2761, %v2763, %v2759
  %v2765 = vmul.f32 1.0, %v2764
  %v2766 = vrcp.pop %v2562
  %v2767 = vmul.f32 %v2562, %v2766
  %v2768 = vsub.f32 1.0, %v2767
  %v2769 = vmul.f32 %v2766, %v2768
  %v2770 = vadd.f32 %v2766, %v2769
  %vm2771 = vweird.f32 %v2562
  %vm2772 = vweird.f32 %v2766
  %vm2773 = vmor %vm2771, %vm2772
  %v2774 = vsel %vm2773, %v2766, %v2770
  %v2775 = vand.u32 2147483647, %v2562
  %vm2776 = vcmp.eq.f32.partialorder %v2775, 8.507059e+37
  %v2777 = vand.u32 %v2562, 2147483648
  %v2778 = vor.u32 1.1754944e-38, %v2777
  %v2779 = vsel %vm2776, %v2778, %v2774
  %v2780 = vmul.f32 1.0, %v2779
  %v2781 = vrcp.pop %v2563
  %v2782 = vmul.f32 %v2563, %v2781
  %v2783 = vsub.f32 1.0, %v2782
  %v2784 = vmul.f32 %v2781, %v2783
  %v2785 = vadd.f32 %v2781, %v2784
  %vm2786 = vweird.f32 %v2563
  %vm2787 = vweird.f32 %v2781
  %vm2788 = vmor %vm2786, %vm2787
  %v2789 = vsel %vm2788, %v2781, %v2785
  %v2790 = vand.u32 2147483647, %v2563
  %vm2791 = vcmp.eq.f32.partialorder %v2790, 8.507059e+37
  %v2792 = vand.u32 %v2563, 2147483648
  %v2793 = vor.u32 1.1754944e-38, %v2792
  %v2794 = vsel %vm2791, %v2793, %v2789
  %v2795 = vmul.f32 1.0, %v2794
  %v2796 = vrcp.pop %v2564
  %v2797 = vmul.f32 %v2564, %v2796
  %v2798 = vsub.f32 1.0, %v2797
  %v2799 = vmul.f32 %v2796, %v2798
  %v2800 = vadd.f32 %v2796, %v2799
  %vm2801 = vweird.f32 %v2564
  %vm2802 = vweird.f32 %v2796
  %vm2803 = vmor %vm2801, %vm2802
  %v2804 = vsel %vm2803, %v2796, %v2800
  %v2805 = vand.u32 2147483647, %v2564
  %vm2806 = vcmp.eq.f32.partialorder %v2805, 8.507059e+37
  %v2807 = vand.u32 %v2564, 2147483648
  %v2808 = vor.u32 1.1754944e-38, %v2807
  %v2809 = vsel %vm2806, %v2808, %v2804
  %v2810 = vmul.f32 1.0, %v2809
  %v2811 = vrcp.pop %v2565
  %v2812 = vmul.f32 %v2565, %v2811
  %v2813 = vsub.f32 1.0, %v2812
  %v2814 = vmul.f32 %v2811, %v2813
  %v2815 = vadd.f32 %v2811, %v2814
  %vm2816 = vweird.f32 %v2565
  %vm2817 = vweird.f32 %v2811
  %vm2818 = vmor %vm2816, %vm2817
  %v2819 = vsel %vm2818, %v2811, %v2815
  %v2820 = vand.u32 2147483647, %v2565
  %vm2821 = vcmp.eq.f32.partialorder %v2820, 8.507059e+37
  %v2822 = vand.u32 %v2565, 2147483648
  %v2823 = vor.u32 1.1754944e-38, %v2822
  %v2824 = vsel %vm2821, %v2823, %v2819
  %v2825 = vmul.f32 1.0, %v2824
  %v2826 = vrcp.pop %v2566
  %v2827 = vmul.f32 %v2566, %v2826
  %v2828 = vsub.f32 1.0, %v2827
  %v2829 = vmul.f32 %v2826, %v2828
  %v2830 = vadd.f32 %v2826, %v2829
  %vm2831 = vweird.f32 %v2566
  %vm2832 = vweird.f32 %v2826
  %vm2833 = vmor %vm2831, %vm2832
  %v2834 = vsel %vm2833, %v2826, %v2830
  %v2835 = vand.u32 2147483647, %v2566
  %vm2836 = vcmp.eq.f32.partialorder %v2835, 8.507059e+37
  %v2837 = vand.u32 %v2566, 2147483648
  %v2838 = vor.u32 1.1754944e-38, %v2837
  %v2839 = vsel %vm2836, %v2838, %v2834
  %v2840 = vmul.f32 1.0, %v2839
  %v2841 = vrcp.pop %v2567
  %v2842 = vmul.f32 %v2567, %v2841
  %v2843 = vsub.f32 1.0, %v2842
  %v2844 = vmul.f32 %v2841, %v2843
  %v2845 = vadd.f32 %v2841, %v2844
  %vm2846 = vweird.f32 %v2567
  %vm2847 = vweird.f32 %v2841
  %vm2848 = vmor %vm2846, %vm2847
  %v2849 = vsel %vm2848, %v2841, %v2845
  %v2850 = vand.u32 2147483647, %v2567
  %vm2851 = vcmp.eq.f32.partialorder %v2850, 8.507059e+37
  %v2852 = vand.u32 %v2567, 2147483648
  %v2853 = vor.u32 1.1754944e-38, %v2852
  %v2854 = vsel %vm2851, %v2853, %v2849
  %v2855 = vmul.f32 1.0, %v2854
  %v2856 = vrcp.pop %v2568
  %v2857 = vmul.f32 %v2568, %v2856
  %v2858 = vsub.f32 1.0, %v2857
  %v2859 = vmul.f32 %v2856, %v2858
  %v2860 = vadd.f32 %v2856, %v2859
  %vm2861 = vweird.f32 %v2568
  %vm2862 = vweird.f32 %v2856
  %vm2863 = vmor %vm2861, %vm2862
  %v2864 = vsel %vm2863, %v2856, %v2860
  %v2865 = vand.u32 2147483647, %v2568
  %vm2866 = vcmp.eq.f32.partialorder %v2865, 8.507059e+37
  %v2867 = vand.u32 %v2568, 2147483648
  %v2868 = vor.u32 1.1754944e-38, %v2867
  %v2869 = vsel %vm2866, %v2868, %v2864
  %v2870 = vmul.f32 1.0, %v2869
  %v2871 = vrcp.pop %v2569
  %v2872 = vmul.f32 %v2569, %v2871
  %v2873 = vsub.f32 1.0, %v2872
  %v2874 = vmul.f32 %v2871, %v2873
  %v2875 = vadd.f32 %v2871, %v2874
  %vm2876 = vweird.f32 %v2569
  %vm2877 = vweird.f32 %v2871
  %vm2878 = vmor %vm2876, %vm2877
  %v2879 = vsel %vm2878, %v2871, %v2875
  %v2880 = vand.u32 2147483647, %v2569
  %vm2881 = vcmp.eq.f32.partialorder %v2880, 8.507059e+37
  %v2882 = vand.u32 %v2569, 2147483648
  %v2883 = vor.u32 1.1754944e-38, %v2882
  %v2884 = vsel %vm2881, %v2883, %v2879
  %v2885 = vmul.f32 1.0, %v2884
  %v2886 = vrcp.pop %v2570
  %v2887 = vmul.f32 %v2570, %v2886
  %v2888 = vsub.f32 1.0, %v2887
  %v2889 = vmul.f32 %v2886, %v2888
  %v2890 = vadd.f32 %v2886, %v2889
  %vm2891 = vweird.f32 %v2570
  %vm2892 = vweird.f32 %v2886
  %vm2893 = vmor %vm2891, %vm2892
  %v2894 = vsel %vm2893, %v2886, %v2890
  %v2895 = vand.u32 2147483647, %v2570
  %vm2896 = vcmp.eq.f32.partialorder %v2895, 8.507059e+37
  %v2897 = vand.u32 %v2570, 2147483648
  %v2898 = vor.u32 1.1754944e-38, %v2897
  %v2899 = vsel %vm2896, %v2898, %v2894
  %v2900 = vmul.f32 1.0, %v2899
  %v2901 = vrcp.pop %v2571
  %v2902 = vmul.f32 %v2571, %v2901
  %v2903 = vsub.f32 1.0, %v2902
  %v2904 = vmul.f32 %v2901, %v2903
  %v2905 = vadd.f32 %v2901, %v2904
  %vm2906 = vweird.f32 %v2571
  %vm2907 = vweird.f32 %v2901
  %vm2908 = vmor %vm2906, %vm2907
  %v2909 = vsel %vm2908, %v2901, %v2905
  %v2910 = vand.u32 2147483647, %v2571
  %vm2911 = vcmp.eq.f32.partialorder %v2910, 8.507059e+37
  %v2912 = vand.u32 %v2571, 2147483648
  %v2913 = vor.u32 1.1754944e-38, %v2912
  %v2914 = vsel %vm2911, %v2913, %v2909
  %v2915 = vmul.f32 1.0, %v2914
  %v2916 = vrcp.pop %v2572
  %v2917 = vmul.f32 %v2572, %v2916
  %v2918 = vsub.f32 1.0, %v2917
  %v2919 = vmul.f32 %v2916, %v2918
  %v2920 = vadd.f32 %v2916, %v2919
  %vm2921 = vweird.f32 %v2572
  %vm2922 = vweird.f32 %v2916
  %vm2923 = vmor %vm2921, %vm2922
  %v2924 = vsel %vm2923, %v2916, %v2920
  %v2925 = vand.u32 2147483647, %v2572
  %vm2926 = vcmp.eq.f32.partialorder %v2925, 8.507059e+37
  %v2927 = vand.u32 %v2572, 2147483648
  %v2928 = vor.u32 1.1754944e-38, %v2927
  %v2929 = vsel %vm2926, %v2928, %v2924
  %v2930 = vmul.f32 1.0, %v2929
  %v2931 = vrcp.pop %v2573
  %v2932 = vmul.f32 %v2573, %v2931
  %v2933 = vsub.f32 1.0, %v2932
  %v2934 = vmul.f32 %v2931, %v2933
  %v2935 = vadd.f32 %v2931, %v2934
  %vm2936 = vweird.f32 %v2573
  %vm2937 = vweird.f32 %v2931
  %vm2938 = vmor %vm2936, %vm2937
  %v2939 = vsel %vm2938, %v2931, %v2935
  %v2940 = vand.u32 2147483647, %v2573
  %vm2941 = vcmp.eq.f32.partialorder %v2940, 8.507059e+37
  %v2942 = vand.u32 %v2573, 2147483648
  %v2943 = vor.u32 1.1754944e-38, %v2942
  %v2944 = vsel %vm2941, %v2943, %v2939
  %v2945 = vmul.f32 1.0, %v2944
  %v2946 = vrcp.pop %v2574
  %v2947 = vmul.f32 %v2574, %v2946
  %v2948 = vsub.f32 1.0, %v2947
  %v2949 = vmul.f32 %v2946, %v2948
  %v2950 = vadd.f32 %v2946, %v2949
  %vm2951 = vweird.f32 %v2574
  %vm2952 = vweird.f32 %v2946
  %vm2953 = vmor %vm2951, %vm2952
  %v2954 = vsel %vm2953, %v2946, %v2950
  %v2955 = vand.u32 2147483647, %v2574
  %vm2956 = vcmp.eq.f32.partialorder %v2955, 8.507059e+37
  %v2957 = vand.u32 %v2574, 2147483648
  %v2958 = vor.u32 1.1754944e-38, %v2957
  %v2959 = vsel %vm2956, %v2958, %v2954
  %v2960 = vmul.f32 1.0, %v2959
  %v2961 = vrcp.pop %v2575
  %v2962 = vmul.f32 %v2575, %v2961
  %v2963 = vsub.f32 1.0, %v2962
  %v2964 = vmul.f32 %v2961, %v2963
  %v2965 = vadd.f32 %v2961, %v2964
  %vm2966 = vweird.f32 %v2575
  %vm2967 = vweird.f32 %v2961
  %vm2968 = vmor %vm2966, %vm2967
  %v2969 = vsel %vm2968, %v2961, %v2965
  %v2970 = vand.u32 2147483647, %v2575
  %vm2971 = vcmp.eq.f32.partialorder %v2970, 8.507059e+37
  %v2972 = vand.u32 %v2575, 2147483648
  %v2973 = vor.u32 1.1754944e-38, %v2972
  %v2974 = vsel %vm2971, %v2973, %v2969
  %v2975 = vmul.f32 1.0, %v2974
  %v2976 = vrcp.pop %v2576
  %v2977 = vmul.f32 %v2576, %v2976
  %v2978 = vsub.f32 1.0, %v2977
  %v2979 = vmul.f32 %v2976, %v2978
  %v2980 = vadd.f32 %v2976, %v2979
  %vm2981 = vweird.f32 %v2576
  %vm2982 = vweird.f32 %v2976
  %vm2983 = vmor %vm2981, %vm2982
  %v2984 = vsel %vm2983, %v2976, %v2980
  %v2985 = vand.u32 2147483647, %v2576
  %vm2986 = vcmp.eq.f32.partialorder %v2985, 8.507059e+37
  %v2987 = vand.u32 %v2576, 2147483648
  %v2988 = vor.u32 1.1754944e-38, %v2987
  %v2989 = vsel %vm2986, %v2988, %v2984
  %v2990 = vmul.f32 1.0, %v2989
  %v2991 = vrcp.pop %v2577
  %v2992 = vmul.f32 %v2577, %v2991
  %v2993 = vsub.f32 1.0, %v2992
  %v2994 = vmul.f32 %v2991, %v2993
  %v2995 = vadd.f32 %v2991, %v2994
  %vm2996 = vweird.f32 %v2577
  %vm2997 = vweird.f32 %v2991
  %vm2998 = vmor %vm2996, %vm2997
  %v2999 = vsel %vm2998, %v2991, %v2995
  %v3000 = vand.u32 2147483647, %v2577
  %vm3001 = vcmp.eq.f32.partialorder %v3000, 8.507059e+37
  %v3002 = vand.u32 %v2577, 2147483648
  %v3003 = vor.u32 1.1754944e-38, %v3002
  %v3004 = vsel %vm3001, %v3003, %v2999
  %v3005 = vmul.f32 1.0, %v3004
  %v3006 = vrcp.pop %v2578
  %v3007 = vmul.f32 %v2578, %v3006
  %v3008 = vsub.f32 1.0, %v3007
  %v3009 = vmul.f32 %v3006, %v3008
  %v3010 = vadd.f32 %v3006, %v3009
  %vm3011 = vweird.f32 %v2578
  %vm3012 = vweird.f32 %v3006
  %vm3013 = vmor %vm3011, %vm3012
  %v3014 = vsel %vm3013, %v3006, %v3010
  %v3015 = vand.u32 2147483647, %v2578
  %vm3016 = vcmp.eq.f32.partialorder %v3015, 8.507059e+37
  %v3017 = vand.u32 %v2578, 2147483648
  %v3018 = vor.u32 1.1754944e-38, %v3017
  %v3019 = vsel %vm3016, %v3018, %v3014
  %v3020 = vmul.f32 1.0, %v3019
  %v3021 = vrcp.pop %v2579
  %v3022 = vmul.f32 %v2579, %v3021
  %v3023 = vsub.f32 1.0, %v3022
  %v3024 = vmul.f32 %v3021, %v3023
  %v3025 = vadd.f32 %v3021, %v3024
  %vm3026 = vweird.f32 %v2579
  %vm3027 = vweird.f32 %v3021
  %vm3028 = vmor %vm3026, %vm3027
  %v3029 = vsel %vm3028, %v3021, %v3025
  %v3030 = vand.u32 2147483647, %v2579
  %vm3031 = vcmp.eq.f32.partialorder %v3030, 8.507059e+37
  %v3032 = vand.u32 %v2579, 2147483648
  %v3033 = vor.u32 1.1754944e-38, %v3032
  %v3034 = vsel %vm3031, %v3033, %v3029
  %v3035 = vmul.f32 1.0, %v3034
  %v3036 = vrcp.pop %v2580
  %v3037 = vmul.f32 %v2580, %v3036
  %v3038 = vsub.f32 1.0, %v3037
  %v3039 = vmul.f32 %v3036, %v3038
  %v3040 = vadd.f32 %v3036, %v3039
  %vm3041 = vweird.f32 %v2580
  %vm3042 = vweird.f32 %v3036
  %vm3043 = vmor %vm3041, %vm3042
  %v3044 = vsel %vm3043, %v3036, %v3040
  %v3045 = vand.u32 2147483647, %v2580
  %vm3046 = vcmp.eq.f32.partialorder %v3045, 8.507059e+37
  %v3047 = vand.u32 %v2580, 2147483648
  %v3048 = vor.u32 1.1754944e-38, %v3047
  %v3049 = vsel %vm3046, %v3048, %v3044
  %v3050 = vmul.f32 1.0, %v3049
  %v3051 = vrcp.pop %v2581
  %v3052 = vmul.f32 %v2581, %v3051
  %v3053 = vsub.f32 1.0, %v3052
  %v3054 = vmul.f32 %v3051, %v3053
  %v3055 = vadd.f32 %v3051, %v3054
  %vm3056 = vweird.f32 %v2581
  %vm3057 = vweird.f32 %v3051
  %vm3058 = vmor %vm3056, %vm3057
  %v3059 = vsel %vm3058, %v3051, %v3055
  %v3060 = vand.u32 2147483647, %v2581
  %vm3061 = vcmp.eq.f32.partialorder %v3060, 8.507059e+37
  %v3062 = vand.u32 %v2581, 2147483648
  %v3063 = vor.u32 1.1754944e-38, %v3062
  %v3064 = vsel %vm3061, %v3063, %v3059
  %v3065 = vmul.f32 1.0, %v3064
  %v3066 = vrcp.pop %v2582
  %v3067 = vmul.f32 %v2582, %v3066
  %v3068 = vsub.f32 1.0, %v3067
  %v3069 = vmul.f32 %v3066, %v3068
  %v3070 = vadd.f32 %v3066, %v3069
  %vm3071 = vweird.f32 %v2582
  %vm3072 = vweird.f32 %v3066
  %vm3073 = vmor %vm3071, %vm3072
  %v3074 = vsel %vm3073, %v3066, %v3070
  %v3075 = vand.u32 2147483647, %v2582
  %vm3076 = vcmp.eq.f32.partialorder %v3075, 8.507059e+37
  %v3077 = vand.u32 %v2582, 2147483648
  %v3078 = vor.u32 1.1754944e-38, %v3077
  %v3079 = vsel %vm3076, %v3078, %v3074
  %v3080 = vmul.f32 1.0, %v3079
  %v3081 = vrcp.pop %v2583
  %v3082 = vmul.f32 %v2583, %v3081
  %v3083 = vsub.f32 1.0, %v3082
  %v3084 = vmul.f32 %v3081, %v3083
  %v3085 = vadd.f32 %v3081, %v3084
  %vm3086 = vweird.f32 %v2583
  %vm3087 = vweird.f32 %v3081
  %vm3088 = vmor %vm3086, %vm3087
  %v3089 = vsel %vm3088, %v3081, %v3085
  %v3090 = vand.u32 2147483647, %v2583
  %vm3091 = vcmp.eq.f32.partialorder %v3090, 8.507059e+37
  %v3092 = vand.u32 %v2583, 2147483648
  %v3093 = vor.u32 1.1754944e-38, %v3092
  %v3094 = vsel %vm3091, %v3093, %v3089
  %v3095 = vmul.f32 1.0, %v3094
  %v3096 = vrcp.pop %v2584
  %v3097 = vmul.f32 %v2584, %v3096
  %v3098 = vsub.f32 1.0, %v3097
  %v3099 = vmul.f32 %v3096, %v3098
  %v3100 = vadd.f32 %v3096, %v3099
  %vm3101 = vweird.f32 %v2584
  %vm3102 = vweird.f32 %v3096
  %vm3103 = vmor %vm3101, %vm3102
  %v3104 = vsel %vm3103, %v3096, %v3100
  %v3105 = vand.u32 2147483647, %v2584
  %vm3106 = vcmp.eq.f32.partialorder %v3105, 8.507059e+37
  %v3107 = vand.u32 %v2584, 2147483648
  %v3108 = vor.u32 1.1754944e-38, %v3107
  %v3109 = vsel %vm3106, %v3108, %v3104
  %v3110 = vmul.f32 1.0, %v3109
  %v3111 = vrcp.pop %v2585
  %v3112 = vmul.f32 %v2585, %v3111
  %v3113 = vsub.f32 1.0, %v3112
  %v3114 = vmul.f32 %v3111, %v3113
  %v3115 = vadd.f32 %v3111, %v3114
  %vm3116 = vweird.f32 %v2585
  %vm3117 = vweird.f32 %v3111
  %vm3118 = vmor %vm3116, %vm3117
  %v3119 = vsel %vm3118, %v3111, %v3115
  %v3120 = vand.u32 2147483647, %v2585
  %vm3121 = vcmp.eq.f32.partialorder %v3120, 8.507059e+37
  %v3122 = vand.u32 %v2585, 2147483648
  %v3123 = vor.u32 1.1754944e-38, %v3122
  %v3124 = vsel %vm3121, %v3123, %v3119
  %v3125 = vmul.f32 1.0, %v3124
  %v3126 = vrcp.pop %v2586
  %v3127 = vmul.f32 %v2586, %v3126
  %v3128 = vsub.f32 1.0, %v3127
  %v3129 = vmul.f32 %v3126, %v3128
  %v3130 = vadd.f32 %v3126, %v3129
  %vm3131 = vweird.f32 %v2586
  %vm3132 = vweird.f32 %v3126
  %vm3133 = vmor %vm3131, %vm3132
  %v3134 = vsel %vm3133, %v3126, %v3130
  %v3135 = vand.u32 2147483647, %v2586
  %vm3136 = vcmp.eq.f32.partialorder %v3135, 8.507059e+37
  %v3137 = vand.u32 %v2586, 2147483648
  %v3138 = vor.u32 1.1754944e-38, %v3137
  %v3139 = vsel %vm3136, %v3138, %v3134
  %v3140 = vmul.f32 1.0, %v3139
  %v3141 = vrcp.pop %v2587
  %v3142 = vmul.f32 %v2587, %v3141
  %v3143 = vsub.f32 1.0, %v3142
  %v3144 = vmul.f32 %v3141, %v3143
  %v3145 = vadd.f32 %v3141, %v3144
  %vm3146 = vweird.f32 %v2587
  %vm3147 = vweird.f32 %v3141
  %vm3148 = vmor %vm3146, %vm3147
  %v3149 = vsel %vm3148, %v3141, %v3145
  %v3150 = vand.u32 2147483647, %v2587
  %vm3151 = vcmp.eq.f32.partialorder %v3150, 8.507059e+37
  %v3152 = vand.u32 %v2587, 2147483648
  %v3153 = vor.u32 1.1754944e-38, %v3152
  %v3154 = vsel %vm3151, %v3153, %v3149
  %v3155 = vmul.f32 1.0, %v3154
  %v3156 = vrcp.pop %v2588
  %v3157 = vmul.f32 %v2588, %v3156
  %v3158 = vsub.f32 1.0, %v3157
  %v3159 = vmul.f32 %v3156, %v3158
  %v3160 = vadd.f32 %v3156, %v3159
  %vm3161 = vweird.f32 %v2588
  %vm3162 = vweird.f32 %v3156
  %vm3163 = vmor %vm3161, %vm3162
  %v3164 = vsel %vm3163, %v3156, %v3160
  %v3165 = vand.u32 2147483647, %v2588
  %vm3166 = vcmp.eq.f32.partialorder %v3165, 8.507059e+37
  %v3167 = vand.u32 %v2588, 2147483648
  %v3168 = vor.u32 1.1754944e-38, %v3167
  %v3169 = vsel %vm3166, %v3168, %v3164
  %v3170 = vmul.f32 1.0, %v3169
  %v3171 = vrcp.pop %v2589
  %v3172 = vmul.f32 %v2589, %v3171
  %v3173 = vsub.f32 1.0, %v3172
  %v3174 = vmul.f32 %v3171, %v3173
  %v3175 = vadd.f32 %v3171, %v3174
  %vm3176 = vweird.f32 %v2589
  %vm3177 = vweird.f32 %v3171
  %vm3178 = vmor %vm3176, %vm3177
  %v3179 = vsel %vm3178, %v3171, %v3175
  %v3180 = vand.u32 2147483647, %v2589
  %vm3181 = vcmp.eq.f32.partialorder %v3180, 8.507059e+37
  %v3182 = vand.u32 %v2589, 2147483648
  %v3183 = vor.u32 1.1754944e-38, %v3182
  %v3184 = vsel %vm3181, %v3183, %v3179
  %v3185 = vmul.f32 1.0, %v3184
  %v3186 = vrcp.pop %v2590
  %v3187 = vmul.f32 %v2590, %v3186
  %v3188 = vsub.f32 1.0, %v3187
  %v3189 = vmul.f32 %v3186, %v3188
  %v3190 = vadd.f32 %v3186, %v3189
  %vm3191 = vweird.f32 %v2590
  %vm3192 = vweird.f32 %v3186
  %vm3193 = vmor %vm3191, %vm3192
  %v3194 = vsel %vm3193, %v3186, %v3190
  %v3195 = vand.u32 2147483647, %v2590
  %vm3196 = vcmp.eq.f32.partialorder %v3195, 8.507059e+37
  %v3197 = vand.u32 %v2590, 2147483648
  %v3198 = vor.u32 1.1754944e-38, %v3197
  %v3199 = vsel %vm3196, %v3198, %v3194
  %v3200 = vmul.f32 1.0, %v3199
  %v3201 = vrcp.pop %v2591
  %v3202 = vmul.f32 %v2591, %v3201
  %v3203 = vsub.f32 1.0, %v3202
  %v3204 = vmul.f32 %v3201, %v3203
  %v3205 = vadd.f32 %v3201, %v3204
  %vm3206 = vweird.f32 %v2591
  %vm3207 = vweird.f32 %v3201
  %vm3208 = vmor %vm3206, %vm3207
  %v3209 = vsel %vm3208, %v3201, %v3205
  %v3210 = vand.u32 2147483647, %v2591
  %vm3211 = vcmp.eq.f32.partialorder %v3210, 8.507059e+37
  %v3212 = vand.u32 %v2591, 2147483648
  %v3213 = vor.u32 1.1754944e-38, %v3212
  %v3214 = vsel %vm3211, %v3213, %v3209
  %v3215 = vmul.f32 1.0, %v3214
  %v3216 = vrcp.pop %v2592
  %v3217 = vmul.f32 %v2592, %v3216
  %v3218 = vsub.f32 1.0, %v3217
  %v3219 = vmul.f32 %v3216, %v3218
  %v3220 = vadd.f32 %v3216, %v3219
  %vm3221 = vweird.f32 %v2592
  %vm3222 = vweird.f32 %v3216
  %vm3223 = vmor %vm3221, %vm3222
  %v3224 = vsel %vm3223, %v3216, %v3220
  %v3225 = vand.u32 2147483647, %v2592
  %vm3226 = vcmp.eq.f32.partialorder %v3225, 8.507059e+37
  %v3227 = vand.u32 %v2592, 2147483648
  %v3228 = vor.u32 1.1754944e-38, %v3227
  %v3229 = vsel %vm3226, %v3228, %v3224
  %v3230 = vmul.f32 1.0, %v3229
  %v3231 = vrcp.pop %v2593
  %v3232 = vmul.f32 %v2593, %v3231
  %v3233 = vsub.f32 1.0, %v3232
  %v3234 = vmul.f32 %v3231, %v3233
  %v3235 = vadd.f32 %v3231, %v3234
  %vm3236 = vweird.f32 %v2593
  %vm3237 = vweird.f32 %v3231
  %vm3238 = vmor %vm3236, %vm3237
  %v3239 = vsel %vm3238, %v3231, %v3235
  %v3240 = vand.u32 2147483647, %v2593
  %vm3241 = vcmp.eq.f32.partialorder %v3240, 8.507059e+37
  %v3242 = vand.u32 %v2593, 2147483648
  %v3243 = vor.u32 1.1754944e-38, %v3242
  %v3244 = vsel %vm3241, %v3243, %v3239
  %v3245 = vmul.f32 1.0, %v3244
  %v3246 = vrcp.pop %v2594
  %v3247 = vmul.f32 %v2594, %v3246
  %v3248 = vsub.f32 1.0, %v3247
  %v3249 = vmul.f32 %v3246, %v3248
  %v3250 = vadd.f32 %v3246, %v3249
  %vm3251 = vweird.f32 %v2594
  %vm3252 = vweird.f32 %v3246
  %vm3253 = vmor %vm3251, %vm3252
  %v3254 = vsel %vm3253, %v3246, %v3250
  %v3255 = vand.u32 2147483647, %v2594
  %vm3256 = vcmp.eq.f32.partialorder %v3255, 8.507059e+37
  %v3257 = vand.u32 %v2594, 2147483648
  %v3258 = vor.u32 1.1754944e-38, %v3257
  %v3259 = vsel %vm3256, %v3258, %v3254
  %v3260 = vmul.f32 1.0, %v3259
  %v3261 = vrcp.pop %v2595
  %v3262 = vmul.f32 %v2595, %v3261
  %v3263 = vsub.f32 1.0, %v3262
  %v3264 = vmul.f32 %v3261, %v3263
  %v3265 = vadd.f32 %v3261, %v3264
  %vm3266 = vweird.f32 %v2595
  %vm3267 = vweird.f32 %v3261
  %vm3268 = vmor %vm3266, %vm3267
  %v3269 = vsel %vm3268, %v3261, %v3265
  %v3270 = vand.u32 2147483647, %v2595
  %vm3271 = vcmp.eq.f32.partialorder %v3270, 8.507059e+37
  %v3272 = vand.u32 %v2595, 2147483648
  %v3273 = vor.u32 1.1754944e-38, %v3272
  %v3274 = vsel %vm3271, %v3273, %v3269
  %v3275 = vmul.f32 1.0, %v3274
  %v3276 = vrcp.pop %v2596
  %v3277 = vmul.f32 %v2596, %v3276
  %v3278 = vsub.f32 1.0, %v3277
  %v3279 = vmul.f32 %v3276, %v3278
  %v3280 = vadd.f32 %v3276, %v3279
  %vm3281 = vweird.f32 %v2596
  %vm3282 = vweird.f32 %v3276
  %vm3283 = vmor %vm3281, %vm3282
  %v3284 = vsel %vm3283, %v3276, %v3280
  %v3285 = vand.u32 2147483647, %v2596
  %vm3286 = vcmp.eq.f32.partialorder %v3285, 8.507059e+37
  %v3287 = vand.u32 %v2596, 2147483648
  %v3288 = vor.u32 1.1754944e-38, %v3287
  %v3289 = vsel %vm3286, %v3288, %v3284
  %v3290 = vmul.f32 1.0, %v3289
  %v3291 = vrcp.pop %v2597
  %v3292 = vmul.f32 %v2597, %v3291
  %v3293 = vsub.f32 1.0, %v3292
  %v3294 = vmul.f32 %v3291, %v3293
  %v3295 = vadd.f32 %v3291, %v3294
  %vm3296 = vweird.f32 %v2597
  %vm3297 = vweird.f32 %v3291
  %vm3298 = vmor %vm3296, %vm3297
  %v3299 = vsel %vm3298, %v3291, %v3295
  %v3300 = vand.u32 2147483647, %v2597
  %vm3301 = vcmp.eq.f32.partialorder %v3300, 8.507059e+37
  %v3302 = vand.u32 %v2597, 2147483648
  %v3303 = vor.u32 1.1754944e-38, %v3302
  %v3304 = vsel %vm3301, %v3303, %v3299
  %v3305 = vmul.f32 1.0, %v3304
  %v3306 = vrcp.pop %v2598
  %v3307 = vmul.f32 %v2598, %v3306
  %v3308 = vsub.f32 1.0, %v3307
  %v3309 = vmul.f32 %v3306, %v3308
  %v3310 = vadd.f32 %v3306, %v3309
  %vm3311 = vweird.f32 %v2598
  %vm3312 = vweird.f32 %v3306
  %vm3313 = vmor %vm3311, %vm3312
  %v3314 = vsel %vm3313, %v3306, %v3310
  %v3315 = vand.u32 2147483647, %v2598
  %vm3316 = vcmp.eq.f32.partialorder %v3315, 8.507059e+37
  %v3317 = vand.u32 %v2598, 2147483648
  %v3318 = vor.u32 1.1754944e-38, %v3317
  %v3319 = vsel %vm3316, %v3318, %v3314
  %v3320 = vmul.f32 1.0, %v3319
  %v3321 = vrcp.pop %v2599
  %v3322 = vmul.f32 %v2599, %v3321
  %v3323 = vsub.f32 1.0, %v3322
  %v3324 = vmul.f32 %v3321, %v3323
  %v3325 = vadd.f32 %v3321, %v3324
  %vm3326 = vweird.f32 %v2599
  %vm3327 = vweird.f32 %v3321
  %vm3328 = vmor %vm3326, %vm3327
  %v3329 = vsel %vm3328, %v3321, %v3325
  %v3330 = vand.u32 2147483647, %v2599
  %vm3331 = vcmp.eq.f32.partialorder %v3330, 8.507059e+37
  %v3332 = vand.u32 %v2599, 2147483648
  %v3333 = vor.u32 1.1754944e-38, %v3332
  %v3334 = vsel %vm3331, %v3333, %v3329
  %v3335 = vmul.f32 1.0, %v3334
  %v3336 = vrcp.pop %v2600
  %v3337 = vmul.f32 %v2600, %v3336
  %v3338 = vsub.f32 1.0, %v3337
  %v3339 = vmul.f32 %v3336, %v3338
  %v3340 = vadd.f32 %v3336, %v3339
  %vm3341 = vweird.f32 %v2600
  %vm3342 = vweird.f32 %v3336
  %vm3343 = vmor %vm3341, %vm3342
  %v3344 = vsel %vm3343, %v3336, %v3340
  %v3345 = vand.u32 2147483647, %v2600
  %vm3346 = vcmp.eq.f32.partialorder %v3345, 8.507059e+37
  %v3347 = vand.u32 %v2600, 2147483648
  %v3348 = vor.u32 1.1754944e-38, %v3347
  %v3349 = vsel %vm3346, %v3348, %v3344
  %v3350 = vmul.f32 1.0, %v3349
  %v3351 = vrcp.pop %v2601
  %v3352 = vmul.f32 %v2601, %v3351
  %v3353 = vsub.f32 1.0, %v3352
  %v3354 = vmul.f32 %v3351, %v3353
  %v3355 = vadd.f32 %v3351, %v3354
  %vm3356 = vweird.f32 %v2601
  %vm3357 = vweird.f32 %v3351
  %vm3358 = vmor %vm3356, %vm3357
  %v3359 = vsel %vm3358, %v3351, %v3355
  %v3360 = vand.u32 2147483647, %v2601
  %vm3361 = vcmp.eq.f32.partialorder %v3360, 8.507059e+37
  %v3362 = vand.u32 %v2601, 2147483648
  %v3363 = vor.u32 1.1754944e-38, %v3362
  %v3364 = vsel %vm3361, %v3363, %v3359
  %v3365 = vmul.f32 1.0, %v3364
  %v3366 = vrcp.pop %v2602
  %v3367 = vmul.f32 %v2602, %v3366
  %v3368 = vsub.f32 1.0, %v3367
  %v3369 = vmul.f32 %v3366, %v3368
  %v3370 = vadd.f32 %v3366, %v3369
  %vm3371 = vweird.f32 %v2602
  %vm3372 = vweird.f32 %v3366
  %vm3373 = vmor %vm3371, %vm3372
  %v3374 = vsel %vm3373, %v3366, %v3370
  %v3375 = vand.u32 2147483647, %v2602
  %vm3376 = vcmp.eq.f32.partialorder %v3375, 8.507059e+37
  %v3377 = vand.u32 %v2602, 2147483648
  %v3378 = vor.u32 1.1754944e-38, %v3377
  %v3379 = vsel %vm3376, %v3378, %v3374
  %v3380 = vmul.f32 1.0, %v3379
  %v3381 = vrcp.pop %v2603
  %v3382 = vmul.f32 %v2603, %v3381
  %v3383 = vsub.f32 1.0, %v3382
  %v3384 = vmul.f32 %v3381, %v3383
  %v3385 = vadd.f32 %v3381, %v3384
  %vm3386 = vweird.f32 %v2603
  %vm3387 = vweird.f32 %v3381
  %vm3388 = vmor %vm3386, %vm3387
  %v3389 = vsel %vm3388, %v3381, %v3385
  %v3390 = vand.u32 2147483647, %v2603
  %vm3391 = vcmp.eq.f32.partialorder %v3390, 8.507059e+37
  %v3392 = vand.u32 %v2603, 2147483648
  %v3393 = vor.u32 1.1754944e-38, %v3392
  %v3394 = vsel %vm3391, %v3393, %v3389
  %v3395 = vmul.f32 1.0, %v3394
  %v3396 = vrcp.pop %v2604
  %v3397 = vmul.f32 %v2604, %v3396
  %v3398 = vsub.f32 1.0, %v3397
  %v3399 = vmul.f32 %v3396, %v3398
  %v3400 = vadd.f32 %v3396, %v3399
  %vm3401 = vweird.f32 %v2604
  %vm3402 = vweird.f32 %v3396
  %vm3403 = vmor %vm3401, %vm3402
  %v3404 = vsel %vm3403, %v3396, %v3400
  %v3405 = vand.u32 2147483647, %v2604
  %vm3406 = vcmp.eq.f32.partialorder %v3405, 8.507059e+37
  %v3407 = vand.u32 %v2604, 2147483648
  %v3408 = vor.u32 1.1754944e-38, %v3407
  %v3409 = vsel %vm3406, %v3408, %v3404
  %v3410 = vmul.f32 1.0, %v3409
  %v3411 = vrcp.pop %v2605
  %v3412 = vmul.f32 %v2605, %v3411
  %v3413 = vsub.f32 1.0, %v3412
  %v3414 = vmul.f32 %v3411, %v3413
  %v3415 = vadd.f32 %v3411, %v3414
  %vm3416 = vweird.f32 %v2605
  %vm3417 = vweird.f32 %v3411
  %vm3418 = vmor %vm3416, %vm3417
  %v3419 = vsel %vm3418, %v3411, %v3415
  %v3420 = vand.u32 2147483647, %v2605
  %vm3421 = vcmp.eq.f32.partialorder %v3420, 8.507059e+37
  %v3422 = vand.u32 %v2605, 2147483648
  %v3423 = vor.u32 1.1754944e-38, %v3422
  %v3424 = vsel %vm3421, %v3423, %v3419
  %v3425 = vmul.f32 1.0, %v3424
  %v3426 = vrcp.pop %v2606
  %v3427 = vmul.f32 %v2606, %v3426
  %v3428 = vsub.f32 1.0, %v3427
  %v3429 = vmul.f32 %v3426, %v3428
  %v3430 = vadd.f32 %v3426, %v3429
  %vm3431 = vweird.f32 %v2606
  %vm3432 = vweird.f32 %v3426
  %vm3433 = vmor %vm3431, %vm3432
  %v3434 = vsel %vm3433, %v3426, %v3430
  %v3435 = vand.u32 2147483647, %v2606
  %vm3436 = vcmp.eq.f32.partialorder %v3435, 8.507059e+37
  %v3437 = vand.u32 %v2606, 2147483648
  %v3438 = vor.u32 1.1754944e-38, %v3437
  %v3439 = vsel %vm3436, %v3438, %v3434
  %v3440 = vmul.f32 1.0, %v3439
  %v3441 = vrcp.pop %v2607
  %v3442 = vmul.f32 %v2607, %v3441
  %v3443 = vsub.f32 1.0, %v3442
  %v3444 = vmul.f32 %v3441, %v3443
  %v3445 = vadd.f32 %v3441, %v3444
  %vm3446 = vweird.f32 %v2607
  %vm3447 = vweird.f32 %v3441
  %vm3448 = vmor %vm3446, %vm3447
  %v3449 = vsel %vm3448, %v3441, %v3445
  %v3450 = vand.u32 2147483647, %v2607
  %vm3451 = vcmp.eq.f32.partialorder %v3450, 8.507059e+37
  %v3452 = vand.u32 %v2607, 2147483648
  %v3453 = vor.u32 1.1754944e-38, %v3452
  %v3454 = vsel %vm3451, %v3453, %v3449
  %v3455 = vmul.f32 1.0, %v3454
  %v3456 = vrcp.pop %v2608
  %v3457 = vmul.f32 %v2608, %v3456
  %v3458 = vsub.f32 1.0, %v3457
  %v3459 = vmul.f32 %v3456, %v3458
  %v3460 = vadd.f32 %v3456, %v3459
  %vm3461 = vweird.f32 %v2608
  %vm3462 = vweird.f32 %v3456
  %vm3463 = vmor %vm3461, %vm3462
  %v3464 = vsel %vm3463, %v3456, %v3460
  %v3465 = vand.u32 2147483647, %v2608
  %vm3466 = vcmp.eq.f32.partialorder %v3465, 8.507059e+37
  %v3467 = vand.u32 %v2608, 2147483648
  %v3468 = vor.u32 1.1754944e-38, %v3467
  %v3469 = vsel %vm3466, %v3468, %v3464
  %v3470 = vmul.f32 1.0, %v3469
  %v3471 = vrcp.pop %v2609
  %v3472 = vmul.f32 %v2609, %v3471
  %v3473 = vsub.f32 1.0, %v3472
  %v3474 = vmul.f32 %v3471, %v3473
  %v3475 = vadd.f32 %v3471, %v3474
  %vm3476 = vweird.f32 %v2609
  %vm3477 = vweird.f32 %v3471
  %vm3478 = vmor %vm3476, %vm3477
  %v3479 = vsel %vm3478, %v3471, %v3475
  %v3480 = vand.u32 2147483647, %v2609
  %vm3481 = vcmp.eq.f32.partialorder %v3480, 8.507059e+37
  %v3482 = vand.u32 %v2609, 2147483648
  %v3483 = vor.u32 1.1754944e-38, %v3482
  %v3484 = vsel %vm3481, %v3483, %v3479
  %v3485 = vmul.f32 1.0, %v3484
  %v3486 = vrcp.pop %v2610
  %v3487 = vmul.f32 %v2610, %v3486
  %v3488 = vsub.f32 1.0, %v3487
  %v3489 = vmul.f32 %v3486, %v3488
  %v3490 = vadd.f32 %v3486, %v3489
  %vm3491 = vweird.f32 %v2610
  %vm3492 = vweird.f32 %v3486
  %vm3493 = vmor %vm3491, %vm3492
  %v3494 = vsel %vm3493, %v3486, %v3490
  %v3495 = vand.u32 2147483647, %v2610
  %vm3496 = vcmp.eq.f32.partialorder %v3495, 8.507059e+37
  %v3497 = vand.u32 %v2610, 2147483648
  %v3498 = vor.u32 1.1754944e-38, %v3497
  %v3499 = vsel %vm3496, %v3498, %v3494
  %v3500 = vmul.f32 1.0, %v3499
  %v3501 = vrcp.pop %v2611
  %v3502 = vmul.f32 %v2611, %v3501
  %v3503 = vsub.f32 1.0, %v3502
  %v3504 = vmul.f32 %v3501, %v3503
  %v3505 = vadd.f32 %v3501, %v3504
  %vm3506 = vweird.f32 %v2611
  %vm3507 = vweird.f32 %v3501
  %vm3508 = vmor %vm3506, %vm3507
  %v3509 = vsel %vm3508, %v3501, %v3505
  %v3510 = vand.u32 2147483647, %v2611
  %vm3511 = vcmp.eq.f32.partialorder %v3510, 8.507059e+37
  %v3512 = vand.u32 %v2611, 2147483648
  %v3513 = vor.u32 1.1754944e-38, %v3512
  %v3514 = vsel %vm3511, %v3513, %v3509
  %v3515 = vmul.f32 1.0, %v3514
  %v3516 = vrcp.pop %v2612
  %v3517 = vmul.f32 %v2612, %v3516
  %v3518 = vsub.f32 1.0, %v3517
  %v3519 = vmul.f32 %v3516, %v3518
  %v3520 = vadd.f32 %v3516, %v3519
  %vm3521 = vweird.f32 %v2612
  %vm3522 = vweird.f32 %v3516
  %vm3523 = vmor %vm3521, %vm3522
  %v3524 = vsel %vm3523, %v3516, %v3520
  %v3525 = vand.u32 2147483647, %v2612
  %vm3526 = vcmp.eq.f32.partialorder %v3525, 8.507059e+37
  %v3527 = vand.u32 %v2612, 2147483648
  %v3528 = vor.u32 1.1754944e-38, %v3527
  %v3529 = vsel %vm3526, %v3528, %v3524
  %v3530 = vmul.f32 1.0, %v3529
  %v3531 = vrcp.pop %v2613
  %v3532 = vmul.f32 %v2613, %v3531
  %v3533 = vsub.f32 1.0, %v3532
  %v3534 = vmul.f32 %v3531, %v3533
  %v3535 = vadd.f32 %v3531, %v3534
  %vm3536 = vweird.f32 %v2613
  %vm3537 = vweird.f32 %v3531
  %vm3538 = vmor %vm3536, %vm3537
  %v3539 = vsel %vm3538, %v3531, %v3535
  %v3540 = vand.u32 2147483647, %v2613
  %vm3541 = vcmp.eq.f32.partialorder %v3540, 8.507059e+37
  %v3542 = vand.u32 %v2613, 2147483648
  %v3543 = vor.u32 1.1754944e-38, %v3542
  %v3544 = vsel %vm3541, %v3543, %v3539
  %v3545 = vmul.f32 1.0, %v3544
  %v3546 = vrcp.pop %v2614
  %v3547 = vmul.f32 %v2614, %v3546
  %v3548 = vsub.f32 1.0, %v3547
  %v3549 = vmul.f32 %v3546, %v3548
  %v3550 = vadd.f32 %v3546, %v3549
  %vm3551 = vweird.f32 %v2614
  %vm3552 = vweird.f32 %v3546
  %vm3553 = vmor %vm3551, %vm3552
  %v3554 = vsel %vm3553, %v3546, %v3550
  %v3555 = vand.u32 2147483647, %v2614
  %vm3556 = vcmp.eq.f32.partialorder %v3555, 8.507059e+37
  %v3557 = vand.u32 %v2614, 2147483648
  %v3558 = vor.u32 1.1754944e-38, %v3557
  %v3559 = vsel %vm3556, %v3558, %v3554
  %v3560 = vmul.f32 1.0, %v3559
  %v3561 = vrcp.pop %v2615
  %v3562 = vmul.f32 %v2615, %v3561
  %v3563 = vsub.f32 1.0, %v3562
  %v3564 = vmul.f32 %v3561, %v3563
  %v3565 = vadd.f32 %v3561, %v3564
  %vm3566 = vweird.f32 %v2615
  %vm3567 = vweird.f32 %v3561
  %vm3568 = vmor %vm3566, %vm3567
  %v3569 = vsel %vm3568, %v3561, %v3565
  %v3570 = vand.u32 2147483647, %v2615
  %vm3571 = vcmp.eq.f32.partialorder %v3570, 8.507059e+37
  %v3572 = vand.u32 %v2615, 2147483648
  %v3573 = vor.u32 1.1754944e-38, %v3572
  %v3574 = vsel %vm3571, %v3573, %v3569
  %v3575 = vmul.f32 1.0, %v3574
  %v3576 = vmul.f32 %v2028, %v2630
  %v3577 = vmul.f32 %v2030, %v2645
  %v3578 = vmul.f32 %v2033, %v2660
  %v3579 = vmul.f32 %v2035, %v2675
  %v3580 = vmul.f32 %v2038, %v2690
  %v3581 = vmul.f32 %v2040, %v2705
  %v3582 = vmul.f32 %v2043, %v2720
  %v3583 = vmul.f32 %v2045, %v2735
  %v3584 = vmul.f32 %v2048, %v2750
  %v3585 = vmul.f32 %v2050, %v2765
  %v3586 = vmul.f32 %v2053, %v2780
  %v3587 = vmul.f32 %v2055, %v2795
  %v3588 = vmul.f32 %v2058, %v2810
  %v3589 = vmul.f32 %v2060, %v2825
  %v3590 = vmul.f32 %v2063, %v2840
  %v3591 = vmul.f32 %v2065, %v2855
  %v3592 = vmul.f32 %v2068, %v2870
  %v3593 = vmul.f32 %v2070, %v2885
  %v3594 = vmul.f32 %v2073, %v2900
  %v3595 = vmul.f32 %v2075, %v2915
  %v3596 = vmul.f32 %v2078, %v2930
  %v3597 = vmul.f32 %v2080, %v2945
  %v3598 = vmul.f32 %v2083, %v2960
  %v3599 = vmul.f32 %v2085, %v2975
  %v3600 = vmul.f32 %v2088, %v2990
  %v3601 = vmul.f32 %v2090, %v3005
  %v3602 = vmul.f32 %v2093, %v3020
  %v3603 = vmul.f32 %v2095, %v3035
  %v3604 = vmul.f32 %v2098, %v3050
  %v3605 = vmul.f32 %v2100, %v3065
  %v3606 = vmul.f32 %v2103, %v3080
  %v3607 = vmul.f32 %v2105, %v3095
  %v3608 = vmul.f32 %v2108, %v3110
  %v3609 = vmul.f32 %v2110, %v3125
  %v3610 = vmul.f32 %v2113, %v3140
  %v3611 = vmul.f32 %v2115, %v3155
  %v3612 = vmul.f32 %v2118, %v3170
  %v3613 = vmul.f32 %v2120, %v3185
  %v3614 = vmul.f32 %v2123, %v3200
  %v3615 = vmul.f32 %v2125, %v3215
  %v3616 = vmul.f32 %v2128, %v3230
  %v3617 = vmul.f32 %v2130, %v3245
  %v3618 = vmul.f32 %v2133, %v3260
  %v3619 = vmul.f32 %v2135, %v3275
  %v3620 = vmul.f32 %v2138, %v3290
  %v3621 = vmul.f32 %v2140, %v3305
  %v3622 = vmul.f32 %v2143, %v3320
  %v3623 = vmul.f32 %v2145, %v3335
  %v3624 = vmul.f32 %v2148, %v3350
  %v3625 = vmul.f32 %v2150, %v3365
  %v3626 = vmul.f32 %v2153, %v3380
  %v3627 = vmul.f32 %v2155, %v3395
  %v3628 = vmul.f32 %v2158, %v3410
  %v3629 = vmul.f32 %v2160, %v3425
  %v3630 = vmul.f32 %v2163, %v3440
  %v3631 = vmul.f32 %v2165, %v3455
  %v3632 = vmul.f32 %v2168, %v3470
  %v3633 = vmul.f32 %v2170, %v3485
  %v3634 = vmul.f32 %v2173, %v3500
  %v3635 = vmul.f32 %v2175, %v3515
  %v3636 = vmul.f32 %v2178, %v3530
  %v3637 = vmul.f32 %v2180, %v3545
  %v3638 = vmul.f32 %v2183, %v3560
  %v3639 = vmul.f32 %v2185, %v3575
  %v3640 = vld [vmem:[%s10] sm:$0xff]
  %v3641 = vld [vmem:[#allocation4] sm:$0x1]
  %v3642 = vpack.c.bf16 %v3577, %v3576
  %v3643 = vpack.c.bf16 %v3579, %v3578
  %v3644 = vpack.c.bf16 %v3581, %v3580
  %v3645 = vpack.c.bf16 %v3583, %v3582
  %v3646 = vpack.c.bf16 %v3585, %v3584
  %v3647 = vpack.c.bf16 %v3587, %v3586
  %v3648 = vpack.c.bf16 %v3589, %v3588
  %v3649 = vpack.c.bf16 %v3591, %v3590
  %v3650 = vpack.c.bf16 %v3593, %v3592
  %v3651 = vpack.c.bf16 %v3595, %v3594
  %v3652 = vpack.c.bf16 %v3597, %v3596
  %v3653 = vpack.c.bf16 %v3599, %v3598
  %v3654 = vpack.c.bf16 %v3601, %v3600
  %v3655 = vpack.c.bf16 %v3603, %v3602
  %v3656 = vpack.c.bf16 %v3605, %v3604
  %v3657 = vpack.c.bf16 %v3607, %v3606
  %v3658 = vpack.c.bf16 %v3609, %v3608
  %v3659 = vpack.c.bf16 %v3611, %v3610
  %v3660 = vpack.c.bf16 %v3613, %v3612
  %v3661 = vpack.c.bf16 %v3615, %v3614
  %v3662 = vpack.c.bf16 %v3617, %v3616
  %v3663 = vpack.c.bf16 %v3619, %v3618
  %v3664 = vpack.c.bf16 %v3621, %v3620
  %v3665 = vpack.c.bf16 %v3623, %v3622
  %v3666 = vpack.c.bf16 %v3625, %v3624
  %v3667 = vpack.c.bf16 %v3627, %v3626
  %v3668 = vpack.c.bf16 %v3629, %v3628
  %v3669 = vpack.c.bf16 %v3631, %v3630
  %v3670 = vpack.c.bf16 %v3633, %v3632
  %v3671 = vpack.c.bf16 %v3635, %v3634
  %v3672 = vpack.c.bf16 %v3637, %v3636
  %v3673 = vpack.c.bf16 %v3639, %v3638
  %v3674 = vpack.c.bf16 %v3640, %v3640
  %vm3675 = vcmask 64512
  %v3677 = vsel %vm3675, %v3642, 0
  %v3680 = vsel %vm3675, %v3643, 0
  %v3683 = vsel %vm3675, %v3644, 0
  %v3686 = vsel %vm3675, %v3645, 0
  %v3689 = vsel %vm3675, %v3646, 0
  %v3692 = vsel %vm3675, %v3647, 0
  %v3695 = vsel %vm3675, %v3648, 0
  %v3698 = vsel %vm3675, %v3649, 0
  %v3701 = vsel %vm3675, %v3650, 0
  %v3704 = vsel %vm3675, %v3651, 0
  %v3707 = vsel %vm3675, %v3652, 0
  %v3710 = vsel %vm3675, %v3653, 0
  %v3713 = vsel %vm3675, %v3654, 0
  %v3716 = vsel %vm3675, %v3655, 0
  %v3719 = vsel %vm3675, %v3656, 0
  %v3722 = vsel %vm3675, %v3657, 0
  %v3725 = vsel %vm3675, %v3658, 0
  %v3728 = vsel %vm3675, %v3659, 0
  %v3731 = vsel %vm3675, %v3660, 0
  %v3734 = vsel %vm3675, %v3661, 0
  %v3737 = vsel %vm3675, %v3662, 0
  %v3740 = vsel %vm3675, %v3663, 0
  %v3743 = vsel %vm3675, %v3664, 0
  %v3746 = vsel %vm3675, %v3665, 0
  %v3749 = vsel %vm3675, %v3666, 0
  %v3752 = vsel %vm3675, %v3667, 0
  %v3755 = vsel %vm3675, %v3668, 0
  %v3758 = vsel %vm3675, %v3669, 0
  %v3761 = vsel %vm3675, %v3670, 0
  %v3764 = vsel %vm3675, %v3671, 0
  %v3767 = vsel %vm3675, %v3672, 0
  %v3770 = vsel %vm3675, %v3673, 0
  %vm3772 = vcmask 1043456
  %v3774 = vsel %vm3772, %v3674, 0
  %3776 = vmatpush.bf16.msra.mxu0 0
  %3777 = vmatpush.bf16.msra.mxu0 0
  %3778 = vmatpush.bf16.msra.mxu0 0
  %3779 = vmatpush.bf16.msra.mxu0 0
  %3780 = vmatpush.bf16.msra.mxu0 0
  %3781 = vmatpush.bf16.msra.mxu0 0
  %3782 = vmatpush.bf16.msra.mxu0 0
  %3783 = vmatpush.bf16.msra.mxu0 %v3774
  %3784 = vmatmul.bf16.gmra.mxu0 %v3677
  %v3785 = vpop.f32.mrf.mxu0
  %v3786 = vadd.f32 0.0, %v3785
  %v3787 = vpop.f32.mrf.mxu0
  %v3788 = vadd.f32 0.0, %v3787
  %3789 = vmatmul.bf16.gmra.mxu0 %v3680
  %v3790 = vpop.f32.mrf.mxu0
  %v3791 = vadd.f32 0.0, %v3790
  %v3792 = vpop.f32.mrf.mxu0
  %v3793 = vadd.f32 0.0, %v3792
  %3794 = vmatmul.bf16.gmra.mxu0 %v3683
  %v3795 = vpop.f32.mrf.mxu0
  %v3796 = vadd.f32 0.0, %v3795
  %v3797 = vpop.f32.mrf.mxu0
  %v3798 = vadd.f32 0.0, %v3797
  %3799 = vmatmul.bf16.gmra.mxu0 %v3686
  %v3800 = vpop.f32.mrf.mxu0
  %v3801 = vadd.f32 0.0, %v3800
  %v3802 = vpop.f32.mrf.mxu0
  %v3803 = vadd.f32 0.0, %v3802
  %3804 = vmatmul.bf16.gmra.mxu0 %v3689
  %v3805 = vpop.f32.mrf.mxu0
  %v3806 = vadd.f32 0.0, %v3805
  %v3807 = vpop.f32.mrf.mxu0
  %v3808 = vadd.f32 0.0, %v3807
  %3809 = vmatmul.bf16.gmra.mxu0 %v3692
  %v3810 = vpop.f32.mrf.mxu0
  %v3811 = vadd.f32 0.0, %v3810
  %v3812 = vpop.f32.mrf.mxu0
  %v3813 = vadd.f32 0.0, %v3812
  %3814 = vmatmul.bf16.gmra.mxu0 %v3695
  %v3815 = vpop.f32.mrf.mxu0
  %v3816 = vadd.f32 0.0, %v3815
  %v3817 = vpop.f32.mrf.mxu0
  %v3818 = vadd.f32 0.0, %v3817
  %3819 = vmatmul.bf16.gmra.mxu0 %v3698
  %v3820 = vpop.f32.mrf.mxu0
  %v3821 = vadd.f32 0.0, %v3820
  %v3822 = vpop.f32.mrf.mxu0
  %v3823 = vadd.f32 0.0, %v3822
  %3824 = vmatmul.bf16.gmra.mxu0 %v3701
  %v3825 = vpop.f32.mrf.mxu0
  %v3826 = vadd.f32 0.0, %v3825
  %v3827 = vpop.f32.mrf.mxu0
  %v3828 = vadd.f32 0.0, %v3827
  %3829 = vmatmul.bf16.gmra.mxu0 %v3704
  %v3830 = vpop.f32.mrf.mxu0
  %v3831 = vadd.f32 0.0, %v3830
  %v3832 = vpop.f32.mrf.mxu0
  %v3833 = vadd.f32 0.0, %v3832
  %3834 = vmatmul.bf16.gmra.mxu0 %v3707
  %v3835 = vpop.f32.mrf.mxu0
  %v3836 = vadd.f32 0.0, %v3835
  %v3837 = vpop.f32.mrf.mxu0
  %v3838 = vadd.f32 0.0, %v3837
  %3839 = vmatmul.bf16.gmra.mxu0 %v3710
  %v3840 = vpop.f32.mrf.mxu0
  %v3841 = vadd.f32 0.0, %v3840
  %v3842 = vpop.f32.mrf.mxu0
  %v3843 = vadd.f32 0.0, %v3842
  %3844 = vmatmul.bf16.gmra.mxu0 %v3713
  %v3845 = vpop.f32.mrf.mxu0
  %v3846 = vadd.f32 0.0, %v3845
  %v3847 = vpop.f32.mrf.mxu0
  %v3848 = vadd.f32 0.0, %v3847
  %3849 = vmatmul.bf16.gmra.mxu0 %v3716
  %v3850 = vpop.f32.mrf.mxu0
  %v3851 = vadd.f32 0.0, %v3850
  %v3852 = vpop.f32.mrf.mxu0
  %v3853 = vadd.f32 0.0, %v3852
  %3854 = vmatmul.bf16.gmra.mxu0 %v3719
  %v3855 = vpop.f32.mrf.mxu0
  %v3856 = vadd.f32 0.0, %v3855
  %v3857 = vpop.f32.mrf.mxu0
  %v3858 = vadd.f32 0.0, %v3857
  %3859 = vmatmul.bf16.gmra.mxu0 %v3722
  %v3860 = vpop.f32.mrf.mxu0
  %v3861 = vadd.f32 0.0, %v3860
  %v3862 = vpop.f32.mrf.mxu0
  %v3863 = vadd.f32 0.0, %v3862
  %3864 = vmatmul.bf16.gmra.mxu0 %v3725
  %v3865 = vpop.f32.mrf.mxu0
  %v3866 = vadd.f32 0.0, %v3865
  %v3867 = vpop.f32.mrf.mxu0
  %v3868 = vadd.f32 0.0, %v3867
  %3869 = vmatmul.bf16.gmra.mxu0 %v3728
  %v3870 = vpop.f32.mrf.mxu0
  %v3871 = vadd.f32 0.0, %v3870
  %v3872 = vpop.f32.mrf.mxu0
  %v3873 = vadd.f32 0.0, %v3872
  %3874 = vmatmul.bf16.gmra.mxu0 %v3731
  %v3875 = vpop.f32.mrf.mxu0
  %v3876 = vadd.f32 0.0, %v3875
  %v3877 = vpop.f32.mrf.mxu0
  %v3878 = vadd.f32 0.0, %v3877
  %3879 = vmatmul.bf16.gmra.mxu0 %v3734
  %v3880 = vpop.f32.mrf.mxu0
  %v3881 = vadd.f32 0.0, %v3880
  %v3882 = vpop.f32.mrf.mxu0
  %v3883 = vadd.f32 0.0, %v3882
  %3884 = vmatmul.bf16.gmra.mxu0 %v3737
  %v3885 = vpop.f32.mrf.mxu0
  %v3886 = vadd.f32 0.0, %v3885
  %v3887 = vpop.f32.mrf.mxu0
  %v3888 = vadd.f32 0.0, %v3887
  %3889 = vmatmul.bf16.gmra.mxu0 %v3740
  %v3890 = vpop.f32.mrf.mxu0
  %v3891 = vadd.f32 0.0, %v3890
  %v3892 = vpop.f32.mrf.mxu0
  %v3893 = vadd.f32 0.0, %v3892
  %3894 = vmatmul.bf16.gmra.mxu0 %v3743
  %v3895 = vpop.f32.mrf.mxu0
  %v3896 = vadd.f32 0.0, %v3895
  %v3897 = vpop.f32.mrf.mxu0
  %v3898 = vadd.f32 0.0, %v3897
  %3899 = vmatmul.bf16.gmra.mxu0 %v3746
  %v3900 = vpop.f32.mrf.mxu0
  %v3901 = vadd.f32 0.0, %v3900
  %v3902 = vpop.f32.mrf.mxu0
  %v3903 = vadd.f32 0.0, %v3902
  %3904 = vmatmul.bf16.gmra.mxu0 %v3749
  %v3905 = vpop.f32.mrf.mxu0
  %v3906 = vadd.f32 0.0, %v3905
  %v3907 = vpop.f32.mrf.mxu0
  %v3908 = vadd.f32 0.0, %v3907
  %3909 = vmatmul.bf16.gmra.mxu0 %v3752
  %v3910 = vpop.f32.mrf.mxu0
  %v3911 = vadd.f32 0.0, %v3910
  %v3912 = vpop.f32.mrf.mxu0
  %v3913 = vadd.f32 0.0, %v3912
  %3914 = vmatmul.bf16.gmra.mxu0 %v3755
  %v3915 = vpop.f32.mrf.mxu0
  %v3916 = vadd.f32 0.0, %v3915
  %v3917 = vpop.f32.mrf.mxu0
  %v3918 = vadd.f32 0.0, %v3917
  %3919 = vmatmul.bf16.gmra.mxu0 %v3758
  %v3920 = vpop.f32.mrf.mxu0
  %v3921 = vadd.f32 0.0, %v3920
  %v3922 = vpop.f32.mrf.mxu0
  %v3923 = vadd.f32 0.0, %v3922
  %3924 = vmatmul.bf16.gmra.mxu0 %v3761
  %v3925 = vpop.f32.mrf.mxu0
  %v3926 = vadd.f32 0.0, %v3925
  %v3927 = vpop.f32.mrf.mxu0
  %v3928 = vadd.f32 0.0, %v3927
  %3929 = vmatmul.bf16.gmra.mxu0 %v3764
  %v3930 = vpop.f32.mrf.mxu0
  %v3931 = vadd.f32 0.0, %v3930
  %v3932 = vpop.f32.mrf.mxu0
  %v3933 = vadd.f32 0.0, %v3932
  %3934 = vmatmul.bf16.gmra.mxu0 %v3767
  %v3935 = vpop.f32.mrf.mxu0
  %v3936 = vadd.f32 0.0, %v3935
  %v3937 = vpop.f32.mrf.mxu0
  %v3938 = vadd.f32 0.0, %v3937
  %3939 = vmatmul.bf16.gmra.mxu0 %v3770
  %v3940 = vpop.f32.mrf.mxu0
  %v3941 = vadd.f32 0.0, %v3940
  %v3942 = vpop.f32.mrf.mxu0
  %v3943 = vadd.f32 0.0, %v3942
  %3944 = vdwg.mxu0
  %v3945 = vlaneseq
  %v3946 = vshrl.u32 %v3945, 7
  %v3947 = vlaneseq
  %v3948 = vand.u32 %v3947, 127
  %vm3949 = vcmp.eq.s32.totalorder %v3946, %v3948
  %v3950 = vsel %vm3949, 1, 0
  %v3951 = vcvt.s32.f32 %v3950
  %v3952 = vadd.s32 %v3946, 8
  %v3953 = vadd.s32 %v3946, 16
  %v3954 = vadd.s32 %v3946, 24
  %v3955 = vadd.s32 %v3946, 32
  %v3956 = vadd.s32 %v3946, 40
  %v3957 = vadd.s32 %v3946, 48
  %v3958 = vadd.s32 %v3946, 56
  %v3959 = vadd.s32 %v3948, 128
  %v3960 = vadd.s32 %v3948, 256
  %v3961 = vadd.s32 %v3948, 384
  %v3962 = vmul.u32 %v3946, 8
  %v3963 = vmul.u32 %v3952, 8
  %v3964 = vmul.u32 %v3953, 8
  %v3965 = vmul.u32 %v3954, 8
  %v3966 = vmul.u32 %v3955, 8
  %v3967 = vmul.u32 %v3956, 8
  %v3968 = vmul.u32 %v3957, 8
  %v3969 = vmul.u32 %v3958, 8
  %vm3970 = vcmp.ge.s32.totalorder %v3948, %v3962
  %vm3971 = vcmp.ge.s32.totalorder %v3959, %v3962
  %vm3972 = vcmp.ge.s32.totalorder %v3960, %v3962
  %vm3973 = vcmp.ge.s32.totalorder %v3961, %v3962
  %vm3974 = vcmp.ge.s32.totalorder %v3948, %v3963
  %vm3975 = vcmp.ge.s32.totalorder %v3959, %v3963
  %vm3976 = vcmp.ge.s32.totalorder %v3960, %v3963
  %vm3977 = vcmp.ge.s32.totalorder %v3961, %v3963
  %vm3978 = vcmp.ge.s32.totalorder %v3948, %v3964
  %vm3979 = vcmp.ge.s32.totalorder %v3959, %v3964
  %vm3980 = vcmp.ge.s32.totalorder %v3960, %v3964
  %vm3981 = vcmp.ge.s32.totalorder %v3961, %v3964
  %vm3982 = vcmp.ge.s32.totalorder %v3948, %v3965
  %vm3983 = vcmp.ge.s32.totalorder %v3959, %v3965
  %vm3984 = vcmp.ge.s32.totalorder %v3960, %v3965
  %vm3985 = vcmp.ge.s32.totalorder %v3961, %v3965
  %vm3986 = vcmp.ge.s32.totalorder %v3948, %v3966
  %vm3987 = vcmp.ge.s32.totalorder %v3959, %v3966
  %vm3988 = vcmp.ge.s32.totalorder %v3960, %v3966
  %vm3989 = vcmp.ge.s32.totalorder %v3961, %v3966
  %vm3990 = vcmp.ge.s32.totalorder %v3948, %v3967
  %vm3991 = vcmp.ge.s32.totalorder %v3959, %v3967
  %vm3992 = vcmp.ge.s32.totalorder %v3960, %v3967
  %vm3993 = vcmp.ge.s32.totalorder %v3961, %v3967
  %vm3994 = vcmp.ge.s32.totalorder %v3948, %v3968
  %vm3995 = vcmp.ge.s32.totalorder %v3959, %v3968
  %vm3996 = vcmp.ge.s32.totalorder %v3960, %v3968
  %vm3997 = vcmp.ge.s32.totalorder %v3961, %v3968
  %vm3998 = vcmp.ge.s32.totalorder %v3948, %v3969
  %vm3999 = vcmp.ge.s32.totalorder %v3959, %v3969
  %vm4000 = vcmp.ge.s32.totalorder %v3960, %v3969
  %vm4001 = vcmp.ge.s32.totalorder %v3961, %v3969
  %v4002 = vadd.s32 %v3946, 1
  %v4003 = vadd.s32 %v3952, 1
  %v4004 = vadd.s32 %v3953, 1
  %v4005 = vadd.s32 %v3954, 1
  %v4006 = vadd.s32 %v3955, 1
  %v4007 = vadd.s32 %v3956, 1
  %v4008 = vadd.s32 %v3957, 1
  %v4009 = vadd.s32 %v3958, 1
  %v4010 = vmul.u32 %v4002, 8
  %v4011 = vmul.u32 %v4003, 8
  %v4012 = vmul.u32 %v4004, 8
  %v4013 = vmul.u32 %v4005, 8
  %v4014 = vmul.u32 %v4006, 8
  %v4015 = vmul.u32 %v4007, 8
  %v4016 = vmul.u32 %v4008, 8
  %v4017 = vmul.u32 %v4009, 8
  %vm4018 = vcmp.lt.s32.totalorder %v3948, %v4010
  %vm4019 = vcmp.lt.s32.totalorder %v3959, %v4010
  %vm4020 = vcmp.lt.s32.totalorder %v3960, %v4010
  %vm4021 = vcmp.lt.s32.totalorder %v3961, %v4010
  %vm4022 = vcmp.lt.s32.totalorder %v3948, %v4011
  %vm4023 = vcmp.lt.s32.totalorder %v3959, %v4011
  %vm4024 = vcmp.lt.s32.totalorder %v3960, %v4011
  %vm4025 = vcmp.lt.s32.totalorder %v3961, %v4011
  %vm4026 = vcmp.lt.s32.totalorder %v3948, %v4012
  %vm4027 = vcmp.lt.s32.totalorder %v3959, %v4012
  %vm4028 = vcmp.lt.s32.totalorder %v3960, %v4012
  %vm4029 = vcmp.lt.s32.totalorder %v3961, %v4012
  %vm4030 = vcmp.lt.s32.totalorder %v3948, %v4013
  %vm4031 = vcmp.lt.s32.totalorder %v3959, %v4013
  %vm4032 = vcmp.lt.s32.totalorder %v3960, %v4013
  %vm4033 = vcmp.lt.s32.totalorder %v3961, %v4013
  %vm4034 = vcmp.lt.s32.totalorder %v3948, %v4014
  %vm4035 = vcmp.lt.s32.totalorder %v3959, %v4014
  %vm4036 = vcmp.lt.s32.totalorder %v3960, %v4014
  %vm4037 = vcmp.lt.s32.totalorder %v3961, %v4014
  %vm4038 = vcmp.lt.s32.totalorder %v3948, %v4015
  %vm4039 = vcmp.lt.s32.totalorder %v3959, %v4015
  %vm4040 = vcmp.lt.s32.totalorder %v3960, %v4015
  %vm4041 = vcmp.lt.s32.totalorder %v3961, %v4015
  %vm4042 = vcmp.lt.s32.totalorder %v3948, %v4016
  %vm4043 = vcmp.lt.s32.totalorder %v3959, %v4016
  %vm4044 = vcmp.lt.s32.totalorder %v3960, %v4016
  %vm4045 = vcmp.lt.s32.totalorder %v3961, %v4016
  %vm4046 = vcmp.lt.s32.totalorder %v3948, %v4017
  %vm4047 = vcmp.lt.s32.totalorder %v3959, %v4017
  %vm4048 = vcmp.lt.s32.totalorder %v3960, %v4017
  %vm4049 = vcmp.lt.s32.totalorder %v3961, %v4017
  %vm4050 = vmand %vm3970, %vm4018
  %vm4051 = vmand %vm3971, %vm4019
  %vm4052 = vmand %vm3972, %vm4020
  %vm4053 = vmand %vm3973, %vm4021
  %vm4054 = vmand %vm3974, %vm4022
  %vm4055 = vmand %vm3975, %vm4023
  %vm4056 = vmand %vm3976, %vm4024
  %vm4057 = vmand %vm3977, %vm4025
  %vm4058 = vmand %vm3978, %vm4026
  %vm4059 = vmand %vm3979, %vm4027
  %vm4060 = vmand %vm3980, %vm4028
  %vm4061 = vmand %vm3981, %vm4029
  %vm4062 = vmand %vm3982, %vm4030
  %vm4063 = vmand %vm3983, %vm4031
  %vm4064 = vmand %vm3984, %vm4032
  %vm4065 = vmand %vm3985, %vm4033
  %vm4066 = vmand %vm3986, %vm4034
  %vm4067 = vmand %vm3987, %vm4035
  %vm4068 = vmand %vm3988, %vm4036
  %vm4069 = vmand %vm3989, %vm4037
  %vm4070 = vmand %vm3990, %vm4038
  %vm4071 = vmand %vm3991, %vm4039
  %vm4072 = vmand %vm3992, %vm4040
  %vm4073 = vmand %vm3993, %vm4041
  %vm4074 = vmand %vm3994, %vm4042
  %vm4075 = vmand %vm3995, %vm4043
  %vm4076 = vmand %vm3996, %vm4044
  %vm4077 = vmand %vm3997, %vm4045
  %vm4078 = vmand %vm3998, %vm4046
  %vm4079 = vmand %vm3999, %vm4047
  %vm4080 = vmand %vm4000, %vm4048
  %vm4081 = vmand %vm4001, %vm4049
  %v4082 = vsel %vm4050, 1, 0
  %v4083 = vsel %vm4051, 1, 0
  %v4084 = vsel %vm4052, 1, 0
  %v4085 = vsel %vm4053, 1, 0
  %v4086 = vsel %vm4054, 1, 0
  %v4087 = vsel %vm4055, 1, 0
  %v4088 = vsel %vm4056, 1, 0
  %v4089 = vsel %vm4057, 1, 0
  %v4090 = vsel %vm4058, 1, 0
  %v4091 = vsel %vm4059, 1, 0
  %v4092 = vsel %vm4060, 1, 0
  %v4093 = vsel %vm4061, 1, 0
  %v4094 = vsel %vm4062, 1, 0
  %v4095 = vsel %vm4063, 1, 0
  %v4096 = vsel %vm4064, 1, 0
  %v4097 = vsel %vm4065, 1, 0
  %v4098 = vsel %vm4066, 1, 0
  %v4099 = vsel %vm4067, 1, 0
  %v4100 = vsel %vm4068, 1, 0
  %v4101 = vsel %vm4069, 1, 0
  %v4102 = vsel %vm4070, 1, 0
  %v4103 = vsel %vm4071, 1, 0
  %v4104 = vsel %vm4072, 1, 0
  %v4105 = vsel %vm4073, 1, 0
  %v4106 = vsel %vm4074, 1, 0
  %v4107 = vsel %vm4075, 1, 0
  %v4108 = vsel %vm4076, 1, 0
  %v4109 = vsel %vm4077, 1, 0
  %v4110 = vsel %vm4078, 1, 0
  %v4111 = vsel %vm4079, 1, 0
  %v4112 = vsel %vm4080, 1, 0
  %v4113 = vsel %vm4081, 1, 0
  %v4114 = vcvt.s32.f32 %v4082
  %v4115 = vcvt.s32.f32 %v4083
  %v4116 = vcvt.s32.f32 %v4084
  %v4117 = vcvt.s32.f32 %v4085
  %v4118 = vcvt.s32.f32 %v4086
  %v4119 = vcvt.s32.f32 %v4087
  %v4120 = vcvt.s32.f32 %v4088
  %v4121 = vcvt.s32.f32 %v4089
  %v4122 = vcvt.s32.f32 %v4090
  %v4123 = vcvt.s32.f32 %v4091
  %v4124 = vcvt.s32.f32 %v4092
  %v4125 = vcvt.s32.f32 %v4093
  %v4126 = vcvt.s32.f32 %v4094
  %v4127 = vcvt.s32.f32 %v4095
  %v4128 = vcvt.s32.f32 %v4096
  %v4129 = vcvt.s32.f32 %v4097
  %v4130 = vcvt.s32.f32 %v4098
  %v4131 = vcvt.s32.f32 %v4099
  %v4132 = vcvt.s32.f32 %v4100
  %v4133 = vcvt.s32.f32 %v4101
  %v4134 = vcvt.s32.f32 %v4102
  %v4135 = vcvt.s32.f32 %v4103
  %v4136 = vcvt.s32.f32 %v4104
  %v4137 = vcvt.s32.f32 %v4105
  %v4138 = vcvt.s32.f32 %v4106
  %v4139 = vcvt.s32.f32 %v4107
  %v4140 = vcvt.s32.f32 %v4108
  %v4141 = vcvt.s32.f32 %v4109
  %v4142 = vcvt.s32.f32 %v4110
  %v4143 = vcvt.s32.f32 %v4111
  %v4144 = vcvt.s32.f32 %v4112
  %v4145 = vcvt.s32.f32 %v4113
  %4147 = vset.pattern.permute.xlu0 0
  %4148 = vperm.xlu0 %4147, %v3786
  %v4149 = vpop.permute.xlu0 %4148
  %4152 = vset.pattern.permute.xlu0 0
  %4153 = vperm.xlu0 %4152, %v3788
  %v4154 = vpop.permute.xlu0 %4153
  %4157 = vset.pattern.permute.xlu0 0
  %4158 = vperm.xlu0 %4157, %v3791
  %v4159 = vpop.permute.xlu0 %4158
  %4162 = vset.pattern.permute.xlu0 0
  %4163 = vperm.xlu0 %4162, %v3793
  %v4164 = vpop.permute.xlu0 %4163
  %4167 = vset.pattern.permute.xlu0 0
  %4168 = vperm.xlu0 %4167, %v3796
  %v4169 = vpop.permute.xlu0 %4168
  %4172 = vset.pattern.permute.xlu0 0
  %4173 = vperm.xlu0 %4172, %v3798
  %v4174 = vpop.permute.xlu0 %4173
  %4177 = vset.pattern.permute.xlu0 0
  %4178 = vperm.xlu0 %4177, %v3801
  %v4179 = vpop.permute.xlu0 %4178
  %4182 = vset.pattern.permute.xlu0 0
  %4183 = vperm.xlu0 %4182, %v3803
  %v4184 = vpop.permute.xlu0 %4183
  %4187 = vset.pattern.permute.xlu0 0
  %4188 = vperm.xlu0 %4187, %v3806
  %v4189 = vpop.permute.xlu0 %4188
  %4192 = vset.pattern.permute.xlu0 0
  %4193 = vperm.xlu0 %4192, %v3808
  %v4194 = vpop.permute.xlu0 %4193
  %4197 = vset.pattern.permute.xlu0 0
  %4198 = vperm.xlu0 %4197, %v3811
  %v4199 = vpop.permute.xlu0 %4198
  %4202 = vset.pattern.permute.xlu0 0
  %4203 = vperm.xlu0 %4202, %v3813
  %v4204 = vpop.permute.xlu0 %4203
  %4207 = vset.pattern.permute.xlu0 0
  %4208 = vperm.xlu0 %4207, %v3816
  %v4209 = vpop.permute.xlu0 %4208
  %4212 = vset.pattern.permute.xlu0 0
  %4213 = vperm.xlu0 %4212, %v3818
  %v4214 = vpop.permute.xlu0 %4213
  %4217 = vset.pattern.permute.xlu0 0
  %4218 = vperm.xlu0 %4217, %v3821
  %v4219 = vpop.permute.xlu0 %4218
  %4222 = vset.pattern.permute.xlu0 0
  %4223 = vperm.xlu0 %4222, %v3823
  %v4224 = vpop.permute.xlu0 %4223
  %4227 = vset.pattern.permute.xlu0 0
  %4228 = vperm.xlu0 %4227, %v3826
  %v4229 = vpop.permute.xlu0 %4228
  %4232 = vset.pattern.permute.xlu0 0
  %4233 = vperm.xlu0 %4232, %v3828
  %v4234 = vpop.permute.xlu0 %4233
  %4237 = vset.pattern.permute.xlu0 0
  %4238 = vperm.xlu0 %4237, %v3831
  %v4239 = vpop.permute.xlu0 %4238
  %4242 = vset.pattern.permute.xlu0 0
  %4243 = vperm.xlu0 %4242, %v3833
  %v4244 = vpop.permute.xlu0 %4243
  %4247 = vset.pattern.permute.xlu0 0
  %4248 = vperm.xlu0 %4247, %v3836
  %v4249 = vpop.permute.xlu0 %4248
  %4252 = vset.pattern.permute.xlu0 0
  %4253 = vperm.xlu0 %4252, %v3838
  %v4254 = vpop.permute.xlu0 %4253
  %4257 = vset.pattern.permute.xlu0 0
  %4258 = vperm.xlu0 %4257, %v3841
  %v4259 = vpop.permute.xlu0 %4258
  %4262 = vset.pattern.permute.xlu0 0
  %4263 = vperm.xlu0 %4262, %v3843
  %v4264 = vpop.permute.xlu0 %4263
  %4267 = vset.pattern.permute.xlu0 0
  %4268 = vperm.xlu0 %4267, %v3846
  %v4269 = vpop.permute.xlu0 %4268
  %4272 = vset.pattern.permute.xlu0 0
  %4273 = vperm.xlu0 %4272, %v3848
  %v4274 = vpop.permute.xlu0 %4273
  %4277 = vset.pattern.permute.xlu0 0
  %4278 = vperm.xlu0 %4277, %v3851
  %v4279 = vpop.permute.xlu0 %4278
  %4282 = vset.pattern.permute.xlu0 0
  %4283 = vperm.xlu0 %4282, %v3853
  %v4284 = vpop.permute.xlu0 %4283
  %4287 = vset.pattern.permute.xlu0 0
  %4288 = vperm.xlu0 %4287, %v3856
  %v4289 = vpop.permute.xlu0 %4288
  %4292 = vset.pattern.permute.xlu0 0
  %4293 = vperm.xlu0 %4292, %v3858
  %v4294 = vpop.permute.xlu0 %4293
  %4297 = vset.pattern.permute.xlu0 0
  %4298 = vperm.xlu0 %4297, %v3861
  %v4299 = vpop.permute.xlu0 %4298
  %4302 = vset.pattern.permute.xlu0 0
  %4303 = vperm.xlu0 %4302, %v3863
  %v4304 = vpop.permute.xlu0 %4303
  %4307 = vset.pattern.permute.xlu0 0
  %4308 = vperm.xlu0 %4307, %v3866
  %v4309 = vpop.permute.xlu0 %4308
  %4312 = vset.pattern.permute.xlu0 0
  %4313 = vperm.xlu0 %4312, %v3868
  %v4314 = vpop.permute.xlu0 %4313
  %4317 = vset.pattern.permute.xlu0 0
  %4318 = vperm.xlu0 %4317, %v3871
  %v4319 = vpop.permute.xlu0 %4318
  %4322 = vset.pattern.permute.xlu0 0
  %4323 = vperm.xlu0 %4322, %v3873
  %v4324 = vpop.permute.xlu0 %4323
  %4327 = vset.pattern.permute.xlu0 0
  %4328 = vperm.xlu0 %4327, %v3876
  %v4329 = vpop.permute.xlu0 %4328
  %4332 = vset.pattern.permute.xlu0 0
  %4333 = vperm.xlu0 %4332, %v3878
  %v4334 = vpop.permute.xlu0 %4333
  %4337 = vset.pattern.permute.xlu0 0
  %4338 = vperm.xlu0 %4337, %v3881
  %v4339 = vpop.permute.xlu0 %4338
  %4342 = vset.pattern.permute.xlu0 0
  %4343 = vperm.xlu0 %4342, %v3883
  %v4344 = vpop.permute.xlu0 %4343
  %4347 = vset.pattern.permute.xlu0 0
  %4348 = vperm.xlu0 %4347, %v3886
  %v4349 = vpop.permute.xlu0 %4348
  %4352 = vset.pattern.permute.xlu0 0
  %4353 = vperm.xlu0 %4352, %v3888
  %v4354 = vpop.permute.xlu0 %4353
  %4357 = vset.pattern.permute.xlu0 0
  %4358 = vperm.xlu0 %4357, %v3891
  %v4359 = vpop.permute.xlu0 %4358
  %4362 = vset.pattern.permute.xlu0 0
  %4363 = vperm.xlu0 %4362, %v3893
  %v4364 = vpop.permute.xlu0 %4363
  %4367 = vset.pattern.permute.xlu0 0
  %4368 = vperm.xlu0 %4367, %v3896
  %v4369 = vpop.permute.xlu0 %4368
  %4372 = vset.pattern.permute.xlu0 0
  %4373 = vperm.xlu0 %4372, %v3898
  %v4374 = vpop.permute.xlu0 %4373
  %4377 = vset.pattern.permute.xlu0 0
  %4378 = vperm.xlu0 %4377, %v3901
  %v4379 = vpop.permute.xlu0 %4378
  %4382 = vset.pattern.permute.xlu0 0
  %4383 = vperm.xlu0 %4382, %v3903
  %v4384 = vpop.permute.xlu0 %4383
  %4387 = vset.pattern.permute.xlu0 0
  %4388 = vperm.xlu0 %4387, %v3906
  %v4389 = vpop.permute.xlu0 %4388
  %4392 = vset.pattern.permute.xlu0 0
  %4393 = vperm.xlu0 %4392, %v3908
  %v4394 = vpop.permute.xlu0 %4393
  %4397 = vset.pattern.permute.xlu0 0
  %4398 = vperm.xlu0 %4397, %v3911
  %v4399 = vpop.permute.xlu0 %4398
  %4402 = vset.pattern.permute.xlu0 0
  %4403 = vperm.xlu0 %4402, %v3913
  %v4404 = vpop.permute.xlu0 %4403
  %4407 = vset.pattern.permute.xlu0 0
  %4408 = vperm.xlu0 %4407, %v3916
  %v4409 = vpop.permute.xlu0 %4408
  %4412 = vset.pattern.permute.xlu0 0
  %4413 = vperm.xlu0 %4412, %v3918
  %v4414 = vpop.permute.xlu0 %4413
  %4417 = vset.pattern.permute.xlu0 0
  %4418 = vperm.xlu0 %4417, %v3921
  %v4419 = vpop.permute.xlu0 %4418
  %4422 = vset.pattern.permute.xlu0 0
  %4423 = vperm.xlu0 %4422, %v3923
  %v4424 = vpop.permute.xlu0 %4423
  %4427 = vset.pattern.permute.xlu0 0
  %4428 = vperm.xlu0 %4427, %v3926
  %v4429 = vpop.permute.xlu0 %4428
  %4432 = vset.pattern.permute.xlu0 0
  %4433 = vperm.xlu0 %4432, %v3928
  %v4434 = vpop.permute.xlu0 %4433
  %4437 = vset.pattern.permute.xlu0 0
  %4438 = vperm.xlu0 %4437, %v3931
  %v4439 = vpop.permute.xlu0 %4438
  %4442 = vset.pattern.permute.xlu0 0
  %4443 = vperm.xlu0 %4442, %v3933
  %v4444 = vpop.permute.xlu0 %4443
  %4447 = vset.pattern.permute.xlu0 0
  %4448 = vperm.xlu0 %4447, %v3936
  %v4449 = vpop.permute.xlu0 %4448
  %4452 = vset.pattern.permute.xlu0 0
  %4453 = vperm.xlu0 %4452, %v3938
  %v4454 = vpop.permute.xlu0 %4453
  %4457 = vset.pattern.permute.xlu0 0
  %4458 = vperm.xlu0 %4457, %v3941
  %v4459 = vpop.permute.xlu0 %4458
  %4462 = vset.pattern.permute.xlu0 0
  %4463 = vperm.xlu0 %4462, %v3943
  %v4464 = vpop.permute.xlu0 %4463
  %v4466 = vmul.f32 %v4149, %v3951
  %v4467 = vmul.f32 %v4154, %v3951
  %v4468 = vmul.f32 %v4159, %v3951
  %v4469 = vmul.f32 %v4164, %v3951
  %v4470 = vmul.f32 %v4169, %v3951
  %v4471 = vmul.f32 %v4174, %v3951
  %v4472 = vmul.f32 %v4179, %v3951
  %v4473 = vmul.f32 %v4184, %v3951
  %v4474 = vmul.f32 %v4189, %v3951
  %v4475 = vmul.f32 %v4194, %v3951
  %v4476 = vmul.f32 %v4199, %v3951
  %v4477 = vmul.f32 %v4204, %v3951
  %v4478 = vmul.f32 %v4209, %v3951
  %v4479 = vmul.f32 %v4214, %v3951
  %v4480 = vmul.f32 %v4219, %v3951
  %v4481 = vmul.f32 %v4224, %v3951
  %v4482 = vmul.f32 %v4229, %v3951
  %v4483 = vmul.f32 %v4234, %v3951
  %v4484 = vmul.f32 %v4239, %v3951
  %v4485 = vmul.f32 %v4244, %v3951
  %v4486 = vmul.f32 %v4249, %v3951
  %v4487 = vmul.f32 %v4254, %v3951
  %v4488 = vmul.f32 %v4259, %v3951
  %v4489 = vmul.f32 %v4264, %v3951
  %v4490 = vmul.f32 %v4269, %v3951
  %v4491 = vmul.f32 %v4274, %v3951
  %v4492 = vmul.f32 %v4279, %v3951
  %v4493 = vmul.f32 %v4284, %v3951
  %v4494 = vmul.f32 %v4289, %v3951
  %v4495 = vmul.f32 %v4294, %v3951
  %v4496 = vmul.f32 %v4299, %v3951
  %v4497 = vmul.f32 %v4304, %v3951
  %v4498 = vmul.f32 %v4309, %v3951
  %v4499 = vmul.f32 %v4314, %v3951
  %v4500 = vmul.f32 %v4319, %v3951
  %v4501 = vmul.f32 %v4324, %v3951
  %v4502 = vmul.f32 %v4329, %v3951
  %v4503 = vmul.f32 %v4334, %v3951
  %v4504 = vmul.f32 %v4339, %v3951
  %v4505 = vmul.f32 %v4344, %v3951
  %v4506 = vmul.f32 %v4349, %v3951
  %v4507 = vmul.f32 %v4354, %v3951
  %v4508 = vmul.f32 %v4359, %v3951
  %v4509 = vmul.f32 %v4364, %v3951
  %v4510 = vmul.f32 %v4369, %v3951
  %v4511 = vmul.f32 %v4374, %v3951
  %v4512 = vmul.f32 %v4379, %v3951
  %v4513 = vmul.f32 %v4384, %v3951
  %v4514 = vmul.f32 %v4389, %v3951
  %v4515 = vmul.f32 %v4394, %v3951
  %v4516 = vmul.f32 %v4399, %v3951
  %v4517 = vmul.f32 %v4404, %v3951
  %v4518 = vmul.f32 %v4409, %v3951
  %v4519 = vmul.f32 %v4414, %v3951
  %v4520 = vmul.f32 %v4419, %v3951
  %v4521 = vmul.f32 %v4424, %v3951
  %v4522 = vmul.f32 %v4429, %v3951
  %v4523 = vmul.f32 %v4434, %v3951
  %v4524 = vmul.f32 %v4439, %v3951
  %v4525 = vmul.f32 %v4444, %v3951
  %v4526 = vmul.f32 %v4449, %v3951
  %v4527 = vmul.f32 %v4454, %v3951
  %v4528 = vmul.f32 %v4459, %v3951
  %v4529 = vmul.f32 %v4464, %v3951
  %v4531 = vperm.slane %v3641, 0
  %4532 = vset.pattern.permute.xlu0 0
  %4533 = vperm.xlu0 %4532, %v4531
  %v4534 = vpop.permute.xlu0 %4533
  %4536 = vmatpush.msra.mxu0 %v4481
  %4537 = vmatpush.msra.mxu0 %v4480
  %4538 = vmatpush.msra.mxu0 %v4479
  %4539 = vmatpush.msra.mxu0 %v4478
  %4540 = vmatpush.msra.mxu0 %v4477
  %4541 = vmatpush.msra.mxu0 %v4476
  %4542 = vmatpush.msra.mxu0 %v4475
  %4543 = vmatpush.msra.mxu0 %v4474
  %4544 = vmatpush.msra.mxu0 %v4473
  %4545 = vmatpush.msra.mxu0 %v4472
  %4546 = vmatpush.msra.mxu0 %v4471
  %4547 = vmatpush.msra.mxu0 %v4470
  %4548 = vmatpush.msra.mxu0 %v4469
  %4549 = vmatpush.msra.mxu0 %v4468
  %4550 = vmatpush.msra.mxu0 %v4467
  %4551 = vmatpush.msra.mxu0 %v4466
  %4552 = vmatmul.f32.gmra.mxu0 %v4114
  %v4553 = vpop.f32.mrf.mxu0
  %v4554 = vadd.f32 %v4534, %v4553
  %4555 = vmatmul.f32.gmra.mxu0 %v4118
  %v4556 = vpop.f32.mrf.mxu0
  %v4557 = vadd.f32 %v4534, %v4556
  %4558 = vmatmul.f32.gmra.mxu0 %v4122
  %v4559 = vpop.f32.mrf.mxu0
  %v4560 = vadd.f32 %v4534, %v4559
  %4561 = vmatmul.f32.gmra.mxu0 %v4126
  %v4562 = vpop.f32.mrf.mxu0
  %v4563 = vadd.f32 %v4534, %v4562
  %4564 = vmatmul.f32.gmra.mxu0 %v4130
  %v4565 = vpop.f32.mrf.mxu0
  %v4566 = vadd.f32 %v4534, %v4565
  %4567 = vmatmul.f32.gmra.mxu0 %v4134
  %v4568 = vpop.f32.mrf.mxu0
  %v4569 = vadd.f32 %v4534, %v4568
  %4570 = vmatmul.f32.gmra.mxu0 %v4138
  %v4571 = vpop.f32.mrf.mxu0
  %v4572 = vadd.f32 %v4534, %v4571
  %4573 = vmatmul.f32.gmra.mxu0 %v4142
  %v4574 = vpop.f32.mrf.mxu0
  %v4575 = vadd.f32 %v4534, %v4574
  %4576 = vdwg.mxu0
  %4577 = vmatpush.msra.mxu0 %v4497
  %4578 = vmatpush.msra.mxu0 %v4496
  %4579 = vmatpush.msra.mxu0 %v4495
  %4580 = vmatpush.msra.mxu0 %v4494
  %4581 = vmatpush.msra.mxu0 %v4493
  %4582 = vmatpush.msra.mxu0 %v4492
  %4583 = vmatpush.msra.mxu0 %v4491
  %4584 = vmatpush.msra.mxu0 %v4490
  %4585 = vmatpush.msra.mxu0 %v4489
  %4586 = vmatpush.msra.mxu0 %v4488
  %4587 = vmatpush.msra.mxu0 %v4487
  %4588 = vmatpush.msra.mxu0 %v4486
  %4589 = vmatpush.msra.mxu0 %v4485
  %4590 = vmatpush.msra.mxu0 %v4484
  %4591 = vmatpush.msra.mxu0 %v4483
  %4592 = vmatpush.msra.mxu0 %v4482
  %4593 = vmatmul.f32.gmra.mxu0 %v4115
  %v4594 = vpop.f32.mrf.mxu0
  %v4595 = vadd.f32 %v4554, %v4594
  %4596 = vmatmul.f32.gmra.mxu0 %v4119
  %v4597 = vpop.f32.mrf.mxu0
  %v4598 = vadd.f32 %v4557, %v4597
  %4599 = vmatmul.f32.gmra.mxu0 %v4123
  %v4600 = vpop.f32.mrf.mxu0
  %v4601 = vadd.f32 %v4560, %v4600
  %4602 = vmatmul.f32.gmra.mxu0 %v4127
  %v4603 = vpop.f32.mrf.mxu0
  %v4604 = vadd.f32 %v4563, %v4603
  %4605 = vmatmul.f32.gmra.mxu0 %v4131
  %v4606 = vpop.f32.mrf.mxu0
  %v4607 = vadd.f32 %v4566, %v4606
  %4608 = vmatmul.f32.gmra.mxu0 %v4135
  %v4609 = vpop.f32.mrf.mxu0
  %v4610 = vadd.f32 %v4569, %v4609
  %4611 = vmatmul.f32.gmra.mxu0 %v4139
  %v4612 = vpop.f32.mrf.mxu0
  %v4613 = vadd.f32 %v4572, %v4612
  %4614 = vmatmul.f32.gmra.mxu0 %v4143
  %v4615 = vpop.f32.mrf.mxu0
  %v4616 = vadd.f32 %v4575, %v4615
  %4617 = vdwg.mxu0
  %4618 = vmatpush.msra.mxu0 %v4513
  %4619 = vmatpush.msra.mxu0 %v4512
  %4620 = vmatpush.msra.mxu0 %v4511
  %4621 = vmatpush.msra.mxu0 %v4510
  %4622 = vmatpush.msra.mxu0 %v4509
  %4623 = vmatpush.msra.mxu0 %v4508
  %4624 = vmatpush.msra.mxu0 %v4507
  %4625 = vmatpush.msra.mxu0 %v4506
  %4626 = vmatpush.msra.mxu0 %v4505
  %4627 = vmatpush.msra.mxu0 %v4504
  %4628 = vmatpush.msra.mxu0 %v4503
  %4629 = vmatpush.msra.mxu0 %v4502
  %4630 = vmatpush.msra.mxu0 %v4501
  %4631 = vmatpush.msra.mxu0 %v4500
  %4632 = vmatpush.msra.mxu0 %v4499
  %4633 = vmatpush.msra.mxu0 %v4498
  %4634 = vmatmul.f32.gmra.mxu0 %v4116
  %v4635 = vpop.f32.mrf.mxu0
  %v4636 = vadd.f32 %v4595, %v4635
  %4637 = vmatmul.f32.gmra.mxu0 %v4120
  %v4638 = vpop.f32.mrf.mxu0
  %v4639 = vadd.f32 %v4598, %v4638
  %4640 = vmatmul.f32.gmra.mxu0 %v4124
  %v4641 = vpop.f32.mrf.mxu0
  %v4642 = vadd.f32 %v4601, %v4641
  %4643 = vmatmul.f32.gmra.mxu0 %v4128
  %v4644 = vpop.f32.mrf.mxu0
  %v4645 = vadd.f32 %v4604, %v4644
  %4646 = vmatmul.f32.gmra.mxu0 %v4132
  %v4647 = vpop.f32.mrf.mxu0
  %v4648 = vadd.f32 %v4607, %v4647
  %4649 = vmatmul.f32.gmra.mxu0 %v4136
  %v4650 = vpop.f32.mrf.mxu0
  %v4651 = vadd.f32 %v4610, %v4650
  %4652 = vmatmul.f32.gmra.mxu0 %v4140
  %v4653 = vpop.f32.mrf.mxu0
  %v4654 = vadd.f32 %v4613, %v4653
  %4655 = vmatmul.f32.gmra.mxu0 %v4144
  %v4656 = vpop.f32.mrf.mxu0
  %v4657 = vadd.f32 %v4616, %v4656
  %4658 = vdwg.mxu0
  %4659 = vmatpush.msra.mxu0 %v4529
  %4660 = vmatpush.msra.mxu0 %v4528
  %4661 = vmatpush.msra.mxu0 %v4527
  %4662 = vmatpush.msra.mxu0 %v4526
  %4663 = vmatpush.msra.mxu0 %v4525
  %4664 = vmatpush.msra.mxu0 %v4524
  %4665 = vmatpush.msra.mxu0 %v4523
  %4666 = vmatpush.msra.mxu0 %v4522
  %4667 = vmatpush.msra.mxu0 %v4521
  %4668 = vmatpush.msra.mxu0 %v4520
  %4669 = vmatpush.msra.mxu0 %v4519
  %4670 = vmatpush.msra.mxu0 %v4518
  %4671 = vmatpush.msra.mxu0 %v4517
  %4672 = vmatpush.msra.mxu0 %v4516
  %4673 = vmatpush.msra.mxu0 %v4515
  %4674 = vmatpush.msra.mxu0 %v4514
  %4675 = vmatmul.f32.gmra.mxu0 %v4117
  %v4676 = vpop.f32.mrf.mxu0
  %v4677 = vadd.f32 %v4636, %v4676
  %4678 = vmatmul.f32.gmra.mxu0 %v4121
  %v4679 = vpop.f32.mrf.mxu0
  %v4680 = vadd.f32 %v4639, %v4679
  %4681 = vmatmul.f32.gmra.mxu0 %v4125
  %v4682 = vpop.f32.mrf.mxu0
  %v4683 = vadd.f32 %v4642, %v4682
  %4684 = vmatmul.f32.gmra.mxu0 %v4129
  %v4685 = vpop.f32.mrf.mxu0
  %v4686 = vadd.f32 %v4645, %v4685
  %4687 = vmatmul.f32.gmra.mxu0 %v4133
  %v4688 = vpop.f32.mrf.mxu0
  %v4689 = vadd.f32 %v4648, %v4688
  %4690 = vmatmul.f32.gmra.mxu0 %v4137
  %v4691 = vpop.f32.mrf.mxu0
  %v4692 = vadd.f32 %v4651, %v4691
  %4693 = vmatmul.f32.gmra.mxu0 %v4141
  %v4694 = vpop.f32.mrf.mxu0
  %v4695 = vadd.f32 %v4654, %v4694
  %4696 = vmatmul.f32.gmra.mxu0 %v4145
  %v4697 = vpop.f32.mrf.mxu0
  %v4698 = vadd.f32 %v4657, %v4697
  %4699 = vdwg.mxu0
  %v4700 = vmin.f32 %v4677, 0.0
  %v4701 = vmin.f32 %v4680, 0.0
  %v4702 = vmin.f32 %v4683, 0.0
  %v4703 = vmin.f32 %v4686, 0.0
  %v4704 = vmin.f32 %v4689, 0.0
  %v4705 = vmin.f32 %v4692, 0.0
  %v4706 = vmin.f32 %v4695, 0.0
  %v4707 = vmin.f32 %v4698, 0.0
  %v4708 = vand.u32 2147483647, %v4677
  %v4709 = vand.u32 2147483647, %v4680
  %v4710 = vand.u32 2147483647, %v4683
  %v4711 = vand.u32 2147483647, %v4686
  %v4712 = vand.u32 2147483647, %v4689
  %v4713 = vand.u32 2147483647, %v4692
  %v4714 = vand.u32 2147483647, %v4695
  %v4715 = vand.u32 2147483647, %v4698
  %v4716 = vsub.f32 0.0, %v4708
  %v4717 = vsub.f32 0.0, %v4709
  %v4718 = vsub.f32 0.0, %v4710
  %v4719 = vsub.f32 0.0, %v4711
  %v4720 = vsub.f32 0.0, %v4712
  %v4721 = vsub.f32 0.0, %v4713
  %v4722 = vsub.f32 0.0, %v4714
  %v4723 = vsub.f32 0.0, %v4715
  %v4724 = vmul.f32 %v4716, 1.442695
  %v4725 = vpow.pop %v4724
  %v4726 = vmul.f32 %v4717, 1.442695
  %v4727 = vpow.pop %v4726
  %v4728 = vmul.f32 %v4718, 1.442695
  %v4729 = vpow.pop %v4728
  %v4730 = vmul.f32 %v4719, 1.442695
  %v4731 = vpow.pop %v4730
  %v4732 = vmul.f32 %v4720, 1.442695
  %v4733 = vpow.pop %v4732
  %v4734 = vmul.f32 %v4721, 1.442695
  %v4735 = vpow.pop %v4734
  %v4736 = vmul.f32 %v4722, 1.442695
  %v4737 = vpow.pop %v4736
  %v4738 = vmul.f32 %v4723, 1.442695
  %v4739 = vpow.pop %v4738
  %v4740 = vadd.f32 %v4725, 1.0
  %v4741 = vadd.f32 %v4727, 1.0
  %v4742 = vadd.f32 %v4729, 1.0
  %v4743 = vadd.f32 %v4731, 1.0
  %v4744 = vadd.f32 %v4733, 1.0
  %v4745 = vadd.f32 %v4735, 1.0
  %v4746 = vadd.f32 %v4737, 1.0
  %v4747 = vadd.f32 %v4739, 1.0
  %v4748 = vlog2.pop %v4740
  %v4749 = vmul.f32 %v4748, 0.6931472
  %v4750 = vlog2.pop %v4741
  %v4751 = vmul.f32 %v4750, 0.6931472
  %v4752 = vlog2.pop %v4742
  %v4753 = vmul.f32 %v4752, 0.6931472
  %v4754 = vlog2.pop %v4743
  %v4755 = vmul.f32 %v4754, 0.6931472
  %v4756 = vlog2.pop %v4744
  %v4757 = vmul.f32 %v4756, 0.6931472
  %v4758 = vlog2.pop %v4745
  %v4759 = vmul.f32 %v4758, 0.6931472
  %v4760 = vlog2.pop %v4746
  %v4761 = vmul.f32 %v4760, 0.6931472
  %v4762 = vlog2.pop %v4747
  %v4763 = vmul.f32 %v4762, 0.6931472
  %v4764 = vsub.f32 %v4700, %v4749
  %v4765 = vsub.f32 %v4701, %v4751
  %v4766 = vsub.f32 %v4702, %v4753
  %v4767 = vsub.f32 %v4703, %v4755
  %v4768 = vsub.f32 %v4704, %v4757
  %v4769 = vsub.f32 %v4705, %v4759
  %v4770 = vsub.f32 %v4706, %v4761
  %v4771 = vsub.f32 %v4707, %v4763
  %v4772 = vsub.f32 %v4764, %v4677
  %v4773 = vsub.f32 %v4765, %v4680
  %v4774 = vsub.f32 %v4766, %v4683
  %v4775 = vsub.f32 %v4767, %v4686
  %v4776 = vsub.f32 %v4768, %v4689
  %v4777 = vsub.f32 %v4769, %v4692
  %v4778 = vsub.f32 %v4770, %v4695
  %v4779 = vsub.f32 %v4771, %v4698
  %4780 = vst.msk [vmem:[%s12] sm:$0xff] %vm3675, %v4764
  %4781 = vst.msk [vmem:[%s12 + $0x8] sm:$0xff] %vm3675, %v4765
  %4782 = vst.msk [vmem:[%s12 + $0x10] sm:$0xff] %vm3675, %v4766
  %4783 = vst.msk [vmem:[%s12 + $0x18] sm:$0xff] %vm3675, %v4767
  %4784 = vst.msk [vmem:[%s12 + $0x20] sm:$0xff] %vm3675, %v4768
  %4785 = vst.msk [vmem:[%s12 + $0x28] sm:$0xff] %vm3675, %v4769
  %4786 = vst.msk [vmem:[%s12 + $0x30] sm:$0xff] %vm3675, %v4770
  %4787 = vst.msk [vmem:[%s12 + $0x38] sm:$0xff] %vm3675, %v4771
  %4788 = vst.msk [vmem:[%s13] sm:$0xff] %vm3675, %v4772
  %4789 = vst.msk [vmem:[%s13 + $0x8] sm:$0xff] %vm3675, %v4773
  %4790 = vst.msk [vmem:[%s13 + $0x10] sm:$0xff] %vm3675, %v4774
  %4791 = vst.msk [vmem:[%s13 + $0x18] sm:$0xff] %vm3675, %v4775
  %4792 = vst.msk [vmem:[%s13 + $0x20] sm:$0xff] %vm3675, %v4776
  %4793 = vst.msk [vmem:[%s13 + $0x28] sm:$0xff] %vm3675, %v4777
  %4794 = vst.msk [vmem:[%s13 + $0x30] sm:$0xff] %vm3675, %v4778
  %4795 = vst.msk [vmem:[%s13 + $0x38] sm:$0xff] %vm3675, %v4779
  %vm4796 = vcmp.eq.s32.totalorder %v3948, 7
  %v4797 = vsel %vm4796, 0.0, %v4772
  %v4798 = vsel %vm4796, 0.0, %v4773
  %v4799 = vsel %vm4796, 0.0, %v4774
  %v4800 = vsel %vm4796, 0.0, %v4775
  %v4801 = vsel %vm4796, 0.0, %v4776
  %v4802 = vsel %vm4796, 0.0, %v4777
  %v4803 = vsel %vm4796, 0.0, %v4778
  %vm4804 = vcmp.lt.s32.totalorder %v3946, %v3948
  %v4805 = vsel %vm4804, 1, 0
  %v4806 = vcvt.s32.f32 %v4805
  %vm4807 = vcmp.le.s32.totalorder %v3946, %v3948
  %v4808 = vsel %vm4807, 1, 0
  %v4809 = vcvt.s32.f32 %v4808
  %vm4810 = vcmp.ge.s32.totalorder %v3946, %v3948
  %v4811 = vsel %vm4810, 1, 0
  %v4812 = vcvt.s32.f32 %v4811
  %vm4813 = vcmp.gt.s32.totalorder %v3946, %v3948
  %v4814 = vsel %vm4813, 1, 0
  %v4815 = vcvt.s32.f32 %v4814
  %v4817 = vsel %vm3675, %v4764, 0
  %v4820 = vsel %vm3675, %v4765, 0
  %v4823 = vsel %vm3675, %v4766, 0
  %v4826 = vsel %vm3675, %v4767, 0
  %v4829 = vsel %vm3675, %v4768, 0
  %v4832 = vsel %vm3675, %v4769, 0
  %v4835 = vsel %vm3675, %v4770, 0
  %v4838 = vsel %vm3675, %v4771, 0
  %4840 = vmatpush.msra.mxu0 0.0
  %4841 = vmatpush.msra.mxu0 0.0
  %4842 = vmatpush.msra.mxu0 0.0
  %4843 = vmatpush.msra.mxu0 0.0
  %4844 = vmatpush.msra.mxu0 0.0
  %4845 = vmatpush.msra.mxu0 0.0
  %4846 = vmatpush.msra.mxu0 0.0
  %4847 = vmatpush.msra.mxu0 0.0
  %4848 = vmatpush.msra.mxu0 0.0
  %4849 = vmatpush.msra.mxu0 0.0
  %4850 = vmatpush.msra.mxu0 0.0
  %4851 = vmatpush.msra.mxu0 0.0
  %4852 = vmatpush.msra.mxu0 0.0
  %4853 = vmatpush.msra.mxu0 0.0
  %4854 = vmatpush.msra.mxu0 0.0
  %4855 = vmatpush.msra.mxu0 %v4806
  %4856 = vmatmul.f32.gmra.mxu0 %v4817
  %v4857 = vpop.f32.mrf.mxu0
  %v4858 = vadd.f32 0.0, %v4857
  %4859 = vmatmul.f32.gmra.mxu0 %v4820
  %v4860 = vpop.f32.mrf.mxu0
  %v4861 = vadd.f32 0.0, %v4860
  %4862 = vmatmul.f32.gmra.mxu0 %v4823
  %v4863 = vpop.f32.mrf.mxu0
  %v4864 = vadd.f32 0.0, %v4863
  %4865 = vmatmul.f32.gmra.mxu0 %v4826
  %v4866 = vpop.f32.mrf.mxu0
  %v4867 = vadd.f32 0.0, %v4866
  %4868 = vmatmul.f32.gmra.mxu0 %v4829
  %v4869 = vpop.f32.mrf.mxu0
  %v4870 = vadd.f32 0.0, %v4869
  %4871 = vmatmul.f32.gmra.mxu0 %v4832
  %v4872 = vpop.f32.mrf.mxu0
  %v4873 = vadd.f32 0.0, %v4872
  %4874 = vmatmul.f32.gmra.mxu0 %v4835
  %v4875 = vpop.f32.mrf.mxu0
  %v4876 = vadd.f32 0.0, %v4875
  %4877 = vmatmul.f32.gmra.mxu0 %v4838
  %v4878 = vpop.f32.mrf.mxu0
  %4879 = vdwg.mxu0
  %v4880 = vld [vmem:[%s1] sm:$0xff]
  %v4881 = vadd.f32 %v4880, -2.0794415
  %v4882 = vsub.f32 %v4881, %v4858
  %v4883 = vsel %vm3675, %v4882, -inf
  %4884 = vmax.xlane.f32.xlu0 %v4883
  %v4885 = vpop.xlane.xlu0 %4884
  %v4886 = vsub.f32 %v4882, %v4885
  %v4887 = vmul.f32 %v4886, 1.442695
  %v4888 = vpow.pop %v4887
  %v4890 = vsel %vm3675, %v4888, 0
  %4892 = vmatpush.msra.mxu0 0.0
  %4893 = vmatpush.msra.mxu0 0.0
  %4894 = vmatpush.msra.mxu0 0.0
  %4895 = vmatpush.msra.mxu0 0.0
  %4896 = vmatpush.msra.mxu0 0.0
  %4897 = vmatpush.msra.mxu0 0.0
  %4898 = vmatpush.msra.mxu0 0.0
  %4899 = vmatpush.msra.mxu0 0.0
  %4900 = vmatpush.msra.mxu0 0.0
  %4901 = vmatpush.msra.mxu0 0.0
  %4902 = vmatpush.msra.mxu0 0.0
  %4903 = vmatpush.msra.mxu0 0.0
  %4904 = vmatpush.msra.mxu0 0.0
  %4905 = vmatpush.msra.mxu0 0.0
  %4906 = vmatpush.msra.mxu0 0.0
  %4907 = vmatpush.msra.mxu0 %v4809
  %4908 = vmatmul.f32.gmra.mxu0 %v4890
  %v4909 = vpop.f32.mrf.mxu0
  %v4910 = vadd.f32 0.0, %v4909
  %4911 = vdwg.mxu0
  %s4912 = scalar_lea.vmem %s1, 8
  %v4913 = vld [vmem:[%s4912] sm:$0xff]
  %v4914 = vadd.f32 %v4913, %v4797
  %v4915 = vadd.f32 %v4914, %v4858
  %v4916 = vadd.f32 %v4915, %v4885
  %v4917 = vlog2.pop %v4910
  %v4918 = vmul.f32 %v4917, 0.6931472
  %v4919 = vadd.f32 %v4916, %v4918
  %v4920 = vsub.f32 %v4919, %v4861
  %v4921 = vsel %vm3675, %v4920, -inf
  %4922 = vmax.xlane.f32.xlu0 %v4921
  %v4923 = vpop.xlane.xlu0 %4922
  %v4924 = vsub.f32 %v4920, %v4923
  %v4925 = vmul.f32 %v4924, 1.442695
  %v4926 = vpow.pop %v4925
  %v4928 = vsel %vm3675, %v4926, 0
  %4930 = vmatpush.msra.mxu0 0.0
  %4931 = vmatpush.msra.mxu0 0.0
  %4932 = vmatpush.msra.mxu0 0.0
  %4933 = vmatpush.msra.mxu0 0.0
  %4934 = vmatpush.msra.mxu0 0.0
  %4935 = vmatpush.msra.mxu0 0.0
  %4936 = vmatpush.msra.mxu0 0.0
  %4937 = vmatpush.msra.mxu0 0.0
  %4938 = vmatpush.msra.mxu0 0.0
  %4939 = vmatpush.msra.mxu0 0.0
  %4940 = vmatpush.msra.mxu0 0.0
  %4941 = vmatpush.msra.mxu0 0.0
  %4942 = vmatpush.msra.mxu0 0.0
  %4943 = vmatpush.msra.mxu0 0.0
  %4944 = vmatpush.msra.mxu0 0.0
  %4945 = vmatpush.msra.mxu0 %v4809
  %4946 = vmatmul.f32.gmra.mxu0 %v4928
  %v4947 = vpop.f32.mrf.mxu0
  %v4948 = vadd.f32 0.0, %v4947
  %4949 = vdwg.mxu0
  %s4950 = scalar_lea.vmem %s1, 16
  %v4951 = vld [vmem:[%s4950] sm:$0xff]
  %v4952 = vadd.f32 %v4951, %v4798
  %v4953 = vadd.f32 %v4952, %v4861
  %v4954 = vadd.f32 %v4953, %v4923
  %v4955 = vlog2.pop %v4948
  %v4956 = vmul.f32 %v4955, 0.6931472
  %v4957 = vadd.f32 %v4954, %v4956
  %v4958 = vsub.f32 %v4957, %v4864
  %v4959 = vsel %vm3675, %v4958, -inf
  %4960 = vmax.xlane.f32.xlu0 %v4959
  %v4961 = vpop.xlane.xlu0 %4960
  %v4962 = vsub.f32 %v4958, %v4961
  %v4963 = vmul.f32 %v4962, 1.442695
  %v4964 = vpow.pop %v4963
  %v4966 = vsel %vm3675, %v4964, 0
  %4968 = vmatpush.msra.mxu0 0.0
  %4969 = vmatpush.msra.mxu0 0.0
  %4970 = vmatpush.msra.mxu0 0.0
  %4971 = vmatpush.msra.mxu0 0.0
  %4972 = vmatpush.msra.mxu0 0.0
  %4973 = vmatpush.msra.mxu0 0.0
  %4974 = vmatpush.msra.mxu0 0.0
  %4975 = vmatpush.msra.mxu0 0.0
  %4976 = vmatpush.msra.mxu0 0.0
  %4977 = vmatpush.msra.mxu0 0.0
  %4978 = vmatpush.msra.mxu0 0.0
  %4979 = vmatpush.msra.mxu0 0.0
  %4980 = vmatpush.msra.mxu0 0.0
  %4981 = vmatpush.msra.mxu0 0.0
  %4982 = vmatpush.msra.mxu0 0.0
  %4983 = vmatpush.msra.mxu0 %v4809
  %4984 = vmatmul.f32.gmra.mxu0 %v4966
  %v4985 = vpop.f32.mrf.mxu0
  %v4986 = vadd.f32 0.0, %v4985
  %4987 = vdwg.mxu0
  %s4988 = scalar_lea.vmem %s1, 24
  %v4989 = vld [vmem:[%s4988] sm:$0xff]
  %v4990 = vadd.f32 %v4989, %v4799
  %v4991 = vadd.f32 %v4990, %v4864
  %v4992 = vadd.f32 %v4991, %v4961
  %v4993 = vlog2.pop %v4986
  %v4994 = vmul.f32 %v4993, 0.6931472
  %v4995 = vadd.f32 %v4992, %v4994
  %v4996 = vsub.f32 %v4995, %v4867
  %v4997 = vsel %vm3675, %v4996, -inf
  %4998 = vmax.xlane.f32.xlu0 %v4997
  %v4999 = vpop.xlane.xlu0 %4998
  %v5000 = vsub.f32 %v4996, %v4999
  %v5001 = vmul.f32 %v5000, 1.442695
  %v5002 = vpow.pop %v5001
  %v5004 = vsel %vm3675, %v5002, 0
  %5006 = vmatpush.msra.mxu0 0.0
  %5007 = vmatpush.msra.mxu0 0.0
  %5008 = vmatpush.msra.mxu0 0.0
  %5009 = vmatpush.msra.mxu0 0.0
  %5010 = vmatpush.msra.mxu0 0.0
  %5011 = vmatpush.msra.mxu0 0.0
  %5012 = vmatpush.msra.mxu0 0.0
  %5013 = vmatpush.msra.mxu0 0.0
  %5014 = vmatpush.msra.mxu0 0.0
  %5015 = vmatpush.msra.mxu0 0.0
  %5016 = vmatpush.msra.mxu0 0.0
  %5017 = vmatpush.msra.mxu0 0.0
  %5018 = vmatpush.msra.mxu0 0.0
  %5019 = vmatpush.msra.mxu0 0.0
  %5020 = vmatpush.msra.mxu0 0.0
  %5021 = vmatpush.msra.mxu0 %v4809
  %5022 = vmatmul.f32.gmra.mxu0 %v5004
  %v5023 = vpop.f32.mrf.mxu0
  %v5024 = vadd.f32 0.0, %v5023
  %5025 = vdwg.mxu0
  %s5026 = scalar_lea.vmem %s1, 32
  %v5027 = vld [vmem:[%s5026] sm:$0xff]
  %v5028 = vadd.f32 %v5027, %v4800
  %v5029 = vadd.f32 %v5028, %v4867
  %v5030 = vadd.f32 %v5029, %v4999
  %v5031 = vlog2.pop %v5024
  %v5032 = vmul.f32 %v5031, 0.6931472
  %v5033 = vadd.f32 %v5030, %v5032
  %v5034 = vsub.f32 %v5033, %v4870
  %v5035 = vsel %vm3675, %v5034, -inf
  %5036 = vmax.xlane.f32.xlu0 %v5035
  %v5037 = vpop.xlane.xlu0 %5036
  %v5038 = vsub.f32 %v5034, %v5037
  %v5039 = vmul.f32 %v5038, 1.442695
  %v5040 = vpow.pop %v5039
  %v5042 = vsel %vm3675, %v5040, 0
  %5044 = vmatpush.msra.mxu0 0.0
  %5045 = vmatpush.msra.mxu0 0.0
  %5046 = vmatpush.msra.mxu0 0.0
  %5047 = vmatpush.msra.mxu0 0.0
  %5048 = vmatpush.msra.mxu0 0.0
  %5049 = vmatpush.msra.mxu0 0.0
  %5050 = vmatpush.msra.mxu0 0.0
  %5051 = vmatpush.msra.mxu0 0.0
  %5052 = vmatpush.msra.mxu0 0.0
  %5053 = vmatpush.msra.mxu0 0.0
  %5054 = vmatpush.msra.mxu0 0.0
  %5055 = vmatpush.msra.mxu0 0.0
  %5056 = vmatpush.msra.mxu0 0.0
  %5057 = vmatpush.msra.mxu0 0.0
  %5058 = vmatpush.msra.mxu0 0.0
  %5059 = vmatpush.msra.mxu0 %v4809
  %5060 = vmatmul.f32.gmra.mxu0 %v5042
  %v5061 = vpop.f32.mrf.mxu0
  %v5062 = vadd.f32 0.0, %v5061
  %5063 = vdwg.mxu0
  %s5064 = scalar_lea.vmem %s1, 40
  %v5065 = vld [vmem:[%s5064] sm:$0xff]
  %v5066 = vadd.f32 %v5065, %v4801
  %v5067 = vadd.f32 %v5066, %v4870
  %v5068 = vadd.f32 %v5067, %v5037
  %v5069 = vlog2.pop %v5062
  %v5070 = vmul.f32 %v5069, 0.6931472
  %v5071 = vadd.f32 %v5068, %v5070
  %v5072 = vsub.f32 %v5071, %v4873
  %v5073 = vsel %vm3675, %v5072, -inf
  %5074 = vmax.xlane.f32.xlu0 %v5073
  %v5075 = vpop.xlane.xlu0 %5074
  %v5076 = vsub.f32 %v5072, %v5075
  %v5077 = vmul.f32 %v5076, 1.442695
  %v5078 = vpow.pop %v5077
  %v5080 = vsel %vm3675, %v5078, 0
  %5082 = vmatpush.msra.mxu0 0.0
  %5083 = vmatpush.msra.mxu0 0.0
  %5084 = vmatpush.msra.mxu0 0.0
  %5085 = vmatpush.msra.mxu0 0.0
  %5086 = vmatpush.msra.mxu0 0.0
  %5087 = vmatpush.msra.mxu0 0.0
  %5088 = vmatpush.msra.mxu0 0.0
  %5089 = vmatpush.msra.mxu0 0.0
  %5090 = vmatpush.msra.mxu0 0.0
  %5091 = vmatpush.msra.mxu0 0.0
  %5092 = vmatpush.msra.mxu0 0.0
  %5093 = vmatpush.msra.mxu0 0.0
  %5094 = vmatpush.msra.mxu0 0.0
  %5095 = vmatpush.msra.mxu0 0.0
  %5096 = vmatpush.msra.mxu0 0.0
  %5097 = vmatpush.msra.mxu0 %v4809
  %5098 = vmatmul.f32.gmra.mxu0 %v5080
  %v5099 = vpop.f32.mrf.mxu0
  %v5100 = vadd.f32 0.0, %v5099
  %5101 = vdwg.mxu0
  %s5102 = scalar_lea.vmem %s1, 48
  %v5103 = vld [vmem:[%s5102] sm:$0xff]
  %v5104 = vadd.f32 %v5103, %v4802
  %v5105 = vadd.f32 %v5104, %v4873
  %v5106 = vadd.f32 %v5105, %v5075
  %v5107 = vlog2.pop %v5100
  %v5108 = vmul.f32 %v5107, 0.6931472
  %v5109 = vadd.f32 %v5106, %v5108
  %v5110 = vsub.f32 %v5109, %v4876
  %v5111 = vsel %vm3675, %v5110, -inf
  %5112 = vmax.xlane.f32.xlu0 %v5111
  %v5113 = vpop.xlane.xlu0 %5112
  %v5114 = vsub.f32 %v5110, %v5113
  %v5115 = vmul.f32 %v5114, 1.442695
  %v5116 = vpow.pop %v5115
  %v5118 = vsel %vm3675, %v5116, 0
  %5120 = vmatpush.msra.mxu0 0.0
  %5121 = vmatpush.msra.mxu0 0.0
  %5122 = vmatpush.msra.mxu0 0.0
  %5123 = vmatpush.msra.mxu0 0.0
  %5124 = vmatpush.msra.mxu0 0.0
  %5125 = vmatpush.msra.mxu0 0.0
  %5126 = vmatpush.msra.mxu0 0.0
  %5127 = vmatpush.msra.mxu0 0.0
  %5128 = vmatpush.msra.mxu0 0.0
  %5129 = vmatpush.msra.mxu0 0.0
  %5130 = vmatpush.msra.mxu0 0.0
  %5131 = vmatpush.msra.mxu0 0.0
  %5132 = vmatpush.msra.mxu0 0.0
  %5133 = vmatpush.msra.mxu0 0.0
  %5134 = vmatpush.msra.mxu0 0.0
  %5135 = vmatpush.msra.mxu0 %v4809
  %5136 = vmatmul.f32.gmra.mxu0 %v5118
  %v5137 = vpop.f32.mrf.mxu0
  %v5138 = vadd.f32 0.0, %v5137
  %5139 = vdwg.mxu0
  %s5140 = scalar_lea.vmem %s1, 56
  %v5141 = vld [vmem:[%s5140] sm:$0xff]
  %v5142 = vadd.f32 %v5141, %v4803
  %v5143 = vadd.f32 %v5142, %v4876
  %v5144 = vadd.f32 %v5143, %v5113
  %v5145 = vlog2.pop %v5138
  %v5146 = vmul.f32 %v5145, 0.6931472
  %v5147 = vadd.f32 %v5144, %v5146
  %v5148 = vsel %vm3675, %v5147, -inf
  %5149 = vmax.xlane.f32.xlu0 %v5148
  %v5150 = vpop.xlane.xlu0 %5149
  %v5151 = vsub.f32 %v5147, %v5150
  %v5152 = vmul.f32 %v5151, 1.442695
  %v5153 = vpow.pop %v5152
  %v5154 = vsel %vm3675, %v5153, 0.0
  %5155 = vadd.xlane.f32.xlu0 %v5154
  %v5156 = vpop.xlane.xlu0 %5155
  %v5157 = vlog2.pop %v5156
  %v5158 = vmul.f32 %v5157, 0.6931472
  %v5159 = vadd.f32 %v5150, %v5158
  %v5160 = vsub.f32 %v5147, %v5159
  %v5161 = vmul.f32 %v5160, 1.442695
  %v5162 = vpow.pop %v5161
  %s5163 = scalar_lea.vmem %s14, 56
  %5164 = vst.msk [vmem:[%s5163] sm:$0xff] %vm3675, %v5162
  %v5165 = vadd.f32 %v4803, %v4876
  %v5166 = vadd.f32 %v5165, 0.0
  %v5167 = vld [vmem:[%s5140] sm:$0xff]
  %v5168 = vadd.f32 %v5166, %v5167
  %5169 = vst.msk [vmem:[#allocation3 + $0x30] sm:$0xff] %vm3675, %v5168
  %v5170 = vsub.f32 %v5110, %v5159
  %5171 = vst.msk [vmem:[#allocation2 + $0x30] sm:$0xff] %vm3675, %v5170
  %v5172 = vsel %vm3675, %v5168, -inf
  %5173 = vmax.xlane.f32.xlu0 %v5172
  %v5174 = vpop.xlane.xlu0 %5173
  %v5175 = vsub.f32 %v5168, %v5174
  %v5176 = vmul.f32 %v5175, 1.442695
  %v5177 = vpow.pop %v5176
  %v5179 = vsel %vm3675, %v5177, 0
  %5181 = vmatpush.msra.mxu0 0.0
  %5182 = vmatpush.msra.mxu0 0.0
  %5183 = vmatpush.msra.mxu0 0.0
  %5184 = vmatpush.msra.mxu0 0.0
  %5185 = vmatpush.msra.mxu0 0.0
  %5186 = vmatpush.msra.mxu0 0.0
  %5187 = vmatpush.msra.mxu0 0.0
  %5188 = vmatpush.msra.mxu0 0.0
  %5189 = vmatpush.msra.mxu0 0.0
  %5190 = vmatpush.msra.mxu0 0.0
  %5191 = vmatpush.msra.mxu0 0.0
  %5192 = vmatpush.msra.mxu0 0.0
  %5193 = vmatpush.msra.mxu0 0.0
  %5194 = vmatpush.msra.mxu0 0.0
  %5195 = vmatpush.msra.mxu0 0.0
  %5196 = vmatpush.msra.mxu0 %v4812
  %5197 = vmatmul.f32.gmra.mxu0 %v5179
  %v5198 = vpop.f32.mrf.mxu0
  %v5199 = vadd.f32 0.0, %v5198
  %5200 = vdwg.mxu0
  %v5201 = vsub.f32 0.0, %v4876
  %v5202 = vadd.f32 %v5201, %v5174
  %v5203 = vlog2.pop %v5199
  %v5204 = vmul.f32 %v5203, 0.6931472
  %v5205 = vadd.f32 %v5202, %v5204
  %v5206 = vadd.f32 %v5109, %v5205
  %v5207 = vsub.f32 %v5206, %v5159
  %v5208 = vmul.f32 %v5207, 1.442695
  %v5209 = vpow.pop %v5208
  %s5210 = scalar_lea.vmem %s14, 48
  %5211 = vst.msk [vmem:[%s5210] sm:$0xff] %vm3675, %v5209
  %v5212 = vadd.f32 %v4802, %v4873
  %v5213 = vadd.f32 %v5212, %v5205
  %v5214 = vld [vmem:[%s5102] sm:$0xff]
  %v5215 = vadd.f32 %v5213, %v5214
  %5216 = vst.msk [vmem:[#allocation3 + $0x28] sm:$0xff] %vm3675, %v5215
  %v5217 = vsub.f32 %v5072, %v5159
  %5218 = vst.msk [vmem:[#allocation2 + $0x28] sm:$0xff] %vm3675, %v5217
  %v5219 = vsel %vm3675, %v5215, -inf
  %5220 = vmax.xlane.f32.xlu0 %v5219
  %v5221 = vpop.xlane.xlu0 %5220
  %v5222 = vsub.f32 %v5215, %v5221
  %v5223 = vmul.f32 %v5222, 1.442695
  %v5224 = vpow.pop %v5223
  %v5226 = vsel %vm3675, %v5224, 0
  %5228 = vmatpush.msra.mxu0 0.0
  %5229 = vmatpush.msra.mxu0 0.0
  %5230 = vmatpush.msra.mxu0 0.0
  %5231 = vmatpush.msra.mxu0 0.0
  %5232 = vmatpush.msra.mxu0 0.0
  %5233 = vmatpush.msra.mxu0 0.0
  %5234 = vmatpush.msra.mxu0 0.0
  %5235 = vmatpush.msra.mxu0 0.0
  %5236 = vmatpush.msra.mxu0 0.0
  %5237 = vmatpush.msra.mxu0 0.0
  %5238 = vmatpush.msra.mxu0 0.0
  %5239 = vmatpush.msra.mxu0 0.0
  %5240 = vmatpush.msra.mxu0 0.0
  %5241 = vmatpush.msra.mxu0 0.0
  %5242 = vmatpush.msra.mxu0 0.0
  %5243 = vmatpush.msra.mxu0 %v4812
  %5244 = vmatmul.f32.gmra.mxu0 %v5226
  %v5245 = vpop.f32.mrf.mxu0
  %v5246 = vadd.f32 0.0, %v5245
  %5247 = vdwg.mxu0
  %v5248 = vsub.f32 0.0, %v4873
  %v5249 = vadd.f32 %v5248, %v5221
  %v5250 = vlog2.pop %v5246
  %v5251 = vmul.f32 %v5250, 0.6931472
  %v5252 = vadd.f32 %v5249, %v5251
  %v5253 = vadd.f32 %v5071, %v5252
  %v5254 = vsub.f32 %v5253, %v5159
  %v5255 = vmul.f32 %v5254, 1.442695
  %v5256 = vpow.pop %v5255
  %s5257 = scalar_lea.vmem %s14, 40
  %5258 = vst.msk [vmem:[%s5257] sm:$0xff] %vm3675, %v5256
  %v5259 = vadd.f32 %v4801, %v4870
  %v5260 = vadd.f32 %v5259, %v5252
  %v5261 = vld [vmem:[%s5064] sm:$0xff]
  %v5262 = vadd.f32 %v5260, %v5261
  %5263 = vst.msk [vmem:[#allocation3 + $0x20] sm:$0xff] %vm3675, %v5262
  %v5264 = vsub.f32 %v5034, %v5159
  %5265 = vst.msk [vmem:[#allocation2 + $0x20] sm:$0xff] %vm3675, %v5264
  %v5266 = vsel %vm3675, %v5262, -inf
  %5267 = vmax.xlane.f32.xlu0 %v5266
  %v5268 = vpop.xlane.xlu0 %5267
  %v5269 = vsub.f32 %v5262, %v5268
  %v5270 = vmul.f32 %v5269, 1.442695
  %v5271 = vpow.pop %v5270
  %v5273 = vsel %vm3675, %v5271, 0
  %5275 = vmatpush.msra.mxu0 0.0
  %5276 = vmatpush.msra.mxu0 0.0
  %5277 = vmatpush.msra.mxu0 0.0
  %5278 = vmatpush.msra.mxu0 0.0
  %5279 = vmatpush.msra.mxu0 0.0
  %5280 = vmatpush.msra.mxu0 0.0
  %5281 = vmatpush.msra.mxu0 0.0
  %5282 = vmatpush.msra.mxu0 0.0
  %5283 = vmatpush.msra.mxu0 0.0
  %5284 = vmatpush.msra.mxu0 0.0
  %5285 = vmatpush.msra.mxu0 0.0
  %5286 = vmatpush.msra.mxu0 0.0
  %5287 = vmatpush.msra.mxu0 0.0
  %5288 = vmatpush.msra.mxu0 0.0
  %5289 = vmatpush.msra.mxu0 0.0
  %5290 = vmatpush.msra.mxu0 %v4812
  %5291 = vmatmul.f32.gmra.mxu0 %v5273
  %v5292 = vpop.f32.mrf.mxu0
  %v5293 = vadd.f32 0.0, %v5292
  %5294 = vdwg.mxu0
  %v5295 = vsub.f32 0.0, %v4870
  %v5296 = vadd.f32 %v5295, %v5268
  %v5297 = vlog2.pop %v5293
  %v5298 = vmul.f32 %v5297, 0.6931472
  %v5299 = vadd.f32 %v5296, %v5298
  %v5300 = vadd.f32 %v5033, %v5299
  %v5301 = vsub.f32 %v5300, %v5159
  %v5302 = vmul.f32 %v5301, 1.442695
  %v5303 = vpow.pop %v5302
  %s5304 = scalar_lea.vmem %s14, 32
  %5305 = vst.msk [vmem:[%s5304] sm:$0xff] %vm3675, %v5303
  %v5306 = vadd.f32 %v4800, %v4867
  %v5307 = vadd.f32 %v5306, %v5299
  %v5308 = vld [vmem:[%s5026] sm:$0xff]
  %v5309 = vadd.f32 %v5307, %v5308
  %5310 = vst.msk [vmem:[#allocation3 + $0x18] sm:$0xff] %vm3675, %v5309
  %v5311 = vsub.f32 %v4996, %v5159
  %5312 = vst.msk [vmem:[#allocation2 + $0x18] sm:$0xff] %vm3675, %v5311
  %v5313 = vsel %vm3675, %v5309, -inf
  %5314 = vmax.xlane.f32.xlu0 %v5313
  %v5315 = vpop.xlane.xlu0 %5314
  %v5316 = vsub.f32 %v5309, %v5315
  %v5317 = vmul.f32 %v5316, 1.442695
  %v5318 = vpow.pop %v5317
  %v5320 = vsel %vm3675, %v5318, 0
  %5322 = vmatpush.msra.mxu0 0.0
  %5323 = vmatpush.msra.mxu0 0.0
  %5324 = vmatpush.msra.mxu0 0.0
  %5325 = vmatpush.msra.mxu0 0.0
  %5326 = vmatpush.msra.mxu0 0.0
  %5327 = vmatpush.msra.mxu0 0.0
  %5328 = vmatpush.msra.mxu0 0.0
  %5329 = vmatpush.msra.mxu0 0.0
  %5330 = vmatpush.msra.mxu0 0.0
  %5331 = vmatpush.msra.mxu0 0.0
  %5332 = vmatpush.msra.mxu0 0.0
  %5333 = vmatpush.msra.mxu0 0.0
  %5334 = vmatpush.msra.mxu0 0.0
  %5335 = vmatpush.msra.mxu0 0.0
  %5336 = vmatpush.msra.mxu0 0.0
  %5337 = vmatpush.msra.mxu0 %v4812
  %5338 = vmatmul.f32.gmra.mxu0 %v5320
  %v5339 = vpop.f32.mrf.mxu0
  %v5340 = vadd.f32 0.0, %v5339
  %5341 = vdwg.mxu0
  %v5342 = vsub.f32 0.0, %v4867
  %v5343 = vadd.f32 %v5342, %v5315
  %v5344 = vlog2.pop %v5340
  %v5345 = vmul.f32 %v5344, 0.6931472
  %v5346 = vadd.f32 %v5343, %v5345
  %v5347 = vadd.f32 %v4995, %v5346
  %v5348 = vsub.f32 %v5347, %v5159
  %v5349 = vmul.f32 %v5348, 1.442695
  %v5350 = vpow.pop %v5349
  %s5351 = scalar_lea.vmem %s14, 24
  %5352 = vst.msk [vmem:[%s5351] sm:$0xff] %vm3675, %v5350
  %v5353 = vadd.f32 %v4799, %v4864
  %v5354 = vadd.f32 %v5353, %v5346
  %v5355 = vld [vmem:[%s4988] sm:$0xff]
  %v5356 = vadd.f32 %v5354, %v5355
  %5357 = vst.msk [vmem:[#allocation3 + $0x10] sm:$0xff] %vm3675, %v5356
  %v5358 = vsub.f32 %v4958, %v5159
  %5359 = vst.msk [vmem:[#allocation2 + $0x10] sm:$0xff] %vm3675, %v5358
  %v5360 = vsel %vm3675, %v5356, -inf
  %5361 = vmax.xlane.f32.xlu0 %v5360
  %v5362 = vpop.xlane.xlu0 %5361
  %v5363 = vsub.f32 %v5356, %v5362
  %v5364 = vmul.f32 %v5363, 1.442695
  %v5365 = vpow.pop %v5364
  %v5367 = vsel %vm3675, %v5365, 0
  %5369 = vmatpush.msra.mxu0 0.0
  %5370 = vmatpush.msra.mxu0 0.0
  %5371 = vmatpush.msra.mxu0 0.0
  %5372 = vmatpush.msra.mxu0 0.0
  %5373 = vmatpush.msra.mxu0 0.0
  %5374 = vmatpush.msra.mxu0 0.0
  %5375 = vmatpush.msra.mxu0 0.0
  %5376 = vmatpush.msra.mxu0 0.0
  %5377 = vmatpush.msra.mxu0 0.0
  %5378 = vmatpush.msra.mxu0 0.0
  %5379 = vmatpush.msra.mxu0 0.0
  %5380 = vmatpush.msra.mxu0 0.0
  %5381 = vmatpush.msra.mxu0 0.0
  %5382 = vmatpush.msra.mxu0 0.0
  %5383 = vmatpush.msra.mxu0 0.0
  %5384 = vmatpush.msra.mxu0 %v4812
  %5385 = vmatmul.f32.gmra.mxu0 %v5367
  %v5386 = vpop.f32.mrf.mxu0
  %v5387 = vadd.f32 0.0, %v5386
  %5388 = vdwg.mxu0
  %v5389 = vsub.f32 0.0, %v4864
  %v5390 = vadd.f32 %v5389, %v5362
  %v5391 = vlog2.pop %v5387
  %v5392 = vmul.f32 %v5391, 0.6931472
  %v5393 = vadd.f32 %v5390, %v5392
  %v5394 = vadd.f32 %v4957, %v5393
  %v5395 = vsub.f32 %v5394, %v5159
  %v5396 = vmul.f32 %v5395, 1.442695
  %v5397 = vpow.pop %v5396
  %s5398 = scalar_lea.vmem %s14, 16
  %5399 = vst.msk [vmem:[%s5398] sm:$0xff] %vm3675, %v5397
  %v5400 = vadd.f32 %v4798, %v4861
  %v5401 = vadd.f32 %v5400, %v5393
  %v5402 = vld [vmem:[%s4950] sm:$0xff]
  %v5403 = vadd.f32 %v5401, %v5402
  %5404 = vst.msk [vmem:[#allocation3 + $0x8] sm:$0xff] %vm3675, %v5403
  %v5405 = vsub.f32 %v4920, %v5159
  %5406 = vst.msk [vmem:[#allocation2 + $0x8] sm:$0xff] %vm3675, %v5405
  %v5407 = vsel %vm3675, %v5403, -inf
  %5408 = vmax.xlane.f32.xlu0 %v5407
  %v5409 = vpop.xlane.xlu0 %5408
  %v5410 = vsub.f32 %v5403, %v5409
  %v5411 = vmul.f32 %v5410, 1.442695
  %v5412 = vpow.pop %v5411
  %v5414 = vsel %vm3675, %v5412, 0
  %5416 = vmatpush.msra.mxu0 0.0
  %5417 = vmatpush.msra.mxu0 0.0
  %5418 = vmatpush.msra.mxu0 0.0
  %5419 = vmatpush.msra.mxu0 0.0
  %5420 = vmatpush.msra.mxu0 0.0
  %5421 = vmatpush.msra.mxu0 0.0
  %5422 = vmatpush.msra.mxu0 0.0
  %5423 = vmatpush.msra.mxu0 0.0
  %5424 = vmatpush.msra.mxu0 0.0
  %5425 = vmatpush.msra.mxu0 0.0
  %5426 = vmatpush.msra.mxu0 0.0
  %5427 = vmatpush.msra.mxu0 0.0
  %5428 = vmatpush.msra.mxu0 0.0
  %5429 = vmatpush.msra.mxu0 0.0
  %5430 = vmatpush.msra.mxu0 0.0
  %5431 = vmatpush.msra.mxu0 %v4812
  %5432 = vmatmul.f32.gmra.mxu0 %v5414
  %v5433 = vpop.f32.mrf.mxu0
  %v5434 = vadd.f32 0.0, %v5433
  %5435 = vdwg.mxu0
  %v5436 = vsub.f32 0.0, %v4861
  %v5437 = vadd.f32 %v5436, %v5409
  %v5438 = vlog2.pop %v5434
  %v5439 = vmul.f32 %v5438, 0.6931472
  %v5440 = vadd.f32 %v5437, %v5439
  %v5441 = vadd.f32 %v4919, %v5440
  %v5442 = vsub.f32 %v5441, %v5159
  %v5443 = vmul.f32 %v5442, 1.442695
  %v5444 = vpow.pop %v5443
  %s5445 = scalar_lea.vmem %s14, 8
  %5446 = vst.msk [vmem:[%s5445] sm:$0xff] %vm3675, %v5444
  %v5447 = vadd.f32 %v4797, %v4858
  %v5448 = vadd.f32 %v5447, %v5440
  %v5449 = vld [vmem:[%s4912] sm:$0xff]
  %v5450 = vadd.f32 %v5448, %v5449
  %5451 = vst.msk [vmem:[#allocation3] sm:$0xff] %vm3675, %v5450
  %v5452 = vsub.f32 %v4882, %v5159
  %5453 = vst.msk [vmem:[#allocation2] sm:$0xff] %vm3675, %v5452
  %v5454 = vsel %vm3675, %v5450, -inf
  %5455 = vmax.xlane.f32.xlu0 %v5454
  %v5456 = vpop.xlane.xlu0 %5455
  %v5457 = vsub.f32 %v5450, %v5456
  %v5458 = vmul.f32 %v5457, 1.442695
  %v5459 = vpow.pop %v5458
  %v5461 = vsel %vm3675, %v5459, 0
  %5463 = vmatpush.msra.mxu0 0.0
  %5464 = vmatpush.msra.mxu0 0.0
  %5465 = vmatpush.msra.mxu0 0.0
  %5466 = vmatpush.msra.mxu0 0.0
  %5467 = vmatpush.msra.mxu0 0.0
  %5468 = vmatpush.msra.mxu0 0.0
  %5469 = vmatpush.msra.mxu0 0.0
  %5470 = vmatpush.msra.mxu0 0.0
  %5471 = vmatpush.msra.mxu0 0.0
  %5472 = vmatpush.msra.mxu0 0.0
  %5473 = vmatpush.msra.mxu0 0.0
  %5474 = vmatpush.msra.mxu0 0.0
  %5475 = vmatpush.msra.mxu0 0.0
  %5476 = vmatpush.msra.mxu0 0.0
  %5477 = vmatpush.msra.mxu0 0.0
  %5478 = vmatpush.msra.mxu0 %v4812
  %5479 = vmatmul.f32.gmra.mxu0 %v5461
  %v5480 = vpop.f32.mrf.mxu0
  %v5481 = vadd.f32 0.0, %v5480
  %5482 = vdwg.mxu0
  %v5483 = vsub.f32 0.0, %v4858
  %v5484 = vadd.f32 %v5483, %v5456
  %v5485 = vlog2.pop %v5481
  %v5486 = vmul.f32 %v5485, 0.6931472
  %v5487 = vadd.f32 %v5484, %v5486
  %v5488 = vadd.f32 %v4881, %v5487
  %v5489 = vsub.f32 %v5488, %v5159
  %v5490 = vmul.f32 %v5489, 1.442695
  %v5491 = vpow.pop %v5490
  %5492 = vst.msk [vmem:[%s14] sm:$0xff] %vm3675, %v5491
  %v5493 = vld [vmem:[#allocation2] sm:$0xff]
  %v5494 = vld [vmem:[#allocation2 + $0x8] sm:$0xff]
  %v5495 = vld [vmem:[#allocation2 + $0x10] sm:$0xff]
  %v5496 = vld [vmem:[#allocation2 + $0x18] sm:$0xff]
  %v5497 = vld [vmem:[#allocation2 + $0x20] sm:$0xff]
  %v5498 = vld [vmem:[#allocation2 + $0x28] sm:$0xff]
  %v5499 = vld [vmem:[#allocation2 + $0x30] sm:$0xff]
  %v5500 = vld [vmem:[#allocation3] sm:$0xff]
  %v5501 = vld [vmem:[#allocation3 + $0x8] sm:$0xff]
  %v5502 = vld [vmem:[#allocation3 + $0x10] sm:$0xff]
  %v5503 = vld [vmem:[#allocation3 + $0x18] sm:$0xff]
  %v5504 = vld [vmem:[#allocation3 + $0x20] sm:$0xff]
  %v5505 = vld [vmem:[#allocation3 + $0x28] sm:$0xff]
  %v5506 = vld [vmem:[#allocation3 + $0x30] sm:$0xff]
  %v5507 = vsel %vm3675, %v5493, -inf
  %5508 = vmax.xlane.f32.xlu0 %v5507
  %v5509 = vpop.xlane.xlu0 %5508
  %v5510 = vsel %vm3675, %v5494, -inf
  %5511 = vmax.xlane.f32.xlu0 %v5510
  %v5512 = vpop.xlane.xlu0 %5511
  %v5513 = vsel %vm3675, %v5495, -inf
  %5514 = vmax.xlane.f32.xlu0 %v5513
  %v5515 = vpop.xlane.xlu0 %5514
  %v5516 = vsel %vm3675, %v5496, -inf
  %5517 = vmax.xlane.f32.xlu0 %v5516
  %v5518 = vpop.xlane.xlu0 %5517
  %v5519 = vsel %vm3675, %v5497, -inf
  %5520 = vmax.xlane.f32.xlu0 %v5519
  %v5521 = vpop.xlane.xlu0 %5520
  %v5522 = vsel %vm3675, %v5498, -inf
  %5523 = vmax.xlane.f32.xlu0 %v5522
  %v5524 = vpop.xlane.xlu0 %5523
  %v5525 = vsel %vm3675, %v5499, -inf
  %5526 = vmax.xlane.f32.xlu0 %v5525
  %v5527 = vpop.xlane.xlu0 %5526
  %v5528 = vsel %vm3675, %v5500, -inf
  %5529 = vmax.xlane.f32.xlu0 %v5528
  %v5530 = vpop.xlane.xlu0 %5529
  %v5531 = vsel %vm3675, %v5501, -inf
  %5532 = vmax.xlane.f32.xlu0 %v5531
  %v5533 = vpop.xlane.xlu0 %5532
  %v5534 = vsel %vm3675, %v5502, -inf
  %5535 = vmax.xlane.f32.xlu0 %v5534
  %v5536 = vpop.xlane.xlu0 %5535
  %v5537 = vsel %vm3675, %v5503, -inf
  %5538 = vmax.xlane.f32.xlu0 %v5537
  %v5539 = vpop.xlane.xlu0 %5538
  %v5540 = vsel %vm3675, %v5504, -inf
  %5541 = vmax.xlane.f32.xlu0 %v5540
  %v5542 = vpop.xlane.xlu0 %5541
  %v5543 = vsel %vm3675, %v5505, -inf
  %5544 = vmax.xlane.f32.xlu0 %v5543
  %v5545 = vpop.xlane.xlu0 %5544
  %v5546 = vsel %vm3675, %v5506, -inf
  %5547 = vmax.xlane.f32.xlu0 %v5546
  %v5548 = vpop.xlane.xlu0 %5547
  %v5549 = vsub.f32 %v5493, %v5509
  %v5550 = vsub.f32 %v5494, %v5512
  %v5551 = vsub.f32 %v5495, %v5515
  %v5552 = vsub.f32 %v5496, %v5518
  %v5553 = vsub.f32 %v5497, %v5521
  %v5554 = vsub.f32 %v5498, %v5524
  %v5555 = vsub.f32 %v5499, %v5527
  %v5556 = vmul.f32 %v5549, 1.442695
  %v5557 = vpow.pop %v5556
  %v5558 = vmul.f32 %v5550, 1.442695
  %v5559 = vpow.pop %v5558
  %v5560 = vmul.f32 %v5551, 1.442695
  %v5561 = vpow.pop %v5560
  %v5562 = vmul.f32 %v5552, 1.442695
  %v5563 = vpow.pop %v5562
  %v5564 = vmul.f32 %v5553, 1.442695
  %v5565 = vpow.pop %v5564
  %v5566 = vmul.f32 %v5554, 1.442695
  %v5567 = vpow.pop %v5566
  %v5568 = vmul.f32 %v5555, 1.442695
  %v5569 = vpow.pop %v5568
  %v5571 = vsel %vm3675, %v5557, 0
  %v5574 = vsel %vm3675, %v5559, 0
  %v5577 = vsel %vm3675, %v5561, 0
  %v5580 = vsel %vm3675, %v5563, 0
  %v5583 = vsel %vm3675, %v5565, 0
  %v5586 = vsel %vm3675, %v5567, 0
  %v5589 = vsel %vm3675, %v5569, 0
  %5591 = vmatpush.msra.mxu0 0.0
  %5592 = vmatpush.msra.mxu0 0.0
  %5593 = vmatpush.msra.mxu0 0.0
  %5594 = vmatpush.msra.mxu0 0.0
  %5595 = vmatpush.msra.mxu0 0.0
  %5596 = vmatpush.msra.mxu0 0.0
  %5597 = vmatpush.msra.mxu0 0.0
  %5598 = vmatpush.msra.mxu0 0.0
  %5599 = vmatpush.msra.mxu0 0.0
  %5600 = vmatpush.msra.mxu0 0.0
  %5601 = vmatpush.msra.mxu0 0.0
  %5602 = vmatpush.msra.mxu0 0.0
  %5603 = vmatpush.msra.mxu0 0.0
  %5604 = vmatpush.msra.mxu0 0.0
  %5605 = vmatpush.msra.mxu0 0.0
  %5606 = vmatpush.msra.mxu0 %v4809
  %5607 = vmatmul.f32.gmra.mxu0 %v5571
  %v5608 = vpop.f32.mrf.mxu0
  %v5609 = vadd.f32 0.0, %v5608
  %5610 = vmatmul.f32.gmra.mxu0 %v5574
  %v5611 = vpop.f32.mrf.mxu0
  %v5612 = vadd.f32 0.0, %v5611
  %5613 = vmatmul.f32.gmra.mxu0 %v5577
  %v5614 = vpop.f32.mrf.mxu0
  %v5615 = vadd.f32 0.0, %v5614
  %5616 = vmatmul.f32.gmra.mxu0 %v5580
  %v5617 = vpop.f32.mrf.mxu0
  %v5618 = vadd.f32 0.0, %v5617
  %5619 = vmatmul.f32.gmra.mxu0 %v5583
  %v5620 = vpop.f32.mrf.mxu0
  %v5621 = vadd.f32 0.0, %v5620
  %5622 = vmatmul.f32.gmra.mxu0 %v5586
  %v5623 = vpop.f32.mrf.mxu0
  %v5624 = vadd.f32 0.0, %v5623
  %5625 = vmatmul.f32.gmra.mxu0 %v5589
  %v5626 = vpop.f32.mrf.mxu0
  %v5627 = vadd.f32 0.0, %v5626
  %5628 = vdwg.mxu0
  %v5629 = vsub.f32 %v5500, %v5530
  %v5630 = vsub.f32 %v5501, %v5533
  %v5631 = vsub.f32 %v5502, %v5536
  %v5632 = vsub.f32 %v5503, %v5539
  %v5633 = vsub.f32 %v5504, %v5542
  %v5634 = vsub.f32 %v5505, %v5545
  %v5635 = vsub.f32 %v5506, %v5548
  %v5636 = vmul.f32 %v5629, 1.442695
  %v5637 = vpow.pop %v5636
  %v5638 = vmul.f32 %v5630, 1.442695
  %v5639 = vpow.pop %v5638
  %v5640 = vmul.f32 %v5631, 1.442695
  %v5641 = vpow.pop %v5640
  %v5642 = vmul.f32 %v5632, 1.442695
  %v5643 = vpow.pop %v5642
  %v5644 = vmul.f32 %v5633, 1.442695
  %v5645 = vpow.pop %v5644
  %v5646 = vmul.f32 %v5634, 1.442695
  %v5647 = vpow.pop %v5646
  %v5648 = vmul.f32 %v5635, 1.442695
  %v5649 = vpow.pop %v5648
  %v5651 = vsel %vm3675, %v5637, 0
  %v5654 = vsel %vm3675, %v5639, 0
  %v5657 = vsel %vm3675, %v5641, 0
  %v5660 = vsel %vm3675, %v5643, 0
  %v5663 = vsel %vm3675, %v5645, 0
  %v5666 = vsel %vm3675, %v5647, 0
  %v5669 = vsel %vm3675, %v5649, 0
  %5671 = vmatpush.msra.mxu0 0.0
  %5672 = vmatpush.msra.mxu0 0.0
  %5673 = vmatpush.msra.mxu0 0.0
  %5674 = vmatpush.msra.mxu0 0.0
  %5675 = vmatpush.msra.mxu0 0.0
  %5676 = vmatpush.msra.mxu0 0.0
  %5677 = vmatpush.msra.mxu0 0.0
  %5678 = vmatpush.msra.mxu0 0.0
  %5679 = vmatpush.msra.mxu0 0.0
  %5680 = vmatpush.msra.mxu0 0.0
  %5681 = vmatpush.msra.mxu0 0.0
  %5682 = vmatpush.msra.mxu0 0.0
  %5683 = vmatpush.msra.mxu0 0.0
  %5684 = vmatpush.msra.mxu0 0.0
  %5685 = vmatpush.msra.mxu0 0.0
  %5686 = vmatpush.msra.mxu0 %v4815
  %5687 = vmatmul.f32.gmra.mxu0 %v5651
  %v5688 = vpop.f32.mrf.mxu0
  %v5689 = vadd.f32 0.0, %v5688
  %5690 = vmatmul.f32.gmra.mxu0 %v5654
  %v5691 = vpop.f32.mrf.mxu0
  %v5692 = vadd.f32 0.0, %v5691
  %5693 = vmatmul.f32.gmra.mxu0 %v5657
  %v5694 = vpop.f32.mrf.mxu0
  %v5695 = vadd.f32 0.0, %v5694
  %5696 = vmatmul.f32.gmra.mxu0 %v5660
  %v5697 = vpop.f32.mrf.mxu0
  %v5698 = vadd.f32 0.0, %v5697
  %5699 = vmatmul.f32.gmra.mxu0 %v5663
  %v5700 = vpop.f32.mrf.mxu0
  %v5701 = vadd.f32 0.0, %v5700
  %5702 = vmatmul.f32.gmra.mxu0 %v5666
  %v5703 = vpop.f32.mrf.mxu0
  %v5704 = vadd.f32 0.0, %v5703
  %5705 = vmatmul.f32.gmra.mxu0 %v5669
  %v5706 = vpop.f32.mrf.mxu0
  %v5707 = vadd.f32 0.0, %v5706
  %5708 = vdwg.mxu0
  %v5709 = vmul.f32 %v5609, %v5689
  %v5710 = vmul.f32 %v5612, %v5692
  %v5711 = vmul.f32 %v5615, %v5695
  %v5712 = vmul.f32 %v5618, %v5698
  %v5713 = vmul.f32 %v5621, %v5701
  %v5714 = vmul.f32 %v5624, %v5704
  %v5715 = vmul.f32 %v5627, %v5707
  %v5716 = vadd.f32 %v5509, %v5530
  %v5717 = vadd.f32 %v5512, %v5533
  %v5718 = vadd.f32 %v5515, %v5536
  %v5719 = vadd.f32 %v5518, %v5539
  %v5720 = vadd.f32 %v5521, %v5542
  %v5721 = vadd.f32 %v5524, %v5545
  %v5722 = vadd.f32 %v5527, %v5548
  %v5723 = vmul.f32 %v5716, 1.442695
  %v5724 = vpow.pop %v5723
  %v5725 = vmul.f32 %v5717, 1.442695
  %v5726 = vpow.pop %v5725
  %v5727 = vmul.f32 %v5718, 1.442695
  %v5728 = vpow.pop %v5727
  %v5729 = vmul.f32 %v5719, 1.442695
  %v5730 = vpow.pop %v5729
  %v5731 = vmul.f32 %v5720, 1.442695
  %v5732 = vpow.pop %v5731
  %v5733 = vmul.f32 %v5721, 1.442695
  %v5734 = vpow.pop %v5733
  %v5735 = vmul.f32 %v5722, 1.442695
  %v5736 = vpow.pop %v5735
  %v5737 = vmul.f32 %v5709, %v5724
  %v5738 = vmul.f32 %v5710, %v5726
  %v5739 = vmul.f32 %v5711, %v5728
  %v5740 = vmul.f32 %v5712, %v5730
  %v5741 = vmul.f32 %v5713, %v5732
  %v5742 = vmul.f32 %v5714, %v5734
  %v5743 = vmul.f32 %v5715, %v5736
  %5744 = vst.msk [vmem:[%s15] sm:$0xff] %vm3675, %v5737
  %5745 = vst.msk [vmem:[%s15 + $0x8] sm:$0xff] %vm3675, %v5738
  %5746 = vst.msk [vmem:[%s15 + $0x10] sm:$0xff] %vm3675, %v5739
  %5747 = vst.msk [vmem:[%s15 + $0x18] sm:$0xff] %vm3675, %v5740
  %5748 = vst.msk [vmem:[%s15 + $0x20] sm:$0xff] %vm3675, %v5741
  %5749 = vst.msk [vmem:[%s15 + $0x28] sm:$0xff] %vm3675, %v5742
  %5750 = vst.msk [vmem:[%s15 + $0x30] sm:$0xff] %vm3675, %v5743
  // Predicated region
  $region50: #{_lambda_.1} parent=0 // pred_check
    _
  $region51: #{_lambda_.1} parent=0 // pred_check_branch
    %5752 = sbr.rel (0) target = $region53
  $region52: #{_lambda_.1} parent=0 // pred_region
    _
  $region53: #{_lambda_.1} parent=0 // pred_fallthru
    _
  // Predicated region
  $region54: #{_lambda_.1} parent=0 // pred_check
    _
  $region55: #{_lambda_.1} parent=0 // pred_check_branch
    %5754 = sbr.rel (0) target = $region57
  $region56: #{_lambda_.1} parent=0 // pred_region
    _
  $region57: #{_lambda_.1} parent=0 // pred_fallthru
    _
  // Predicated region
  $region58: #{_lambda_.1} parent=0 // pred_check
    _
  $region59: #{_lambda_.1} parent=0 // pred_check_branch
    %5756 = sbr.rel (0) target = $region61
  $region60: #{_lambda_.1} parent=0 // pred_region
    _
  $region61: #{_lambda_.1} parent=0 // pred_fallthru
    _
  // Predicated region
  $region62: #{_lambda_.1} parent=0 // pred_check
    _
  $region63: #{_lambda_.1} parent=0 // pred_check_branch
    %5758 = sbr.rel (0) target = $region65
  $region64: #{_lambda_.1} parent=0 // pred_region
    _
  $region65: #{_lambda_.1} parent=0 // pred_fallthru
    _
  // Predicated region
  $region66: #{_lambda_.1} parent=0 // pred_check
    _
  $region67: #{_lambda_.1} parent=0 // pred_check_branch
    %5760 = sbr.rel (0) target = $region69
  $region68: #{_lambda_.1} parent=0 // pred_region
    _
  $region69: #{_lambda_.1} parent=0 // pred_fallthru
    _
  // Predicated region
  $region70: #{_lambda_.1} parent=0 // pred_check
    _
  $region71: #{_lambda_.1} parent=0 // pred_check_branch
    %5762 = sbr.rel (0) target = $region73
  $region72: #{_lambda_.1} parent=0 // pred_region
    _
  $region73: #{_lambda_.1} parent=0 // pred_fallthru
    _
  // Predicated region
  $region74: #{_lambda_.1} parent=0 // pred_check
    _
  $region75: #{_lambda_.1} parent=0 // pred_check_branch
    %5764 = sbr.rel (0) target = $region77
  $region76: #{_lambda_.1} parent=0 // pred_region
    _
  $region77: #{_lambda_.1} parent=0 // pred_fallthru
    _
  // Predicated region
  $region78: #{_lambda_.1} parent=0 // pred_check
    _
  $region79: #{_lambda_.1} parent=0 // pred_check_branch
    %5766 = sbr.rel (0) target = $region81
  $region80: #{_lambda_.1} parent=0 // pred_region
    _
  $region81: #{_lambda_.1} parent=0 // pred_fallthru
    _

</llo_original>
